<compile_context>
chip_gen: v7x
topology: tpu7x:2x2x1
jax: 0.10.0
libtpu: 0.0.40
codegen_flags: <defaults>
</compile_context>

<pallas_src>
import numpy as np
import jax
import jax.numpy as jnp
from jax import lax
from jax.experimental import pallas as pl
from jax.experimental.pallas import tpu as pltpu


B_TILE = 8  # images processed per grid step


# ---------------------------------------------------------------------------
# Fused LeNet kernel: one grid step == B_TILE batch elements, end to end.
# ---------------------------------------------------------------------------
def _lenet_kernel(x_ref,                      # (B_TILE, 32, 32) padded images
                  t1_ref, b1_ref,             # (160,168), (28,168)
                  pv1_ref, ph1_ref,           # (14,28),   (168,84)
                  t2_ref, b2_ref,             # (420,160), (10,160)
                  pv2_ref, ph2_ref,           # (5,10),    (160,80)
                  wf1_ref, bf1_ref,           # (5,80,120),(1,120)
                  wf2_ref, bf2_ref,           # (120,84),  (1,84)
                  wf3_ref, bf3_ref,           # (84,128),  (1,128)
                  out_ref,                    # (B_TILE, 128)
                  x1_ref, x2_ref, p2_ref):    # VMEM scratch:
                                              # (28,160),(10,420),(5,B_TILE,80)
    f32 = jnp.float32
    n_img = out_ref.shape[0]

    # ---- Per-image conv pipeline (sequential; shared slab scratch keeps
    #      live vreg state small and prevents over-interleaving).
    for b in range(n_img):
        # Conv2d(1, 6, 5, padding=2): stage 5 shifted row taps into one slab,
        # then a single K=160 contraction on the MXU.
        for ki in range(5):
            x1_ref[:, ki * 32:(ki + 1) * 32] = x_ref[b, ki:ki + 28, :]
        s1 = jax.nn.sigmoid(
            jnp.dot(x1_ref[...], t1_ref[...], preferred_element_type=f32)
            + b1_ref[...])                                        # (28, 168)

        # AvgPool2d(2): row pooling (left matmul) then col/channel pooling.
        p1 = jnp.dot(jnp.dot(pv1_ref[...], s1, preferred_element_type=f32),
                     ph1_ref[...], preferred_element_type=f32)    # (14, 84)

        # Conv2d(6, 16, 5): same fused-K lowering, K=420.
        for ki in range(5):
            x2_ref[:, ki * 84:(ki + 1) * 84] = p1[ki:ki + 10, :]
        s2 = jax.nn.sigmoid(
            jnp.dot(x2_ref[...], t2_ref[...], preferred_element_type=f32)
            + b2_ref[...])                                        # (10, 160)

        # AvgPool2d(2).
        p2 = jnp.dot(jnp.dot(pv2_ref[...], s2, preferred_element_type=f32),
                     ph2_ref[...], preferred_element_type=f32)    # (5, 80)

        # Stage pooled features grouped by pooled row h, batch along sublanes.
        for h in range(5):
            p2_ref[h, b:b + 1, :] = p2[h:h + 1, :]

    # ---- FC stack with the whole tile's batch in the matmul M dimension.
    f1 = jnp.zeros((n_img, 120), f32)
    for h in range(5):
        f1 = f1 + jnp.dot(p2_ref[h], wf1_ref[h], preferred_element_type=f32)
    f1 = jax.nn.sigmoid(f1 + bf1_ref[...])                        # (B_TILE, 120)

    f2 = jax.nn.sigmoid(
        jnp.dot(f1, wf2_ref[...], preferred_element_type=f32) + bf2_ref[...])

    # fc3 is pre-padded to 128 output lanes -> one lane-dense, unmasked store.
    out_ref[...] = (jnp.dot(f2, wf3_ref[...], preferred_element_type=f32)
                    + bf3_ref[...]).astype(out_ref.dtype)         # (B_TILE, 128)


_WEIGHT_KEYS = ("T1", "B1", "Pv1", "Ph1", "T2", "B2", "Pv2", "Ph2",
                "Wf1", "bf1", "Wf2", "bf2", "Wf3", "bf3")


def lenet_forward(prep, x):
    """x: (B, 1, 28, 28) float32 -> logits (B, 10)."""
    B = x.shape[0]
    n_tiles = -(-B // B_TILE)
    B_pad = n_tiles * B_TILE
    # Per-call glue: pad batch to a multiple of B_TILE, pad H/W by 2 for
    # conv1's padding=2, drop the singleton channel dim -> (B_pad, 32, 32).
    xp = jnp.pad(x[:, 0, :, :].astype(jnp.float32),
                 ((0, B_pad - B), (2, 2), (2, 2)))

    weights = [prep[k] for k in _WEIGHT_KEYS]

    def _wspec(arr):
        nd = arr.ndim
        return pl.BlockSpec(arr.shape, lambda i, _nd=nd: (0,) * _nd)

    out = pl.pallas_call(
        _lenet_kernel,
        out_shape=jax.ShapeDtypeStruct((B_pad, 128), jnp.float32),
        grid=(n_tiles,),
        in_specs=[pl.BlockSpec((B_TILE, 32, 32), lambda i: (i, 0, 0))]
                 + [_wspec(w) for w in weights],
        out_specs=pl.BlockSpec((B_TILE, 128), lambda i: (i, 0)),
        scratch_shapes=[pltpu.VMEM((28, 160), jnp.float32),        # conv1 slab
                        pltpu.VMEM((10, 420), jnp.float32),        # conv2 slab
                        pltpu.VMEM((5, B_TILE, 80), jnp.float32)], # pooled feats
        compiler_params=pltpu.CompilerParams(
            dimension_semantics=("parallel",)),
    )(xp, *weights)
    return out[:B, :10]


# ---------------------------------------------------------------------------
# One-time weight repacking (PyTorch layout -> kernel layout).  Runs at init,
# never per forward call.
# ---------------------------------------------------------------------------
def _toeplitz_weights(w, w_in, w_out):
    """w: (Cout,Cin,KH,KW) -> (KH*w_in*Cin, w_out*Cout) fused-K banded matrix."""
    cout, cin, kh, kw = w.shape
    t = np.zeros((kh, w_in * cin, w_out * cout), np.float32)
    for ki in range(kh):
        for ow in range(w_out):
            for kj in range(kw):
                iw = ow + kj
                t[ki, iw * cin:(iw + 1) * cin,
                  ow * cout:(ow + 1) * cout] = w[:, :, ki, kj].T
    return t.reshape(kh * w_in * cin, w_out * cout)


def _pool_matrices(h, w, c):
    """2x2 average pooling expressed as left (rows) / right (cols*ch) matmuls."""
    pv = np.zeros((h // 2, h), np.float32)
    for i in range(h // 2):
        pv[i, 2 * i] = 0.5
        pv[i, 2 * i + 1] = 0.5
    ph = np.zeros((w * c, (w // 2) * c), np.float32)
    for j in range(w // 2):
        for ch in range(c):
            ph[(2 * j) * c + ch, j * c + ch] = 0.5
            ph[(2 * j + 1) * c + ch, j * c + ch] = 0.5
    return pv, ph


def prepare_params(params):
    p = {k: np.asarray(v, np.float32) for k, v in params.items()}

    pv1, ph1 = _pool_matrices(28, 28, 6)
    pv2, ph2 = _pool_matrices(10, 10, 16)

    # Linear(400,120): permute torch's (c,h,w)-flatten columns into the
    # kernel's per-pooled-row (w,c) layout, blocked by pooled row h.
    wf1 = np.zeros((5, 80, 120), np.float32)
    for h in range(5):
        for w in range(5):
            for c in range(16):
                wf1[h, w * 16 + c, :] = p["fc1_w"][:, c * 25 + h * 5 + w]

    # fc3 padded to 128 output lanes for a lane-dense final store.
    wf3 = np.zeros((84, 128), np.float32)
    wf3[:, :10] = p["fc3_w"].T
    bf3 = np.zeros((1, 128), np.float32)
    bf3[0, :10] = p["fc3_b"]

    prep = {
        "T1": _toeplitz_weights(p["conv1_w"], 32, 28),               # (160,168)
        "B1": np.tile(np.tile(p["conv1_b"], 28)[None, :], (28, 1)),  # (28, 168)
        "Pv1": pv1, "Ph1": ph1,                                      # (14,28),(168,84)
        "T2": _toeplitz_weights(p["conv2_w"], 14, 10),               # (420,160)
        "B2": np.tile(np.tile(p["conv2_b"], 10)[None, :], (10, 1)),  # (10, 160)
        "Pv2": pv2, "Ph2": ph2,                                      # (5,10),(160,80)
        "Wf1": wf1, "bf1": p["fc1_b"].reshape(1, 120),
        "Wf2": p["fc2_w"].T.copy(), "bf2": p["fc2_b"].reshape(1, 84),
        "Wf3": wf3, "bf3": bf3,
    }
    return {k: jnp.asarray(v) for k, v in prep.items()}


# ---------------------------------------------------------------------------
# Parameters (PyTorch-style init) and a pure-JAX reference for self-checking.
# ---------------------------------------------------------------------------
def init_params(key):
    ks = jax.random.split(key, 10)

    def uinit(k, shape, fan_in):
        bound = 1.0 / float(np.sqrt(fan_in))
        return jax.random.uniform(k, shape, jnp.float32, -bound, bound)

    return {
        "conv1_w": uinit(ks[0], (6, 1, 5, 5), 25),
        "conv1_b": uinit(ks[1], (6,), 25),
        "conv2_w": uinit(ks[2], (16, 6, 5, 5), 150),
        "conv2_b": uinit(ks[3], (16,), 150),
        "fc1_w": uinit(ks[4], (120, 400), 400),
        "fc1_b": uinit(ks[5], (120,), 400),
        "fc2_w": uinit(ks[6], (84, 120), 120),
        "fc2_b": uinit(ks[7], (84,), 120),
        "fc3_w": uinit(ks[8], (10, 84), 84),
        "fc3_b": uinit(ks[9], (10,), 84),
    }


def lenet_reference(params, x):
    hp = lax.Precision.HIGHEST
    dn = ("NCHW", "OIHW", "NCHW")
    h = lax.conv_general_dilated(x, params["conv1_w"], (1, 1),
                                 ((2, 2), (2, 2)), dimension_numbers=dn,
                                 precision=hp)
    h = jax.nn.sigmoid(h + params["conv1_b"][None, :, None, None])
    B, C, H, W = h.shape
    h = h.reshape(B, C, H // 2, 2, W // 2, 2).mean(axis=(3, 5))
    h = lax.conv_general_dilated(h, params["conv2_w"], (1, 1),
                                 ((0, 0), (0, 0)), dimension_numbers=dn,
                                 precision=hp)
    h = jax.nn.sigmoid(h + params["conv2_b"][None, :, None, None])
    B, C, H, W = h.shape
    h = h.reshape(B, C, H // 2, 2, W // 2, 2).mean(axis=(3, 5))
    h = h.reshape(B, -1)
    h = jax.nn.sigmoid(jnp.dot(h, params["fc1_w"].T, precision=hp)
                       + params["fc1_b"])
    h = jax.nn.sigmoid(jnp.dot(h, params["fc2_w"].T, precision=hp)
                       + params["fc2_b"])
    return jnp.dot(h, params["fc3_w"].T, precision=hp) + params["fc3_b"]


if __name__ == "__main__":
    key = jax.random.PRNGKey(0)
    pkey, xkey = jax.random.split(key)
    params = init_params(pkey)
    prep = prepare_params(params)          # one-time weight repacking

    # Input shape implied by the module (Linear(16*5*5)): (B, 1, 28, 28).
    x = jax.random.normal(xkey, (2, 1, 28, 28), dtype=jnp.float32)

    fwd = jax.jit(lenet_forward)
    out = fwd(prep, x)
    jax.block_until_ready(out)
    assert out.shape == (2, 10) and out.dtype == jnp.float32

    ref = lenet_reference(params, x)
    err = float(jnp.max(jnp.abs(out - ref)))
    assert err < 5e-3, f"mismatch vs reference: {err}"

    print("KERNEL_OK")
</pallas_src>

<mosaic_0001>
module attributes {stable_mosaic.version = 11 : i64} {
  func.func @_lenet_kernel(%arg0: i32, %arg1: memref<8x32x32xf32, #tpu.memory_space<vmem>>, %arg2: memref<160x168xf32, #tpu.memory_space<vmem>>, %arg3: memref<28x168xf32, #tpu.memory_space<vmem>>, %arg4: memref<14x28xf32, #tpu.memory_space<vmem>>, %arg5: memref<168x84xf32, #tpu.memory_space<vmem>>, %arg6: memref<420x160xf32, #tpu.memory_space<vmem>>, %arg7: memref<10x160xf32, #tpu.memory_space<vmem>>, %arg8: memref<5x10xf32, #tpu.memory_space<vmem>>, %arg9: memref<160x80xf32, #tpu.memory_space<vmem>>, %arg10: memref<5x80x120xf32, #tpu.memory_space<vmem>>, %arg11: memref<1x120xf32, #tpu.memory_space<vmem>>, %arg12: memref<120x84xf32, #tpu.memory_space<vmem>>, %arg13: memref<1x84xf32, #tpu.memory_space<vmem>>, %arg14: memref<84x128xf32, #tpu.memory_space<vmem>>, %arg15: memref<1x128xf32, #tpu.memory_space<vmem>>, %arg16: memref<8x128xf32, #tpu.memory_space<vmem>>, %arg17: memref<28x160xf32, #tpu.memory_space<vmem>>, %arg18: memref<10x420xf32, #tpu.memory_space<vmem>>, %arg19: memref<5x8x80xf32, #tpu.memory_space<vmem>>) attributes {dimension_semantics = [#tpu.dimension_semantics<parallel>], iteration_bounds = array<i64: 1>, scalar_prefetch = 0 : i64, scratch_operands = 3 : i64, tpu.core_type = #tpu.core_type<tc>, window_params = [{transform_indices = @transform_0, window_bounds = array<i64: 8, 32, 32>}, {pipeline_mode = #tpu.pipeline_mode<synchronous>, transform_indices = @transform_1, window_bounds = array<i64: 160, 168>}, {pipeline_mode = #tpu.pipeline_mode<synchronous>, transform_indices = @transform_2, window_bounds = array<i64: 28, 168>}, {pipeline_mode = #tpu.pipeline_mode<synchronous>, transform_indices = @transform_3, window_bounds = array<i64: 14, 28>}, {pipeline_mode = #tpu.pipeline_mode<synchronous>, transform_indices = @transform_4, window_bounds = array<i64: 168, 84>}, {pipeline_mode = #tpu.pipeline_mode<synchronous>, transform_indices = @transform_5, window_bounds = array<i64: 420, 160>}, {pipeline_mode = #tpu.pipeline_mode<synchronous>, transform_indices = @transform_6, window_bounds = array<i64: 10, 160>}, {pipeline_mode = #tpu.pipeline_mode<synchronous>, transform_indices = @transform_7, window_bounds = array<i64: 5, 10>}, {pipeline_mode = #tpu.pipeline_mode<synchronous>, transform_indices = @transform_8, window_bounds = array<i64: 160, 80>}, {pipeline_mode = #tpu.pipeline_mode<synchronous>, transform_indices = @transform_9, window_bounds = array<i64: 5, 80, 120>}, {pipeline_mode = #tpu.pipeline_mode<synchronous>, transform_indices = @transform_10, window_bounds = array<i64: 1, 120>}, {pipeline_mode = #tpu.pipeline_mode<synchronous>, transform_indices = @transform_11, window_bounds = array<i64: 120, 84>}, {pipeline_mode = #tpu.pipeline_mode<synchronous>, transform_indices = @transform_12, window_bounds = array<i64: 1, 84>}, {pipeline_mode = #tpu.pipeline_mode<synchronous>, transform_indices = @transform_13, window_bounds = array<i64: 84, 128>}, {pipeline_mode = #tpu.pipeline_mode<synchronous>, transform_indices = @transform_14, window_bounds = array<i64: 1, 128>}, {transform_indices = @transform_15, window_bounds = array<i64: 8, 128>}]} {
    %c0 = arith.constant 0 : index
    %c0_0 = arith.constant 0 : index
    %c0_1 = arith.constant 0 : index
    %0 = vector.load %arg1[%c0, %c0_0, %c0_1] : memref<8x32x32xf32, #tpu.memory_space<vmem>>, vector<1x28x32xf32>
    %1 = vector.shape_cast %0 : vector<1x28x32xf32> to vector<28x32xf32>
    %c0_2 = arith.constant 0 : index
    %c0_3 = arith.constant 0 : index
    %2 = vector.load %arg17[%c0_2, %c0_3] : memref<28x160xf32, #tpu.memory_space<vmem>>, vector<28x32xf32>
    tpu.vector_store %arg17[%c0_2, %c0_3], %1 {strides = array<i32>} : memref<28x160xf32, #tpu.memory_space<vmem>>, vector<28x32xf32>,
    %c0_4 = arith.constant 0 : index
    %c1 = arith.constant 1 : index
    %c0_5 = arith.constant 0 : index
    %3 = vector.load %arg1[%c0_4, %c1, %c0_5] : memref<8x32x32xf32, #tpu.memory_space<vmem>>, vector<1x28x32xf32>
    %4 = vector.shape_cast %3 : vector<1x28x32xf32> to vector<28x32xf32>
    %c0_6 = arith.constant 0 : index
    %c32 = arith.constant 32 : index
    %5 = vector.load %arg17[%c0_6, %c32] : memref<28x160xf32, #tpu.memory_space<vmem>>, vector<28x32xf32>
    tpu.vector_store %arg17[%c0_6, %c32], %4 {strides = array<i32>} : memref<28x160xf32, #tpu.memory_space<vmem>>, vector<28x32xf32>,
    %c0_7 = arith.constant 0 : index
    %c2 = arith.constant 2 : index
    %c0_8 = arith.constant 0 : index
    %6 = vector.load %arg1[%c0_7, %c2, %c0_8] : memref<8x32x32xf32, #tpu.memory_space<vmem>>, vector<1x28x32xf32>
    %7 = vector.shape_cast %6 : vector<1x28x32xf32> to vector<28x32xf32>
    %c0_9 = arith.constant 0 : index
    %c64 = arith.constant 64 : index
    %8 = vector.load %arg17[%c0_9, %c64] : memref<28x160xf32, #tpu.memory_space<vmem>>, vector<28x32xf32>
    tpu.vector_store %arg17[%c0_9, %c64], %7 {strides = array<i32>} : memref<28x160xf32, #tpu.memory_space<vmem>>, vector<28x32xf32>,
    %c0_10 = arith.constant 0 : index
    %c3 = arith.constant 3 : index
    %c0_11 = arith.constant 0 : index
    %9 = vector.load %arg1[%c0_10, %c3, %c0_11] : memref<8x32x32xf32, #tpu.memory_space<vmem>>, vector<1x28x32xf32>
    %10 = vector.shape_cast %9 : vector<1x28x32xf32> to vector<28x32xf32>
    %c0_12 = arith.constant 0 : index
    %c96 = arith.constant 96 : index
    %11 = vector.load %arg17[%c0_12, %c96] : memref<28x160xf32, #tpu.memory_space<vmem>>, vector<28x32xf32>
    tpu.vector_store %arg17[%c0_12, %c96], %10 {strides = array<i32>} : memref<28x160xf32, #tpu.memory_space<vmem>>, vector<28x32xf32>,
    %c0_13 = arith.constant 0 : index
    %c4 = arith.constant 4 : index
    %c0_14 = arith.constant 0 : index
    %12 = vector.load %arg1[%c0_13, %c4, %c0_14] : memref<8x32x32xf32, #tpu.memory_space<vmem>>, vector<1x28x32xf32>
    %13 = vector.shape_cast %12 : vector<1x28x32xf32> to vector<28x32xf32>
    %c0_15 = arith.constant 0 : index
    %c128 = arith.constant 128 : index
    %14 = vector.load %arg17[%c0_15, %c128] : memref<28x160xf32, #tpu.memory_space<vmem>>, vector<28x32xf32>
    tpu.vector_store %arg17[%c0_15, %c128], %13 {strides = array<i32>} : memref<28x160xf32, #tpu.memory_space<vmem>>, vector<28x32xf32>,
    %c0_16 = arith.constant 0 : index
    %c0_17 = arith.constant 0 : index
    %15 = vector.load %arg17[%c0_16, %c0_17] : memref<28x160xf32, #tpu.memory_space<vmem>>, vector<28x160xf32>
    %c0_18 = arith.constant 0 : index
    %c0_19 = arith.constant 0 : index
    %16 = vector.load %arg2[%c0_18, %c0_19] : memref<160x168xf32, #tpu.memory_space<vmem>>, vector<160x168xf32>
    %cst = arith.constant dense<0.000000e+00> : vector<28x168xf32>
    %17 = tpu.matmul %15, %16, %cst {dimension_numbers = #tpu.dot_dimension_numbers<[1], [0], [0], [1], [0, 0, 1, 1], [], []>} : vector<28x160xf32>, vector<160x168xf32>, vector<28x168xf32> -> vector<28x168xf32>
    %c0_20 = arith.constant 0 : index
    %c0_21 = arith.constant 0 : index
    %18 = vector.load %arg3[%c0_20, %c0_21] : memref<28x168xf32, #tpu.memory_space<vmem>>, vector<28x168xf32>
    %19 = arith.addf %17, %18 : vector<28x168xf32>
    %20 = arith.negf %19 : vector<28x168xf32>
    %21 = math.exp %20 : vector<28x168xf32>
    %cst_22 = arith.constant 1.000000e+00 : f32
    %22 = vector.broadcast %cst_22 : f32 to vector<28x168xf32>
    %23 = arith.addf %22, %21 : vector<28x168xf32>
    %24 = arith.divf %22, %23 : vector<28x168xf32>
    %c0_23 = arith.constant 0 : index
    %c0_24 = arith.constant 0 : index
    %25 = vector.load %arg4[%c0_23, %c0_24] : memref<14x28xf32, #tpu.memory_space<vmem>>, vector<14x28xf32>
    %cst_25 = arith.constant dense<0.000000e+00> : vector<14x168xf32>
    %26 = tpu.matmul %25, %24, %cst_25 {dimension_numbers = #tpu.dot_dimension_numbers<[1], [0], [0], [1], [0, 0, 1, 1], [], []>} : vector<14x28xf32>, vector<28x168xf32>, vector<14x168xf32> -> vector<14x168xf32>
    %c0_26 = arith.constant 0 : index
    %c0_27 = arith.constant 0 : index
    %27 = vector.load %arg5[%c0_26, %c0_27] : memref<168x84xf32, #tpu.memory_space<vmem>>, vector<168x84xf32>
    %cst_28 = arith.constant dense<0.000000e+00> : vector<14x84xf32>
    %28 = tpu.matmul %26, %27, %cst_28 {dimension_numbers = #tpu.dot_dimension_numbers<[1], [0], [0], [1], [0, 0, 1, 1], [], []>} : vector<14x168xf32>, vector<168x84xf32>, vector<14x84xf32> -> vector<14x84xf32>
    %29 = vector.extract_strided_slice %28 {offsets = [0, 0], sizes = [10, 84], strides = [1, 1]} : vector<14x84xf32> to vector<10x84xf32>
    %c0_29 = arith.constant 0 : index
    %c0_30 = arith.constant 0 : index
    %30 = vector.load %arg18[%c0_29, %c0_30] : memref<10x420xf32, #tpu.memory_space<vmem>>, vector<10x84xf32>
    tpu.vector_store %arg18[%c0_29, %c0_30], %29 {strides = array<i32>} : memref<10x420xf32, #tpu.memory_space<vmem>>, vector<10x84xf32>,
    %31 = vector.extract_strided_slice %28 {offsets = [1, 0], sizes = [10, 84], strides = [1, 1]} : vector<14x84xf32> to vector<10x84xf32>
    %c0_31 = arith.constant 0 : index
    %c84 = arith.constant 84 : index
    %32 = vector.load %arg18[%c0_31, %c84] : memref<10x420xf32, #tpu.memory_space<vmem>>, vector<10x84xf32>
    tpu.vector_store %arg18[%c0_31, %c84], %31 {strides = array<i32>} : memref<10x420xf32, #tpu.memory_space<vmem>>, vector<10x84xf32>,
    %33 = vector.extract_strided_slice %28 {offsets = [2, 0], sizes = [10, 84], strides = [1, 1]} : vector<14x84xf32> to vector<10x84xf32>
    %c0_32 = arith.constant 0 : index
    %c168 = arith.constant 168 : index
    %34 = vector.load %arg18[%c0_32, %c168] : memref<10x420xf32, #tpu.memory_space<vmem>>, vector<10x84xf32>
    tpu.vector_store %arg18[%c0_32, %c168], %33 {strides = array<i32>} : memref<10x420xf32, #tpu.memory_space<vmem>>, vector<10x84xf32>,
    %35 = vector.extract_strided_slice %28 {offsets = [3, 0], sizes = [10, 84], strides = [1, 1]} : vector<14x84xf32> to vector<10x84xf32>
    %c0_33 = arith.constant 0 : index
    %c252 = arith.constant 252 : index
    %36 = vector.load %arg18[%c0_33, %c252] : memref<10x420xf32, #tpu.memory_space<vmem>>, vector<10x84xf32>
    tpu.vector_store %arg18[%c0_33, %c252], %35 {strides = array<i32>} : memref<10x420xf32, #tpu.memory_space<vmem>>, vector<10x84xf32>,
    %37 = vector.extract_strided_slice %28 {offsets = [4, 0], sizes = [10, 84], strides = [1, 1]} : vector<14x84xf32> to vector<10x84xf32>
    %c0_34 = arith.constant 0 : index
    %c336 = arith.constant 336 : index
    %38 = vector.load %arg18[%c0_34, %c336] : memref<10x420xf32, #tpu.memory_space<vmem>>, vector<10x84xf32>
    tpu.vector_store %arg18[%c0_34, %c336], %37 {strides = array<i32>} : memref<10x420xf32, #tpu.memory_space<vmem>>, vector<10x84xf32>,
    %c0_35 = arith.constant 0 : index
    %c0_36 = arith.constant 0 : index
    %39 = vector.load %arg18[%c0_35, %c0_36] : memref<10x420xf32, #tpu.memory_space<vmem>>, vector<10x420xf32>
    %c0_37 = arith.constant 0 : index
    %c0_38 = arith.constant 0 : index
    %40 = vector.load %arg6[%c0_37, %c0_38] : memref<420x160xf32, #tpu.memory_space<vmem>>, vector<420x160xf32>
    %cst_39 = arith.constant dense<0.000000e+00> : vector<10x160xf32>
    %41 = tpu.matmul %39, %40, %cst_39 {dimension_numbers = #tpu.dot_dimension_numbers<[1], [0], [0], [1], [0, 0, 1, 1], [], []>} : vector<10x420xf32>, vector<420x160xf32>, vector<10x160xf32> -> vector<10x160xf32>
    %c0_40 = arith.constant 0 : index
    %c0_41 = arith.constant 0 : index
    %42 = vector.load %arg7[%c0_40, %c0_41] : memref<10x160xf32, #tpu.memory_space<vmem>>, vector<10x160xf32>
    %43 = arith.addf %41, %42 : vector<10x160xf32>
    %44 = arith.negf %43 : vector<10x160xf32>
    %45 = math.exp %44 : vector<10x160xf32>
    %cst_42 = arith.constant 1.000000e+00 : f32
    %46 = vector.broadcast %cst_42 : f32 to vector<10x160xf32>
    %47 = arith.addf %46, %45 : vector<10x160xf32>
    %48 = arith.divf %46, %47 : vector<10x160xf32>
    %c0_43 = arith.constant 0 : index
    %c0_44 = arith.constant 0 : index
    %49 = vector.load %arg8[%c0_43, %c0_44] : memref<5x10xf32, #tpu.memory_space<vmem>>, vector<5x10xf32>
    %cst_45 = arith.constant dense<0.000000e+00> : vector<5x160xf32>
    %50 = tpu.matmul %49, %48, %cst_45 {dimension_numbers = #tpu.dot_dimension_numbers<[1], [0], [0], [1], [0, 0, 1, 1], [], []>} : vector<5x10xf32>, vector<10x160xf32>, vector<5x160xf32> -> vector<5x160xf32>
    %c0_46 = arith.constant 0 : index
    %c0_47 = arith.constant 0 : index
    %51 = vector.load %arg9[%c0_46, %c0_47] : memref<160x80xf32, #tpu.memory_space<vmem>>, vector<160x80xf32>
    %cst_48 = arith.constant dense<0.000000e+00> : vector<5x80xf32>
    %52 = tpu.matmul %50, %51, %cst_48 {dimension_numbers = #tpu.dot_dimension_numbers<[1], [0], [0], [1], [0, 0, 1, 1], [], []>} : vector<5x160xf32>, vector<160x80xf32>, vector<5x80xf32> -> vector<5x80xf32>
    %53 = vector.extract_strided_slice %52 {offsets = [0, 0], sizes = [1, 80], strides = [1, 1]} : vector<5x80xf32> to vector<1x80xf32>
    %c0_49 = arith.constant 0 : index
    %c0_50 = arith.constant 0 : index
    %c0_51 = arith.constant 0 : index
    %54 = vector.load %arg19[%c0_49, %c0_50, %c0_51] : memref<5x8x80xf32, #tpu.memory_space<vmem>>, vector<1x1x80xf32>
    %55 = vector.shape_cast %54 : vector<1x1x80xf32> to vector<1x80xf32>
    %56 = vector.shape_cast %53 : vector<1x80xf32> to vector<1x1x80xf32>
    tpu.vector_store %arg19[%c0_49, %c0_50, %c0_51], %56 {strides = array<i32>} : memref<5x8x80xf32, #tpu.memory_space<vmem>>, vector<1x1x80xf32>,
    %57 = vector.extract_strided_slice %52 {offsets = [1, 0], sizes = [1, 80], strides = [1, 1]} : vector<5x80xf32> to vector<1x80xf32>
    %c1_52 = arith.constant 1 : index
    %c0_53 = arith.constant 0 : index
    %c0_54 = arith.constant 0 : index
    %58 = vector.load %arg19[%c1_52, %c0_53, %c0_54] : memref<5x8x80xf32, #tpu.memory_space<vmem>>, vector<1x1x80xf32>
    %59 = vector.shape_cast %58 : vector<1x1x80xf32> to vector<1x80xf32>
    %60 = vector.shape_cast %57 : vector<1x80xf32> to vector<1x1x80xf32>
    tpu.vector_store %arg19[%c1_52, %c0_53, %c0_54], %60 {strides = array<i32>} : memref<5x8x80xf32, #tpu.memory_space<vmem>>, vector<1x1x80xf32>,
    %61 = vector.extract_strided_slice %52 {offsets = [2, 0], sizes = [1, 80], strides = [1, 1]} : vector<5x80xf32> to vector<1x80xf32>
    %c2_55 = arith.constant 2 : index
    %c0_56 = arith.constant 0 : index
    %c0_57 = arith.constant 0 : index
    %62 = vector.load %arg19[%c2_55, %c0_56, %c0_57] : memref<5x8x80xf32, #tpu.memory_space<vmem>>, vector<1x1x80xf32>
    %63 = vector.shape_cast %62 : vector<1x1x80xf32> to vector<1x80xf32>
    %64 = vector.shape_cast %61 : vector<1x80xf32> to vector<1x1x80xf32>
    tpu.vector_store %arg19[%c2_55, %c0_56, %c0_57], %64 {strides = array<i32>} : memref<5x8x80xf32, #tpu.memory_space<vmem>>, vector<1x1x80xf32>,
    %65 = vector.extract_strided_slice %52 {offsets = [3, 0], sizes = [1, 80], strides = [1, 1]} : vector<5x80xf32> to vector<1x80xf32>
    %c3_58 = arith.constant 3 : index
    %c0_59 = arith.constant 0 : index
    %c0_60 = arith.constant 0 : index
    %66 = vector.load %arg19[%c3_58, %c0_59, %c0_60] : memref<5x8x80xf32, #tpu.memory_space<vmem>>, vector<1x1x80xf32>
    %67 = vector.shape_cast %66 : vector<1x1x80xf32> to vector<1x80xf32>
    %68 = vector.shape_cast %65 : vector<1x80xf32> to vector<1x1x80xf32>
    tpu.vector_store %arg19[%c3_58, %c0_59, %c0_60], %68 {strides = array<i32>} : memref<5x8x80xf32, #tpu.memory_space<vmem>>, vector<1x1x80xf32>,
    %69 = vector.extract_strided_slice %52 {offsets = [4, 0], sizes = [1, 80], strides = [1, 1]} : vector<5x80xf32> to vector<1x80xf32>
    %c4_61 = arith.constant 4 : index
    %c0_62 = arith.constant 0 : index
    %c0_63 = arith.constant 0 : index
    %70 = vector.load %arg19[%c4_61, %c0_62, %c0_63] : memref<5x8x80xf32, #tpu.memory_space<vmem>>, vector<1x1x80xf32>
    %71 = vector.shape_cast %70 : vector<1x1x80xf32> to vector<1x80xf32>
    %72 = vector.shape_cast %69 : vector<1x80xf32> to vector<1x1x80xf32>
    tpu.vector_store %arg19[%c4_61, %c0_62, %c0_63], %72 {strides = array<i32>} : memref<5x8x80xf32, #tpu.memory_space<vmem>>, vector<1x1x80xf32>,
    %c1_64 = arith.constant 1 : index
    %c0_65 = arith.constant 0 : index
    %c0_66 = arith.constant 0 : index
    %73 = vector.load %arg1[%c1_64, %c0_65, %c0_66] : memref<8x32x32xf32, #tpu.memory_space<vmem>>, vector<1x28x32xf32>
    %74 = vector.shape_cast %73 : vector<1x28x32xf32> to vector<28x32xf32>
    %c0_67 = arith.constant 0 : index
    %c0_68 = arith.constant 0 : index
    %75 = vector.load %arg17[%c0_67, %c0_68] : memref<28x160xf32, #tpu.memory_space<vmem>>, vector<28x32xf32>
    tpu.vector_store %arg17[%c0_67, %c0_68], %74 {strides = array<i32>} : memref<28x160xf32, #tpu.memory_space<vmem>>, vector<28x32xf32>,
    %c1_69 = arith.constant 1 : index
    %c1_70 = arith.constant 1 : index
    %c0_71 = arith.constant 0 : index
    %76 = vector.load %arg1[%c1_69, %c1_70, %c0_71] : memref<8x32x32xf32, #tpu.memory_space<vmem>>, vector<1x28x32xf32>
    %77 = vector.shape_cast %76 : vector<1x28x32xf32> to vector<28x32xf32>
    %c0_72 = arith.constant 0 : index
    %c32_73 = arith.constant 32 : index
    %78 = vector.load %arg17[%c0_72, %c32_73] : memref<28x160xf32, #tpu.memory_space<vmem>>, vector<28x32xf32>
    tpu.vector_store %arg17[%c0_72, %c32_73], %77 {strides = array<i32>} : memref<28x160xf32, #tpu.memory_space<vmem>>, vector<28x32xf32>,
    %c1_74 = arith.constant 1 : index
    %c2_75 = arith.constant 2 : index
    %c0_76 = arith.constant 0 : index
    %79 = vector.load %arg1[%c1_74, %c2_75, %c0_76] : memref<8x32x32xf32, #tpu.memory_space<vmem>>, vector<1x28x32xf32>
    %80 = vector.shape_cast %79 : vector<1x28x32xf32> to vector<28x32xf32>
    %c0_77 = arith.constant 0 : index
    %c64_78 = arith.constant 64 : index
    %81 = vector.load %arg17[%c0_77, %c64_78] : memref<28x160xf32, #tpu.memory_space<vmem>>, vector<28x32xf32>
    tpu.vector_store %arg17[%c0_77, %c64_78], %80 {strides = array<i32>} : memref<28x160xf32, #tpu.memory_space<vmem>>, vector<28x32xf32>,
    %c1_79 = arith.constant 1 : index
    %c3_80 = arith.constant 3 : index
    %c0_81 = arith.constant 0 : index
    %82 = vector.load %arg1[%c1_79, %c3_80, %c0_81] : memref<8x32x32xf32, #tpu.memory_space<vmem>>, vector<1x28x32xf32>
    %83 = vector.shape_cast %82 : vector<1x28x32xf32> to vector<28x32xf32>
    %c0_82 = arith.constant 0 : index
    %c96_83 = arith.constant 96 : index
    %84 = vector.load %arg17[%c0_82, %c96_83] : memref<28x160xf32, #tpu.memory_space<vmem>>, vector<28x32xf32>
    tpu.vector_store %arg17[%c0_82, %c96_83], %83 {strides = array<i32>} : memref<28x160xf32, #tpu.memory_space<vmem>>, vector<28x32xf32>,
    %c1_84 = arith.constant 1 : index
    %c4_85 = arith.constant 4 : index
    %c0_86 = arith.constant 0 : index
    %85 = vector.load %arg1[%c1_84, %c4_85, %c0_86] : memref<8x32x32xf32, #tpu.memory_space<vmem>>, vector<1x28x32xf32>
    %86 = vector.shape_cast %85 : vector<1x28x32xf32> to vector<28x32xf32>
    %c0_87 = arith.constant 0 : index
    %c128_88 = arith.constant 128 : index
    %87 = vector.load %arg17[%c0_87, %c128_88] : memref<28x160xf32, #tpu.memory_space<vmem>>, vector<28x32xf32>
    tpu.vector_store %arg17[%c0_87, %c128_88], %86 {strides = array<i32>} : memref<28x160xf32, #tpu.memory_space<vmem>>, vector<28x32xf32>,
    %c0_89 = arith.constant 0 : index
    %c0_90 = arith.constant 0 : index
    %88 = vector.load %arg17[%c0_89, %c0_90] : memref<28x160xf32, #tpu.memory_space<vmem>>, vector<28x160xf32>
    %c0_91 = arith.constant 0 : index
    %c0_92 = arith.constant 0 : index
    %89 = vector.load %arg2[%c0_91, %c0_92] : memref<160x168xf32, #tpu.memory_space<vmem>>, vector<160x168xf32>
    %cst_93 = arith.constant dense<0.000000e+00> : vector<28x168xf32>
    %90 = tpu.matmul %88, %89, %cst_93 {dimension_numbers = #tpu.dot_dimension_numbers<[1], [0], [0], [1], [0, 0, 1, 1], [], []>} : vector<28x160xf32>, vector<160x168xf32>, vector<28x168xf32> -> vector<28x168xf32>
    %c0_94 = arith.constant 0 : index
    %c0_95 = arith.constant 0 : index
    %91 = vector.load %arg3[%c0_94, %c0_95] : memref<28x168xf32, #tpu.memory_space<vmem>>, vector<28x168xf32>
    %92 = arith.addf %90, %91 : vector<28x168xf32>
    %93 = arith.negf %92 : vector<28x168xf32>
    %94 = math.exp %93 : vector<28x168xf32>
    %cst_96 = arith.constant 1.000000e+00 : f32
    %95 = vector.broadcast %cst_96 : f32 to vector<28x168xf32>
    %96 = arith.addf %95, %94 : vector<28x168xf32>
    %97 = arith.divf %95, %96 : vector<28x168xf32>
    %c0_97 = arith.constant 0 : index
    %c0_98 = arith.constant 0 : index
    %98 = vector.load %arg4[%c0_97, %c0_98] : memref<14x28xf32, #tpu.memory_space<vmem>>, vector<14x28xf32>
    %cst_99 = arith.constant dense<0.000000e+00> : vector<14x168xf32>
    %99 = tpu.matmul %98, %97, %cst_99 {dimension_numbers = #tpu.dot_dimension_numbers<[1], [0], [0], [1], [0, 0, 1, 1], [], []>} : vector<14x28xf32>, vector<28x168xf32>, vector<14x168xf32> -> vector<14x168xf32>
    %c0_100 = arith.constant 0 : index
    %c0_101 = arith.constant 0 : index
    %100 = vector.load %arg5[%c0_100, %c0_101] : memref<168x84xf32, #tpu.memory_space<vmem>>, vector<168x84xf32>
    %cst_102 = arith.constant dense<0.000000e+00> : vector<14x84xf32>
    %101 = tpu.matmul %99, %100, %cst_102 {dimension_numbers = #tpu.dot_dimension_numbers<[1], [0], [0], [1], [0, 0, 1, 1], [], []>} : vector<14x168xf32>, vector<168x84xf32>, vector<14x84xf32> -> vector<14x84xf32>
    %102 = vector.extract_strided_slice %101 {offsets = [0, 0], sizes = [10, 84], strides = [1, 1]} : vector<14x84xf32> to vector<10x84xf32>
    %c0_103 = arith.constant 0 : index
    %c0_104 = arith.constant 0 : index
    %103 = vector.load %arg18[%c0_103, %c0_104] : memref<10x420xf32, #tpu.memory_space<vmem>>, vector<10x84xf32>
    tpu.vector_store %arg18[%c0_103, %c0_104], %102 {strides = array<i32>} : memref<10x420xf32, #tpu.memory_space<vmem>>, vector<10x84xf32>,
    %104 = vector.extract_strided_slice %101 {offsets = [1, 0], sizes = [10, 84], strides = [1, 1]} : vector<14x84xf32> to vector<10x84xf32>
    %c0_105 = arith.constant 0 : index
    %c84_106 = arith.constant 84 : index
    %105 = vector.load %arg18[%c0_105, %c84_106] : memref<10x420xf32, #tpu.memory_space<vmem>>, vector<10x84xf32>
    tpu.vector_store %arg18[%c0_105, %c84_106], %104 {strides = array<i32>} : memref<10x420xf32, #tpu.memory_space<vmem>>, vector<10x84xf32>,
    %106 = vector.extract_strided_slice %101 {offsets = [2, 0], sizes = [10, 84], strides = [1, 1]} : vector<14x84xf32> to vector<10x84xf32>
    %c0_107 = arith.constant 0 : index
    %c168_108 = arith.constant 168 : index
    %107 = vector.load %arg18[%c0_107, %c168_108] : memref<10x420xf32, #tpu.memory_space<vmem>>, vector<10x84xf32>
    tpu.vector_store %arg18[%c0_107, %c168_108], %106 {strides = array<i32>} : memref<10x420xf32, #tpu.memory_space<vmem>>, vector<10x84xf32>,
    %108 = vector.extract_strided_slice %101 {offsets = [3, 0], sizes = [10, 84], strides = [1, 1]} : vector<14x84xf32> to vector<10x84xf32>
    %c0_109 = arith.constant 0 : index
    %c252_110 = arith.constant 252 : index
    %109 = vector.load %arg18[%c0_109, %c252_110] : memref<10x420xf32, #tpu.memory_space<vmem>>, vector<10x84xf32>
    tpu.vector_store %arg18[%c0_109, %c252_110], %108 {strides = array<i32>} : memref<10x420xf32, #tpu.memory_space<vmem>>, vector<10x84xf32>,
    %110 = vector.extract_strided_slice %101 {offsets = [4, 0], sizes = [10, 84], strides = [1, 1]} : vector<14x84xf32> to vector<10x84xf32>
    %c0_111 = arith.constant 0 : index
    %c336_112 = arith.constant 336 : index
    %111 = vector.load %arg18[%c0_111, %c336_112] : memref<10x420xf32, #tpu.memory_space<vmem>>, vector<10x84xf32>
    tpu.vector_store %arg18[%c0_111, %c336_112], %110 {strides = array<i32>} : memref<10x420xf32, #tpu.memory_space<vmem>>, vector<10x84xf32>,
    %c0_113 = arith.constant 0 : index
    %c0_114 = arith.constant 0 : index
    %112 = vector.load %arg18[%c0_113, %c0_114] : memref<10x420xf32, #tpu.memory_space<vmem>>, vector<10x420xf32>
    %c0_115 = arith.constant 0 : index
    %c0_116 = arith.constant 0 : index
    %113 = vector.load %arg6[%c0_115, %c0_116] : memref<420x160xf32, #tpu.memory_space<vmem>>, vector<420x160xf32>
    %cst_117 = arith.constant dense<0.000000e+00> : vector<10x160xf32>
    %114 = tpu.matmul %112, %113, %cst_117 {dimension_numbers = #tpu.dot_dimension_numbers<[1], [0], [0], [1], [0, 0, 1, 1], [], []>} : vector<10x420xf32>, vector<420x160xf32>, vector<10x160xf32> -> vector<10x160xf32>
    %c0_118 = arith.constant 0 : index
    %c0_119 = arith.constant 0 : index
    %115 = vector.load %arg7[%c0_118, %c0_119] : memref<10x160xf32, #tpu.memory_space<vmem>>, vector<10x160xf32>
    %116 = arith.addf %114, %115 : vector<10x160xf32>
    %117 = arith.negf %116 : vector<10x160xf32>
    %118 = math.exp %117 : vector<10x160xf32>
    %cst_120 = arith.constant 1.000000e+00 : f32
    %119 = vector.broadcast %cst_120 : f32 to vector<10x160xf32>
    %120 = arith.addf %119, %118 : vector<10x160xf32>
    %121 = arith.divf %119, %120 : vector<10x160xf32>
    %c0_121 = arith.constant 0 : index
    %c0_122 = arith.constant 0 : index
    %122 = vector.load %arg8[%c0_121, %c0_122] : memref<5x10xf32, #tpu.memory_space<vmem>>, vector<5x10xf32>
    %cst_123 = arith.constant dense<0.000000e+00> : vector<5x160xf32>
    %123 = tpu.matmul %122, %121, %cst_123 {dimension_numbers = #tpu.dot_dimension_numbers<[1], [0], [0], [1], [0, 0, 1, 1], [], []>} : vector<5x10xf32>, vector<10x160xf32>, vector<5x160xf32> -> vector<5x160xf32>
    %c0_124 = arith.constant 0 : index
    %c0_125 = arith.constant 0 : index
    %124 = vector.load %arg9[%c0_124, %c0_125] : memref<160x80xf32, #tpu.memory_space<vmem>>, vector<160x80xf32>
    %cst_126 = arith.constant dense<0.000000e+00> : vector<5x80xf32>
    %125 = tpu.matmul %123, %124, %cst_126 {dimension_numbers = #tpu.dot_dimension_numbers<[1], [0], [0], [1], [0, 0, 1, 1], [], []>} : vector<5x160xf32>, vector<160x80xf32>, vector<5x80xf32> -> vector<5x80xf32>
    %126 = vector.extract_strided_slice %125 {offsets = [0, 0], sizes = [1, 80], strides = [1, 1]} : vector<5x80xf32> to vector<1x80xf32>
    %c0_127 = arith.constant 0 : index
    %c1_128 = arith.constant 1 : index
    %c0_129 = arith.constant 0 : index
    %127 = vector.load %arg19[%c0_127, %c1_128, %c0_129] : memref<5x8x80xf32, #tpu.memory_space<vmem>>, vector<1x1x80xf32>
    %128 = vector.shape_cast %127 : vector<1x1x80xf32> to vector<1x80xf32>
    %129 = vector.shape_cast %126 : vector<1x80xf32> to vector<1x1x80xf32>
    tpu.vector_store %arg19[%c0_127, %c1_128, %c0_129], %129 {strides = array<i32>} : memref<5x8x80xf32, #tpu.memory_space<vmem>>, vector<1x1x80xf32>,
    %130 = vector.extract_strided_slice %125 {offsets = [1, 0], sizes = [1, 80], strides = [1, 1]} : vector<5x80xf32> to vector<1x80xf32>
    %c1_130 = arith.constant 1 : index
    %c1_131 = arith.constant 1 : index
    %c0_132 = arith.constant 0 : index
    %131 = vector.load %arg19[%c1_130, %c1_131, %c0_132] : memref<5x8x80xf32, #tpu.memory_space<vmem>>, vector<1x1x80xf32>
    %132 = vector.shape_cast %131 : vector<1x1x80xf32> to vector<1x80xf32>
    %133 = vector.shape_cast %130 : vector<1x80xf32> to vector<1x1x80xf32>
    tpu.vector_store %arg19[%c1_130, %c1_131, %c0_132], %133 {strides = array<i32>} : memref<5x8x80xf32, #tpu.memory_space<vmem>>, vector<1x1x80xf32>,
    %134 = vector.extract_strided_slice %125 {offsets = [2, 0], sizes = [1, 80], strides = [1, 1]} : vector<5x80xf32> to vector<1x80xf32>
    %c2_133 = arith.constant 2 : index
    %c1_134 = arith.constant 1 : index
    %c0_135 = arith.constant 0 : index
    %135 = vector.load %arg19[%c2_133, %c1_134, %c0_135] : memref<5x8x80xf32, #tpu.memory_space<vmem>>, vector<1x1x80xf32>
    %136 = vector.shape_cast %135 : vector<1x1x80xf32> to vector<1x80xf32>
    %137 = vector.shape_cast %134 : vector<1x80xf32> to vector<1x1x80xf32>
    tpu.vector_store %arg19[%c2_133, %c1_134, %c0_135], %137 {strides = array<i32>} : memref<5x8x80xf32, #tpu.memory_space<vmem>>, vector<1x1x80xf32>,
    %138 = vector.extract_strided_slice %125 {offsets = [3, 0], sizes = [1, 80], strides = [1, 1]} : vector<5x80xf32> to vector<1x80xf32>
    %c3_136 = arith.constant 3 : index
    %c1_137 = arith.constant 1 : index
    %c0_138 = arith.constant 0 : index
    %139 = vector.load %arg19[%c3_136, %c1_137, %c0_138] : memref<5x8x80xf32, #tpu.memory_space<vmem>>, vector<1x1x80xf32>
    %140 = vector.shape_cast %139 : vector<1x1x80xf32> to vector<1x80xf32>
    %141 = vector.shape_cast %138 : vector<1x80xf32> to vector<1x1x80xf32>
    tpu.vector_store %arg19[%c3_136, %c1_137, %c0_138], %141 {strides = array<i32>} : memref<5x8x80xf32, #tpu.memory_space<vmem>>, vector<1x1x80xf32>,
    %142 = vector.extract_strided_slice %125 {offsets = [4, 0], sizes = [1, 80], strides = [1, 1]} : vector<5x80xf32> to vector<1x80xf32>
    %c4_139 = arith.constant 4 : index
    %c1_140 = arith.constant 1 : index
    %c0_141 = arith.constant 0 : index
    %143 = vector.load %arg19[%c4_139, %c1_140, %c0_141] : memref<5x8x80xf32, #tpu.memory_space<vmem>>, vector<1x1x80xf32>
    %144 = vector.shape_cast %143 : vector<1x1x80xf32> to vector<1x80xf32>
    %145 = vector.shape_cast %142 : vector<1x80xf32> to vector<1x1x80xf32>
    tpu.vector_store %arg19[%c4_139, %c1_140, %c0_141], %145 {strides = array<i32>} : memref<5x8x80xf32, #tpu.memory_space<vmem>>, vector<1x1x80xf32>,
    %c2_142 = arith.constant 2 : index
    %c0_143 = arith.constant 0 : index
    %c0_144 = arith.constant 0 : index
    %146 = vector.load %arg1[%c2_142, %c0_143, %c0_144] : memref<8x32x32xf32, #tpu.memory_space<vmem>>, vector<1x28x32xf32>
    %147 = vector.shape_cast %146 : vector<1x28x32xf32> to vector<28x32xf32>
    %c0_145 = arith.constant 0 : index
    %c0_146 = arith.constant 0 : index
    %148 = vector.load %arg17[%c0_145, %c0_146] : memref<28x160xf32, #tpu.memory_space<vmem>>, vector<28x32xf32>
    tpu.vector_store %arg17[%c0_145, %c0_146], %147 {strides = array<i32>} : memref<28x160xf32, #tpu.memory_space<vmem>>, vector<28x32xf32>,
    %c2_147 = arith.constant 2 : index
    %c1_148 = arith.constant 1 : index
    %c0_149 = arith.constant 0 : index
    %149 = vector.load %arg1[%c2_147, %c1_148, %c0_149] : memref<8x32x32xf32, #tpu.memory_space<vmem>>, vector<1x28x32xf32>
    %150 = vector.shape_cast %149 : vector<1x28x32xf32> to vector<28x32xf32>
    %c0_150 = arith.constant 0 : index
    %c32_151 = arith.constant 32 : index
    %151 = vector.load %arg17[%c0_150, %c32_151] : memref<28x160xf32, #tpu.memory_space<vmem>>, vector<28x32xf32>
    tpu.vector_store %arg17[%c0_150, %c32_151], %150 {strides = array<i32>} : memref<28x160xf32, #tpu.memory_space<vmem>>, vector<28x32xf32>,
    %c2_152 = arith.constant 2 : index
    %c2_153 = arith.constant 2 : index
    %c0_154 = arith.constant 0 : index
    %152 = vector.load %arg1[%c2_152, %c2_153, %c0_154] : memref<8x32x32xf32, #tpu.memory_space<vmem>>, vector<1x28x32xf32>
    %153 = vector.shape_cast %152 : vector<1x28x32xf32> to vector<28x32xf32>
    %c0_155 = arith.constant 0 : index
    %c64_156 = arith.constant 64 : index
    %154 = vector.load %arg17[%c0_155, %c64_156] : memref<28x160xf32, #tpu.memory_space<vmem>>, vector<28x32xf32>
    tpu.vector_store %arg17[%c0_155, %c64_156], %153 {strides = array<i32>} : memref<28x160xf32, #tpu.memory_space<vmem>>, vector<28x32xf32>,
    %c2_157 = arith.constant 2 : index
    %c3_158 = arith.constant 3 : index
    %c0_159 = arith.constant 0 : index
    %155 = vector.load %arg1[%c2_157, %c3_158, %c0_159] : memref<8x32x32xf32, #tpu.memory_space<vmem>>, vector<1x28x32xf32>
    %156 = vector.shape_cast %155 : vector<1x28x32xf32> to vector<28x32xf32>
    %c0_160 = arith.constant 0 : index
    %c96_161 = arith.constant 96 : index
    %157 = vector.load %arg17[%c0_160, %c96_161] : memref<28x160xf32, #tpu.memory_space<vmem>>, vector<28x32xf32>
    tpu.vector_store %arg17[%c0_160, %c96_161], %156 {strides = array<i32>} : memref<28x160xf32, #tpu.memory_space<vmem>>, vector<28x32xf32>,
    %c2_162 = arith.constant 2 : index
    %c4_163 = arith.constant 4 : index
    %c0_164 = arith.constant 0 : index
    %158 = vector.load %arg1[%c2_162, %c4_163, %c0_164] : memref<8x32x32xf32, #tpu.memory_space<vmem>>, vector<1x28x32xf32>
    %159 = vector.shape_cast %158 : vector<1x28x32xf32> to vector<28x32xf32>
    %c0_165 = arith.constant 0 : index
    %c128_166 = arith.constant 128 : index
    %160 = vector.load %arg17[%c0_165, %c128_166] : memref<28x160xf32, #tpu.memory_space<vmem>>, vector<28x32xf32>
    tpu.vector_store %arg17[%c0_165, %c128_166], %159 {strides = array<i32>} : memref<28x160xf32, #tpu.memory_space<vmem>>, vector<28x32xf32>,
    %c0_167 = arith.constant 0 : index
    %c0_168 = arith.constant 0 : index
    %161 = vector.load %arg17[%c0_167, %c0_168] : memref<28x160xf32, #tpu.memory_space<vmem>>, vector<28x160xf32>
    %c0_169 = arith.constant 0 : index
    %c0_170 = arith.constant 0 : index
    %162 = vector.load %arg2[%c0_169, %c0_170] : memref<160x168xf32, #tpu.memory_space<vmem>>, vector<160x168xf32>
    %cst_171 = arith.constant dense<0.000000e+00> : vector<28x168xf32>
    %163 = tpu.matmul %161, %162, %cst_171 {dimension_numbers = #tpu.dot_dimension_numbers<[1], [0], [0], [1], [0, 0, 1, 1], [], []>} : vector<28x160xf32>, vector<160x168xf32>, vector<28x168xf32> -> vector<28x168xf32>
    %c0_172 = arith.constant 0 : index
    %c0_173 = arith.constant 0 : index
    %164 = vector.load %arg3[%c0_172, %c0_173] : memref<28x168xf32, #tpu.memory_space<vmem>>, vector<28x168xf32>
    %165 = arith.addf %163, %164 : vector<28x168xf32>
    %166 = arith.negf %165 : vector<28x168xf32>
    %167 = math.exp %166 : vector<28x168xf32>
    %cst_174 = arith.constant 1.000000e+00 : f32
    %168 = vector.broadcast %cst_174 : f32 to vector<28x168xf32>
    %169 = arith.addf %168, %167 : vector<28x168xf32>
    %170 = arith.divf %168, %169 : vector<28x168xf32>
    %c0_175 = arith.constant 0 : index
    %c0_176 = arith.constant 0 : index
    %171 = vector.load %arg4[%c0_175, %c0_176] : memref<14x28xf32, #tpu.memory_space<vmem>>, vector<14x28xf32>
    %cst_177 = arith.constant dense<0.000000e+00> : vector<14x168xf32>
    %172 = tpu.matmul %171, %170, %cst_177 {dimension_numbers = #tpu.dot_dimension_numbers<[1], [0], [0], [1], [0, 0, 1, 1], [], []>} : vector<14x28xf32>, vector<28x168xf32>, vector<14x168xf32> -> vector<14x168xf32>
    %c0_178 = arith.constant 0 : index
    %c0_179 = arith.constant 0 : index
    %173 = vector.load %arg5[%c0_178, %c0_179] : memref<168x84xf32, #tpu.memory_space<vmem>>, vector<168x84xf32>
    %cst_180 = arith.constant dense<0.000000e+00> : vector<14x84xf32>
    %174 = tpu.matmul %172, %173, %cst_180 {dimension_numbers = #tpu.dot_dimension_numbers<[1], [0], [0], [1], [0, 0, 1, 1], [], []>} : vector<14x168xf32>, vector<168x84xf32>, vector<14x84xf32> -> vector<14x84xf32>
    %175 = vector.extract_strided_slice %174 {offsets = [0, 0], sizes = [10, 84], strides = [1, 1]} : vector<14x84xf32> to vector<10x84xf32>
    %c0_181 = arith.constant 0 : index
    %c0_182 = arith.constant 0 : index
    %176 = vector.load %arg18[%c0_181, %c0_182] : memref<10x420xf32, #tpu.memory_space<vmem>>, vector<10x84xf32>
    tpu.vector_store %arg18[%c0_181, %c0_182], %175 {strides = array<i32>} : memref<10x420xf32, #tpu.memory_space<vmem>>, vector<10x84xf32>,
    %177 = vector.extract_strided_slice %174 {offsets = [1, 0], sizes = [10, 84], strides = [1, 1]} : vector<14x84xf32> to vector<10x84xf32>
    %c0_183 = arith.constant 0 : index
    %c84_184 = arith.constant 84 : index
    %178 = vector.load %arg18[%c0_183, %c84_184] : memref<10x420xf32, #tpu.memory_space<vmem>>, vector<10x84xf32>
    tpu.vector_store %arg18[%c0_183, %c84_184], %177 {strides = array<i32>} : memref<10x420xf32, #tpu.memory_space<vmem>>, vector<10x84xf32>,
    %179 = vector.extract_strided_slice %174 {offsets = [2, 0], sizes = [10, 84], strides = [1, 1]} : vector<14x84xf32> to vector<10x84xf32>
    %c0_185 = arith.constant 0 : index
    %c168_186 = arith.constant 168 : index
    %180 = vector.load %arg18[%c0_185, %c168_186] : memref<10x420xf32, #tpu.memory_space<vmem>>, vector<10x84xf32>
    tpu.vector_store %arg18[%c0_185, %c168_186], %179 {strides = array<i32>} : memref<10x420xf32, #tpu.memory_space<vmem>>, vector<10x84xf32>,
    %181 = vector.extract_strided_slice %174 {offsets = [3, 0], sizes = [10, 84], strides = [1, 1]} : vector<14x84xf32> to vector<10x84xf32>
    %c0_187 = arith.constant 0 : index
    %c252_188 = arith.constant 252 : index
    %182 = vector.load %arg18[%c0_187, %c252_188] : memref<10x420xf32, #tpu.memory_space<vmem>>, vector<10x84xf32>
    tpu.vector_store %arg18[%c0_187, %c252_188], %181 {strides = array<i32>} : memref<10x420xf32, #tpu.memory_space<vmem>>, vector<10x84xf32>,
    %183 = vector.extract_strided_slice %174 {offsets = [4, 0], sizes = [10, 84], strides = [1, 1]} : vector<14x84xf32> to vector<10x84xf32>
    %c0_189 = arith.constant 0 : index
    %c336_190 = arith.constant 336 : index
    %184 = vector.load %arg18[%c0_189, %c336_190] : memref<10x420xf32, #tpu.memory_space<vmem>>, vector<10x84xf32>
    tpu.vector_store %arg18[%c0_189, %c336_190], %183 {strides = array<i32>} : memref<10x420xf32, #tpu.memory_space<vmem>>, vector<10x84xf32>,
    %c0_191 = arith.constant 0 : index
    %c0_192 = arith.constant 0 : index
    %185 = vector.load %arg18[%c0_191, %c0_192] : memref<10x420xf32, #tpu.memory_space<vmem>>, vector<10x420xf32>
    %c0_193 = arith.constant 0 : index
    %c0_194 = arith.constant 0 : index
    %186 = vector.load %arg6[%c0_193, %c0_194] : memref<420x160xf32, #tpu.memory_space<vmem>>, vector<420x160xf32>
    %cst_195 = arith.constant dense<0.000000e+00> : vector<10x160xf32>
    %187 = tpu.matmul %185, %186, %cst_195 {dimension_numbers = #tpu.dot_dimension_numbers<[1], [0], [0], [1], [0, 0, 1, 1], [], []>} : vector<10x420xf32>, vector<420x160xf32>, vector<10x160xf32> -> vector<10x160xf32>
    %c0_196 = arith.constant 0 : index
    %c0_197 = arith.constant 0 : index
    %188 = vector.load %arg7[%c0_196, %c0_197] : memref<10x160xf32, #tpu.memory_space<vmem>>, vector<10x160xf32>
    %189 = arith.addf %187, %188 : vector<10x160xf32>
    %190 = arith.negf %189 : vector<10x160xf32>
    %191 = math.exp %190 : vector<10x160xf32>
    %cst_198 = arith.constant 1.000000e+00 : f32
    %192 = vector.broadcast %cst_198 : f32 to vector<10x160xf32>
    %193 = arith.addf %192, %191 : vector<10x160xf32>
    %194 = arith.divf %192, %193 : vector<10x160xf32>
    %c0_199 = arith.constant 0 : index
    %c0_200 = arith.constant 0 : index
    %195 = vector.load %arg8[%c0_199, %c0_200] : memref<5x10xf32, #tpu.memory_space<vmem>>, vector<5x10xf32>
    %cst_201 = arith.constant dense<0.000000e+00> : vector<5x160xf32>
    %196 = tpu.matmul %195, %194, %cst_201 {dimension_numbers = #tpu.dot_dimension_numbers<[1], [0], [0], [1], [0, 0, 1, 1], [], []>} : vector<5x10xf32>, vector<10x160xf32>, vector<5x160xf32> -> vector<5x160xf32>
    %c0_202 = arith.constant 0 : index
    %c0_203 = arith.constant 0 : index
    %197 = vector.load %arg9[%c0_202, %c0_203] : memref<160x80xf32, #tpu.memory_space<vmem>>, vector<160x80xf32>
    %cst_204 = arith.constant dense<0.000000e+00> : vector<5x80xf32>
    %198 = tpu.matmul %196, %197, %cst_204 {dimension_numbers = #tpu.dot_dimension_numbers<[1], [0], [0], [1], [0, 0, 1, 1], [], []>} : vector<5x160xf32>, vector<160x80xf32>, vector<5x80xf32> -> vector<5x80xf32>
    %199 = vector.extract_strided_slice %198 {offsets = [0, 0], sizes = [1, 80], strides = [1, 1]} : vector<5x80xf32> to vector<1x80xf32>
    %c0_205 = arith.constant 0 : index
    %c2_206 = arith.constant 2 : index
    %c0_207 = arith.constant 0 : index
    %200 = vector.load %arg19[%c0_205, %c2_206, %c0_207] : memref<5x8x80xf32, #tpu.memory_space<vmem>>, vector<1x1x80xf32>
    %201 = vector.shape_cast %200 : vector<1x1x80xf32> to vector<1x80xf32>
    %202 = vector.shape_cast %199 : vector<1x80xf32> to vector<1x1x80xf32>
    tpu.vector_store %arg19[%c0_205, %c2_206, %c0_207], %202 {strides = array<i32>} : memref<5x8x80xf32, #tpu.memory_space<vmem>>, vector<1x1x80xf32>,
    %203 = vector.extract_strided_slice %198 {offsets = [1, 0], sizes = [1, 80], strides = [1, 1]} : vector<5x80xf32> to vector<1x80xf32>
    %c1_208 = arith.constant 1 : index
    %c2_209 = arith.constant 2 : index
    %c0_210 = arith.constant 0 : index
    %204 = vector.load %arg19[%c1_208, %c2_209, %c0_210] : memref<5x8x80xf32, #tpu.memory_space<vmem>>, vector<1x1x80xf32>
    %205 = vector.shape_cast %204 : vector<1x1x80xf32> to vector<1x80xf32>
    %206 = vector.shape_cast %203 : vector<1x80xf32> to vector<1x1x80xf32>
    tpu.vector_store %arg19[%c1_208, %c2_209, %c0_210], %206 {strides = array<i32>} : memref<5x8x80xf32, #tpu.memory_space<vmem>>, vector<1x1x80xf32>,
    %207 = vector.extract_strided_slice %198 {offsets = [2, 0], sizes = [1, 80], strides = [1, 1]} : vector<5x80xf32> to vector<1x80xf32>
    %c2_211 = arith.constant 2 : index
    %c2_212 = arith.constant 2 : index
    %c0_213 = arith.constant 0 : index
    %208 = vector.load %arg19[%c2_211, %c2_212, %c0_213] : memref<5x8x80xf32, #tpu.memory_space<vmem>>, vector<1x1x80xf32>
    %209 = vector.shape_cast %208 : vector<1x1x80xf32> to vector<1x80xf32>
    %210 = vector.shape_cast %207 : vector<1x80xf32> to vector<1x1x80xf32>
    tpu.vector_store %arg19[%c2_211, %c2_212, %c0_213], %210 {strides = array<i32>} : memref<5x8x80xf32, #tpu.memory_space<vmem>>, vector<1x1x80xf32>,
    %211 = vector.extract_strided_slice %198 {offsets = [3, 0], sizes = [1, 80], strides = [1, 1]} : vector<5x80xf32> to vector<1x80xf32>
    %c3_214 = arith.constant 3 : index
    %c2_215 = arith.constant 2 : index
    %c0_216 = arith.constant 0 : index
    %212 = vector.load %arg19[%c3_214, %c2_215, %c0_216] : memref<5x8x80xf32, #tpu.memory_space<vmem>>, vector<1x1x80xf32>
    %213 = vector.shape_cast %212 : vector<1x1x80xf32> to vector<1x80xf32>
    %214 = vector.shape_cast %211 : vector<1x80xf32> to vector<1x1x80xf32>
    tpu.vector_store %arg19[%c3_214, %c2_215, %c0_216], %214 {strides = array<i32>} : memref<5x8x80xf32, #tpu.memory_space<vmem>>, vector<1x1x80xf32>,
    %215 = vector.extract_strided_slice %198 {offsets = [4, 0], sizes = [1, 80], strides = [1, 1]} : vector<5x80xf32> to vector<1x80xf32>
    %c4_217 = arith.constant 4 : index
    %c2_218 = arith.constant 2 : index
    %c0_219 = arith.constant 0 : index
    %216 = vector.load %arg19[%c4_217, %c2_218, %c0_219] : memref<5x8x80xf32, #tpu.memory_space<vmem>>, vector<1x1x80xf32>
    %217 = vector.shape_cast %216 : vector<1x1x80xf32> to vector<1x80xf32>
    %218 = vector.shape_cast %215 : vector<1x80xf32> to vector<1x1x80xf32>
    tpu.vector_store %arg19[%c4_217, %c2_218, %c0_219], %218 {strides = array<i32>} : memref<5x8x80xf32, #tpu.memory_space<vmem>>, vector<1x1x80xf32>,
    %c3_220 = arith.constant 3 : index
    %c0_221 = arith.constant 0 : index
    %c0_222 = arith.constant 0 : index
    %219 = vector.load %arg1[%c3_220, %c0_221, %c0_222] : memref<8x32x32xf32, #tpu.memory_space<vmem>>, vector<1x28x32xf32>
    %220 = vector.shape_cast %219 : vector<1x28x32xf32> to vector<28x32xf32>
    %c0_223 = arith.constant 0 : index
    %c0_224 = arith.constant 0 : index
    %221 = vector.load %arg17[%c0_223, %c0_224] : memref<28x160xf32, #tpu.memory_space<vmem>>, vector<28x32xf32>
    tpu.vector_store %arg17[%c0_223, %c0_224], %220 {strides = array<i32>} : memref<28x160xf32, #tpu.memory_space<vmem>>, vector<28x32xf32>,
    %c3_225 = arith.constant 3 : index
    %c1_226 = arith.constant 1 : index
    %c0_227 = arith.constant 0 : index
    %222 = vector.load %arg1[%c3_225, %c1_226, %c0_227] : memref<8x32x32xf32, #tpu.memory_space<vmem>>, vector<1x28x32xf32>
    %223 = vector.shape_cast %222 : vector<1x28x32xf32> to vector<28x32xf32>
    %c0_228 = arith.constant 0 : index
    %c32_229 = arith.constant 32 : index
    %224 = vector.load %arg17[%c0_228, %c32_229] : memref<28x160xf32, #tpu.memory_space<vmem>>, vector<28x32xf32>
    tpu.vector_store %arg17[%c0_228, %c32_229], %223 {strides = array<i32>} : memref<28x160xf32, #tpu.memory_space<vmem>>, vector<28x32xf32>,
    %c3_230 = arith.constant 3 : index
    %c2_231 = arith.constant 2 : index
    %c0_232 = arith.constant 0 : index
    %225 = vector.load %arg1[%c3_230, %c2_231, %c0_232] : memref<8x32x32xf32, #tpu.memory_space<vmem>>, vector<1x28x32xf32>
    %226 = vector.shape_cast %225 : vector<1x28x32xf32> to vector<28x32xf32>
    %c0_233 = arith.constant 0 : index
    %c64_234 = arith.constant 64 : index
    %227 = vector.load %arg17[%c0_233, %c64_234] : memref<28x160xf32, #tpu.memory_space<vmem>>, vector<28x32xf32>
    tpu.vector_store %arg17[%c0_233, %c64_234], %226 {strides = array<i32>} : memref<28x160xf32, #tpu.memory_space<vmem>>, vector<28x32xf32>,
    %c3_235 = arith.constant 3 : index
    %c3_236 = arith.constant 3 : index
    %c0_237 = arith.constant 0 : index
    %228 = vector.load %arg1[%c3_235, %c3_236, %c0_237] : memref<8x32x32xf32, #tpu.memory_space<vmem>>, vector<1x28x32xf32>
    %229 = vector.shape_cast %228 : vector<1x28x32xf32> to vector<28x32xf32>
    %c0_238 = arith.constant 0 : index
    %c96_239 = arith.constant 96 : index
    %230 = vector.load %arg17[%c0_238, %c96_239] : memref<28x160xf32, #tpu.memory_space<vmem>>, vector<28x32xf32>
    tpu.vector_store %arg17[%c0_238, %c96_239], %229 {strides = array<i32>} : memref<28x160xf32, #tpu.memory_space<vmem>>, vector<28x32xf32>,
    %c3_240 = arith.constant 3 : index
    %c4_241 = arith.constant 4 : index
    %c0_242 = arith.constant 0 : index
    %231 = vector.load %arg1[%c3_240, %c4_241, %c0_242] : memref<8x32x32xf32, #tpu.memory_space<vmem>>, vector<1x28x32xf32>
    %232 = vector.shape_cast %231 : vector<1x28x32xf32> to vector<28x32xf32>
    %c0_243 = arith.constant 0 : index
    %c128_244 = arith.constant 128 : index
    %233 = vector.load %arg17[%c0_243, %c128_244] : memref<28x160xf32, #tpu.memory_space<vmem>>, vector<28x32xf32>
    tpu.vector_store %arg17[%c0_243, %c128_244], %232 {strides = array<i32>} : memref<28x160xf32, #tpu.memory_space<vmem>>, vector<28x32xf32>,
    %c0_245 = arith.constant 0 : index
    %c0_246 = arith.constant 0 : index
    %234 = vector.load %arg17[%c0_245, %c0_246] : memref<28x160xf32, #tpu.memory_space<vmem>>, vector<28x160xf32>
    %c0_247 = arith.constant 0 : index
    %c0_248 = arith.constant 0 : index
    %235 = vector.load %arg2[%c0_247, %c0_248] : memref<160x168xf32, #tpu.memory_space<vmem>>, vector<160x168xf32>
    %cst_249 = arith.constant dense<0.000000e+00> : vector<28x168xf32>
    %236 = tpu.matmul %234, %235, %cst_249 {dimension_numbers = #tpu.dot_dimension_numbers<[1], [0], [0], [1], [0, 0, 1, 1], [], []>} : vector<28x160xf32>, vector<160x168xf32>, vector<28x168xf32> -> vector<28x168xf32>
    %c0_250 = arith.constant 0 : index
    %c0_251 = arith.constant 0 : index
    %237 = vector.load %arg3[%c0_250, %c0_251] : memref<28x168xf32, #tpu.memory_space<vmem>>, vector<28x168xf32>
    %238 = arith.addf %236, %237 : vector<28x168xf32>
    %239 = arith.negf %238 : vector<28x168xf32>
    %240 = math.exp %239 : vector<28x168xf32>
    %cst_252 = arith.constant 1.000000e+00 : f32
    %241 = vector.broadcast %cst_252 : f32 to vector<28x168xf32>
    %242 = arith.addf %241, %240 : vector<28x168xf32>
    %243 = arith.divf %241, %242 : vector<28x168xf32>
    %c0_253 = arith.constant 0 : index
    %c0_254 = arith.constant 0 : index
    %244 = vector.load %arg4[%c0_253, %c0_254] : memref<14x28xf32, #tpu.memory_space<vmem>>, vector<14x28xf32>
    %cst_255 = arith.constant dense<0.000000e+00> : vector<14x168xf32>
    %245 = tpu.matmul %244, %243, %cst_255 {dimension_numbers = #tpu.dot_dimension_numbers<[1], [0], [0], [1], [0, 0, 1, 1], [], []>} : vector<14x28xf32>, vector<28x168xf32>, vector<14x168xf32> -> vector<14x168xf32>
    %c0_256 = arith.constant 0 : index
    %c0_257 = arith.constant 0 : index
    %246 = vector.load %arg5[%c0_256, %c0_257] : memref<168x84xf32, #tpu.memory_space<vmem>>, vector<168x84xf32>
    %cst_258 = arith.constant dense<0.000000e+00> : vector<14x84xf32>
    %247 = tpu.matmul %245, %246, %cst_258 {dimension_numbers = #tpu.dot_dimension_numbers<[1], [0], [0], [1], [0, 0, 1, 1], [], []>} : vector<14x168xf32>, vector<168x84xf32>, vector<14x84xf32> -> vector<14x84xf32>
    %248 = vector.extract_strided_slice %247 {offsets = [0, 0], sizes = [10, 84], strides = [1, 1]} : vector<14x84xf32> to vector<10x84xf32>
    %c0_259 = arith.constant 0 : index
    %c0_260 = arith.constant 0 : index
    %249 = vector.load %arg18[%c0_259, %c0_260] : memref<10x420xf32, #tpu.memory_space<vmem>>, vector<10x84xf32>
    tpu.vector_store %arg18[%c0_259, %c0_260], %248 {strides = array<i32>} : memref<10x420xf32, #tpu.memory_space<vmem>>, vector<10x84xf32>,
    %250 = vector.extract_strided_slice %247 {offsets = [1, 0], sizes = [10, 84], strides = [1, 1]} : vector<14x84xf32> to vector<10x84xf32>
    %c0_261 = arith.constant 0 : index
    %c84_262 = arith.constant 84 : index
    %251 = vector.load %arg18[%c0_261, %c84_262] : memref<10x420xf32, #tpu.memory_space<vmem>>, vector<10x84xf32>
    tpu.vector_store %arg18[%c0_261, %c84_262], %250 {strides = array<i32>} : memref<10x420xf32, #tpu.memory_space<vmem>>, vector<10x84xf32>,
    %252 = vector.extract_strided_slice %247 {offsets = [2, 0], sizes = [10, 84], strides = [1, 1]} : vector<14x84xf32> to vector<10x84xf32>
    %c0_263 = arith.constant 0 : index
    %c168_264 = arith.constant 168 : index
    %253 = vector.load %arg18[%c0_263, %c168_264] : memref<10x420xf32, #tpu.memory_space<vmem>>, vector<10x84xf32>
    tpu.vector_store %arg18[%c0_263, %c168_264], %252 {strides = array<i32>} : memref<10x420xf32, #tpu.memory_space<vmem>>, vector<10x84xf32>,
    %254 = vector.extract_strided_slice %247 {offsets = [3, 0], sizes = [10, 84], strides = [1, 1]} : vector<14x84xf32> to vector<10x84xf32>
    %c0_265 = arith.constant 0 : index
    %c252_266 = arith.constant 252 : index
    %255 = vector.load %arg18[%c0_265, %c252_266] : memref<10x420xf32, #tpu.memory_space<vmem>>, vector<10x84xf32>
    tpu.vector_store %arg18[%c0_265, %c252_266], %254 {strides = array<i32>} : memref<10x420xf32, #tpu.memory_space<vmem>>, vector<10x84xf32>,
    %256 = vector.extract_strided_slice %247 {offsets = [4, 0], sizes = [10, 84], strides = [1, 1]} : vector<14x84xf32> to vector<10x84xf32>
    %c0_267 = arith.constant 0 : index
    %c336_268 = arith.constant 336 : index
    %257 = vector.load %arg18[%c0_267, %c336_268] : memref<10x420xf32, #tpu.memory_space<vmem>>, vector<10x84xf32>
    tpu.vector_store %arg18[%c0_267, %c336_268], %256 {strides = array<i32>} : memref<10x420xf32, #tpu.memory_space<vmem>>, vector<10x84xf32>,
    %c0_269 = arith.constant 0 : index
    %c0_270 = arith.constant 0 : index
    %258 = vector.load %arg18[%c0_269, %c0_270] : memref<10x420xf32, #tpu.memory_space<vmem>>, vector<10x420xf32>
    %c0_271 = arith.constant 0 : index
    %c0_272 = arith.constant 0 : index
    %259 = vector.load %arg6[%c0_271, %c0_272] : memref<420x160xf32, #tpu.memory_space<vmem>>, vector<420x160xf32>
    %cst_273 = arith.constant dense<0.000000e+00> : vector<10x160xf32>
    %260 = tpu.matmul %258, %259, %cst_273 {dimension_numbers = #tpu.dot_dimension_numbers<[1], [0], [0], [1], [0, 0, 1, 1], [], []>} : vector<10x420xf32>, vector<420x160xf32>, vector<10x160xf32> -> vector<10x160xf32>
    %c0_274 = arith.constant 0 : index
    %c0_275 = arith.constant 0 : index
    %261 = vector.load %arg7[%c0_274, %c0_275] : memref<10x160xf32, #tpu.memory_space<vmem>>, vector<10x160xf32>
    %262 = arith.addf %260, %261 : vector<10x160xf32>
    %263 = arith.negf %262 : vector<10x160xf32>
    %264 = math.exp %263 : vector<10x160xf32>
    %cst_276 = arith.constant 1.000000e+00 : f32
    %265 = vector.broadcast %cst_276 : f32 to vector<10x160xf32>
    %266 = arith.addf %265, %264 : vector<10x160xf32>
    %267 = arith.divf %265, %266 : vector<10x160xf32>
    %c0_277 = arith.constant 0 : index
    %c0_278 = arith.constant 0 : index
    %268 = vector.load %arg8[%c0_277, %c0_278] : memref<5x10xf32, #tpu.memory_space<vmem>>, vector<5x10xf32>
    %cst_279 = arith.constant dense<0.000000e+00> : vector<5x160xf32>
    %269 = tpu.matmul %268, %267, %cst_279 {dimension_numbers = #tpu.dot_dimension_numbers<[1], [0], [0], [1], [0, 0, 1, 1], [], []>} : vector<5x10xf32>, vector<10x160xf32>, vector<5x160xf32> -> vector<5x160xf32>
    %c0_280 = arith.constant 0 : index
    %c0_281 = arith.constant 0 : index
    %270 = vector.load %arg9[%c0_280, %c0_281] : memref<160x80xf32, #tpu.memory_space<vmem>>, vector<160x80xf32>
    %cst_282 = arith.constant dense<0.000000e+00> : vector<5x80xf32>
    %271 = tpu.matmul %269, %270, %cst_282 {dimension_numbers = #tpu.dot_dimension_numbers<[1], [0], [0], [1], [0, 0, 1, 1], [], []>} : vector<5x160xf32>, vector<160x80xf32>, vector<5x80xf32> -> vector<5x80xf32>
    %272 = vector.extract_strided_slice %271 {offsets = [0, 0], sizes = [1, 80], strides = [1, 1]} : vector<5x80xf32> to vector<1x80xf32>
    %c0_283 = arith.constant 0 : index
    %c3_284 = arith.constant 3 : index
    %c0_285 = arith.constant 0 : index
    %273 = vector.load %arg19[%c0_283, %c3_284, %c0_285] : memref<5x8x80xf32, #tpu.memory_space<vmem>>, vector<1x1x80xf32>
    %274 = vector.shape_cast %273 : vector<1x1x80xf32> to vector<1x80xf32>
    %275 = vector.shape_cast %272 : vector<1x80xf32> to vector<1x1x80xf32>
    tpu.vector_store %arg19[%c0_283, %c3_284, %c0_285], %275 {strides = array<i32>} : memref<5x8x80xf32, #tpu.memory_space<vmem>>, vector<1x1x80xf32>,
    %276 = vector.extract_strided_slice %271 {offsets = [1, 0], sizes = [1, 80], strides = [1, 1]} : vector<5x80xf32> to vector<1x80xf32>
    %c1_286 = arith.constant 1 : index
    %c3_287 = arith.constant 3 : index
    %c0_288 = arith.constant 0 : index
    %277 = vector.load %arg19[%c1_286, %c3_287, %c0_288] : memref<5x8x80xf32, #tpu.memory_space<vmem>>, vector<1x1x80xf32>
    %278 = vector.shape_cast %277 : vector<1x1x80xf32> to vector<1x80xf32>
    %279 = vector.shape_cast %276 : vector<1x80xf32> to vector<1x1x80xf32>
    tpu.vector_store %arg19[%c1_286, %c3_287, %c0_288], %279 {strides = array<i32>} : memref<5x8x80xf32, #tpu.memory_space<vmem>>, vector<1x1x80xf32>,
    %280 = vector.extract_strided_slice %271 {offsets = [2, 0], sizes = [1, 80], strides = [1, 1]} : vector<5x80xf32> to vector<1x80xf32>
    %c2_289 = arith.constant 2 : index
    %c3_290 = arith.constant 3 : index
    %c0_291 = arith.constant 0 : index
    %281 = vector.load %arg19[%c2_289, %c3_290, %c0_291] : memref<5x8x80xf32, #tpu.memory_space<vmem>>, vector<1x1x80xf32>
    %282 = vector.shape_cast %281 : vector<1x1x80xf32> to vector<1x80xf32>
    %283 = vector.shape_cast %280 : vector<1x80xf32> to vector<1x1x80xf32>
    tpu.vector_store %arg19[%c2_289, %c3_290, %c0_291], %283 {strides = array<i32>} : memref<5x8x80xf32, #tpu.memory_space<vmem>>, vector<1x1x80xf32>,
    %284 = vector.extract_strided_slice %271 {offsets = [3, 0], sizes = [1, 80], strides = [1, 1]} : vector<5x80xf32> to vector<1x80xf32>
    %c3_292 = arith.constant 3 : index
    %c3_293 = arith.constant 3 : index
    %c0_294 = arith.constant 0 : index
    %285 = vector.load %arg19[%c3_292, %c3_293, %c0_294] : memref<5x8x80xf32, #tpu.memory_space<vmem>>, vector<1x1x80xf32>
    %286 = vector.shape_cast %285 : vector<1x1x80xf32> to vector<1x80xf32>
    %287 = vector.shape_cast %284 : vector<1x80xf32> to vector<1x1x80xf32>
    tpu.vector_store %arg19[%c3_292, %c3_293, %c0_294], %287 {strides = array<i32>} : memref<5x8x80xf32, #tpu.memory_space<vmem>>, vector<1x1x80xf32>,
    %288 = vector.extract_strided_slice %271 {offsets = [4, 0], sizes = [1, 80], strides = [1, 1]} : vector<5x80xf32> to vector<1x80xf32>
    %c4_295 = arith.constant 4 : index
    %c3_296 = arith.constant 3 : index
    %c0_297 = arith.constant 0 : index
    %289 = vector.load %arg19[%c4_295, %c3_296, %c0_297] : memref<5x8x80xf32, #tpu.memory_space<vmem>>, vector<1x1x80xf32>
    %290 = vector.shape_cast %289 : vector<1x1x80xf32> to vector<1x80xf32>
    %291 = vector.shape_cast %288 : vector<1x80xf32> to vector<1x1x80xf32>
    tpu.vector_store %arg19[%c4_295, %c3_296, %c0_297], %291 {strides = array<i32>} : memref<5x8x80xf32, #tpu.memory_space<vmem>>, vector<1x1x80xf32>,
    %c4_298 = arith.constant 4 : index
    %c0_299 = arith.constant 0 : index
    %c0_300 = arith.constant 0 : index
    %292 = vector.load %arg1[%c4_298, %c0_299, %c0_300] : memref<8x32x32xf32, #tpu.memory_space<vmem>>, vector<1x28x32xf32>
    %293 = vector.shape_cast %292 : vector<1x28x32xf32> to vector<28x32xf32>
    %c0_301 = arith.constant 0 : index
    %c0_302 = arith.constant 0 : index
    %294 = vector.load %arg17[%c0_301, %c0_302] : memref<28x160xf32, #tpu.memory_space<vmem>>, vector<28x32xf32>
    tpu.vector_store %arg17[%c0_301, %c0_302], %293 {strides = array<i32>} : memref<28x160xf32, #tpu.memory_space<vmem>>, vector<28x32xf32>,
    %c4_303 = arith.constant 4 : index
    %c1_304 = arith.constant 1 : index
    %c0_305 = arith.constant 0 : index
    %295 = vector.load %arg1[%c4_303, %c1_304, %c0_305] : memref<8x32x32xf32, #tpu.memory_space<vmem>>, vector<1x28x32xf32>
    %296 = vector.shape_cast %295 : vector<1x28x32xf32> to vector<28x32xf32>
    %c0_306 = arith.constant 0 : index
    %c32_307 = arith.constant 32 : index
    %297 = vector.load %arg17[%c0_306, %c32_307] : memref<28x160xf32, #tpu.memory_space<vmem>>, vector<28x32xf32>
    tpu.vector_store %arg17[%c0_306, %c32_307], %296 {strides = array<i32>} : memref<28x160xf32, #tpu.memory_space<vmem>>, vector<28x32xf32>,
    %c4_308 = arith.constant 4 : index
    %c2_309 = arith.constant 2 : index
    %c0_310 = arith.constant 0 : index
    %298 = vector.load %arg1[%c4_308, %c2_309, %c0_310] : memref<8x32x32xf32, #tpu.memory_space<vmem>>, vector<1x28x32xf32>
    %299 = vector.shape_cast %298 : vector<1x28x32xf32> to vector<28x32xf32>
    %c0_311 = arith.constant 0 : index
    %c64_312 = arith.constant 64 : index
    %300 = vector.load %arg17[%c0_311, %c64_312] : memref<28x160xf32, #tpu.memory_space<vmem>>, vector<28x32xf32>
    tpu.vector_store %arg17[%c0_311, %c64_312], %299 {strides = array<i32>} : memref<28x160xf32, #tpu.memory_space<vmem>>, vector<28x32xf32>,
    %c4_313 = arith.constant 4 : index
    %c3_314 = arith.constant 3 : index
    %c0_315 = arith.constant 0 : index
    %301 = vector.load %arg1[%c4_313, %c3_314, %c0_315] : memref<8x32x32xf32, #tpu.memory_space<vmem>>, vector<1x28x32xf32>
    %302 = vector.shape_cast %301 : vector<1x28x32xf32> to vector<28x32xf32>
    %c0_316 = arith.constant 0 : index
    %c96_317 = arith.constant 96 : index
    %303 = vector.load %arg17[%c0_316, %c96_317] : memref<28x160xf32, #tpu.memory_space<vmem>>, vector<28x32xf32>
    tpu.vector_store %arg17[%c0_316, %c96_317], %302 {strides = array<i32>} : memref<28x160xf32, #tpu.memory_space<vmem>>, vector<28x32xf32>,
    %c4_318 = arith.constant 4 : index
    %c4_319 = arith.constant 4 : index
    %c0_320 = arith.constant 0 : index
    %304 = vector.load %arg1[%c4_318, %c4_319, %c0_320] : memref<8x32x32xf32, #tpu.memory_space<vmem>>, vector<1x28x32xf32>
    %305 = vector.shape_cast %304 : vector<1x28x32xf32> to vector<28x32xf32>
    %c0_321 = arith.constant 0 : index
    %c128_322 = arith.constant 128 : index
    %306 = vector.load %arg17[%c0_321, %c128_322] : memref<28x160xf32, #tpu.memory_space<vmem>>, vector<28x32xf32>
    tpu.vector_store %arg17[%c0_321, %c128_322], %305 {strides = array<i32>} : memref<28x160xf32, #tpu.memory_space<vmem>>, vector<28x32xf32>,
    %c0_323 = arith.constant 0 : index
    %c0_324 = arith.constant 0 : index
    %307 = vector.load %arg17[%c0_323, %c0_324] : memref<28x160xf32, #tpu.memory_space<vmem>>, vector<28x160xf32>
    %c0_325 = arith.constant 0 : index
    %c0_326 = arith.constant 0 : index
    %308 = vector.load %arg2[%c0_325, %c0_326] : memref<160x168xf32, #tpu.memory_space<vmem>>, vector<160x168xf32>
    %cst_327 = arith.constant dense<0.000000e+00> : vector<28x168xf32>
    %309 = tpu.matmul %307, %308, %cst_327 {dimension_numbers = #tpu.dot_dimension_numbers<[1], [0], [0], [1], [0, 0, 1, 1], [], []>} : vector<28x160xf32>, vector<160x168xf32>, vector<28x168xf32> -> vector<28x168xf32>
    %c0_328 = arith.constant 0 : index
    %c0_329 = arith.constant 0 : index
    %310 = vector.load %arg3[%c0_328, %c0_329] : memref<28x168xf32, #tpu.memory_space<vmem>>, vector<28x168xf32>
    %311 = arith.addf %309, %310 : vector<28x168xf32>
    %312 = arith.negf %311 : vector<28x168xf32>
    %313 = math.exp %312 : vector<28x168xf32>
    %cst_330 = arith.constant 1.000000e+00 : f32
    %314 = vector.broadcast %cst_330 : f32 to vector<28x168xf32>
    %315 = arith.addf %314, %313 : vector<28x168xf32>
    %316 = arith.divf %314, %315 : vector<28x168xf32>
    %c0_331 = arith.constant 0 : index
    %c0_332 = arith.constant 0 : index
    %317 = vector.load %arg4[%c0_331, %c0_332] : memref<14x28xf32, #tpu.memory_space<vmem>>, vector<14x28xf32>
    %cst_333 = arith.constant dense<0.000000e+00> : vector<14x168xf32>
    %318 = tpu.matmul %317, %316, %cst_333 {dimension_numbers = #tpu.dot_dimension_numbers<[1], [0], [0], [1], [0, 0, 1, 1], [], []>} : vector<14x28xf32>, vector<28x168xf32>, vector<14x168xf32> -> vector<14x168xf32>
    %c0_334 = arith.constant 0 : index
    %c0_335 = arith.constant 0 : index
    %319 = vector.load %arg5[%c0_334, %c0_335] : memref<168x84xf32, #tpu.memory_space<vmem>>, vector<168x84xf32>
    %cst_336 = arith.constant dense<0.000000e+00> : vector<14x84xf32>
    %320 = tpu.matmul %318, %319, %cst_336 {dimension_numbers = #tpu.dot_dimension_numbers<[1], [0], [0], [1], [0, 0, 1, 1], [], []>} : vector<14x168xf32>, vector<168x84xf32>, vector<14x84xf32> -> vector<14x84xf32>
    %321 = vector.extract_strided_slice %320 {offsets = [0, 0], sizes = [10, 84], strides = [1, 1]} : vector<14x84xf32> to vector<10x84xf32>
    %c0_337 = arith.constant 0 : index
    %c0_338 = arith.constant 0 : index
    %322 = vector.load %arg18[%c0_337, %c0_338] : memref<10x420xf32, #tpu.memory_space<vmem>>, vector<10x84xf32>
    tpu.vector_store %arg18[%c0_337, %c0_338], %321 {strides = array<i32>} : memref<10x420xf32, #tpu.memory_space<vmem>>, vector<10x84xf32>,
    %323 = vector.extract_strided_slice %320 {offsets = [1, 0], sizes = [10, 84], strides = [1, 1]} : vector<14x84xf32> to vector<10x84xf32>
    %c0_339 = arith.constant 0 : index
    %c84_340 = arith.constant 84 : index
    %324 = vector.load %arg18[%c0_339, %c84_340] : memref<10x420xf32, #tpu.memory_space<vmem>>, vector<10x84xf32>
    tpu.vector_store %arg18[%c0_339, %c84_340], %323 {strides = array<i32>} : memref<10x420xf32, #tpu.memory_space<vmem>>, vector<10x84xf32>,
    %325 = vector.extract_strided_slice %320 {offsets = [2, 0], sizes = [10, 84], strides = [1, 1]} : vector<14x84xf32> to vector<10x84xf32>
    %c0_341 = arith.constant 0 : index
    %c168_342 = arith.constant 168 : index
    %326 = vector.load %arg18[%c0_341, %c168_342] : memref<10x420xf32, #tpu.memory_space<vmem>>, vector<10x84xf32>
    tpu.vector_store %arg18[%c0_341, %c168_342], %325 {strides = array<i32>} : memref<10x420xf32, #tpu.memory_space<vmem>>, vector<10x84xf32>,
    %327 = vector.extract_strided_slice %320 {offsets = [3, 0], sizes = [10, 84], strides = [1, 1]} : vector<14x84xf32> to vector<10x84xf32>
    %c0_343 = arith.constant 0 : index
    %c252_344 = arith.constant 252 : index
    %328 = vector.load %arg18[%c0_343, %c252_344] : memref<10x420xf32, #tpu.memory_space<vmem>>, vector<10x84xf32>
    tpu.vector_store %arg18[%c0_343, %c252_344], %327 {strides = array<i32>} : memref<10x420xf32, #tpu.memory_space<vmem>>, vector<10x84xf32>,
    %329 = vector.extract_strided_slice %320 {offsets = [4, 0], sizes = [10, 84], strides = [1, 1]} : vector<14x84xf32> to vector<10x84xf32>
    %c0_345 = arith.constant 0 : index
    %c336_346 = arith.constant 336 : index
    %330 = vector.load %arg18[%c0_345, %c336_346] : memref<10x420xf32, #tpu.memory_space<vmem>>, vector<10x84xf32>
    tpu.vector_store %arg18[%c0_345, %c336_346], %329 {strides = array<i32>} : memref<10x420xf32, #tpu.memory_space<vmem>>, vector<10x84xf32>,
    %c0_347 = arith.constant 0 : index
    %c0_348 = arith.constant 0 : index
    %331 = vector.load %arg18[%c0_347, %c0_348] : memref<10x420xf32, #tpu.memory_space<vmem>>, vector<10x420xf32>
    %c0_349 = arith.constant 0 : index
    %c0_350 = arith.constant 0 : index
    %332 = vector.load %arg6[%c0_349, %c0_350] : memref<420x160xf32, #tpu.memory_space<vmem>>, vector<420x160xf32>
    %cst_351 = arith.constant dense<0.000000e+00> : vector<10x160xf32>
    %333 = tpu.matmul %331, %332, %cst_351 {dimension_numbers = #tpu.dot_dimension_numbers<[1], [0], [0], [1], [0, 0, 1, 1], [], []>} : vector<10x420xf32>, vector<420x160xf32>, vector<10x160xf32> -> vector<10x160xf32>
    %c0_352 = arith.constant 0 : index
    %c0_353 = arith.constant 0 : index
    %334 = vector.load %arg7[%c0_352, %c0_353] : memref<10x160xf32, #tpu.memory_space<vmem>>, vector<10x160xf32>
    %335 = arith.addf %333, %334 : vector<10x160xf32>
    %336 = arith.negf %335 : vector<10x160xf32>
    %337 = math.exp %336 : vector<10x160xf32>
    %cst_354 = arith.constant 1.000000e+00 : f32
    %338 = vector.broadcast %cst_354 : f32 to vector<10x160xf32>
    %339 = arith.addf %338, %337 : vector<10x160xf32>
    %340 = arith.divf %338, %339 : vector<10x160xf32>
    %c0_355 = arith.constant 0 : index
    %c0_356 = arith.constant 0 : index
    %341 = vector.load %arg8[%c0_355, %c0_356] : memref<5x10xf32, #tpu.memory_space<vmem>>, vector<5x10xf32>
    %cst_357 = arith.constant dense<0.000000e+00> : vector<5x160xf32>
    %342 = tpu.matmul %341, %340, %cst_357 {dimension_numbers = #tpu.dot_dimension_numbers<[1], [0], [0], [1], [0, 0, 1, 1], [], []>} : vector<5x10xf32>, vector<10x160xf32>, vector<5x160xf32> -> vector<5x160xf32>
    %c0_358 = arith.constant 0 : index
    %c0_359 = arith.constant 0 : index
    %343 = vector.load %arg9[%c0_358, %c0_359] : memref<160x80xf32, #tpu.memory_space<vmem>>, vector<160x80xf32>
    %cst_360 = arith.constant dense<0.000000e+00> : vector<5x80xf32>
    %344 = tpu.matmul %342, %343, %cst_360 {dimension_numbers = #tpu.dot_dimension_numbers<[1], [0], [0], [1], [0, 0, 1, 1], [], []>} : vector<5x160xf32>, vector<160x80xf32>, vector<5x80xf32> -> vector<5x80xf32>
    %345 = vector.extract_strided_slice %344 {offsets = [0, 0], sizes = [1, 80], strides = [1, 1]} : vector<5x80xf32> to vector<1x80xf32>
    %c0_361 = arith.constant 0 : index
    %c4_362 = arith.constant 4 : index
    %c0_363 = arith.constant 0 : index
    %346 = vector.load %arg19[%c0_361, %c4_362, %c0_363] : memref<5x8x80xf32, #tpu.memory_space<vmem>>, vector<1x1x80xf32>
    %347 = vector.shape_cast %346 : vector<1x1x80xf32> to vector<1x80xf32>
    %348 = vector.shape_cast %345 : vector<1x80xf32> to vector<1x1x80xf32>
    tpu.vector_store %arg19[%c0_361, %c4_362, %c0_363], %348 {strides = array<i32>} : memref<5x8x80xf32, #tpu.memory_space<vmem>>, vector<1x1x80xf32>,
    %349 = vector.extract_strided_slice %344 {offsets = [1, 0], sizes = [1, 80], strides = [1, 1]} : vector<5x80xf32> to vector<1x80xf32>
    %c1_364 = arith.constant 1 : index
    %c4_365 = arith.constant 4 : index
    %c0_366 = arith.constant 0 : index
    %350 = vector.load %arg19[%c1_364, %c4_365, %c0_366] : memref<5x8x80xf32, #tpu.memory_space<vmem>>, vector<1x1x80xf32>
    %351 = vector.shape_cast %350 : vector<1x1x80xf32> to vector<1x80xf32>
    %352 = vector.shape_cast %349 : vector<1x80xf32> to vector<1x1x80xf32>
    tpu.vector_store %arg19[%c1_364, %c4_365, %c0_366], %352 {strides = array<i32>} : memref<5x8x80xf32, #tpu.memory_space<vmem>>, vector<1x1x80xf32>,
    %353 = vector.extract_strided_slice %344 {offsets = [2, 0], sizes = [1, 80], strides = [1, 1]} : vector<5x80xf32> to vector<1x80xf32>
    %c2_367 = arith.constant 2 : index
    %c4_368 = arith.constant 4 : index
    %c0_369 = arith.constant 0 : index
    %354 = vector.load %arg19[%c2_367, %c4_368, %c0_369] : memref<5x8x80xf32, #tpu.memory_space<vmem>>, vector<1x1x80xf32>
    %355 = vector.shape_cast %354 : vector<1x1x80xf32> to vector<1x80xf32>
    %356 = vector.shape_cast %353 : vector<1x80xf32> to vector<1x1x80xf32>
    tpu.vector_store %arg19[%c2_367, %c4_368, %c0_369], %356 {strides = array<i32>} : memref<5x8x80xf32, #tpu.memory_space<vmem>>, vector<1x1x80xf32>,
    %357 = vector.extract_strided_slice %344 {offsets = [3, 0], sizes = [1, 80], strides = [1, 1]} : vector<5x80xf32> to vector<1x80xf32>
    %c3_370 = arith.constant 3 : index
    %c4_371 = arith.constant 4 : index
    %c0_372 = arith.constant 0 : index
    %358 = vector.load %arg19[%c3_370, %c4_371, %c0_372] : memref<5x8x80xf32, #tpu.memory_space<vmem>>, vector<1x1x80xf32>
    %359 = vector.shape_cast %358 : vector<1x1x80xf32> to vector<1x80xf32>
    %360 = vector.shape_cast %357 : vector<1x80xf32> to vector<1x1x80xf32>
    tpu.vector_store %arg19[%c3_370, %c4_371, %c0_372], %360 {strides = array<i32>} : memref<5x8x80xf32, #tpu.memory_space<vmem>>, vector<1x1x80xf32>,
    %361 = vector.extract_strided_slice %344 {offsets = [4, 0], sizes = [1, 80], strides = [1, 1]} : vector<5x80xf32> to vector<1x80xf32>
    %c4_373 = arith.constant 4 : index
    %c4_374 = arith.constant 4 : index
    %c0_375 = arith.constant 0 : index
    %362 = vector.load %arg19[%c4_373, %c4_374, %c0_375] : memref<5x8x80xf32, #tpu.memory_space<vmem>>, vector<1x1x80xf32>
    %363 = vector.shape_cast %362 : vector<1x1x80xf32> to vector<1x80xf32>
    %364 = vector.shape_cast %361 : vector<1x80xf32> to vector<1x1x80xf32>
    tpu.vector_store %arg19[%c4_373, %c4_374, %c0_375], %364 {strides = array<i32>} : memref<5x8x80xf32, #tpu.memory_space<vmem>>, vector<1x1x80xf32>,
    %c5 = arith.constant 5 : index
    %c0_376 = arith.constant 0 : index
    %c0_377 = arith.constant 0 : index
    %365 = vector.load %arg1[%c5, %c0_376, %c0_377] : memref<8x32x32xf32, #tpu.memory_space<vmem>>, vector<1x28x32xf32>
    %366 = vector.shape_cast %365 : vector<1x28x32xf32> to vector<28x32xf32>
    %c0_378 = arith.constant 0 : index
    %c0_379 = arith.constant 0 : index
    %367 = vector.load %arg17[%c0_378, %c0_379] : memref<28x160xf32, #tpu.memory_space<vmem>>, vector<28x32xf32>
    tpu.vector_store %arg17[%c0_378, %c0_379], %366 {strides = array<i32>} : memref<28x160xf32, #tpu.memory_space<vmem>>, vector<28x32xf32>,
    %c5_380 = arith.constant 5 : index
    %c1_381 = arith.constant 1 : index
    %c0_382 = arith.constant 0 : index
    %368 = vector.load %arg1[%c5_380, %c1_381, %c0_382] : memref<8x32x32xf32, #tpu.memory_space<vmem>>, vector<1x28x32xf32>
    %369 = vector.shape_cast %368 : vector<1x28x32xf32> to vector<28x32xf32>
    %c0_383 = arith.constant 0 : index
    %c32_384 = arith.constant 32 : index
    %370 = vector.load %arg17[%c0_383, %c32_384] : memref<28x160xf32, #tpu.memory_space<vmem>>, vector<28x32xf32>
    tpu.vector_store %arg17[%c0_383, %c32_384], %369 {strides = array<i32>} : memref<28x160xf32, #tpu.memory_space<vmem>>, vector<28x32xf32>,
    %c5_385 = arith.constant 5 : index
    %c2_386 = arith.constant 2 : index
    %c0_387 = arith.constant 0 : index
    %371 = vector.load %arg1[%c5_385, %c2_386, %c0_387] : memref<8x32x32xf32, #tpu.memory_space<vmem>>, vector<1x28x32xf32>
    %372 = vector.shape_cast %371 : vector<1x28x32xf32> to vector<28x32xf32>
    %c0_388 = arith.constant 0 : index
    %c64_389 = arith.constant 64 : index
    %373 = vector.load %arg17[%c0_388, %c64_389] : memref<28x160xf32, #tpu.memory_space<vmem>>, vector<28x32xf32>
    tpu.vector_store %arg17[%c0_388, %c64_389], %372 {strides = array<i32>} : memref<28x160xf32, #tpu.memory_space<vmem>>, vector<28x32xf32>,
    %c5_390 = arith.constant 5 : index
    %c3_391 = arith.constant 3 : index
    %c0_392 = arith.constant 0 : index
    %374 = vector.load %arg1[%c5_390, %c3_391, %c0_392] : memref<8x32x32xf32, #tpu.memory_space<vmem>>, vector<1x28x32xf32>
    %375 = vector.shape_cast %374 : vector<1x28x32xf32> to vector<28x32xf32>
    %c0_393 = arith.constant 0 : index
    %c96_394 = arith.constant 96 : index
    %376 = vector.load %arg17[%c0_393, %c96_394] : memref<28x160xf32, #tpu.memory_space<vmem>>, vector<28x32xf32>
    tpu.vector_store %arg17[%c0_393, %c96_394], %375 {strides = array<i32>} : memref<28x160xf32, #tpu.memory_space<vmem>>, vector<28x32xf32>,
    %c5_395 = arith.constant 5 : index
    %c4_396 = arith.constant 4 : index
    %c0_397 = arith.constant 0 : index
    %377 = vector.load %arg1[%c5_395, %c4_396, %c0_397] : memref<8x32x32xf32, #tpu.memory_space<vmem>>, vector<1x28x32xf32>
    %378 = vector.shape_cast %377 : vector<1x28x32xf32> to vector<28x32xf32>
    %c0_398 = arith.constant 0 : index
    %c128_399 = arith.constant 128 : index
    %379 = vector.load %arg17[%c0_398, %c128_399] : memref<28x160xf32, #tpu.memory_space<vmem>>, vector<28x32xf32>
    tpu.vector_store %arg17[%c0_398, %c128_399], %378 {strides = array<i32>} : memref<28x160xf32, #tpu.memory_space<vmem>>, vector<28x32xf32>,
    %c0_400 = arith.constant 0 : index
    %c0_401 = arith.constant 0 : index
    %380 = vector.load %arg17[%c0_400, %c0_401] : memref<28x160xf32, #tpu.memory_space<vmem>>, vector<28x160xf32>
    %c0_402 = arith.constant 0 : index
    %c0_403 = arith.constant 0 : index
    %381 = vector.load %arg2[%c0_402, %c0_403] : memref<160x168xf32, #tpu.memory_space<vmem>>, vector<160x168xf32>
    %cst_404 = arith.constant dense<0.000000e+00> : vector<28x168xf32>
    %382 = tpu.matmul %380, %381, %cst_404 {dimension_numbers = #tpu.dot_dimension_numbers<[1], [0], [0], [1], [0, 0, 1, 1], [], []>} : vector<28x160xf32>, vector<160x168xf32>, vector<28x168xf32> -> vector<28x168xf32>
    %c0_405 = arith.constant 0 : index
    %c0_406 = arith.constant 0 : index
    %383 = vector.load %arg3[%c0_405, %c0_406] : memref<28x168xf32, #tpu.memory_space<vmem>>, vector<28x168xf32>
    %384 = arith.addf %382, %383 : vector<28x168xf32>
    %385 = arith.negf %384 : vector<28x168xf32>
    %386 = math.exp %385 : vector<28x168xf32>
    %cst_407 = arith.constant 1.000000e+00 : f32
    %387 = vector.broadcast %cst_407 : f32 to vector<28x168xf32>
    %388 = arith.addf %387, %386 : vector<28x168xf32>
    %389 = arith.divf %387, %388 : vector<28x168xf32>
    %c0_408 = arith.constant 0 : index
    %c0_409 = arith.constant 0 : index
    %390 = vector.load %arg4[%c0_408, %c0_409] : memref<14x28xf32, #tpu.memory_space<vmem>>, vector<14x28xf32>
    %cst_410 = arith.constant dense<0.000000e+00> : vector<14x168xf32>
    %391 = tpu.matmul %390, %389, %cst_410 {dimension_numbers = #tpu.dot_dimension_numbers<[1], [0], [0], [1], [0, 0, 1, 1], [], []>} : vector<14x28xf32>, vector<28x168xf32>, vector<14x168xf32> -> vector<14x168xf32>
    %c0_411 = arith.constant 0 : index
    %c0_412 = arith.constant 0 : index
    %392 = vector.load %arg5[%c0_411, %c0_412] : memref<168x84xf32, #tpu.memory_space<vmem>>, vector<168x84xf32>
    %cst_413 = arith.constant dense<0.000000e+00> : vector<14x84xf32>
    %393 = tpu.matmul %391, %392, %cst_413 {dimension_numbers = #tpu.dot_dimension_numbers<[1], [0], [0], [1], [0, 0, 1, 1], [], []>} : vector<14x168xf32>, vector<168x84xf32>, vector<14x84xf32> -> vector<14x84xf32>
    %394 = vector.extract_strided_slice %393 {offsets = [0, 0], sizes = [10, 84], strides = [1, 1]} : vector<14x84xf32> to vector<10x84xf32>
    %c0_414 = arith.constant 0 : index
    %c0_415 = arith.constant 0 : index
    %395 = vector.load %arg18[%c0_414, %c0_415] : memref<10x420xf32, #tpu.memory_space<vmem>>, vector<10x84xf32>
    tpu.vector_store %arg18[%c0_414, %c0_415], %394 {strides = array<i32>} : memref<10x420xf32, #tpu.memory_space<vmem>>, vector<10x84xf32>,
    %396 = vector.extract_strided_slice %393 {offsets = [1, 0], sizes = [10, 84], strides = [1, 1]} : vector<14x84xf32> to vector<10x84xf32>
    %c0_416 = arith.constant 0 : index
    %c84_417 = arith.constant 84 : index
    %397 = vector.load %arg18[%c0_416, %c84_417] : memref<10x420xf32, #tpu.memory_space<vmem>>, vector<10x84xf32>
    tpu.vector_store %arg18[%c0_416, %c84_417], %396 {strides = array<i32>} : memref<10x420xf32, #tpu.memory_space<vmem>>, vector<10x84xf32>,
    %398 = vector.extract_strided_slice %393 {offsets = [2, 0], sizes = [10, 84], strides = [1, 1]} : vector<14x84xf32> to vector<10x84xf32>
    %c0_418 = arith.constant 0 : index
    %c168_419 = arith.constant 168 : index
    %399 = vector.load %arg18[%c0_418, %c168_419] : memref<10x420xf32, #tpu.memory_space<vmem>>, vector<10x84xf32>
    tpu.vector_store %arg18[%c0_418, %c168_419], %398 {strides = array<i32>} : memref<10x420xf32, #tpu.memory_space<vmem>>, vector<10x84xf32>,
    %400 = vector.extract_strided_slice %393 {offsets = [3, 0], sizes = [10, 84], strides = [1, 1]} : vector<14x84xf32> to vector<10x84xf32>
    %c0_420 = arith.constant 0 : index
    %c252_421 = arith.constant 252 : index
    %401 = vector.load %arg18[%c0_420, %c252_421] : memref<10x420xf32, #tpu.memory_space<vmem>>, vector<10x84xf32>
    tpu.vector_store %arg18[%c0_420, %c252_421], %400 {strides = array<i32>} : memref<10x420xf32, #tpu.memory_space<vmem>>, vector<10x84xf32>,
    %402 = vector.extract_strided_slice %393 {offsets = [4, 0], sizes = [10, 84], strides = [1, 1]} : vector<14x84xf32> to vector<10x84xf32>
    %c0_422 = arith.constant 0 : index
    %c336_423 = arith.constant 336 : index
    %403 = vector.load %arg18[%c0_422, %c336_423] : memref<10x420xf32, #tpu.memory_space<vmem>>, vector<10x84xf32>
    tpu.vector_store %arg18[%c0_422, %c336_423], %402 {strides = array<i32>} : memref<10x420xf32, #tpu.memory_space<vmem>>, vector<10x84xf32>,
    %c0_424 = arith.constant 0 : index
    %c0_425 = arith.constant 0 : index
    %404 = vector.load %arg18[%c0_424, %c0_425] : memref<10x420xf32, #tpu.memory_space<vmem>>, vector<10x420xf32>
    %c0_426 = arith.constant 0 : index
    %c0_427 = arith.constant 0 : index
    %405 = vector.load %arg6[%c0_426, %c0_427] : memref<420x160xf32, #tpu.memory_space<vmem>>, vector<420x160xf32>
    %cst_428 = arith.constant dense<0.000000e+00> : vector<10x160xf32>
    %406 = tpu.matmul %404, %405, %cst_428 {dimension_numbers = #tpu.dot_dimension_numbers<[1], [0], [0], [1], [0, 0, 1, 1], [], []>} : vector<10x420xf32>, vector<420x160xf32>, vector<10x160xf32> -> vector<10x160xf32>
    %c0_429 = arith.constant 0 : index
    %c0_430 = arith.constant 0 : index
    %407 = vector.load %arg7[%c0_429, %c0_430] : memref<10x160xf32, #tpu.memory_space<vmem>>, vector<10x160xf32>
    %408 = arith.addf %406, %407 : vector<10x160xf32>
    %409 = arith.negf %408 : vector<10x160xf32>
    %410 = math.exp %409 : vector<10x160xf32>
    %cst_431 = arith.constant 1.000000e+00 : f32
    %411 = vector.broadcast %cst_431 : f32 to vector<10x160xf32>
    %412 = arith.addf %411, %410 : vector<10x160xf32>
    %413 = arith.divf %411, %412 : vector<10x160xf32>
    %c0_432 = arith.constant 0 : index
    %c0_433 = arith.constant 0 : index
    %414 = vector.load %arg8[%c0_432, %c0_433] : memref<5x10xf32, #tpu.memory_space<vmem>>, vector<5x10xf32>
    %cst_434 = arith.constant dense<0.000000e+00> : vector<5x160xf32>
    %415 = tpu.matmul %414, %413, %cst_434 {dimension_numbers = #tpu.dot_dimension_numbers<[1], [0], [0], [1], [0, 0, 1, 1], [], []>} : vector<5x10xf32>, vector<10x160xf32>, vector<5x160xf32> -> vector<5x160xf32>
    %c0_435 = arith.constant 0 : index
    %c0_436 = arith.constant 0 : index
    %416 = vector.load %arg9[%c0_435, %c0_436] : memref<160x80xf32, #tpu.memory_space<vmem>>, vector<160x80xf32>
    %cst_437 = arith.constant dense<0.000000e+00> : vector<5x80xf32>
    %417 = tpu.matmul %415, %416, %cst_437 {dimension_numbers = #tpu.dot_dimension_numbers<[1], [0], [0], [1], [0, 0, 1, 1], [], []>} : vector<5x160xf32>, vector<160x80xf32>, vector<5x80xf32> -> vector<5x80xf32>
    %418 = vector.extract_strided_slice %417 {offsets = [0, 0], sizes = [1, 80], strides = [1, 1]} : vector<5x80xf32> to vector<1x80xf32>
    %c0_438 = arith.constant 0 : index
    %c5_439 = arith.constant 5 : index
    %c0_440 = arith.constant 0 : index
    %419 = vector.load %arg19[%c0_438, %c5_439, %c0_440] : memref<5x8x80xf32, #tpu.memory_space<vmem>>, vector<1x1x80xf32>
    %420 = vector.shape_cast %419 : vector<1x1x80xf32> to vector<1x80xf32>
    %421 = vector.shape_cast %418 : vector<1x80xf32> to vector<1x1x80xf32>
    tpu.vector_store %arg19[%c0_438, %c5_439, %c0_440], %421 {strides = array<i32>} : memref<5x8x80xf32, #tpu.memory_space<vmem>>, vector<1x1x80xf32>,
    %422 = vector.extract_strided_slice %417 {offsets = [1, 0], sizes = [1, 80], strides = [1, 1]} : vector<5x80xf32> to vector<1x80xf32>
    %c1_441 = arith.constant 1 : index
    %c5_442 = arith.constant 5 : index
    %c0_443 = arith.constant 0 : index
    %423 = vector.load %arg19[%c1_441, %c5_442, %c0_443] : memref<5x8x80xf32, #tpu.memory_space<vmem>>, vector<1x1x80xf32>
    %424 = vector.shape_cast %423 : vector<1x1x80xf32> to vector<1x80xf32>
    %425 = vector.shape_cast %422 : vector<1x80xf32> to vector<1x1x80xf32>
    tpu.vector_store %arg19[%c1_441, %c5_442, %c0_443], %425 {strides = array<i32>} : memref<5x8x80xf32, #tpu.memory_space<vmem>>, vector<1x1x80xf32>,
    %426 = vector.extract_strided_slice %417 {offsets = [2, 0], sizes = [1, 80], strides = [1, 1]} : vector<5x80xf32> to vector<1x80xf32>
    %c2_444 = arith.constant 2 : index
    %c5_445 = arith.constant 5 : index
    %c0_446 = arith.constant 0 : index
    %427 = vector.load %arg19[%c2_444, %c5_445, %c0_446] : memref<5x8x80xf32, #tpu.memory_space<vmem>>, vector<1x1x80xf32>
    %428 = vector.shape_cast %427 : vector<1x1x80xf32> to vector<1x80xf32>
    %429 = vector.shape_cast %426 : vector<1x80xf32> to vector<1x1x80xf32>
    tpu.vector_store %arg19[%c2_444, %c5_445, %c0_446], %429 {strides = array<i32>} : memref<5x8x80xf32, #tpu.memory_space<vmem>>, vector<1x1x80xf32>,
    %430 = vector.extract_strided_slice %417 {offsets = [3, 0], sizes = [1, 80], strides = [1, 1]} : vector<5x80xf32> to vector<1x80xf32>
    %c3_447 = arith.constant 3 : index
    %c5_448 = arith.constant 5 : index
    %c0_449 = arith.constant 0 : index
    %431 = vector.load %arg19[%c3_447, %c5_448, %c0_449] : memref<5x8x80xf32, #tpu.memory_space<vmem>>, vector<1x1x80xf32>
    %432 = vector.shape_cast %431 : vector<1x1x80xf32> to vector<1x80xf32>
    %433 = vector.shape_cast %430 : vector<1x80xf32> to vector<1x1x80xf32>
    tpu.vector_store %arg19[%c3_447, %c5_448, %c0_449], %433 {strides = array<i32>} : memref<5x8x80xf32, #tpu.memory_space<vmem>>, vector<1x1x80xf32>,
    %434 = vector.extract_strided_slice %417 {offsets = [4, 0], sizes = [1, 80], strides = [1, 1]} : vector<5x80xf32> to vector<1x80xf32>
    %c4_450 = arith.constant 4 : index
    %c5_451 = arith.constant 5 : index
    %c0_452 = arith.constant 0 : index
    %435 = vector.load %arg19[%c4_450, %c5_451, %c0_452] : memref<5x8x80xf32, #tpu.memory_space<vmem>>, vector<1x1x80xf32>
    %436 = vector.shape_cast %435 : vector<1x1x80xf32> to vector<1x80xf32>
    %437 = vector.shape_cast %434 : vector<1x80xf32> to vector<1x1x80xf32>
    tpu.vector_store %arg19[%c4_450, %c5_451, %c0_452], %437 {strides = array<i32>} : memref<5x8x80xf32, #tpu.memory_space<vmem>>, vector<1x1x80xf32>,
    %c6 = arith.constant 6 : index
    %c0_453 = arith.constant 0 : index
    %c0_454 = arith.constant 0 : index
    %438 = vector.load %arg1[%c6, %c0_453, %c0_454] : memref<8x32x32xf32, #tpu.memory_space<vmem>>, vector<1x28x32xf32>
    %439 = vector.shape_cast %438 : vector<1x28x32xf32> to vector<28x32xf32>
    %c0_455 = arith.constant 0 : index
    %c0_456 = arith.constant 0 : index
    %440 = vector.load %arg17[%c0_455, %c0_456] : memref<28x160xf32, #tpu.memory_space<vmem>>, vector<28x32xf32>
    tpu.vector_store %arg17[%c0_455, %c0_456], %439 {strides = array<i32>} : memref<28x160xf32, #tpu.memory_space<vmem>>, vector<28x32xf32>,
    %c6_457 = arith.constant 6 : index
    %c1_458 = arith.constant 1 : index
    %c0_459 = arith.constant 0 : index
    %441 = vector.load %arg1[%c6_457, %c1_458, %c0_459] : memref<8x32x32xf32, #tpu.memory_space<vmem>>, vector<1x28x32xf32>
    %442 = vector.shape_cast %441 : vector<1x28x32xf32> to vector<28x32xf32>
    %c0_460 = arith.constant 0 : index
    %c32_461 = arith.constant 32 : index
    %443 = vector.load %arg17[%c0_460, %c32_461] : memref<28x160xf32, #tpu.memory_space<vmem>>, vector<28x32xf32>
    tpu.vector_store %arg17[%c0_460, %c32_461], %442 {strides = array<i32>} : memref<28x160xf32, #tpu.memory_space<vmem>>, vector<28x32xf32>,
    %c6_462 = arith.constant 6 : index
    %c2_463 = arith.constant 2 : index
    %c0_464 = arith.constant 0 : index
    %444 = vector.load %arg1[%c6_462, %c2_463, %c0_464] : memref<8x32x32xf32, #tpu.memory_space<vmem>>, vector<1x28x32xf32>
    %445 = vector.shape_cast %444 : vector<1x28x32xf32> to vector<28x32xf32>
    %c0_465 = arith.constant 0 : index
    %c64_466 = arith.constant 64 : index
    %446 = vector.load %arg17[%c0_465, %c64_466] : memref<28x160xf32, #tpu.memory_space<vmem>>, vector<28x32xf32>
    tpu.vector_store %arg17[%c0_465, %c64_466], %445 {strides = array<i32>} : memref<28x160xf32, #tpu.memory_space<vmem>>, vector<28x32xf32>,
    %c6_467 = arith.constant 6 : index
    %c3_468 = arith.constant 3 : index
    %c0_469 = arith.constant 0 : index
    %447 = vector.load %arg1[%c6_467, %c3_468, %c0_469] : memref<8x32x32xf32, #tpu.memory_space<vmem>>, vector<1x28x32xf32>
    %448 = vector.shape_cast %447 : vector<1x28x32xf32> to vector<28x32xf32>
    %c0_470 = arith.constant 0 : index
    %c96_471 = arith.constant 96 : index
    %449 = vector.load %arg17[%c0_470, %c96_471] : memref<28x160xf32, #tpu.memory_space<vmem>>, vector<28x32xf32>
    tpu.vector_store %arg17[%c0_470, %c96_471], %448 {strides = array<i32>} : memref<28x160xf32, #tpu.memory_space<vmem>>, vector<28x32xf32>,
    %c6_472 = arith.constant 6 : index
    %c4_473 = arith.constant 4 : index
    %c0_474 = arith.constant 0 : index
    %450 = vector.load %arg1[%c6_472, %c4_473, %c0_474] : memref<8x32x32xf32, #tpu.memory_space<vmem>>, vector<1x28x32xf32>
    %451 = vector.shape_cast %450 : vector<1x28x32xf32> to vector<28x32xf32>
    %c0_475 = arith.constant 0 : index
    %c128_476 = arith.constant 128 : index
    %452 = vector.load %arg17[%c0_475, %c128_476] : memref<28x160xf32, #tpu.memory_space<vmem>>, vector<28x32xf32>
    tpu.vector_store %arg17[%c0_475, %c128_476], %451 {strides = array<i32>} : memref<28x160xf32, #tpu.memory_space<vmem>>, vector<28x32xf32>,
    %c0_477 = arith.constant 0 : index
    %c0_478 = arith.constant 0 : index
    %453 = vector.load %arg17[%c0_477, %c0_478] : memref<28x160xf32, #tpu.memory_space<vmem>>, vector<28x160xf32>
    %c0_479 = arith.constant 0 : index
    %c0_480 = arith.constant 0 : index
    %454 = vector.load %arg2[%c0_479, %c0_480] : memref<160x168xf32, #tpu.memory_space<vmem>>, vector<160x168xf32>
    %cst_481 = arith.constant dense<0.000000e+00> : vector<28x168xf32>
    %455 = tpu.matmul %453, %454, %cst_481 {dimension_numbers = #tpu.dot_dimension_numbers<[1], [0], [0], [1], [0, 0, 1, 1], [], []>} : vector<28x160xf32>, vector<160x168xf32>, vector<28x168xf32> -> vector<28x168xf32>
    %c0_482 = arith.constant 0 : index
    %c0_483 = arith.constant 0 : index
    %456 = vector.load %arg3[%c0_482, %c0_483] : memref<28x168xf32, #tpu.memory_space<vmem>>, vector<28x168xf32>
    %457 = arith.addf %455, %456 : vector<28x168xf32>
    %458 = arith.negf %457 : vector<28x168xf32>
    %459 = math.exp %458 : vector<28x168xf32>
    %cst_484 = arith.constant 1.000000e+00 : f32
    %460 = vector.broadcast %cst_484 : f32 to vector<28x168xf32>
    %461 = arith.addf %460, %459 : vector<28x168xf32>
    %462 = arith.divf %460, %461 : vector<28x168xf32>
    %c0_485 = arith.constant 0 : index
    %c0_486 = arith.constant 0 : index
    %463 = vector.load %arg4[%c0_485, %c0_486] : memref<14x28xf32, #tpu.memory_space<vmem>>, vector<14x28xf32>
    %cst_487 = arith.constant dense<0.000000e+00> : vector<14x168xf32>
    %464 = tpu.matmul %463, %462, %cst_487 {dimension_numbers = #tpu.dot_dimension_numbers<[1], [0], [0], [1], [0, 0, 1, 1], [], []>} : vector<14x28xf32>, vector<28x168xf32>, vector<14x168xf32> -> vector<14x168xf32>
    %c0_488 = arith.constant 0 : index
    %c0_489 = arith.constant 0 : index
    %465 = vector.load %arg5[%c0_488, %c0_489] : memref<168x84xf32, #tpu.memory_space<vmem>>, vector<168x84xf32>
    %cst_490 = arith.constant dense<0.000000e+00> : vector<14x84xf32>
    %466 = tpu.matmul %464, %465, %cst_490 {dimension_numbers = #tpu.dot_dimension_numbers<[1], [0], [0], [1], [0, 0, 1, 1], [], []>} : vector<14x168xf32>, vector<168x84xf32>, vector<14x84xf32> -> vector<14x84xf32>
    %467 = vector.extract_strided_slice %466 {offsets = [0, 0], sizes = [10, 84], strides = [1, 1]} : vector<14x84xf32> to vector<10x84xf32>
    %c0_491 = arith.constant 0 : index
    %c0_492 = arith.constant 0 : index
    %468 = vector.load %arg18[%c0_491, %c0_492] : memref<10x420xf32, #tpu.memory_space<vmem>>, vector<10x84xf32>
    tpu.vector_store %arg18[%c0_491, %c0_492], %467 {strides = array<i32>} : memref<10x420xf32, #tpu.memory_space<vmem>>, vector<10x84xf32>,
    %469 = vector.extract_strided_slice %466 {offsets = [1, 0], sizes = [10, 84], strides = [1, 1]} : vector<14x84xf32> to vector<10x84xf32>
    %c0_493 = arith.constant 0 : index
    %c84_494 = arith.constant 84 : index
    %470 = vector.load %arg18[%c0_493, %c84_494] : memref<10x420xf32, #tpu.memory_space<vmem>>, vector<10x84xf32>
    tpu.vector_store %arg18[%c0_493, %c84_494], %469 {strides = array<i32>} : memref<10x420xf32, #tpu.memory_space<vmem>>, vector<10x84xf32>,
    %471 = vector.extract_strided_slice %466 {offsets = [2, 0], sizes = [10, 84], strides = [1, 1]} : vector<14x84xf32> to vector<10x84xf32>
    %c0_495 = arith.constant 0 : index
    %c168_496 = arith.constant 168 : index
    %472 = vector.load %arg18[%c0_495, %c168_496] : memref<10x420xf32, #tpu.memory_space<vmem>>, vector<10x84xf32>
    tpu.vector_store %arg18[%c0_495, %c168_496], %471 {strides = array<i32>} : memref<10x420xf32, #tpu.memory_space<vmem>>, vector<10x84xf32>,
    %473 = vector.extract_strided_slice %466 {offsets = [3, 0], sizes = [10, 84], strides = [1, 1]} : vector<14x84xf32> to vector<10x84xf32>
    %c0_497 = arith.constant 0 : index
    %c252_498 = arith.constant 252 : index
    %474 = vector.load %arg18[%c0_497, %c252_498] : memref<10x420xf32, #tpu.memory_space<vmem>>, vector<10x84xf32>
    tpu.vector_store %arg18[%c0_497, %c252_498], %473 {strides = array<i32>} : memref<10x420xf32, #tpu.memory_space<vmem>>, vector<10x84xf32>,
    %475 = vector.extract_strided_slice %466 {offsets = [4, 0], sizes = [10, 84], strides = [1, 1]} : vector<14x84xf32> to vector<10x84xf32>
    %c0_499 = arith.constant 0 : index
    %c336_500 = arith.constant 336 : index
    %476 = vector.load %arg18[%c0_499, %c336_500] : memref<10x420xf32, #tpu.memory_space<vmem>>, vector<10x84xf32>
    tpu.vector_store %arg18[%c0_499, %c336_500], %475 {strides = array<i32>} : memref<10x420xf32, #tpu.memory_space<vmem>>, vector<10x84xf32>,
    %c0_501 = arith.constant 0 : index
    %c0_502 = arith.constant 0 : index
    %477 = vector.load %arg18[%c0_501, %c0_502] : memref<10x420xf32, #tpu.memory_space<vmem>>, vector<10x420xf32>
    %c0_503 = arith.constant 0 : index
    %c0_504 = arith.constant 0 : index
    %478 = vector.load %arg6[%c0_503, %c0_504] : memref<420x160xf32, #tpu.memory_space<vmem>>, vector<420x160xf32>
    %cst_505 = arith.constant dense<0.000000e+00> : vector<10x160xf32>
    %479 = tpu.matmul %477, %478, %cst_505 {dimension_numbers = #tpu.dot_dimension_numbers<[1], [0], [0], [1], [0, 0, 1, 1], [], []>} : vector<10x420xf32>, vector<420x160xf32>, vector<10x160xf32> -> vector<10x160xf32>
    %c0_506 = arith.constant 0 : index
    %c0_507 = arith.constant 0 : index
    %480 = vector.load %arg7[%c0_506, %c0_507] : memref<10x160xf32, #tpu.memory_space<vmem>>, vector<10x160xf32>
    %481 = arith.addf %479, %480 : vector<10x160xf32>
    %482 = arith.negf %481 : vector<10x160xf32>
    %483 = math.exp %482 : vector<10x160xf32>
    %cst_508 = arith.constant 1.000000e+00 : f32
    %484 = vector.broadcast %cst_508 : f32 to vector<10x160xf32>
    %485 = arith.addf %484, %483 : vector<10x160xf32>
    %486 = arith.divf %484, %485 : vector<10x160xf32>
    %c0_509 = arith.constant 0 : index
    %c0_510 = arith.constant 0 : index
    %487 = vector.load %arg8[%c0_509, %c0_510] : memref<5x10xf32, #tpu.memory_space<vmem>>, vector<5x10xf32>
    %cst_511 = arith.constant dense<0.000000e+00> : vector<5x160xf32>
    %488 = tpu.matmul %487, %486, %cst_511 {dimension_numbers = #tpu.dot_dimension_numbers<[1], [0], [0], [1], [0, 0, 1, 1], [], []>} : vector<5x10xf32>, vector<10x160xf32>, vector<5x160xf32> -> vector<5x160xf32>
    %c0_512 = arith.constant 0 : index
    %c0_513 = arith.constant 0 : index
    %489 = vector.load %arg9[%c0_512, %c0_513] : memref<160x80xf32, #tpu.memory_space<vmem>>, vector<160x80xf32>
    %cst_514 = arith.constant dense<0.000000e+00> : vector<5x80xf32>
    %490 = tpu.matmul %488, %489, %cst_514 {dimension_numbers = #tpu.dot_dimension_numbers<[1], [0], [0], [1], [0, 0, 1, 1], [], []>} : vector<5x160xf32>, vector<160x80xf32>, vector<5x80xf32> -> vector<5x80xf32>
    %491 = vector.extract_strided_slice %490 {offsets = [0, 0], sizes = [1, 80], strides = [1, 1]} : vector<5x80xf32> to vector<1x80xf32>
    %c0_515 = arith.constant 0 : index
    %c6_516 = arith.constant 6 : index
    %c0_517 = arith.constant 0 : index
    %492 = vector.load %arg19[%c0_515, %c6_516, %c0_517] : memref<5x8x80xf32, #tpu.memory_space<vmem>>, vector<1x1x80xf32>
    %493 = vector.shape_cast %492 : vector<1x1x80xf32> to vector<1x80xf32>
    %494 = vector.shape_cast %491 : vector<1x80xf32> to vector<1x1x80xf32>
    tpu.vector_store %arg19[%c0_515, %c6_516, %c0_517], %494 {strides = array<i32>} : memref<5x8x80xf32, #tpu.memory_space<vmem>>, vector<1x1x80xf32>,
    %495 = vector.extract_strided_slice %490 {offsets = [1, 0], sizes = [1, 80], strides = [1, 1]} : vector<5x80xf32> to vector<1x80xf32>
    %c1_518 = arith.constant 1 : index
    %c6_519 = arith.constant 6 : index
    %c0_520 = arith.constant 0 : index
    %496 = vector.load %arg19[%c1_518, %c6_519, %c0_520] : memref<5x8x80xf32, #tpu.memory_space<vmem>>, vector<1x1x80xf32>
    %497 = vector.shape_cast %496 : vector<1x1x80xf32> to vector<1x80xf32>
    %498 = vector.shape_cast %495 : vector<1x80xf32> to vector<1x1x80xf32>
    tpu.vector_store %arg19[%c1_518, %c6_519, %c0_520], %498 {strides = array<i32>} : memref<5x8x80xf32, #tpu.memory_space<vmem>>, vector<1x1x80xf32>,
    %499 = vector.extract_strided_slice %490 {offsets = [2, 0], sizes = [1, 80], strides = [1, 1]} : vector<5x80xf32> to vector<1x80xf32>
    %c2_521 = arith.constant 2 : index
    %c6_522 = arith.constant 6 : index
    %c0_523 = arith.constant 0 : index
    %500 = vector.load %arg19[%c2_521, %c6_522, %c0_523] : memref<5x8x80xf32, #tpu.memory_space<vmem>>, vector<1x1x80xf32>
    %501 = vector.shape_cast %500 : vector<1x1x80xf32> to vector<1x80xf32>
    %502 = vector.shape_cast %499 : vector<1x80xf32> to vector<1x1x80xf32>
    tpu.vector_store %arg19[%c2_521, %c6_522, %c0_523], %502 {strides = array<i32>} : memref<5x8x80xf32, #tpu.memory_space<vmem>>, vector<1x1x80xf32>,
    %503 = vector.extract_strided_slice %490 {offsets = [3, 0], sizes = [1, 80], strides = [1, 1]} : vector<5x80xf32> to vector<1x80xf32>
    %c3_524 = arith.constant 3 : index
    %c6_525 = arith.constant 6 : index
    %c0_526 = arith.constant 0 : index
    %504 = vector.load %arg19[%c3_524, %c6_525, %c0_526] : memref<5x8x80xf32, #tpu.memory_space<vmem>>, vector<1x1x80xf32>
    %505 = vector.shape_cast %504 : vector<1x1x80xf32> to vector<1x80xf32>
    %506 = vector.shape_cast %503 : vector<1x80xf32> to vector<1x1x80xf32>
    tpu.vector_store %arg19[%c3_524, %c6_525, %c0_526], %506 {strides = array<i32>} : memref<5x8x80xf32, #tpu.memory_space<vmem>>, vector<1x1x80xf32>,
    %507 = vector.extract_strided_slice %490 {offsets = [4, 0], sizes = [1, 80], strides = [1, 1]} : vector<5x80xf32> to vector<1x80xf32>
    %c4_527 = arith.constant 4 : index
    %c6_528 = arith.constant 6 : index
    %c0_529 = arith.constant 0 : index
    %508 = vector.load %arg19[%c4_527, %c6_528, %c0_529] : memref<5x8x80xf32, #tpu.memory_space<vmem>>, vector<1x1x80xf32>
    %509 = vector.shape_cast %508 : vector<1x1x80xf32> to vector<1x80xf32>
    %510 = vector.shape_cast %507 : vector<1x80xf32> to vector<1x1x80xf32>
    tpu.vector_store %arg19[%c4_527, %c6_528, %c0_529], %510 {strides = array<i32>} : memref<5x8x80xf32, #tpu.memory_space<vmem>>, vector<1x1x80xf32>,
    %c7 = arith.constant 7 : index
    %c0_530 = arith.constant 0 : index
    %c0_531 = arith.constant 0 : index
    %511 = vector.load %arg1[%c7, %c0_530, %c0_531] : memref<8x32x32xf32, #tpu.memory_space<vmem>>, vector<1x28x32xf32>
    %512 = vector.shape_cast %511 : vector<1x28x32xf32> to vector<28x32xf32>
    %c0_532 = arith.constant 0 : index
    %c0_533 = arith.constant 0 : index
    %513 = vector.load %arg17[%c0_532, %c0_533] : memref<28x160xf32, #tpu.memory_space<vmem>>, vector<28x32xf32>
    tpu.vector_store %arg17[%c0_532, %c0_533], %512 {strides = array<i32>} : memref<28x160xf32, #tpu.memory_space<vmem>>, vector<28x32xf32>,
    %c7_534 = arith.constant 7 : index
    %c1_535 = arith.constant 1 : index
    %c0_536 = arith.constant 0 : index
    %514 = vector.load %arg1[%c7_534, %c1_535, %c0_536] : memref<8x32x32xf32, #tpu.memory_space<vmem>>, vector<1x28x32xf32>
    %515 = vector.shape_cast %514 : vector<1x28x32xf32> to vector<28x32xf32>
    %c0_537 = arith.constant 0 : index
    %c32_538 = arith.constant 32 : index
    %516 = vector.load %arg17[%c0_537, %c32_538] : memref<28x160xf32, #tpu.memory_space<vmem>>, vector<28x32xf32>
    tpu.vector_store %arg17[%c0_537, %c32_538], %515 {strides = array<i32>} : memref<28x160xf32, #tpu.memory_space<vmem>>, vector<28x32xf32>,
    %c7_539 = arith.constant 7 : index
    %c2_540 = arith.constant 2 : index
    %c0_541 = arith.constant 0 : index
    %517 = vector.load %arg1[%c7_539, %c2_540, %c0_541] : memref<8x32x32xf32, #tpu.memory_space<vmem>>, vector<1x28x32xf32>
    %518 = vector.shape_cast %517 : vector<1x28x32xf32> to vector<28x32xf32>
    %c0_542 = arith.constant 0 : index
    %c64_543 = arith.constant 64 : index
    %519 = vector.load %arg17[%c0_542, %c64_543] : memref<28x160xf32, #tpu.memory_space<vmem>>, vector<28x32xf32>
    tpu.vector_store %arg17[%c0_542, %c64_543], %518 {strides = array<i32>} : memref<28x160xf32, #tpu.memory_space<vmem>>, vector<28x32xf32>,
    %c7_544 = arith.constant 7 : index
    %c3_545 = arith.constant 3 : index
    %c0_546 = arith.constant 0 : index
    %520 = vector.load %arg1[%c7_544, %c3_545, %c0_546] : memref<8x32x32xf32, #tpu.memory_space<vmem>>, vector<1x28x32xf32>
    %521 = vector.shape_cast %520 : vector<1x28x32xf32> to vector<28x32xf32>
    %c0_547 = arith.constant 0 : index
    %c96_548 = arith.constant 96 : index
    %522 = vector.load %arg17[%c0_547, %c96_548] : memref<28x160xf32, #tpu.memory_space<vmem>>, vector<28x32xf32>
    tpu.vector_store %arg17[%c0_547, %c96_548], %521 {strides = array<i32>} : memref<28x160xf32, #tpu.memory_space<vmem>>, vector<28x32xf32>,
    %c7_549 = arith.constant 7 : index
    %c4_550 = arith.constant 4 : index
    %c0_551 = arith.constant 0 : index
    %523 = vector.load %arg1[%c7_549, %c4_550, %c0_551] : memref<8x32x32xf32, #tpu.memory_space<vmem>>, vector<1x28x32xf32>
    %524 = vector.shape_cast %523 : vector<1x28x32xf32> to vector<28x32xf32>
    %c0_552 = arith.constant 0 : index
    %c128_553 = arith.constant 128 : index
    %525 = vector.load %arg17[%c0_552, %c128_553] : memref<28x160xf32, #tpu.memory_space<vmem>>, vector<28x32xf32>
    tpu.vector_store %arg17[%c0_552, %c128_553], %524 {strides = array<i32>} : memref<28x160xf32, #tpu.memory_space<vmem>>, vector<28x32xf32>,
    %c0_554 = arith.constant 0 : index
    %c0_555 = arith.constant 0 : index
    %526 = vector.load %arg17[%c0_554, %c0_555] : memref<28x160xf32, #tpu.memory_space<vmem>>, vector<28x160xf32>
    %c0_556 = arith.constant 0 : index
    %c0_557 = arith.constant 0 : index
    %527 = vector.load %arg2[%c0_556, %c0_557] : memref<160x168xf32, #tpu.memory_space<vmem>>, vector<160x168xf32>
    %cst_558 = arith.constant dense<0.000000e+00> : vector<28x168xf32>
    %528 = tpu.matmul %526, %527, %cst_558 {dimension_numbers = #tpu.dot_dimension_numbers<[1], [0], [0], [1], [0, 0, 1, 1], [], []>} : vector<28x160xf32>, vector<160x168xf32>, vector<28x168xf32> -> vector<28x168xf32>
    %c0_559 = arith.constant 0 : index
    %c0_560 = arith.constant 0 : index
    %529 = vector.load %arg3[%c0_559, %c0_560] : memref<28x168xf32, #tpu.memory_space<vmem>>, vector<28x168xf32>
    %530 = arith.addf %528, %529 : vector<28x168xf32>
    %531 = arith.negf %530 : vector<28x168xf32>
    %532 = math.exp %531 : vector<28x168xf32>
    %cst_561 = arith.constant 1.000000e+00 : f32
    %533 = vector.broadcast %cst_561 : f32 to vector<28x168xf32>
    %534 = arith.addf %533, %532 : vector<28x168xf32>
    %535 = arith.divf %533, %534 : vector<28x168xf32>
    %c0_562 = arith.constant 0 : index
    %c0_563 = arith.constant 0 : index
    %536 = vector.load %arg4[%c0_562, %c0_563] : memref<14x28xf32, #tpu.memory_space<vmem>>, vector<14x28xf32>
    %cst_564 = arith.constant dense<0.000000e+00> : vector<14x168xf32>
    %537 = tpu.matmul %536, %535, %cst_564 {dimension_numbers = #tpu.dot_dimension_numbers<[1], [0], [0], [1], [0, 0, 1, 1], [], []>} : vector<14x28xf32>, vector<28x168xf32>, vector<14x168xf32> -> vector<14x168xf32>
    %c0_565 = arith.constant 0 : index
    %c0_566 = arith.constant 0 : index
    %538 = vector.load %arg5[%c0_565, %c0_566] : memref<168x84xf32, #tpu.memory_space<vmem>>, vector<168x84xf32>
    %cst_567 = arith.constant dense<0.000000e+00> : vector<14x84xf32>
    %539 = tpu.matmul %537, %538, %cst_567 {dimension_numbers = #tpu.dot_dimension_numbers<[1], [0], [0], [1], [0, 0, 1, 1], [], []>} : vector<14x168xf32>, vector<168x84xf32>, vector<14x84xf32> -> vector<14x84xf32>
    %540 = vector.extract_strided_slice %539 {offsets = [0, 0], sizes = [10, 84], strides = [1, 1]} : vector<14x84xf32> to vector<10x84xf32>
    %c0_568 = arith.constant 0 : index
    %c0_569 = arith.constant 0 : index
    %541 = vector.load %arg18[%c0_568, %c0_569] : memref<10x420xf32, #tpu.memory_space<vmem>>, vector<10x84xf32>
    tpu.vector_store %arg18[%c0_568, %c0_569], %540 {strides = array<i32>} : memref<10x420xf32, #tpu.memory_space<vmem>>, vector<10x84xf32>,
    %542 = vector.extract_strided_slice %539 {offsets = [1, 0], sizes = [10, 84], strides = [1, 1]} : vector<14x84xf32> to vector<10x84xf32>
    %c0_570 = arith.constant 0 : index
    %c84_571 = arith.constant 84 : index
    %543 = vector.load %arg18[%c0_570, %c84_571] : memref<10x420xf32, #tpu.memory_space<vmem>>, vector<10x84xf32>
    tpu.vector_store %arg18[%c0_570, %c84_571], %542 {strides = array<i32>} : memref<10x420xf32, #tpu.memory_space<vmem>>, vector<10x84xf32>,
    %544 = vector.extract_strided_slice %539 {offsets = [2, 0], sizes = [10, 84], strides = [1, 1]} : vector<14x84xf32> to vector<10x84xf32>
    %c0_572 = arith.constant 0 : index
    %c168_573 = arith.constant 168 : index
    %545 = vector.load %arg18[%c0_572, %c168_573] : memref<10x420xf32, #tpu.memory_space<vmem>>, vector<10x84xf32>
    tpu.vector_store %arg18[%c0_572, %c168_573], %544 {strides = array<i32>} : memref<10x420xf32, #tpu.memory_space<vmem>>, vector<10x84xf32>,
    %546 = vector.extract_strided_slice %539 {offsets = [3, 0], sizes = [10, 84], strides = [1, 1]} : vector<14x84xf32> to vector<10x84xf32>
    %c0_574 = arith.constant 0 : index
    %c252_575 = arith.constant 252 : index
    %547 = vector.load %arg18[%c0_574, %c252_575] : memref<10x420xf32, #tpu.memory_space<vmem>>, vector<10x84xf32>
    tpu.vector_store %arg18[%c0_574, %c252_575], %546 {strides = array<i32>} : memref<10x420xf32, #tpu.memory_space<vmem>>, vector<10x84xf32>,
    %548 = vector.extract_strided_slice %539 {offsets = [4, 0], sizes = [10, 84], strides = [1, 1]} : vector<14x84xf32> to vector<10x84xf32>
    %c0_576 = arith.constant 0 : index
    %c336_577 = arith.constant 336 : index
    %549 = vector.load %arg18[%c0_576, %c336_577] : memref<10x420xf32, #tpu.memory_space<vmem>>, vector<10x84xf32>
    tpu.vector_store %arg18[%c0_576, %c336_577], %548 {strides = array<i32>} : memref<10x420xf32, #tpu.memory_space<vmem>>, vector<10x84xf32>,
    %c0_578 = arith.constant 0 : index
    %c0_579 = arith.constant 0 : index
    %550 = vector.load %arg18[%c0_578, %c0_579] : memref<10x420xf32, #tpu.memory_space<vmem>>, vector<10x420xf32>
    %c0_580 = arith.constant 0 : index
    %c0_581 = arith.constant 0 : index
    %551 = vector.load %arg6[%c0_580, %c0_581] : memref<420x160xf32, #tpu.memory_space<vmem>>, vector<420x160xf32>
    %cst_582 = arith.constant dense<0.000000e+00> : vector<10x160xf32>
    %552 = tpu.matmul %550, %551, %cst_582 {dimension_numbers = #tpu.dot_dimension_numbers<[1], [0], [0], [1], [0, 0, 1, 1], [], []>} : vector<10x420xf32>, vector<420x160xf32>, vector<10x160xf32> -> vector<10x160xf32>
    %c0_583 = arith.constant 0 : index
    %c0_584 = arith.constant 0 : index
    %553 = vector.load %arg7[%c0_583, %c0_584] : memref<10x160xf32, #tpu.memory_space<vmem>>, vector<10x160xf32>
    %554 = arith.addf %552, %553 : vector<10x160xf32>
    %555 = arith.negf %554 : vector<10x160xf32>
    %556 = math.exp %555 : vector<10x160xf32>
    %cst_585 = arith.constant 1.000000e+00 : f32
    %557 = vector.broadcast %cst_585 : f32 to vector<10x160xf32>
    %558 = arith.addf %557, %556 : vector<10x160xf32>
    %559 = arith.divf %557, %558 : vector<10x160xf32>
    %c0_586 = arith.constant 0 : index
    %c0_587 = arith.constant 0 : index
    %560 = vector.load %arg8[%c0_586, %c0_587] : memref<5x10xf32, #tpu.memory_space<vmem>>, vector<5x10xf32>
    %cst_588 = arith.constant dense<0.000000e+00> : vector<5x160xf32>
    %561 = tpu.matmul %560, %559, %cst_588 {dimension_numbers = #tpu.dot_dimension_numbers<[1], [0], [0], [1], [0, 0, 1, 1], [], []>} : vector<5x10xf32>, vector<10x160xf32>, vector<5x160xf32> -> vector<5x160xf32>
    %c0_589 = arith.constant 0 : index
    %c0_590 = arith.constant 0 : index
    %562 = vector.load %arg9[%c0_589, %c0_590] : memref<160x80xf32, #tpu.memory_space<vmem>>, vector<160x80xf32>
    %cst_591 = arith.constant dense<0.000000e+00> : vector<5x80xf32>
    %563 = tpu.matmul %561, %562, %cst_591 {dimension_numbers = #tpu.dot_dimension_numbers<[1], [0], [0], [1], [0, 0, 1, 1], [], []>} : vector<5x160xf32>, vector<160x80xf32>, vector<5x80xf32> -> vector<5x80xf32>
    %564 = vector.extract_strided_slice %563 {offsets = [0, 0], sizes = [1, 80], strides = [1, 1]} : vector<5x80xf32> to vector<1x80xf32>
    %c0_592 = arith.constant 0 : index
    %c7_593 = arith.constant 7 : index
    %c0_594 = arith.constant 0 : index
    %565 = vector.load %arg19[%c0_592, %c7_593, %c0_594] : memref<5x8x80xf32, #tpu.memory_space<vmem>>, vector<1x1x80xf32>
    %566 = vector.shape_cast %565 : vector<1x1x80xf32> to vector<1x80xf32>
    %567 = vector.shape_cast %564 : vector<1x80xf32> to vector<1x1x80xf32>
    tpu.vector_store %arg19[%c0_592, %c7_593, %c0_594], %567 {strides = array<i32>} : memref<5x8x80xf32, #tpu.memory_space<vmem>>, vector<1x1x80xf32>,
    %568 = vector.extract_strided_slice %563 {offsets = [1, 0], sizes = [1, 80], strides = [1, 1]} : vector<5x80xf32> to vector<1x80xf32>
    %c1_595 = arith.constant 1 : index
    %c7_596 = arith.constant 7 : index
    %c0_597 = arith.constant 0 : index
    %569 = vector.load %arg19[%c1_595, %c7_596, %c0_597] : memref<5x8x80xf32, #tpu.memory_space<vmem>>, vector<1x1x80xf32>
    %570 = vector.shape_cast %569 : vector<1x1x80xf32> to vector<1x80xf32>
    %571 = vector.shape_cast %568 : vector<1x80xf32> to vector<1x1x80xf32>
    tpu.vector_store %arg19[%c1_595, %c7_596, %c0_597], %571 {strides = array<i32>} : memref<5x8x80xf32, #tpu.memory_space<vmem>>, vector<1x1x80xf32>,
    %572 = vector.extract_strided_slice %563 {offsets = [2, 0], sizes = [1, 80], strides = [1, 1]} : vector<5x80xf32> to vector<1x80xf32>
    %c2_598 = arith.constant 2 : index
    %c7_599 = arith.constant 7 : index
    %c0_600 = arith.constant 0 : index
    %573 = vector.load %arg19[%c2_598, %c7_599, %c0_600] : memref<5x8x80xf32, #tpu.memory_space<vmem>>, vector<1x1x80xf32>
    %574 = vector.shape_cast %573 : vector<1x1x80xf32> to vector<1x80xf32>
    %575 = vector.shape_cast %572 : vector<1x80xf32> to vector<1x1x80xf32>
    tpu.vector_store %arg19[%c2_598, %c7_599, %c0_600], %575 {strides = array<i32>} : memref<5x8x80xf32, #tpu.memory_space<vmem>>, vector<1x1x80xf32>,
    %576 = vector.extract_strided_slice %563 {offsets = [3, 0], sizes = [1, 80], strides = [1, 1]} : vector<5x80xf32> to vector<1x80xf32>
    %c3_601 = arith.constant 3 : index
    %c7_602 = arith.constant 7 : index
    %c0_603 = arith.constant 0 : index
    %577 = vector.load %arg19[%c3_601, %c7_602, %c0_603] : memref<5x8x80xf32, #tpu.memory_space<vmem>>, vector<1x1x80xf32>
    %578 = vector.shape_cast %577 : vector<1x1x80xf32> to vector<1x80xf32>
    %579 = vector.shape_cast %576 : vector<1x80xf32> to vector<1x1x80xf32>
    tpu.vector_store %arg19[%c3_601, %c7_602, %c0_603], %579 {strides = array<i32>} : memref<5x8x80xf32, #tpu.memory_space<vmem>>, vector<1x1x80xf32>,
    %580 = vector.extract_strided_slice %563 {offsets = [4, 0], sizes = [1, 80], strides = [1, 1]} : vector<5x80xf32> to vector<1x80xf32>
    %c4_604 = arith.constant 4 : index
    %c7_605 = arith.constant 7 : index
    %c0_606 = arith.constant 0 : index
    %581 = vector.load %arg19[%c4_604, %c7_605, %c0_606] : memref<5x8x80xf32, #tpu.memory_space<vmem>>, vector<1x1x80xf32>
    %582 = vector.shape_cast %581 : vector<1x1x80xf32> to vector<1x80xf32>
    %583 = vector.shape_cast %580 : vector<1x80xf32> to vector<1x1x80xf32>
    tpu.vector_store %arg19[%c4_604, %c7_605, %c0_606], %583 {strides = array<i32>} : memref<5x8x80xf32, #tpu.memory_space<vmem>>, vector<1x1x80xf32>,
    %cst_607 = arith.constant 0.000000e+00 : f32
    %584 = vector.broadcast %cst_607 : f32 to vector<8x120xf32>
    %c0_608 = arith.constant 0 : index
    %c0_609 = arith.constant 0 : index
    %c0_610 = arith.constant 0 : index
    %585 = vector.load %arg19[%c0_608, %c0_609, %c0_610] : memref<5x8x80xf32, #tpu.memory_space<vmem>>, vector<1x8x80xf32>
    %586 = vector.shape_cast %585 : vector<1x8x80xf32> to vector<8x80xf32>
    %c0_611 = arith.constant 0 : index
    %c0_612 = arith.constant 0 : index
    %c0_613 = arith.constant 0 : index
    %587 = vector.load %arg10[%c0_611, %c0_612, %c0_613] : memref<5x80x120xf32, #tpu.memory_space<vmem>>, vector<1x80x120xf32>
    %588 = vector.shape_cast %587 : vector<1x80x120xf32> to vector<80x120xf32>
    %cst_614 = arith.constant dense<0.000000e+00> : vector<8x120xf32>
    %589 = tpu.matmul %586, %588, %cst_614 {dimension_numbers = #tpu.dot_dimension_numbers<[1], [0], [0], [1], [0, 0, 1, 1], [], []>} : vector<8x80xf32>, vector<80x120xf32>, vector<8x120xf32> -> vector<8x120xf32>
    %590 = arith.addf %584, %589 : vector<8x120xf32>
    %c1_615 = arith.constant 1 : index
    %c0_616 = arith.constant 0 : index
    %c0_617 = arith.constant 0 : index
    %591 = vector.load %arg19[%c1_615, %c0_616, %c0_617] : memref<5x8x80xf32, #tpu.memory_space<vmem>>, vector<1x8x80xf32>
    %592 = vector.shape_cast %591 : vector<1x8x80xf32> to vector<8x80xf32>
    %c1_618 = arith.constant 1 : index
    %c0_619 = arith.constant 0 : index
    %c0_620 = arith.constant 0 : index
    %593 = vector.load %arg10[%c1_618, %c0_619, %c0_620] : memref<5x80x120xf32, #tpu.memory_space<vmem>>, vector<1x80x120xf32>
    %594 = vector.shape_cast %593 : vector<1x80x120xf32> to vector<80x120xf32>
    %cst_621 = arith.constant dense<0.000000e+00> : vector<8x120xf32>
    %595 = tpu.matmul %592, %594, %cst_621 {dimension_numbers = #tpu.dot_dimension_numbers<[1], [0], [0], [1], [0, 0, 1, 1], [], []>} : vector<8x80xf32>, vector<80x120xf32>, vector<8x120xf32> -> vector<8x120xf32>
    %596 = arith.addf %590, %595 : vector<8x120xf32>
    %c2_622 = arith.constant 2 : index
    %c0_623 = arith.constant 0 : index
    %c0_624 = arith.constant 0 : index
    %597 = vector.load %arg19[%c2_622, %c0_623, %c0_624] : memref<5x8x80xf32, #tpu.memory_space<vmem>>, vector<1x8x80xf32>
    %598 = vector.shape_cast %597 : vector<1x8x80xf32> to vector<8x80xf32>
    %c2_625 = arith.constant 2 : index
    %c0_626 = arith.constant 0 : index
    %c0_627 = arith.constant 0 : index
    %599 = vector.load %arg10[%c2_625, %c0_626, %c0_627] : memref<5x80x120xf32, #tpu.memory_space<vmem>>, vector<1x80x120xf32>
    %600 = vector.shape_cast %599 : vector<1x80x120xf32> to vector<80x120xf32>
    %cst_628 = arith.constant dense<0.000000e+00> : vector<8x120xf32>
    %601 = tpu.matmul %598, %600, %cst_628 {dimension_numbers = #tpu.dot_dimension_numbers<[1], [0], [0], [1], [0, 0, 1, 1], [], []>} : vector<8x80xf32>, vector<80x120xf32>, vector<8x120xf32> -> vector<8x120xf32>
    %602 = arith.addf %596, %601 : vector<8x120xf32>
    %c3_629 = arith.constant 3 : index
    %c0_630 = arith.constant 0 : index
    %c0_631 = arith.constant 0 : index
    %603 = vector.load %arg19[%c3_629, %c0_630, %c0_631] : memref<5x8x80xf32, #tpu.memory_space<vmem>>, vector<1x8x80xf32>
    %604 = vector.shape_cast %603 : vector<1x8x80xf32> to vector<8x80xf32>
    %c3_632 = arith.constant 3 : index
    %c0_633 = arith.constant 0 : index
    %c0_634 = arith.constant 0 : index
    %605 = vector.load %arg10[%c3_632, %c0_633, %c0_634] : memref<5x80x120xf32, #tpu.memory_space<vmem>>, vector<1x80x120xf32>
    %606 = vector.shape_cast %605 : vector<1x80x120xf32> to vector<80x120xf32>
    %cst_635 = arith.constant dense<0.000000e+00> : vector<8x120xf32>
    %607 = tpu.matmul %604, %606, %cst_635 {dimension_numbers = #tpu.dot_dimension_numbers<[1], [0], [0], [1], [0, 0, 1, 1], [], []>} : vector<8x80xf32>, vector<80x120xf32>, vector<8x120xf32> -> vector<8x120xf32>
    %608 = arith.addf %602, %607 : vector<8x120xf32>
    %c4_636 = arith.constant 4 : index
    %c0_637 = arith.constant 0 : index
    %c0_638 = arith.constant 0 : index
    %609 = vector.load %arg19[%c4_636, %c0_637, %c0_638] : memref<5x8x80xf32, #tpu.memory_space<vmem>>, vector<1x8x80xf32>
    %610 = vector.shape_cast %609 : vector<1x8x80xf32> to vector<8x80xf32>
    %c4_639 = arith.constant 4 : index
    %c0_640 = arith.constant 0 : index
    %c0_641 = arith.constant 0 : index
    %611 = vector.load %arg10[%c4_639, %c0_640, %c0_641] : memref<5x80x120xf32, #tpu.memory_space<vmem>>, vector<1x80x120xf32>
    %612 = vector.shape_cast %611 : vector<1x80x120xf32> to vector<80x120xf32>
    %cst_642 = arith.constant dense<0.000000e+00> : vector<8x120xf32>
    %613 = tpu.matmul %610, %612, %cst_642 {dimension_numbers = #tpu.dot_dimension_numbers<[1], [0], [0], [1], [0, 0, 1, 1], [], []>} : vector<8x80xf32>, vector<80x120xf32>, vector<8x120xf32> -> vector<8x120xf32>
    %614 = arith.addf %608, %613 : vector<8x120xf32>
    %c0_643 = arith.constant 0 : index
    %c0_644 = arith.constant 0 : index
    %615 = vector.load %arg11[%c0_643, %c0_644] : memref<1x120xf32, #tpu.memory_space<vmem>>, vector<1x120xf32>
    %616 = vector.broadcast %615 : vector<1x120xf32> to vector<8x120xf32>
    %617 = arith.addf %614, %616 : vector<8x120xf32>
    %618 = arith.negf %617 : vector<8x120xf32>
    %619 = math.exp %618 : vector<8x120xf32>
    %cst_645 = arith.constant 1.000000e+00 : f32
    %620 = vector.broadcast %cst_645 : f32 to vector<8x120xf32>
    %621 = arith.addf %620, %619 : vector<8x120xf32>
    %622 = arith.divf %620, %621 : vector<8x120xf32>
    %c0_646 = arith.constant 0 : index
    %c0_647 = arith.constant 0 : index
    %623 = vector.load %arg12[%c0_646, %c0_647] : memref<120x84xf32, #tpu.memory_space<vmem>>, vector<120x84xf32>
    %cst_648 = arith.constant dense<0.000000e+00> : vector<8x84xf32>
    %624 = tpu.matmul %622, %623, %cst_648 {dimension_numbers = #tpu.dot_dimension_numbers<[1], [0], [0], [1], [0, 0, 1, 1], [], []>} : vector<8x120xf32>, vector<120x84xf32>, vector<8x84xf32> -> vector<8x84xf32>
    %c0_649 = arith.constant 0 : index
    %c0_650 = arith.constant 0 : index
    %625 = vector.load %arg13[%c0_649, %c0_650] : memref<1x84xf32, #tpu.memory_space<vmem>>, vector<1x84xf32>
    %626 = vector.broadcast %625 : vector<1x84xf32> to vector<8x84xf32>
    %627 = arith.addf %624, %626 : vector<8x84xf32>
    %628 = arith.negf %627 : vector<8x84xf32>
    %629 = math.exp %628 : vector<8x84xf32>
    %cst_651 = arith.constant 1.000000e+00 : f32
    %630 = vector.broadcast %cst_651 : f32 to vector<8x84xf32>
    %631 = arith.addf %630, %629 : vector<8x84xf32>
    %632 = arith.divf %630, %631 : vector<8x84xf32>
    %c0_652 = arith.constant 0 : index
    %c0_653 = arith.constant 0 : index
    %633 = vector.load %arg14[%c0_652, %c0_653] : memref<84x128xf32, #tpu.memory_space<vmem>>, vector<84x128xf32>
    %cst_654 = arith.constant dense<0.000000e+00> : vector<8x128xf32>
    %634 = tpu.matmul %632, %633, %cst_654 {dimension_numbers = #tpu.dot_dimension_numbers<[1], [0], [0], [1], [0, 0, 1, 1], [], []>} : vector<8x84xf32>, vector<84x128xf32>, vector<8x128xf32> -> vector<8x128xf32>
    %c0_655 = arith.constant 0 : index
    %c0_656 = arith.constant 0 : index
    %635 = vector.load %arg15[%c0_655, %c0_656] : memref<1x128xf32, #tpu.memory_space<vmem>>, vector<1x128xf32>
    %636 = vector.broadcast %635 : vector<1x128xf32> to vector<8x128xf32>
    %637 = arith.addf %634, %636 : vector<8x128xf32>
    %c0_657 = arith.constant 0 : index
    %c0_658 = arith.constant 0 : index
    %638 = vector.load %arg16[%c0_657, %c0_658] : memref<8x128xf32, #tpu.memory_space<vmem>>, vector<8x128xf32>
    tpu.vector_store %arg16[%c0_657, %c0_658], %637 {strides = array<i32>} : memref<8x128xf32, #tpu.memory_space<vmem>>, vector<8x128xf32>,
    return
  }
  func.func @transform_0(%arg0: i32) -> (i32, i32, i32) {
    %c0_i32 = arith.constant 0 : i32
    %c0_i32_0 = arith.constant 0 : i32
    %c0_i32_1 = arith.constant 0 : i32
    return %arg0, %c0_i32, %c0_i32_0 : i32, i32, i32
  }
  func.func @transform_1(%arg0: i32) -> (i32, i32) {
    %c0_i32 = arith.constant 0 : i32
    %c0_i32_0 = arith.constant 0 : i32
    %c0_i32_1 = arith.constant 0 : i32
    return %c0_i32, %c0_i32_0 : i32, i32
  }
  func.func @transform_2(%arg0: i32) -> (i32, i32) {
    %c0_i32 = arith.constant 0 : i32
    %c0_i32_0 = arith.constant 0 : i32
    %c0_i32_1 = arith.constant 0 : i32
    return %c0_i32, %c0_i32_0 : i32, i32
  }
  func.func @transform_3(%arg0: i32) -> (i32, i32) {
    %c0_i32 = arith.constant 0 : i32
    %c0_i32_0 = arith.constant 0 : i32
    %c0_i32_1 = arith.constant 0 : i32
    return %c0_i32, %c0_i32_0 : i32, i32
  }
  func.func @transform_4(%arg0: i32) -> (i32, i32) {
    %c0_i32 = arith.constant 0 : i32
    %c0_i32_0 = arith.constant 0 : i32
    %c0_i32_1 = arith.constant 0 : i32
    return %c0_i32, %c0_i32_0 : i32, i32
  }
  func.func @transform_5(%arg0: i32) -> (i32, i32) {
    %c0_i32 = arith.constant 0 : i32
    %c0_i32_0 = arith.constant 0 : i32
    %c0_i32_1 = arith.constant 0 : i32
    return %c0_i32, %c0_i32_0 : i32, i32
  }
  func.func @transform_6(%arg0: i32) -> (i32, i32) {
    %c0_i32 = arith.constant 0 : i32
    %c0_i32_0 = arith.constant 0 : i32
    %c0_i32_1 = arith.constant 0 : i32
    return %c0_i32, %c0_i32_0 : i32, i32
  }
  func.func @transform_7(%arg0: i32) -> (i32, i32) {
    %c0_i32 = arith.constant 0 : i32
    %c0_i32_0 = arith.constant 0 : i32
    %c0_i32_1 = arith.constant 0 : i32
    return %c0_i32, %c0_i32_0 : i32, i32
  }
  func.func @transform_8(%arg0: i32) -> (i32, i32) {
    %c0_i32 = arith.constant 0 : i32
    %c0_i32_0 = arith.constant 0 : i32
    %c0_i32_1 = arith.constant 0 : i32
    return %c0_i32, %c0_i32_0 : i32, i32
  }
  func.func @transform_9(%arg0: i32) -> (i32, i32, i32) {
    %c0_i32 = arith.constant 0 : i32
    %c0_i32_0 = arith.constant 0 : i32
    %c0_i32_1 = arith.constant 0 : i32
    %c0_i32_2 = arith.constant 0 : i32
    return %c0_i32, %c0_i32_0, %c0_i32_1 : i32, i32, i32
  }
  func.func @transform_10(%arg0: i32) -> (i32, i32) {
    %c0_i32 = arith.constant 0 : i32
    %c0_i32_0 = arith.constant 0 : i32
    %c0_i32_1 = arith.constant 0 : i32
    return %c0_i32, %c0_i32_0 : i32, i32
  }
  func.func @transform_11(%arg0: i32) -> (i32, i32) {
    %c0_i32 = arith.constant 0 : i32
    %c0_i32_0 = arith.constant 0 : i32
    %c0_i32_1 = arith.constant 0 : i32
    return %c0_i32, %c0_i32_0 : i32, i32
  }
  func.func @transform_12(%arg0: i32) -> (i32, i32) {
    %c0_i32 = arith.constant 0 : i32
    %c0_i32_0 = arith.constant 0 : i32
    %c0_i32_1 = arith.constant 0 : i32
    return %c0_i32, %c0_i32_0 : i32, i32
  }
  func.func @transform_13(%arg0: i32) -> (i32, i32) {
    %c0_i32 = arith.constant 0 : i32
    %c0_i32_0 = arith.constant 0 : i32
    %c0_i32_1 = arith.constant 0 : i32
    return %c0_i32, %c0_i32_0 : i32, i32
  }
  func.func @transform_14(%arg0: i32) -> (i32, i32) {
    %c0_i32 = arith.constant 0 : i32
    %c0_i32_0 = arith.constant 0 : i32
    %c0_i32_1 = arith.constant 0 : i32
    return %c0_i32, %c0_i32_0 : i32, i32
  }
  func.func @transform_15(%arg0: i32) -> (i32, i32) {
    %c0_i32 = arith.constant 0 : i32
    %c0_i32_0 = arith.constant 0 : i32
    return %arg0, %c0_i32 : i32, i32
  }
}

</mosaic_0001>

<llo_original>
// kernel: lenet_forward.1
$region0: #{lenet_forward.1}
  #allocation0 [shape = 'u32[]', space=smem, size = 0x4, offset = 0x4, fixed_abs, tag = 'smem constant byte address 0x4 - core index']
  #allocation1 [shape = 'u32[144,128]{1,0:T(1,128)}', space=vmem, size = 0x12000, scoped, tag = 'internal scratch']
  #allocation2 [shape = 'f32[28,160]{1,0:T(8,128)}', space=vmem, size = 0x8000, scoped, tag = 'scratch operand']
  #allocation3 [shape = 'f32[10,420]{1,0:T(8,128)}', space=vmem, size = 0x8000, scoped, tag = 'scratch operand']
  #allocation4 [shape = 'f32[5,8,80]{2,1,0:T(8,128)}', space=vmem, size = 0x5000, scoped, tag = 'scratch operand']
  %s0 = inlined_call_operand.vmem [shape: f32[8,32,32], index: 0, kind: input, shape index: {}]
  %s1 = inlined_call_operand.vmem [shape: f32[160,168], index: 1, kind: input, shape index: {}]
  %s2 = inlined_call_operand.vmem [shape: f32[28,168], index: 2, kind: input, shape index: {}]
  %s3 = inlined_call_operand.vmem [shape: f32[14,28], index: 3, kind: input, shape index: {}]
  %s4 = inlined_call_operand.vmem [shape: f32[168,84], index: 4, kind: input, shape index: {}]
  %s5 = inlined_call_operand.vmem [shape: f32[420,160], index: 5, kind: input, shape index: {}]
  %s6 = inlined_call_operand.vmem [shape: f32[10,160], index: 6, kind: input, shape index: {}]
  %s7 = inlined_call_operand.vmem [shape: f32[5,10], index: 7, kind: input, shape index: {}]
  %s8 = inlined_call_operand.vmem [shape: f32[160,80], index: 8, kind: input, shape index: {}]
  %s9 = inlined_call_operand.vmem [shape: f32[5,80,120], index: 9, kind: input, shape index: {}]
  %s10 = inlined_call_operand.vmem [shape: f32[1,120], index: 10, kind: input, shape index: {}]
  %s11 = inlined_call_operand.vmem [shape: f32[120,84], index: 11, kind: input, shape index: {}]
  %s12 = inlined_call_operand.vmem [shape: f32[1,84], index: 12, kind: input, shape index: {}]
  %s13 = inlined_call_operand.vmem [shape: f32[84,128], index: 13, kind: input, shape index: {}]
  %s14 = inlined_call_operand.vmem [shape: f32[1,128], index: 14, kind: input, shape index: {}]
  %s15 = inlined_call_operand.vmem [shape: f32[8,128], index: 15, kind: output, shape index: {}]
  %s16 = sld [smem:[#allocation0]]
  $region70: #{lenet_forward.1} parent=0
    _
  %s18 = ssub.s32 1, %s16
  %s19 = scalar_select 0, %s18, %s16
  // Predicated region
  $region2: #{lenet_forward.1} parent=0 // pred_check
    _
  $region3: #{lenet_forward.1} parent=0 // pred_check_branch
    %21 = sbr.rel (0) target = $region5
  $region4: #{lenet_forward.1} parent=0 // pred_region
    _
  $region5: #{lenet_forward.1} parent=0 // pred_fallthru
    _
  // Predicated region
  $region6: #{lenet_forward.1} parent=0 // pred_check
    _
  $region7: #{lenet_forward.1} parent=0 // pred_check_branch
    %23 = sbr.rel (0) target = $region9
  $region8: #{lenet_forward.1} parent=0 // pred_region
    _
  $region9: #{lenet_forward.1} parent=0 // pred_fallthru
    _
  // Predicated region
  $region10: #{lenet_forward.1} parent=0 // pred_check
    _
  $region11: #{lenet_forward.1} parent=0 // pred_check_branch
    %25 = sbr.rel (0) target = $region13
  $region12: #{lenet_forward.1} parent=0 // pred_region
    _
  $region13: #{lenet_forward.1} parent=0 // pred_fallthru
    _
  // Predicated region
  $region14: #{lenet_forward.1} parent=0 // pred_check
    _
  $region15: #{lenet_forward.1} parent=0 // pred_check_branch
    %27 = sbr.rel (0) target = $region17
  $region16: #{lenet_forward.1} parent=0 // pred_region
    _
  $region17: #{lenet_forward.1} parent=0 // pred_fallthru
    _
  // Predicated region
  $region18: #{lenet_forward.1} parent=0 // pred_check
    _
  $region19: #{lenet_forward.1} parent=0 // pred_check_branch
    %29 = sbr.rel (0) target = $region21
  $region20: #{lenet_forward.1} parent=0 // pred_region
    _
  $region21: #{lenet_forward.1} parent=0 // pred_fallthru
    _
  // Predicated region
  $region22: #{lenet_forward.1} parent=0 // pred_check
    _
  $region23: #{lenet_forward.1} parent=0 // pred_check_branch
    %31 = sbr.rel (0) target = $region25
  $region24: #{lenet_forward.1} parent=0 // pred_region
    _
  $region25: #{lenet_forward.1} parent=0 // pred_fallthru
    _
  // Predicated region
  $region26: #{lenet_forward.1} parent=0 // pred_check
    _
  $region27: #{lenet_forward.1} parent=0 // pred_check_branch
    %33 = sbr.rel (0) target = $region29
  $region28: #{lenet_forward.1} parent=0 // pred_region
    _
  $region29: #{lenet_forward.1} parent=0 // pred_fallthru
    _
  // Predicated region
  $region30: #{lenet_forward.1} parent=0 // pred_check
    _
  $region31: #{lenet_forward.1} parent=0 // pred_check_branch
    %35 = sbr.rel (0) target = $region33
  $region32: #{lenet_forward.1} parent=0 // pred_region
    _
  $region33: #{lenet_forward.1} parent=0 // pred_fallthru
    _
  // Predicated region
  $region34: #{lenet_forward.1} parent=0 // pred_check
    _
  $region35: #{lenet_forward.1} parent=0 // pred_check_branch
    %37 = sbr.rel (0) target = $region37
  $region36: #{lenet_forward.1} parent=0 // pred_region
    _
  $region37: #{lenet_forward.1} parent=0 // pred_fallthru
    _
  // Predicated region
  $region38: #{lenet_forward.1} parent=0 // pred_check
    _
  $region39: #{lenet_forward.1} parent=0 // pred_check_branch
    %39 = sbr.rel (0) target = $region41
  $region40: #{lenet_forward.1} parent=0 // pred_region
    _
  $region41: #{lenet_forward.1} parent=0 // pred_fallthru
    _
  // Predicated region
  $region42: #{lenet_forward.1} parent=0 // pred_check
    _
  $region43: #{lenet_forward.1} parent=0 // pred_check_branch
    %41 = sbr.rel (0) target = $region45
  $region44: #{lenet_forward.1} parent=0 // pred_region
    _
  $region45: #{lenet_forward.1} parent=0 // pred_fallthru
    _
  // Predicated region
  $region46: #{lenet_forward.1} parent=0 // pred_check
    _
  $region47: #{lenet_forward.1} parent=0 // pred_check_branch
    %43 = sbr.rel (0) target = $region49
  $region48: #{lenet_forward.1} parent=0 // pred_region
    _
  $region49: #{lenet_forward.1} parent=0 // pred_fallthru
    _
  // Predicated region
  $region50: #{lenet_forward.1} parent=0 // pred_check
    _
  $region51: #{lenet_forward.1} parent=0 // pred_check_branch
    %45 = sbr.rel (0) target = $region53
  $region52: #{lenet_forward.1} parent=0 // pred_region
    _
  $region53: #{lenet_forward.1} parent=0 // pred_fallthru
    _
  // Predicated region
  $region54: #{lenet_forward.1} parent=0 // pred_check
    _
  $region55: #{lenet_forward.1} parent=0 // pred_check_branch
    %47 = sbr.rel (0) target = $region57
  $region56: #{lenet_forward.1} parent=0 // pred_region
    _
  $region57: #{lenet_forward.1} parent=0 // pred_fallthru
    _
  // Predicated region
  $region58: #{lenet_forward.1} parent=0 // pred_check
    _
  $region59: #{lenet_forward.1} parent=0 // pred_check_branch
    %49 = sbr.rel (0) target = $region61
  $region60: #{lenet_forward.1} parent=0 // pred_region
    _
  $region61: #{lenet_forward.1} parent=0 // pred_fallthru
    _
  %v50 = vld [vmem:[%s0] sm:$0xff]
  %v51 = vld [vmem:[%s0 + $0x8] sm:$0xff]
  %v52 = vld [vmem:[%s0 + $0x10] sm:$0xff]
  %v53 = vld [vmem:[%s0 + $0x18] sm:$0xf]
  %vm54 = vcmask 261120
  %55 = vst.msk [vmem:[#allocation2] sm:$0xff] %vm54, %v50
  %56 = vst.msk [vmem:[#allocation2 + $0x10] sm:$0xff] %vm54, %v51
  %57 = vst.msk [vmem:[#allocation2 + $0x20] sm:$0xff] %vm54, %v52
  %vm58 = vcmask 257024
  %59 = vst.msk [vmem:[#allocation2 + $0x30] sm:$0xf] %vm58, %v53
  %v60 = vld [vmem:[%s0 + $0x1] sm:$0xff]
  %v61 = vld [vmem:[%s0 + $0x9] sm:$0xff]
  %v62 = vld [vmem:[%s0 + $0x11] sm:$0xff]
  %v63 = vld [vmem:[%s0 + $0x19] sm:$0xf]
  %68 = vrot.lane.b32.xlu0 %v60, 32
  %v69 = vpop.permute.xlu0 %68
  %70 = vrot.lane.b32.xlu0 %v61, 32
  %v71 = vpop.permute.xlu0 %70
  %72 = vrot.lane.b32.xlu0 %v62, 32
  %v73 = vpop.permute.xlu0 %72
  %74 = vrot.lane.b32.xlu0 %v63, 32
  %v75 = vpop.permute.xlu0 %74
  %vm80 = vcmask 523520
  %81 = vst.msk [vmem:[#allocation2] sm:$0xff] %vm80, %v69
  %82 = vst.msk [vmem:[#allocation2 + $0x10] sm:$0xff] %vm80, %v71
  %83 = vst.msk [vmem:[#allocation2 + $0x20] sm:$0xff] %vm80, %v73
  %vm84 = vcmask 519424
  %85 = vst.msk [vmem:[#allocation2 + $0x30] sm:$0xf] %vm84, %v75
  %v86 = vld [vmem:[%s0 + $0x2] sm:$0xff]
  %v87 = vld [vmem:[%s0 + $0xa] sm:$0xff]
  %v88 = vld [vmem:[%s0 + $0x12] sm:$0xff]
  %v89 = vld [vmem:[%s0 + $0x1a] sm:$0xf]
  %94 = vrot.lane.b32.xlu0 %v86, 64
  %v95 = vpop.permute.xlu0 %94
  %96 = vrot.lane.b32.xlu0 %v87, 64
  %v97 = vpop.permute.xlu0 %96
  %98 = vrot.lane.b32.xlu0 %v88, 64
  %v99 = vpop.permute.xlu0 %98
  %100 = vrot.lane.b32.xlu0 %v89, 64
  %v101 = vpop.permute.xlu0 %100
  %vm106 = vcmask 785920
  %107 = vst.msk [vmem:[#allocation2] sm:$0xff] %vm106, %v95
  %108 = vst.msk [vmem:[#allocation2 + $0x10] sm:$0xff] %vm106, %v97
  %109 = vst.msk [vmem:[#allocation2 + $0x20] sm:$0xff] %vm106, %v99
  %vm110 = vcmask 781824
  %111 = vst.msk [vmem:[#allocation2 + $0x30] sm:$0xf] %vm110, %v101
  %v112 = vld [vmem:[%s0 + $0x3] sm:$0xff]
  %v113 = vld [vmem:[%s0 + $0xb] sm:$0xff]
  %v114 = vld [vmem:[%s0 + $0x13] sm:$0xff]
  %v115 = vld [vmem:[%s0 + $0x1b] sm:$0xf]
  %120 = vrot.lane.b32.xlu0 %v112, 96
  %v121 = vpop.permute.xlu0 %120
  %122 = vrot.lane.b32.xlu0 %v113, 96
  %v123 = vpop.permute.xlu0 %122
  %124 = vrot.lane.b32.xlu0 %v114, 96
  %v125 = vpop.permute.xlu0 %124
  %126 = vrot.lane.b32.xlu0 %v115, 96
  %v127 = vpop.permute.xlu0 %126
  %vm132 = vcmask 1048320
  %133 = vst.msk [vmem:[#allocation2] sm:$0xff] %vm132, %v121
  %134 = vst.msk [vmem:[#allocation2 + $0x10] sm:$0xff] %vm132, %v123
  %135 = vst.msk [vmem:[#allocation2 + $0x20] sm:$0xff] %vm132, %v125
  %vm136 = vcmask 1044224
  %137 = vst.msk [vmem:[#allocation2 + $0x30] sm:$0xf] %vm136, %v127
  %v138 = vld [vmem:[%s0 + $0x4] sm:$0xff]
  %v139 = vld [vmem:[%s0 + $0xc] sm:$0xff]
  %v140 = vld [vmem:[%s0 + $0x14] sm:$0xff]
  %v141 = vld [vmem:[%s0 + $0x1c] sm:$0xf]
  %142 = vst.msk [vmem:[#allocation2 + $0x8] sm:$0xff] %vm54, %v138
  %143 = vst.msk [vmem:[#allocation2 + $0x18] sm:$0xff] %vm54, %v139
  %144 = vst.msk [vmem:[#allocation2 + $0x28] sm:$0xff] %vm54, %v140
  %145 = vst.msk [vmem:[#allocation2 + $0x38] sm:$0xf] %vm58, %v141
  %v146 = vld [vmem:[#allocation2] sm:$0xff]
  %v147 = vld [vmem:[#allocation2 + $0x8] sm:$0xff]
  %v148 = vld [vmem:[#allocation2 + $0x10] sm:$0xff]
  %v149 = vld [vmem:[#allocation2 + $0x18] sm:$0xff]
  %v150 = vld [vmem:[#allocation2 + $0x20] sm:$0xff]
  %v151 = vld [vmem:[#allocation2 + $0x28] sm:$0xff]
  %v152 = vld [vmem:[#allocation2 + $0x30] sm:$0xf]
  %v153 = vld [vmem:[#allocation2 + $0x38] sm:$0xf]
  %v154 = vld [vmem:[%s1] sm:$0xff]
  %v155 = vld [vmem:[%s1 + $0x8] sm:$0xff]
  %v156 = vld [vmem:[%s1 + $0x10] sm:$0xff]
  %v157 = vld [vmem:[%s1 + $0x18] sm:$0xff]
  %v158 = vld [vmem:[%s1 + $0x20] sm:$0xff]
  %v159 = vld [vmem:[%s1 + $0x28] sm:$0xff]
  %v160 = vld [vmem:[%s1 + $0x30] sm:$0xff]
  %v161 = vld [vmem:[%s1 + $0x38] sm:$0xff]
  %v162 = vld [vmem:[%s1 + $0x40] sm:$0xff]
  %v163 = vld [vmem:[%s1 + $0x48] sm:$0xff]
  %v164 = vld [vmem:[%s1 + $0x50] sm:$0xff]
  %v165 = vld [vmem:[%s1 + $0x58] sm:$0xff]
  %v166 = vld [vmem:[%s1 + $0x60] sm:$0xff]
  %v167 = vld [vmem:[%s1 + $0x68] sm:$0xff]
  %v168 = vld [vmem:[%s1 + $0x70] sm:$0xff]
  %v169 = vld [vmem:[%s1 + $0x78] sm:$0xff]
  %v170 = vld [vmem:[%s1 + $0x80] sm:$0xff]
  %v171 = vld [vmem:[%s1 + $0x88] sm:$0xff]
  %v172 = vld [vmem:[%s1 + $0x90] sm:$0xff]
  %v173 = vld [vmem:[%s1 + $0x98] sm:$0xff]
  %v174 = vld [vmem:[%s1 + $0xa0] sm:$0xff]
  %v175 = vld [vmem:[%s1 + $0xa8] sm:$0xff]
  %v176 = vld [vmem:[%s1 + $0xb0] sm:$0xff]
  %v177 = vld [vmem:[%s1 + $0xb8] sm:$0xff]
  %v178 = vld [vmem:[%s1 + $0xc0] sm:$0xff]
  %v179 = vld [vmem:[%s1 + $0xc8] sm:$0xff]
  %v180 = vld [vmem:[%s1 + $0xd0] sm:$0xff]
  %v181 = vld [vmem:[%s1 + $0xd8] sm:$0xff]
  %v182 = vld [vmem:[%s1 + $0xe0] sm:$0xff]
  %v183 = vld [vmem:[%s1 + $0xe8] sm:$0xff]
  %v184 = vld [vmem:[%s1 + $0xf0] sm:$0xff]
  %v185 = vld [vmem:[%s1 + $0xf8] sm:$0xff]
  %v186 = vld [vmem:[%s1 + $0x100] sm:$0xff]
  %v187 = vld [vmem:[%s1 + $0x108] sm:$0xff]
  %v188 = vld [vmem:[%s1 + $0x110] sm:$0xff]
  %v189 = vld [vmem:[%s1 + $0x118] sm:$0xff]
  %v190 = vld [vmem:[%s1 + $0x120] sm:$0xff]
  %v191 = vld [vmem:[%s1 + $0x128] sm:$0xff]
  %v192 = vld [vmem:[%s1 + $0x130] sm:$0xff]
  %v193 = vld [vmem:[%s1 + $0x138] sm:$0xff]
  %v194 = vld [vmem:[%s2] sm:$0xff]
  %v195 = vld [vmem:[%s2 + $0x8] sm:$0xff]
  %v196 = vld [vmem:[%s2 + $0x10] sm:$0xff]
  %v197 = vld [vmem:[%s2 + $0x18] sm:$0xff]
  %v198 = vld [vmem:[%s2 + $0x20] sm:$0xff]
  %v199 = vld [vmem:[%s2 + $0x28] sm:$0xff]
  %v200 = vld [vmem:[%s2 + $0x30] sm:$0xf]
  %v201 = vld [vmem:[%s2 + $0x38] sm:$0xf]
  %v203 = vsel %vm54, %v147, 0
  %v206 = vsel %vm54, %v149, 0
  %v209 = vsel %vm54, %v151, 0
  %v212 = vsel %vm54, %v153, 0
  %214 = vmatprep.subr.mxu0 %v155
  %215 = vmatpush1.msra.mxu0 %v154
  %216 = vmatprep.subr.mxu0 %v157
  %217 = vmatpush1.msra.mxu0 %v156
  %218 = vmatprep.subr.mxu0 %v159
  %219 = vmatpush1.msra.mxu0 %v158
  %220 = vmatprep.subr.mxu0 %v161
  %221 = vmatpush1.msra.mxu0 %v160
  %222 = vmatprep.subr.mxu0 %v163
  %223 = vmatpush1.msra.mxu0 %v162
  %224 = vmatprep.subr.mxu0 %v165
  %225 = vmatpush1.msra.mxu0 %v164
  %226 = vmatprep.subr.mxu0 %v167
  %227 = vmatpush1.msra.mxu0 %v166
  %228 = vmatprep.subr.mxu0 %v169
  %229 = vmatpush1.msra.mxu0 %v168
  %230 = vmatprep.subr.mxu0 %v171
  %231 = vmatpush1.msra.mxu0 %v170
  %232 = vmatprep.subr.mxu0 %v173
  %233 = vmatpush1.msra.mxu0 %v172
  %234 = vmatprep.subr.mxu0 %v175
  %235 = vmatpush1.msra.mxu0 %v174
  %236 = vmatprep.subr.mxu0 %v177
  %237 = vmatpush1.msra.mxu0 %v176
  %238 = vmatprep.subr.mxu0 %v179
  %239 = vmatpush1.msra.mxu0 %v178
  %240 = vmatprep.subr.mxu0 %v181
  %241 = vmatpush1.msra.mxu0 %v180
  %242 = vmatprep.subr.mxu0 %v183
  %243 = vmatpush1.msra.mxu0 %v182
  %244 = vmatprep.subr.mxu0 %v185
  %245 = vmatpush1.msra.mxu0 %v184
  %246 = vmatprep.subr.mxu0 %v187
  %247 = vmatpush1.msra.mxu0 %v186
  %248 = vmatprep.subr.mxu0 %v189
  %249 = vmatpush1.msra.mxu0 %v188
  %250 = vmatprep.subr.mxu0 %v191
  %251 = vmatpush1.msra.mxu0 %v190
  %252 = vmatprep.subr.mxu0 %v193
  %253 = vmatpush1.msra.mxu0 %v192
  %254 = vmatprep.subr.mxu0 0.0
  %255 = vmatpush1.msra.mxu0 0.0
  %256 = vmatprep.subr.mxu0 0.0
  %257 = vmatpush1.msra.mxu0 0.0
  %258 = vmatprep.subr.mxu0 0.0
  %259 = vmatpush1.msra.mxu0 0.0
  %260 = vmatprep.subr.mxu0 0.0
  %261 = vmatpush1.msra.mxu0 0.0
  %262 = vmatprep.subr.mxu0 0.0
  %263 = vmatpush1.msra.mxu0 0.0
  %264 = vmatprep.subr.mxu0 0.0
  %265 = vmatpush1.msra.mxu0 0.0
  %266 = vmatprep.subr.mxu0 0.0
  %267 = vmatpush1.msra.mxu0 0.0
  %268 = vmatprep.subr.mxu0 0.0
  %269 = vmatpush1.msra.mxu0 0.0
  %270 = vmatprep.subr.mxu0 0.0
  %271 = vmatpush1.msra.mxu0 0.0
  %272 = vmatprep.subr.mxu0 0.0
  %273 = vmatpush1.msra.mxu0 0.0
  %274 = vmatprep.subr.mxu0 0.0
  %275 = vmatpush1.msra.mxu0 0.0
  %276 = vmatprep.subr.mxu0 0.0
  %277 = vmatpush1.msra.mxu0 0.0
  %278 = vmatprep.mubr.f32.mxu0 %v203
  %279 = vmatmul.mubr.f32.gmra.mrb[0].mxu0 %v146
  %v280 = vpop.f32.mrb[0].mxu0
  %v281 = vadd.f32 %v194, %v280
  %v282 = vpop.f32.mrb[0].mxu0
  %v283 = vadd.f32 %v195, %v282
  %284 = vmatprep.mubr.f32.mxu0 %v206
  %285 = vmatmul.mubr.f32.gmra.mrb[0].mxu0 %v148
  %v286 = vpop.f32.mrb[0].mxu0
  %v287 = vadd.f32 %v196, %v286
  %v288 = vpop.f32.mrb[0].mxu0
  %v289 = vadd.f32 %v197, %v288
  %290 = vmatprep.mubr.f32.mxu0 %v209
  %291 = vmatmul.mubr.f32.gmra.mrb[0].mxu0 %v150
  %v292 = vpop.f32.mrb[0].mxu0
  %v293 = vadd.f32 %v198, %v292
  %v294 = vpop.f32.mrb[0].mxu0
  %v295 = vadd.f32 %v199, %v294
  %296 = vmatprep.mubr.f32.mxu0 %v212
  %297 = vmatmul.mubr.f32.gmra.mrb[0].mxu0 %v152
  %v298 = vpop.f32.mrb[0].mxu0
  %v299 = vadd.f32 %v200, %v298
  %v300 = vpop.f32.mrb[0].mxu0
  %v301 = vadd.f32 %v201, %v300
  %302 = vdwg.mxu0
  %v303 = vxor.u32 %v281, 2147483648
  %v304 = vxor.u32 %v283, 2147483648
  %v305 = vxor.u32 %v287, 2147483648
  %v306 = vxor.u32 %v289, 2147483648
  %v307 = vxor.u32 %v293, 2147483648
  %v308 = vxor.u32 %v295, 2147483648
  %v309 = vxor.u32 %v299, 2147483648
  %v310 = vxor.u32 %v301, 2147483648
  %v311 = vmul.f32 %v303, 1.442695
  %v312 = vpow.pop %v311
  %v313 = vmul.f32 %v304, 1.442695
  %v314 = vpow.pop %v313
  %v315 = vmul.f32 %v305, 1.442695
  %v316 = vpow.pop %v315
  %v317 = vmul.f32 %v306, 1.442695
  %v318 = vpow.pop %v317
  %v319 = vmul.f32 %v307, 1.442695
  %v320 = vpow.pop %v319
  %v321 = vmul.f32 %v308, 1.442695
  %v322 = vpow.pop %v321
  %v323 = vmul.f32 %v309, 1.442695
  %v324 = vpow.pop %v323
  %v325 = vmul.f32 %v310, 1.442695
  %v326 = vpow.pop %v325
  %v327 = vadd.f32 %v312, 1.0
  %v328 = vadd.f32 %v314, 1.0
  %v329 = vadd.f32 %v316, 1.0
  %v330 = vadd.f32 %v318, 1.0
  %v331 = vadd.f32 %v320, 1.0
  %v332 = vadd.f32 %v322, 1.0
  %v333 = vadd.f32 %v324, 1.0
  %v334 = vadd.f32 %v326, 1.0
  %v335 = vrcp.pop %v327
  %v336 = vmul.f32 1.0, %v335
  %v337 = vrcp.pop %v328
  %v338 = vmul.f32 1.0, %v337
  %v339 = vrcp.pop %v329
  %v340 = vmul.f32 1.0, %v339
  %v341 = vrcp.pop %v330
  %v342 = vmul.f32 1.0, %v341
  %v343 = vrcp.pop %v331
  %v344 = vmul.f32 1.0, %v343
  %v345 = vrcp.pop %v332
  %v346 = vmul.f32 1.0, %v345
  %v347 = vrcp.pop %v333
  %v348 = vmul.f32 1.0, %v347
  %v349 = vrcp.pop %v334
  %v350 = vmul.f32 1.0, %v349
  %v351 = vld [vmem:[%s3] sm:$0xff]
  %v352 = vld [vmem:[%s3 + $0x8] sm:$0x3f]
  %vm353 = vcmask 228352
  %v355 = vsel %vm353, %v351, 0
  %v358 = vsel %vm353, %v352, 0
  %vm360 = vcmask 1043456
  %v362 = vsel %vm360, %v348, 0
  %v365 = vsel %vm360, %v350, 0
  %367 = vmatprep.subr.mxu0 %v338
  %368 = vmatpush1.msra.mxu0 %v336
  %369 = vmatprep.subr.mxu0 %v342
  %370 = vmatpush1.msra.mxu0 %v340
  %371 = vmatprep.subr.mxu0 %v346
  %372 = vmatpush1.msra.mxu0 %v344
  %373 = vmatprep.subr.mxu0 %v365
  %374 = vmatpush1.msra.mxu0 %v362
  %375 = vmatprep.subr.mxu0 0.0
  %376 = vmatpush1.msra.mxu0 0.0
  %377 = vmatprep.subr.mxu0 0.0
  %378 = vmatpush1.msra.mxu0 0.0
  %379 = vmatprep.subr.mxu0 0.0
  %380 = vmatpush1.msra.mxu0 0.0
  %381 = vmatprep.subr.mxu0 0.0
  %382 = vmatpush1.msra.mxu0 0.0
  %383 = vmatprep.subr.mxu0 0.0
  %384 = vmatpush1.msra.mxu0 0.0
  %385 = vmatprep.subr.mxu0 0.0
  %386 = vmatpush1.msra.mxu0 0.0
  %387 = vmatprep.subr.mxu0 0.0
  %388 = vmatpush1.msra.mxu0 0.0
  %389 = vmatprep.subr.mxu0 0.0
  %390 = vmatpush1.msra.mxu0 0.0
  %391 = vmatprep.subr.mxu0 0.0
  %392 = vmatpush1.msra.mxu0 0.0
  %393 = vmatprep.subr.mxu0 0.0
  %394 = vmatpush1.msra.mxu0 0.0
  %395 = vmatprep.subr.mxu0 0.0
  %396 = vmatpush1.msra.mxu0 0.0
  %397 = vmatprep.subr.mxu0 0.0
  %398 = vmatpush1.msra.mxu0 0.0
  %399 = vmatprep.subr.mxu0 0.0
  %400 = vmatpush1.msra.mxu0 0.0
  %401 = vmatprep.subr.mxu0 0.0
  %402 = vmatpush1.msra.mxu0 0.0
  %403 = vmatprep.subr.mxu0 0.0
  %404 = vmatpush1.msra.mxu0 0.0
  %405 = vmatprep.subr.mxu0 0.0
  %406 = vmatpush1.msra.mxu0 0.0
  %407 = vmatprep.subr.mxu0 0.0
  %408 = vmatpush1.msra.mxu0 0.0
  %409 = vmatprep.subr.mxu0 0.0
  %410 = vmatpush1.msra.mxu0 0.0
  %411 = vmatprep.subr.mxu0 0.0
  %412 = vmatpush1.msra.mxu0 0.0
  %413 = vmatprep.subr.mxu0 0.0
  %414 = vmatpush1.msra.mxu0 0.0
  %415 = vmatprep.subr.mxu0 0.0
  %416 = vmatpush1.msra.mxu0 0.0
  %417 = vmatprep.subr.mxu0 0.0
  %418 = vmatpush1.msra.mxu0 0.0
  %419 = vmatprep.subr.mxu0 0.0
  %420 = vmatpush1.msra.mxu0 0.0
  %421 = vmatprep.subr.mxu0 0.0
  %422 = vmatpush1.msra.mxu0 0.0
  %423 = vmatprep.subr.mxu0 0.0
  %424 = vmatpush1.msra.mxu0 0.0
  %425 = vmatprep.subr.mxu0 0.0
  %426 = vmatpush1.msra.mxu0 0.0
  %427 = vmatprep.subr.mxu0 0.0
  %428 = vmatpush1.msra.mxu0 0.0
  %429 = vmatprep.subr.mxu0 0.0
  %430 = vmatpush1.msra.mxu0 0.0
  %431 = vmatprep.mubr.f32.mxu0 0.0
  %432 = vmatmul.mubr.f32.gmra.mrb[0].mxu0 %v355
  %v433 = vpop.f32.mrb[0].mxu0
  %v434 = vadd.f32 0.0, %v433
  %v435 = vpop.f32.mrb[0].mxu0
  %v436 = vadd.f32 0.0, %v435
  %437 = vmatprep.mubr.f32.mxu0 0.0
  %438 = vmatmul.mubr.f32.gmra.mrb[0].mxu0 %v358
  %v439 = vpop.f32.mrb[0].mxu0
  %v440 = vadd.f32 0.0, %v439
  %v441 = vpop.f32.mrb[0].mxu0
  %v442 = vadd.f32 0.0, %v441
  %443 = vdwg.mxu0
  %v444 = vld [vmem:[%s4] sm:$0xff]
  %v445 = vld [vmem:[%s4 + $0x8] sm:$0xff]
  %v446 = vld [vmem:[%s4 + $0x10] sm:$0xff]
  %v447 = vld [vmem:[%s4 + $0x18] sm:$0xff]
  %v448 = vld [vmem:[%s4 + $0x20] sm:$0xff]
  %v449 = vld [vmem:[%s4 + $0x28] sm:$0xff]
  %v450 = vld [vmem:[%s4 + $0x30] sm:$0xff]
  %v451 = vld [vmem:[%s4 + $0x38] sm:$0xff]
  %v452 = vld [vmem:[%s4 + $0x40] sm:$0xff]
  %v453 = vld [vmem:[%s4 + $0x48] sm:$0xff]
  %v454 = vld [vmem:[%s4 + $0x50] sm:$0xff]
  %v455 = vld [vmem:[%s4 + $0x58] sm:$0xff]
  %v456 = vld [vmem:[%s4 + $0x60] sm:$0xff]
  %v457 = vld [vmem:[%s4 + $0x68] sm:$0xff]
  %v458 = vld [vmem:[%s4 + $0x70] sm:$0xff]
  %v459 = vld [vmem:[%s4 + $0x78] sm:$0xff]
  %v460 = vld [vmem:[%s4 + $0x80] sm:$0xff]
  %v461 = vld [vmem:[%s4 + $0x88] sm:$0xff]
  %v462 = vld [vmem:[%s4 + $0x90] sm:$0xff]
  %v463 = vld [vmem:[%s4 + $0x98] sm:$0xff]
  %v464 = vld [vmem:[%s4 + $0xa0] sm:$0xff]
  %vm465 = vcmask 326656
  %v467 = vsel %vm465, %v436, 0
  %v470 = vsel %vm465, %v442, 0
  %472 = vmatprep.subr.mxu0 0.0
  %473 = vmatpush1.msra.mxu0 %v444
  %474 = vmatprep.subr.mxu0 0.0
  %475 = vmatpush1.msra.mxu0 %v445
  %476 = vmatprep.subr.mxu0 0.0
  %477 = vmatpush1.msra.mxu0 %v446
  %478 = vmatprep.subr.mxu0 0.0
  %479 = vmatpush1.msra.mxu0 %v447
  %480 = vmatprep.subr.mxu0 0.0
  %481 = vmatpush1.msra.mxu0 %v448
  %482 = vmatprep.subr.mxu0 0.0
  %483 = vmatpush1.msra.mxu0 %v449
  %484 = vmatprep.subr.mxu0 0.0
  %485 = vmatpush1.msra.mxu0 %v450
  %486 = vmatprep.subr.mxu0 0.0
  %487 = vmatpush1.msra.mxu0 %v451
  %488 = vmatprep.subr.mxu0 0.0
  %489 = vmatpush1.msra.mxu0 %v452
  %490 = vmatprep.subr.mxu0 0.0
  %491 = vmatpush1.msra.mxu0 %v453
  %492 = vmatprep.subr.mxu0 0.0
  %493 = vmatpush1.msra.mxu0 %v454
  %494 = vmatprep.subr.mxu0 0.0
  %495 = vmatpush1.msra.mxu0 %v455
  %496 = vmatprep.subr.mxu0 0.0
  %497 = vmatpush1.msra.mxu0 %v456
  %498 = vmatprep.subr.mxu0 0.0
  %499 = vmatpush1.msra.mxu0 %v457
  %500 = vmatprep.subr.mxu0 0.0
  %501 = vmatpush1.msra.mxu0 %v458
  %502 = vmatprep.subr.mxu0 0.0
  %503 = vmatpush1.msra.mxu0 %v459
  %504 = vmatprep.subr.mxu0 0.0
  %505 = vmatpush1.msra.mxu0 %v460
  %506 = vmatprep.subr.mxu0 0.0
  %507 = vmatpush1.msra.mxu0 %v461
  %508 = vmatprep.subr.mxu0 0.0
  %509 = vmatpush1.msra.mxu0 %v462
  %510 = vmatprep.subr.mxu0 0.0
  %511 = vmatpush1.msra.mxu0 %v463
  %512 = vmatprep.subr.mxu0 0.0
  %513 = vmatpush1.msra.mxu0 %v464
  %514 = vmatprep.subr.mxu0 0.0
  %515 = vmatpush1.msra.mxu0 0.0
  %516 = vmatprep.subr.mxu0 0.0
  %517 = vmatpush1.msra.mxu0 0.0
  %518 = vmatprep.subr.mxu0 0.0
  %519 = vmatpush1.msra.mxu0 0.0
  %520 = vmatprep.subr.mxu0 0.0
  %521 = vmatpush1.msra.mxu0 0.0
  %522 = vmatprep.subr.mxu0 0.0
  %523 = vmatpush1.msra.mxu0 0.0
  %524 = vmatprep.subr.mxu0 0.0
  %525 = vmatpush1.msra.mxu0 0.0
  %526 = vmatprep.subr.mxu0 0.0
  %527 = vmatpush1.msra.mxu0 0.0
  %528 = vmatprep.subr.mxu0 0.0
  %529 = vmatpush1.msra.mxu0 0.0
  %530 = vmatprep.subr.mxu0 0.0
  %531 = vmatpush1.msra.mxu0 0.0
  %532 = vmatprep.subr.mxu0 0.0
  %533 = vmatpush1.msra.mxu0 0.0
  %534 = vmatprep.subr.mxu0 0.0
  %535 = vmatpush1.msra.mxu0 0.0
  %536 = vmatprep.mubr.f32.mxu0 %v467
  %537 = vmatmul.mubr.f32.gmra.mrb[0].mxu0 %v434
  %v538 = vpop.f32.mrb[0].mxu0
  %v539 = vadd.f32 0.0, %v538
  %v540 = vpop.f32.mrb[0].mxu0
  %541 = vmatprep.mubr.f32.mxu0 %v470
  %542 = vmatmul.mubr.f32.gmra.mrb[0].mxu0 %v440
  %v543 = vpop.f32.mrb[0].mxu0
  %v544 = vadd.f32 0.0, %v543
  %v545 = vpop.f32.mrb[0].mxu0
  %546 = vdwg.mxu0
  %vm547 = vcmask 687104
  %548 = vst.msk [vmem:[#allocation3] sm:$0xff] %vm547, %v539
  %vm549 = vcmask 680960
  %550 = vst.msk [vmem:[#allocation3 + $0x20] sm:$0x3] %vm549, %v544
  %vm553 = vcmask 1046528
  %v554 = vrot.slane %v539, 1
  %v555 = vrot.slane %v544, 1
  %v556 = vsel %vm553, %v554, %v555
  %557 = vrot.lane.b32.xlu0 %v556, 84
  %v558 = vpop.permute.xlu0 %557
  %559 = vrot.lane.b32.xlu0 %v555, 84
  %v560 = vpop.permute.xlu0 %559
  %vm563 = vcmask 1048224
  %564 = vst.msk [vmem:[#allocation3] sm:$0xff] %vm563, %v558
  %565 = vst.msk [vmem:[#allocation3 + $0x8] sm:$0xff] %vm465, %v558
  %vm566 = vcmask 1042080
  %567 = vst.msk [vmem:[#allocation3 + $0x20] sm:$0x3] %vm566, %v560
  %vm568 = vcmask 320512
  %569 = vst.msk [vmem:[#allocation3 + $0x28] sm:$0x3] %vm568, %v560
  %vm570 = vcmask 1045504
  %v571 = vrot.slane %v539, 2
  %v572 = vrot.slane %v544, 2
  %v573 = vsel %vm570, %v571, %v572
  %574 = vrot.lane.b32.xlu0 %v573, 40
  %v575 = vpop.permute.xlu0 %574
  %576 = vrot.lane.b32.xlu0 %v572, 40
  %v577 = vpop.permute.xlu0 %576
  %vm580 = vcmask 1015104
  %581 = vst.msk [vmem:[#allocation3 + $0x8] sm:$0xff] %vm580, %v575
  %vm582 = vcmask 1008960
  %583 = vst.msk [vmem:[#allocation3 + $0x28] sm:$0x3] %vm582, %v577
  %vm584 = vcmask 1044480
  %v585 = vrot.slane %v539, 3
  %v586 = vrot.slane %v544, 3
  %v587 = vsel %vm584, %v585, %v586
  %588 = vrot.lane.b32.xlu0 %v587, 124
  %v589 = vpop.permute.xlu0 %588
  %590 = vrot.lane.b32.xlu0 %v586, 124
  %v591 = vpop.permute.xlu0 %590
  %vm594 = vcmask 1048544
  %595 = vst.msk [vmem:[#allocation3 + $0x8] sm:$0xff] %vm594, %v589
  %vm596 = vcmask 654336
  %597 = vst.msk [vmem:[#allocation3 + $0x10] sm:$0xff] %vm596, %v589
  %vm598 = vcmask 1042400
  %599 = vst.msk [vmem:[#allocation3 + $0x28] sm:$0x3] %vm598, %v591
  %vm600 = vcmask 648192
  %601 = vst.msk [vmem:[#allocation3 + $0x30] sm:$0x3] %vm600, %v591
  %v602 = vrot.slane %v539, 4
  %v603 = vrot.slane %v544, 4
  %v604 = vsel %vm360, %v602, %v603
  %605 = vrot.lane.b32.xlu0 %v604, 80
  %v606 = vpop.permute.xlu0 %605
  %607 = vrot.lane.b32.xlu0 %v603, 80
  %v608 = vpop.permute.xlu0 %607
  %vm611 = vcmask 1048192
  %612 = vst.msk [vmem:[#allocation3 + $0x10] sm:$0xff] %vm611, %v606
  %vm613 = vcmask 293888
  %614 = vst.msk [vmem:[#allocation3 + $0x18] sm:$0xff] %vm613, %v606
  %vm615 = vcmask 1042048
  %616 = vst.msk [vmem:[#allocation3 + $0x30] sm:$0x3] %vm615, %v608
  %vm617 = vcmask 287744
  %618 = vst.msk [vmem:[#allocation3 + $0x38] sm:$0x3] %vm617, %v608
  %v619 = vld [vmem:[#allocation3] sm:$0xff]
  %v620 = vld [vmem:[#allocation3 + $0x8] sm:$0xff]
  %v621 = vld [vmem:[#allocation3 + $0x10] sm:$0xff]
  %v622 = vld [vmem:[#allocation3 + $0x18] sm:$0xff]
  %v623 = vld [vmem:[#allocation3 + $0x20] sm:$0x3]
  %v624 = vld [vmem:[#allocation3 + $0x28] sm:$0x3]
  %v625 = vld [vmem:[#allocation3 + $0x30] sm:$0x3]
  %v626 = vld [vmem:[#allocation3 + $0x38] sm:$0x3]
  %v627 = vld [vmem:[%s5] sm:$0xff]
  %v628 = vld [vmem:[%s5 + $0x8] sm:$0xff]
  %v629 = vld [vmem:[%s5 + $0x10] sm:$0xff]
  %v630 = vld [vmem:[%s5 + $0x18] sm:$0xff]
  %v631 = vld [vmem:[%s5 + $0x20] sm:$0xff]
  %v632 = vld [vmem:[%s5 + $0x28] sm:$0xff]
  %v633 = vld [vmem:[%s5 + $0x30] sm:$0xff]
  %v634 = vld [vmem:[%s5 + $0x38] sm:$0xff]
  %v635 = vld [vmem:[%s5 + $0x40] sm:$0xff]
  %v636 = vld [vmem:[%s5 + $0x48] sm:$0xff]
  %v637 = vld [vmem:[%s5 + $0x50] sm:$0xff]
  %v638 = vld [vmem:[%s5 + $0x58] sm:$0xff]
  %v639 = vld [vmem:[%s5 + $0x60] sm:$0xff]
  %v640 = vld [vmem:[%s5 + $0x68] sm:$0xff]
  %v641 = vld [vmem:[%s5 + $0x70] sm:$0xff]
  %v642 = vld [vmem:[%s5 + $0x78] sm:$0xff]
  %v643 = vld [vmem:[%s5 + $0x80] sm:$0xff]
  %v644 = vld [vmem:[%s5 + $0x88] sm:$0xff]
  %v645 = vld [vmem:[%s5 + $0x90] sm:$0xff]
  %v646 = vld [vmem:[%s5 + $0x98] sm:$0xff]
  %v647 = vld [vmem:[%s5 + $0xa0] sm:$0xff]
  %v648 = vld [vmem:[%s5 + $0xa8] sm:$0xff]
  %v649 = vld [vmem:[%s5 + $0xb0] sm:$0xff]
  %v650 = vld [vmem:[%s5 + $0xb8] sm:$0xff]
  %v651 = vld [vmem:[%s5 + $0xc0] sm:$0xff]
  %v652 = vld [vmem:[%s5 + $0xc8] sm:$0xff]
  %v653 = vld [vmem:[%s5 + $0xd0] sm:$0xff]
  %v654 = vld [vmem:[%s5 + $0xd8] sm:$0xff]
  %v655 = vld [vmem:[%s5 + $0xe0] sm:$0xff]
  %v656 = vld [vmem:[%s5 + $0xe8] sm:$0xff]
  %v657 = vld [vmem:[%s5 + $0xf0] sm:$0xff]
  %v658 = vld [vmem:[%s5 + $0xf8] sm:$0xff]
  %v659 = vld [vmem:[%s5 + $0x100] sm:$0xff]
  %v660 = vld [vmem:[%s5 + $0x108] sm:$0xff]
  %v661 = vld [vmem:[%s5 + $0x110] sm:$0xff]
  %v662 = vld [vmem:[%s5 + $0x118] sm:$0xff]
  %v663 = vld [vmem:[%s5 + $0x120] sm:$0xff]
  %v664 = vld [vmem:[%s5 + $0x128] sm:$0xff]
  %v665 = vld [vmem:[%s5 + $0x130] sm:$0xff]
  %v666 = vld [vmem:[%s5 + $0x138] sm:$0xff]
  %v667 = vld [vmem:[%s5 + $0x140] sm:$0xff]
  %v668 = vld [vmem:[%s5 + $0x148] sm:$0xff]
  %v669 = vld [vmem:[%s5 + $0x150] sm:$0xff]
  %v670 = vld [vmem:[%s5 + $0x158] sm:$0xff]
  %v671 = vld [vmem:[%s5 + $0x160] sm:$0xff]
  %v672 = vld [vmem:[%s5 + $0x168] sm:$0xff]
  %v673 = vld [vmem:[%s5 + $0x170] sm:$0xff]
  %v674 = vld [vmem:[%s5 + $0x178] sm:$0xff]
  %v675 = vld [vmem:[%s5 + $0x180] sm:$0xff]
  %v676 = vld [vmem:[%s5 + $0x188] sm:$0xff]
  %v677 = vld [vmem:[%s5 + $0x190] sm:$0xff]
  %v678 = vld [vmem:[%s5 + $0x198] sm:$0xff]
  %v679 = vld [vmem:[%s5 + $0x1a0] sm:$0xff]
  %v680 = vld [vmem:[%s5 + $0x1a8] sm:$0xff]
  %v681 = vld [vmem:[%s5 + $0x1b0] sm:$0xff]
  %v682 = vld [vmem:[%s5 + $0x1b8] sm:$0xff]
  %v683 = vld [vmem:[%s5 + $0x1c0] sm:$0xff]
  %v684 = vld [vmem:[%s5 + $0x1c8] sm:$0xff]
  %v685 = vld [vmem:[%s5 + $0x1d0] sm:$0xff]
  %v686 = vld [vmem:[%s5 + $0x1d8] sm:$0xff]
  %v687 = vld [vmem:[%s5 + $0x1e0] sm:$0xff]
  %v688 = vld [vmem:[%s5 + $0x1e8] sm:$0xff]
  %v689 = vld [vmem:[%s5 + $0x1f0] sm:$0xff]
  %v690 = vld [vmem:[%s5 + $0x1f8] sm:$0xff]
  %v691 = vld [vmem:[%s5 + $0x200] sm:$0xff]
  %v692 = vld [vmem:[%s5 + $0x208] sm:$0xff]
  %v693 = vld [vmem:[%s5 + $0x210] sm:$0xff]
  %v694 = vld [vmem:[%s5 + $0x218] sm:$0xff]
  %v695 = vld [vmem:[%s5 + $0x220] sm:$0xff]
  %v696 = vld [vmem:[%s5 + $0x228] sm:$0xff]
  %v697 = vld [vmem:[%s5 + $0x230] sm:$0xff]
  %v698 = vld [vmem:[%s5 + $0x238] sm:$0xff]
  %v699 = vld [vmem:[%s5 + $0x240] sm:$0xff]
  %v700 = vld [vmem:[%s5 + $0x248] sm:$0xff]
  %v701 = vld [vmem:[%s5 + $0x250] sm:$0xff]
  %v702 = vld [vmem:[%s5 + $0x258] sm:$0xff]
  %v703 = vld [vmem:[%s5 + $0x260] sm:$0xff]
  %v704 = vld [vmem:[%s5 + $0x268] sm:$0xff]
  %v705 = vld [vmem:[%s5 + $0x270] sm:$0xff]
  %v706 = vld [vmem:[%s5 + $0x278] sm:$0xff]
  %v707 = vld [vmem:[%s5 + $0x280] sm:$0xff]
  %v708 = vld [vmem:[%s5 + $0x288] sm:$0xff]
  %v709 = vld [vmem:[%s5 + $0x290] sm:$0xff]
  %v710 = vld [vmem:[%s5 + $0x298] sm:$0xff]
  %v711 = vld [vmem:[%s5 + $0x2a0] sm:$0xff]
  %v712 = vld [vmem:[%s5 + $0x2a8] sm:$0xff]
  %v713 = vld [vmem:[%s5 + $0x2b0] sm:$0xff]
  %v714 = vld [vmem:[%s5 + $0x2b8] sm:$0xff]
  %v715 = vld [vmem:[%s5 + $0x2c0] sm:$0xff]
  %v716 = vld [vmem:[%s5 + $0x2c8] sm:$0xff]
  %v717 = vld [vmem:[%s5 + $0x2d0] sm:$0xff]
  %v718 = vld [vmem:[%s5 + $0x2d8] sm:$0xff]
  %v719 = vld [vmem:[%s5 + $0x2e0] sm:$0xff]
  %v720 = vld [vmem:[%s5 + $0x2e8] sm:$0xff]
  %v721 = vld [vmem:[%s5 + $0x2f0] sm:$0xff]
  %v722 = vld [vmem:[%s5 + $0x2f8] sm:$0xff]
  %v723 = vld [vmem:[%s5 + $0x300] sm:$0xff]
  %v724 = vld [vmem:[%s5 + $0x308] sm:$0xff]
  %v725 = vld [vmem:[%s5 + $0x310] sm:$0xff]
  %v726 = vld [vmem:[%s5 + $0x318] sm:$0xff]
  %v727 = vld [vmem:[%s5 + $0x320] sm:$0xff]
  %v728 = vld [vmem:[%s5 + $0x328] sm:$0xff]
  %v729 = vld [vmem:[%s5 + $0x330] sm:$0xff]
  %v730 = vld [vmem:[%s5 + $0x338] sm:$0xff]
  %v731 = vld [vmem:[%s5 + $0x340] sm:$0xf]
  %v732 = vld [vmem:[%s5 + $0x348] sm:$0xf]
  %v733 = vld [vmem:[%s6] sm:$0xff]
  %v734 = vld [vmem:[%s6 + $0x8] sm:$0xff]
  %v735 = vld [vmem:[%s6 + $0x10] sm:$0x3]
  %v736 = vld [vmem:[%s6 + $0x18] sm:$0x3]
  %v738 = vsel %vm613, %v622, 0
  %v741 = vsel %vm613, %v626, 0
  %v744 = vsel %vm360, %v731, 0
  %v747 = vsel %vm360, %v732, 0
  %749 = vmatprep.subr.mxu0 %v628
  %750 = vmatpush1.msra.mxu0 %v627
  %751 = vmatprep.subr.mxu0 %v630
  %752 = vmatpush1.msra.mxu0 %v629
  %753 = vmatprep.subr.mxu0 %v632
  %754 = vmatpush1.msra.mxu0 %v631
  %755 = vmatprep.subr.mxu0 %v634
  %756 = vmatpush1.msra.mxu0 %v633
  %757 = vmatprep.subr.mxu0 %v636
  %758 = vmatpush1.msra.mxu0 %v635
  %759 = vmatprep.subr.mxu0 %v638
  %760 = vmatpush1.msra.mxu0 %v637
  %761 = vmatprep.subr.mxu0 %v640
  %762 = vmatpush1.msra.mxu0 %v639
  %763 = vmatprep.subr.mxu0 %v642
  %764 = vmatpush1.msra.mxu0 %v641
  %765 = vmatprep.subr.mxu0 %v644
  %766 = vmatpush1.msra.mxu0 %v643
  %767 = vmatprep.subr.mxu0 %v646
  %768 = vmatpush1.msra.mxu0 %v645
  %769 = vmatprep.subr.mxu0 %v648
  %770 = vmatpush1.msra.mxu0 %v647
  %771 = vmatprep.subr.mxu0 %v650
  %772 = vmatpush1.msra.mxu0 %v649
  %773 = vmatprep.subr.mxu0 %v652
  %774 = vmatpush1.msra.mxu0 %v651
  %775 = vmatprep.subr.mxu0 %v654
  %776 = vmatpush1.msra.mxu0 %v653
  %777 = vmatprep.subr.mxu0 %v656
  %778 = vmatpush1.msra.mxu0 %v655
  %779 = vmatprep.subr.mxu0 %v658
  %780 = vmatpush1.msra.mxu0 %v657
  %781 = vmatprep.subr.mxu0 %v660
  %782 = vmatpush1.msra.mxu0 %v659
  %783 = vmatprep.subr.mxu0 %v662
  %784 = vmatpush1.msra.mxu0 %v661
  %785 = vmatprep.subr.mxu0 %v664
  %786 = vmatpush1.msra.mxu0 %v663
  %787 = vmatprep.subr.mxu0 %v666
  %788 = vmatpush1.msra.mxu0 %v665
  %789 = vmatprep.subr.mxu0 %v668
  %790 = vmatpush1.msra.mxu0 %v667
  %791 = vmatprep.subr.mxu0 %v670
  %792 = vmatpush1.msra.mxu0 %v669
  %793 = vmatprep.subr.mxu0 %v672
  %794 = vmatpush1.msra.mxu0 %v671
  %795 = vmatprep.subr.mxu0 %v674
  %796 = vmatpush1.msra.mxu0 %v673
  %797 = vmatprep.subr.mxu0 %v676
  %798 = vmatpush1.msra.mxu0 %v675
  %799 = vmatprep.subr.mxu0 %v678
  %800 = vmatpush1.msra.mxu0 %v677
  %801 = vmatprep.subr.mxu0 %v680
  %802 = vmatpush1.msra.mxu0 %v679
  %803 = vmatprep.subr.mxu0 %v682
  %804 = vmatpush1.msra.mxu0 %v681
  %805 = vmatprep.subr.mxu0 %v684
  %806 = vmatpush1.msra.mxu0 %v683
  %807 = vmatprep.subr.mxu0 %v686
  %808 = vmatpush1.msra.mxu0 %v685
  %809 = vmatprep.subr.mxu0 %v688
  %810 = vmatpush1.msra.mxu0 %v687
  %811 = vmatprep.subr.mxu0 %v690
  %812 = vmatpush1.msra.mxu0 %v689
  %813 = vmatprep.mubr.f32.mxu0 %v620
  %814 = vmatmul.mubr.f32.gmra.mrb[0].mxu0 %v619
  %v815 = vpop.f32.mrb[0].mxu0
  %v816 = vadd.f32 %v733, %v815
  %v817 = vpop.f32.mrb[0].mxu0
  %v818 = vadd.f32 %v734, %v817
  %819 = vmatprep.mubr.f32.mxu0 %v624
  %820 = vmatmul.mubr.f32.gmra.mrb[0].mxu0 %v623
  %v821 = vpop.f32.mrb[0].mxu0
  %v822 = vadd.f32 %v735, %v821
  %v823 = vpop.f32.mrb[0].mxu0
  %v824 = vadd.f32 %v736, %v823
  %825 = vdwg.mxu0
  %826 = vmatprep.subr.mxu0 %v692
  %827 = vmatpush1.msra.mxu0 %v691
  %828 = vmatprep.subr.mxu0 %v694
  %829 = vmatpush1.msra.mxu0 %v693
  %830 = vmatprep.subr.mxu0 %v696
  %831 = vmatpush1.msra.mxu0 %v695
  %832 = vmatprep.subr.mxu0 %v698
  %833 = vmatpush1.msra.mxu0 %v697
  %834 = vmatprep.subr.mxu0 %v700
  %835 = vmatpush1.msra.mxu0 %v699
  %836 = vmatprep.subr.mxu0 %v702
  %837 = vmatpush1.msra.mxu0 %v701
  %838 = vmatprep.subr.mxu0 %v704
  %839 = vmatpush1.msra.mxu0 %v703
  %840 = vmatprep.subr.mxu0 %v706
  %841 = vmatpush1.msra.mxu0 %v705
  %842 = vmatprep.subr.mxu0 %v708
  %843 = vmatpush1.msra.mxu0 %v707
  %844 = vmatprep.subr.mxu0 %v710
  %845 = vmatpush1.msra.mxu0 %v709
  %846 = vmatprep.subr.mxu0 %v712
  %847 = vmatpush1.msra.mxu0 %v711
  %848 = vmatprep.subr.mxu0 %v714
  %849 = vmatpush1.msra.mxu0 %v713
  %850 = vmatprep.subr.mxu0 %v716
  %851 = vmatpush1.msra.mxu0 %v715
  %852 = vmatprep.subr.mxu0 %v718
  %853 = vmatpush1.msra.mxu0 %v717
  %854 = vmatprep.subr.mxu0 %v720
  %855 = vmatpush1.msra.mxu0 %v719
  %856 = vmatprep.subr.mxu0 %v722
  %857 = vmatpush1.msra.mxu0 %v721
  %858 = vmatprep.subr.mxu0 %v724
  %859 = vmatpush1.msra.mxu0 %v723
  %860 = vmatprep.subr.mxu0 %v726
  %861 = vmatpush1.msra.mxu0 %v725
  %862 = vmatprep.subr.mxu0 %v728
  %863 = vmatpush1.msra.mxu0 %v727
  %864 = vmatprep.subr.mxu0 %v730
  %865 = vmatpush1.msra.mxu0 %v729
  %866 = vmatprep.subr.mxu0 %v747
  %867 = vmatpush1.msra.mxu0 %v744
  %868 = vmatprep.subr.mxu0 0.0
  %869 = vmatpush1.msra.mxu0 0.0
  %870 = vmatprep.subr.mxu0 0.0
  %871 = vmatpush1.msra.mxu0 0.0
  %872 = vmatprep.subr.mxu0 0.0
  %873 = vmatpush1.msra.mxu0 0.0
  %874 = vmatprep.subr.mxu0 0.0
  %875 = vmatpush1.msra.mxu0 0.0
  %876 = vmatprep.subr.mxu0 0.0
  %877 = vmatpush1.msra.mxu0 0.0
  %878 = vmatprep.subr.mxu0 0.0
  %879 = vmatpush1.msra.mxu0 0.0
  %880 = vmatprep.subr.mxu0 0.0
  %881 = vmatpush1.msra.mxu0 0.0
  %882 = vmatprep.subr.mxu0 0.0
  %883 = vmatpush1.msra.mxu0 0.0
  %884 = vmatprep.subr.mxu0 0.0
  %885 = vmatpush1.msra.mxu0 0.0
  %886 = vmatprep.subr.mxu0 0.0
  %887 = vmatpush1.msra.mxu0 0.0
  %888 = vmatprep.subr.mxu0 0.0
  %889 = vmatpush1.msra.mxu0 0.0
  %890 = vmatprep.mubr.f32.mxu0 %v738
  %891 = vmatmul.mubr.f32.gmra.mrb[0].mxu0 %v621
  %v892 = vpop.f32.mrb[0].mxu0
  %v893 = vadd.f32 %v816, %v892
  %v894 = vpop.f32.mrb[0].mxu0
  %v895 = vadd.f32 %v818, %v894
  %896 = vmatprep.mubr.f32.mxu0 %v741
  %897 = vmatmul.mubr.f32.gmra.mrb[0].mxu0 %v625
  %v898 = vpop.f32.mrb[0].mxu0
  %v899 = vadd.f32 %v822, %v898
  %v900 = vpop.f32.mrb[0].mxu0
  %v901 = vadd.f32 %v824, %v900
  %902 = vdwg.mxu0
  %v903 = vxor.u32 %v893, 2147483648
  %v904 = vxor.u32 %v895, 2147483648
  %v905 = vxor.u32 %v899, 2147483648
  %v906 = vxor.u32 %v901, 2147483648
  %v907 = vmul.f32 %v903, 1.442695
  %v908 = vpow.pop %v907
  %v909 = vmul.f32 %v904, 1.442695
  %v910 = vpow.pop %v909
  %v911 = vmul.f32 %v905, 1.442695
  %v912 = vpow.pop %v911
  %v913 = vmul.f32 %v906, 1.442695
  %v914 = vpow.pop %v913
  %v915 = vadd.f32 %v908, 1.0
  %v916 = vadd.f32 %v910, 1.0
  %v917 = vadd.f32 %v912, 1.0
  %v918 = vadd.f32 %v914, 1.0
  %v919 = vrcp.pop %v915
  %v920 = vmul.f32 1.0, %v919
  %v921 = vrcp.pop %v916
  %v922 = vmul.f32 1.0, %v921
  %v923 = vrcp.pop %v917
  %v924 = vmul.f32 1.0, %v923
  %v925 = vrcp.pop %v918
  %v926 = vmul.f32 1.0, %v925
  %v927 = vld [vmem:[%s7] sm:$0x1f]
  %vm928 = vcmask 80896
  %v930 = vsel %vm928, %v927, 0
  %vm932 = vcmask 1041408
  %v934 = vsel %vm932, %v924, 0
  %v937 = vsel %vm932, %v926, 0
  %939 = vmatprep.subr.mxu0 %v922
  %940 = vmatpush1.msra.mxu0 %v920
  %941 = vmatprep.subr.mxu0 %v937
  %942 = vmatpush1.msra.mxu0 %v934
  %943 = vmatprep.subr.mxu0 0.0
  %944 = vmatpush1.msra.mxu0 0.0
  %945 = vmatprep.subr.mxu0 0.0
  %946 = vmatpush1.msra.mxu0 0.0
  %947 = vmatprep.subr.mxu0 0.0
  %948 = vmatpush1.msra.mxu0 0.0
  %949 = vmatprep.subr.mxu0 0.0
  %950 = vmatpush1.msra.mxu0 0.0
  %951 = vmatprep.subr.mxu0 0.0
  %952 = vmatpush1.msra.mxu0 0.0
  %953 = vmatprep.subr.mxu0 0.0
  %954 = vmatpush1.msra.mxu0 0.0
  %955 = vmatprep.subr.mxu0 0.0
  %956 = vmatpush1.msra.mxu0 0.0
  %957 = vmatprep.subr.mxu0 0.0
  %958 = vmatpush1.msra.mxu0 0.0
  %959 = vmatprep.subr.mxu0 0.0
  %960 = vmatpush1.msra.mxu0 0.0
  %961 = vmatprep.subr.mxu0 0.0
  %962 = vmatpush1.msra.mxu0 0.0
  %963 = vmatprep.subr.mxu0 0.0
  %964 = vmatpush1.msra.mxu0 0.0
  %965 = vmatprep.subr.mxu0 0.0
  %966 = vmatpush1.msra.mxu0 0.0
  %967 = vmatprep.subr.mxu0 0.0
  %968 = vmatpush1.msra.mxu0 0.0
  %969 = vmatprep.subr.mxu0 0.0
  %970 = vmatpush1.msra.mxu0 0.0
  %971 = vmatprep.subr.mxu0 0.0
  %972 = vmatpush1.msra.mxu0 0.0
  %973 = vmatprep.subr.mxu0 0.0
  %974 = vmatpush1.msra.mxu0 0.0
  %975 = vmatprep.subr.mxu0 0.0
  %976 = vmatpush1.msra.mxu0 0.0
  %977 = vmatprep.subr.mxu0 0.0
  %978 = vmatpush1.msra.mxu0 0.0
  %979 = vmatprep.subr.mxu0 0.0
  %980 = vmatpush1.msra.mxu0 0.0
  %981 = vmatprep.subr.mxu0 0.0
  %982 = vmatpush1.msra.mxu0 0.0
  %983 = vmatprep.subr.mxu0 0.0
  %984 = vmatpush1.msra.mxu0 0.0
  %985 = vmatprep.subr.mxu0 0.0
  %986 = vmatpush1.msra.mxu0 0.0
  %987 = vmatprep.subr.mxu0 0.0
  %988 = vmatpush1.msra.mxu0 0.0
  %989 = vmatprep.subr.mxu0 0.0
  %990 = vmatpush1.msra.mxu0 0.0
  %991 = vmatprep.subr.mxu0 0.0
  %992 = vmatpush1.msra.mxu0 0.0
  %993 = vmatprep.subr.mxu0 0.0
  %994 = vmatpush1.msra.mxu0 0.0
  %995 = vmatprep.subr.mxu0 0.0
  %996 = vmatpush1.msra.mxu0 0.0
  %997 = vmatprep.subr.mxu0 0.0
  %998 = vmatpush1.msra.mxu0 0.0
  %999 = vmatprep.subr.mxu0 0.0
  %1000 = vmatpush1.msra.mxu0 0.0
  %1001 = vmatprep.subr.mxu0 0.0
  %1002 = vmatpush1.msra.mxu0 0.0
  %1003 = vmatprep.mubr.f32.mxu0 0.0
  %1004 = vmatmul.mubr.f32.gmra.mrb[0].mxu0 %v930
  %v1005 = vpop.f32.mrb[0].mxu0
  %v1006 = vadd.f32 0.0, %v1005
  %v1007 = vpop.f32.mrb[0].mxu0
  %v1008 = vadd.f32 0.0, %v1007
  %1009 = vdwg.mxu0
  %v1010 = vld [vmem:[%s8] sm:$0xff]
  %v1011 = vld [vmem:[%s8 + $0x8] sm:$0xff]
  %v1012 = vld [vmem:[%s8 + $0x10] sm:$0xff]
  %v1013 = vld [vmem:[%s8 + $0x18] sm:$0xff]
  %v1014 = vld [vmem:[%s8 + $0x20] sm:$0xff]
  %v1015 = vld [vmem:[%s8 + $0x28] sm:$0xff]
  %v1016 = vld [vmem:[%s8 + $0x30] sm:$0xff]
  %v1017 = vld [vmem:[%s8 + $0x38] sm:$0xff]
  %v1018 = vld [vmem:[%s8 + $0x40] sm:$0xff]
  %v1019 = vld [vmem:[%s8 + $0x48] sm:$0xff]
  %v1020 = vld [vmem:[%s8 + $0x50] sm:$0xff]
  %v1021 = vld [vmem:[%s8 + $0x58] sm:$0xff]
  %v1022 = vld [vmem:[%s8 + $0x60] sm:$0xff]
  %v1023 = vld [vmem:[%s8 + $0x68] sm:$0xff]
  %v1024 = vld [vmem:[%s8 + $0x70] sm:$0xff]
  %v1025 = vld [vmem:[%s8 + $0x78] sm:$0xff]
  %v1026 = vld [vmem:[%s8 + $0x80] sm:$0xff]
  %v1027 = vld [vmem:[%s8 + $0x88] sm:$0xff]
  %v1028 = vld [vmem:[%s8 + $0x90] sm:$0xff]
  %v1029 = vld [vmem:[%s8 + $0x98] sm:$0xff]
  %v1031 = vsel %vm54, %v1008, 0
  %1033 = vmatprep.subr.mxu0 0.0
  %1034 = vmatpush1.msra.mxu0 %v1010
  %1035 = vmatprep.subr.mxu0 0.0
  %1036 = vmatpush1.msra.mxu0 %v1011
  %1037 = vmatprep.subr.mxu0 0.0
  %1038 = vmatpush1.msra.mxu0 %v1012
  %1039 = vmatprep.subr.mxu0 0.0
  %1040 = vmatpush1.msra.mxu0 %v1013
  %1041 = vmatprep.subr.mxu0 0.0
  %1042 = vmatpush1.msra.mxu0 %v1014
  %1043 = vmatprep.subr.mxu0 0.0
  %1044 = vmatpush1.msra.mxu0 %v1015
  %1045 = vmatprep.subr.mxu0 0.0
  %1046 = vmatpush1.msra.mxu0 %v1016
  %1047 = vmatprep.subr.mxu0 0.0
  %1048 = vmatpush1.msra.mxu0 %v1017
  %1049 = vmatprep.subr.mxu0 0.0
  %1050 = vmatpush1.msra.mxu0 %v1018
  %1051 = vmatprep.subr.mxu0 0.0
  %1052 = vmatpush1.msra.mxu0 %v1019
  %1053 = vmatprep.subr.mxu0 0.0
  %1054 = vmatpush1.msra.mxu0 %v1020
  %1055 = vmatprep.subr.mxu0 0.0
  %1056 = vmatpush1.msra.mxu0 %v1021
  %1057 = vmatprep.subr.mxu0 0.0
  %1058 = vmatpush1.msra.mxu0 %v1022
  %1059 = vmatprep.subr.mxu0 0.0
  %1060 = vmatpush1.msra.mxu0 %v1023
  %1061 = vmatprep.subr.mxu0 0.0
  %1062 = vmatpush1.msra.mxu0 %v1024
  %1063 = vmatprep.subr.mxu0 0.0
  %1064 = vmatpush1.msra.mxu0 %v1025
  %1065 = vmatprep.subr.mxu0 0.0
  %1066 = vmatpush1.msra.mxu0 %v1026
  %1067 = vmatprep.subr.mxu0 0.0
  %1068 = vmatpush1.msra.mxu0 %v1027
  %1069 = vmatprep.subr.mxu0 0.0
  %1070 = vmatpush1.msra.mxu0 %v1028
  %1071 = vmatprep.subr.mxu0 0.0
  %1072 = vmatpush1.msra.mxu0 %v1029
  %1073 = vmatprep.subr.mxu0 0.0
  %1074 = vmatpush1.msra.mxu0 0.0
  %1075 = vmatprep.subr.mxu0 0.0
  %1076 = vmatpush1.msra.mxu0 0.0
  %1077 = vmatprep.subr.mxu0 0.0
  %1078 = vmatpush1.msra.mxu0 0.0
  %1079 = vmatprep.subr.mxu0 0.0
  %1080 = vmatpush1.msra.mxu0 0.0
  %1081 = vmatprep.subr.mxu0 0.0
  %1082 = vmatpush1.msra.mxu0 0.0
  %1083 = vmatprep.subr.mxu0 0.0
  %1084 = vmatpush1.msra.mxu0 0.0
  %1085 = vmatprep.subr.mxu0 0.0
  %1086 = vmatpush1.msra.mxu0 0.0
  %1087 = vmatprep.subr.mxu0 0.0
  %1088 = vmatpush1.msra.mxu0 0.0
  %1089 = vmatprep.subr.mxu0 0.0
  %1090 = vmatpush1.msra.mxu0 0.0
  %1091 = vmatprep.subr.mxu0 0.0
  %1092 = vmatpush1.msra.mxu0 0.0
  %1093 = vmatprep.subr.mxu0 0.0
  %1094 = vmatpush1.msra.mxu0 0.0
  %1095 = vmatprep.subr.mxu0 0.0
  %1096 = vmatpush1.msra.mxu0 0.0
  %1097 = vmatprep.mubr.f32.mxu0 %v1031
  %1098 = vmatmul.mubr.f32.gmra.mrb[0].mxu0 %v1006
  %v1099 = vpop.f32.mrb[0].mxu0
  %v1100 = vadd.f32 0.0, %v1099
  %v1101 = vpop.f32.mrb[0].mxu0
  %1102 = vdwg.mxu0
  %vm1103 = vcmask 647168
  %1104 = vst.msk [vmem:[#allocation4] sm:$0x1] %vm1103, %v1100
  %s1105 = scalar_lea.vmem [#allocation4], 8
  %vm1106 = vcmask 648193
  %1107 = vst.msk [vmem:[%s1105 - $0x1] sm:$0x2] %vm1106, %v1100
  %s1108 = scalar_lea.vmem [#allocation4], 16
  %vm1109 = vcmask 649218
  %1110 = vst.msk [vmem:[%s1108 - $0x2] sm:$0x4] %vm1109, %v1100
  %s1111 = scalar_lea.vmem [#allocation4], 24
  %vm1112 = vcmask 650243
  %1113 = vst.msk [vmem:[%s1111 - $0x3] sm:$0x8] %vm1112, %v1100
  %s1114 = scalar_lea.vmem [#allocation4], 32
  %vm1115 = vcmask 651268
  %1116 = vst.msk [vmem:[%s1114 - $0x4] sm:$0x10] %vm1115, %v1100
  %s1117 = scalar_lea.vmem %s0, 32
  %v1118 = vld [vmem:[%s1117] sm:$0xff]
  %v1119 = vld [vmem:[%s1117 + $0x8] sm:$0xff]
  %v1120 = vld [vmem:[%s1117 + $0x10] sm:$0xff]
  %v1121 = vld [vmem:[%s1117 + $0x18] sm:$0xf]
  %1122 = vst.msk [vmem:[#allocation2] sm:$0xff] %vm54, %v1118
  %1123 = vst.msk [vmem:[#allocation2 + $0x10] sm:$0xff] %vm54, %v1119
  %1124 = vst.msk [vmem:[#allocation2 + $0x20] sm:$0xff] %vm54, %v1120
  %1125 = vst.msk [vmem:[#allocation2 + $0x30] sm:$0xf] %vm58, %v1121
  %v1126 = vld [vmem:[%s1117 + $0x1] sm:$0xff]
  %v1127 = vld [vmem:[%s1117 + $0x9] sm:$0xff]
  %v1128 = vld [vmem:[%s1117 + $0x11] sm:$0xff]
  %v1129 = vld [vmem:[%s1117 + $0x19] sm:$0xf]
  %1134 = vrot.lane.b32.xlu0 %v1126, 32
  %v1135 = vpop.permute.xlu0 %1134
  %1136 = vrot.lane.b32.xlu0 %v1127, 32
  %v1137 = vpop.permute.xlu0 %1136
  %1138 = vrot.lane.b32.xlu0 %v1128, 32
  %v1139 = vpop.permute.xlu0 %1138
  %1140 = vrot.lane.b32.xlu0 %v1129, 32
  %v1141 = vpop.permute.xlu0 %1140
  %1146 = vst.msk [vmem:[#allocation2] sm:$0xff] %vm80, %v1135
  %1147 = vst.msk [vmem:[#allocation2 + $0x10] sm:$0xff] %vm80, %v1137
  %1148 = vst.msk [vmem:[#allocation2 + $0x20] sm:$0xff] %vm80, %v1139
  %1149 = vst.msk [vmem:[#allocation2 + $0x30] sm:$0xf] %vm84, %v1141
  %v1150 = vld [vmem:[%s1117 + $0x2] sm:$0xff]
  %v1151 = vld [vmem:[%s1117 + $0xa] sm:$0xff]
  %v1152 = vld [vmem:[%s1117 + $0x12] sm:$0xff]
  %v1153 = vld [vmem:[%s1117 + $0x1a] sm:$0xf]
  %1158 = vrot.lane.b32.xlu0 %v1150, 64
  %v1159 = vpop.permute.xlu0 %1158
  %1160 = vrot.lane.b32.xlu0 %v1151, 64
  %v1161 = vpop.permute.xlu0 %1160
  %1162 = vrot.lane.b32.xlu0 %v1152, 64
  %v1163 = vpop.permute.xlu0 %1162
  %1164 = vrot.lane.b32.xlu0 %v1153, 64
  %v1165 = vpop.permute.xlu0 %1164
  %1170 = vst.msk [vmem:[#allocation2] sm:$0xff] %vm106, %v1159
  %1171 = vst.msk [vmem:[#allocation2 + $0x10] sm:$0xff] %vm106, %v1161
  %1172 = vst.msk [vmem:[#allocation2 + $0x20] sm:$0xff] %vm106, %v1163
  %1173 = vst.msk [vmem:[#allocation2 + $0x30] sm:$0xf] %vm110, %v1165
  %v1174 = vld [vmem:[%s1117 + $0x3] sm:$0xff]
  %v1175 = vld [vmem:[%s1117 + $0xb] sm:$0xff]
  %v1176 = vld [vmem:[%s1117 + $0x13] sm:$0xff]
  %v1177 = vld [vmem:[%s1117 + $0x1b] sm:$0xf]
  %1182 = vrot.lane.b32.xlu0 %v1174, 96
  %v1183 = vpop.permute.xlu0 %1182
  %1184 = vrot.lane.b32.xlu0 %v1175, 96
  %v1185 = vpop.permute.xlu0 %1184
  %1186 = vrot.lane.b32.xlu0 %v1176, 96
  %v1187 = vpop.permute.xlu0 %1186
  %1188 = vrot.lane.b32.xlu0 %v1177, 96
  %v1189 = vpop.permute.xlu0 %1188
  %1194 = vst.msk [vmem:[#allocation2] sm:$0xff] %vm132, %v1183
  %1195 = vst.msk [vmem:[#allocation2 + $0x10] sm:$0xff] %vm132, %v1185
  %1196 = vst.msk [vmem:[#allocation2 + $0x20] sm:$0xff] %vm132, %v1187
  %1197 = vst.msk [vmem:[#allocation2 + $0x30] sm:$0xf] %vm136, %v1189
  %v1198 = vld [vmem:[%s1117 + $0x4] sm:$0xff]
  %v1199 = vld [vmem:[%s1117 + $0xc] sm:$0xff]
  %v1200 = vld [vmem:[%s1117 + $0x14] sm:$0xff]
  %v1201 = vld [vmem:[%s1117 + $0x1c] sm:$0xf]
  %1202 = vst.msk [vmem:[#allocation2 + $0x8] sm:$0xff] %vm54, %v1198
  %1203 = vst.msk [vmem:[#allocation2 + $0x18] sm:$0xff] %vm54, %v1199
  %1204 = vst.msk [vmem:[#allocation2 + $0x28] sm:$0xff] %vm54, %v1200
  %1205 = vst.msk [vmem:[#allocation2 + $0x38] sm:$0xf] %vm58, %v1201
  %v1206 = vld [vmem:[#allocation2] sm:$0xff]
  %v1207 = vld [vmem:[#allocation2 + $0x8] sm:$0xff]
  %v1208 = vld [vmem:[#allocation2 + $0x10] sm:$0xff]
  %v1209 = vld [vmem:[#allocation2 + $0x18] sm:$0xff]
  %v1210 = vld [vmem:[#allocation2 + $0x20] sm:$0xff]
  %v1211 = vld [vmem:[#allocation2 + $0x28] sm:$0xff]
  %v1212 = vld [vmem:[#allocation2 + $0x30] sm:$0xf]
  %v1213 = vld [vmem:[#allocation2 + $0x38] sm:$0xf]
  %v1214 = vld [vmem:[%s1] sm:$0xff]
  %v1215 = vld [vmem:[%s1 + $0x8] sm:$0xff]
  %v1216 = vld [vmem:[%s1 + $0x10] sm:$0xff]
  %v1217 = vld [vmem:[%s1 + $0x18] sm:$0xff]
  %v1218 = vld [vmem:[%s1 + $0x20] sm:$0xff]
  %v1219 = vld [vmem:[%s1 + $0x28] sm:$0xff]
  %v1220 = vld [vmem:[%s1 + $0x30] sm:$0xff]
  %v1221 = vld [vmem:[%s1 + $0x38] sm:$0xff]
  %v1222 = vld [vmem:[%s1 + $0x40] sm:$0xff]
  %v1223 = vld [vmem:[%s1 + $0x48] sm:$0xff]
  %v1224 = vld [vmem:[%s1 + $0x50] sm:$0xff]
  %v1225 = vld [vmem:[%s1 + $0x58] sm:$0xff]
  %v1226 = vld [vmem:[%s1 + $0x60] sm:$0xff]
  %v1227 = vld [vmem:[%s1 + $0x68] sm:$0xff]
  %v1228 = vld [vmem:[%s1 + $0x70] sm:$0xff]
  %v1229 = vld [vmem:[%s1 + $0x78] sm:$0xff]
  %v1230 = vld [vmem:[%s1 + $0x80] sm:$0xff]
  %v1231 = vld [vmem:[%s1 + $0x88] sm:$0xff]
  %v1232 = vld [vmem:[%s1 + $0x90] sm:$0xff]
  %v1233 = vld [vmem:[%s1 + $0x98] sm:$0xff]
  %v1234 = vld [vmem:[%s1 + $0xa0] sm:$0xff]
  %v1235 = vld [vmem:[%s1 + $0xa8] sm:$0xff]
  %v1236 = vld [vmem:[%s1 + $0xb0] sm:$0xff]
  %v1237 = vld [vmem:[%s1 + $0xb8] sm:$0xff]
  %v1238 = vld [vmem:[%s1 + $0xc0] sm:$0xff]
  %v1239 = vld [vmem:[%s1 + $0xc8] sm:$0xff]
  %v1240 = vld [vmem:[%s1 + $0xd0] sm:$0xff]
  %v1241 = vld [vmem:[%s1 + $0xd8] sm:$0xff]
  %v1242 = vld [vmem:[%s1 + $0xe0] sm:$0xff]
  %v1243 = vld [vmem:[%s1 + $0xe8] sm:$0xff]
  %v1244 = vld [vmem:[%s1 + $0xf0] sm:$0xff]
  %v1245 = vld [vmem:[%s1 + $0xf8] sm:$0xff]
  %v1246 = vld [vmem:[%s1 + $0x100] sm:$0xff]
  %v1247 = vld [vmem:[%s1 + $0x108] sm:$0xff]
  %v1248 = vld [vmem:[%s1 + $0x110] sm:$0xff]
  %v1249 = vld [vmem:[%s1 + $0x118] sm:$0xff]
  %v1250 = vld [vmem:[%s1 + $0x120] sm:$0xff]
  %v1251 = vld [vmem:[%s1 + $0x128] sm:$0xff]
  %v1252 = vld [vmem:[%s1 + $0x130] sm:$0xff]
  %v1253 = vld [vmem:[%s1 + $0x138] sm:$0xff]
  %v1254 = vld [vmem:[%s2] sm:$0xff]
  %v1255 = vld [vmem:[%s2 + $0x8] sm:$0xff]
  %v1256 = vld [vmem:[%s2 + $0x10] sm:$0xff]
  %v1257 = vld [vmem:[%s2 + $0x18] sm:$0xff]
  %v1258 = vld [vmem:[%s2 + $0x20] sm:$0xff]
  %v1259 = vld [vmem:[%s2 + $0x28] sm:$0xff]
  %v1260 = vld [vmem:[%s2 + $0x30] sm:$0xf]
  %v1261 = vld [vmem:[%s2 + $0x38] sm:$0xf]
  %v1263 = vsel %vm54, %v1207, 0
  %v1266 = vsel %vm54, %v1209, 0
  %v1269 = vsel %vm54, %v1211, 0
  %v1272 = vsel %vm54, %v1213, 0
  %1274 = vmatprep.subr.mxu0 %v1215
  %1275 = vmatpush1.msra.mxu0 %v1214
  %1276 = vmatprep.subr.mxu0 %v1217
  %1277 = vmatpush1.msra.mxu0 %v1216
  %1278 = vmatprep.subr.mxu0 %v1219
  %1279 = vmatpush1.msra.mxu0 %v1218
  %1280 = vmatprep.subr.mxu0 %v1221
  %1281 = vmatpush1.msra.mxu0 %v1220
  %1282 = vmatprep.subr.mxu0 %v1223
  %1283 = vmatpush1.msra.mxu0 %v1222
  %1284 = vmatprep.subr.mxu0 %v1225
  %1285 = vmatpush1.msra.mxu0 %v1224
  %1286 = vmatprep.subr.mxu0 %v1227
  %1287 = vmatpush1.msra.mxu0 %v1226
  %1288 = vmatprep.subr.mxu0 %v1229
  %1289 = vmatpush1.msra.mxu0 %v1228
  %1290 = vmatprep.subr.mxu0 %v1231
  %1291 = vmatpush1.msra.mxu0 %v1230
  %1292 = vmatprep.subr.mxu0 %v1233
  %1293 = vmatpush1.msra.mxu0 %v1232
  %1294 = vmatprep.subr.mxu0 %v1235
  %1295 = vmatpush1.msra.mxu0 %v1234
  %1296 = vmatprep.subr.mxu0 %v1237
  %1297 = vmatpush1.msra.mxu0 %v1236
  %1298 = vmatprep.subr.mxu0 %v1239
  %1299 = vmatpush1.msra.mxu0 %v1238
  %1300 = vmatprep.subr.mxu0 %v1241
  %1301 = vmatpush1.msra.mxu0 %v1240
  %1302 = vmatprep.subr.mxu0 %v1243
  %1303 = vmatpush1.msra.mxu0 %v1242
  %1304 = vmatprep.subr.mxu0 %v1245
  %1305 = vmatpush1.msra.mxu0 %v1244
  %1306 = vmatprep.subr.mxu0 %v1247
  %1307 = vmatpush1.msra.mxu0 %v1246
  %1308 = vmatprep.subr.mxu0 %v1249
  %1309 = vmatpush1.msra.mxu0 %v1248
  %1310 = vmatprep.subr.mxu0 %v1251
  %1311 = vmatpush1.msra.mxu0 %v1250
  %1312 = vmatprep.subr.mxu0 %v1253
  %1313 = vmatpush1.msra.mxu0 %v1252
  %1314 = vmatprep.subr.mxu0 0.0
  %1315 = vmatpush1.msra.mxu0 0.0
  %1316 = vmatprep.subr.mxu0 0.0
  %1317 = vmatpush1.msra.mxu0 0.0
  %1318 = vmatprep.subr.mxu0 0.0
  %1319 = vmatpush1.msra.mxu0 0.0
  %1320 = vmatprep.subr.mxu0 0.0
  %1321 = vmatpush1.msra.mxu0 0.0
  %1322 = vmatprep.subr.mxu0 0.0
  %1323 = vmatpush1.msra.mxu0 0.0
  %1324 = vmatprep.subr.mxu0 0.0
  %1325 = vmatpush1.msra.mxu0 0.0
  %1326 = vmatprep.subr.mxu0 0.0
  %1327 = vmatpush1.msra.mxu0 0.0
  %1328 = vmatprep.subr.mxu0 0.0
  %1329 = vmatpush1.msra.mxu0 0.0
  %1330 = vmatprep.subr.mxu0 0.0
  %1331 = vmatpush1.msra.mxu0 0.0
  %1332 = vmatprep.subr.mxu0 0.0
  %1333 = vmatpush1.msra.mxu0 0.0
  %1334 = vmatprep.subr.mxu0 0.0
  %1335 = vmatpush1.msra.mxu0 0.0
  %1336 = vmatprep.subr.mxu0 0.0
  %1337 = vmatpush1.msra.mxu0 0.0
  %1338 = vmatprep.mubr.f32.mxu0 %v1263
  %1339 = vmatmul.mubr.f32.gmra.mrb[0].mxu0 %v1206
  %v1340 = vpop.f32.mrb[0].mxu0
  %v1341 = vadd.f32 %v1254, %v1340
  %v1342 = vpop.f32.mrb[0].mxu0
  %v1343 = vadd.f32 %v1255, %v1342
  %1344 = vmatprep.mubr.f32.mxu0 %v1266
  %1345 = vmatmul.mubr.f32.gmra.mrb[0].mxu0 %v1208
  %v1346 = vpop.f32.mrb[0].mxu0
  %v1347 = vadd.f32 %v1256, %v1346
  %v1348 = vpop.f32.mrb[0].mxu0
  %v1349 = vadd.f32 %v1257, %v1348
  %1350 = vmatprep.mubr.f32.mxu0 %v1269
  %1351 = vmatmul.mubr.f32.gmra.mrb[0].mxu0 %v1210
  %v1352 = vpop.f32.mrb[0].mxu0
  %v1353 = vadd.f32 %v1258, %v1352
  %v1354 = vpop.f32.mrb[0].mxu0
  %v1355 = vadd.f32 %v1259, %v1354
  %1356 = vmatprep.mubr.f32.mxu0 %v1272
  %1357 = vmatmul.mubr.f32.gmra.mrb[0].mxu0 %v1212
  %v1358 = vpop.f32.mrb[0].mxu0
  %v1359 = vadd.f32 %v1260, %v1358
  %v1360 = vpop.f32.mrb[0].mxu0
  %v1361 = vadd.f32 %v1261, %v1360
  %1362 = vdwg.mxu0
  %v1363 = vxor.u32 %v1341, 2147483648
  %v1364 = vxor.u32 %v1343, 2147483648
  %v1365 = vxor.u32 %v1347, 2147483648
  %v1366 = vxor.u32 %v1349, 2147483648
  %v1367 = vxor.u32 %v1353, 2147483648
  %v1368 = vxor.u32 %v1355, 2147483648
  %v1369 = vxor.u32 %v1359, 2147483648
  %v1370 = vxor.u32 %v1361, 2147483648
  %v1371 = vmul.f32 %v1363, 1.442695
  %v1372 = vpow.pop %v1371
  %v1373 = vmul.f32 %v1364, 1.442695
  %v1374 = vpow.pop %v1373
  %v1375 = vmul.f32 %v1365, 1.442695
  %v1376 = vpow.pop %v1375
  %v1377 = vmul.f32 %v1366, 1.442695
  %v1378 = vpow.pop %v1377
  %v1379 = vmul.f32 %v1367, 1.442695
  %v1380 = vpow.pop %v1379
  %v1381 = vmul.f32 %v1368, 1.442695
  %v1382 = vpow.pop %v1381
  %v1383 = vmul.f32 %v1369, 1.442695
  %v1384 = vpow.pop %v1383
  %v1385 = vmul.f32 %v1370, 1.442695
  %v1386 = vpow.pop %v1385
  %v1387 = vadd.f32 %v1372, 1.0
  %v1388 = vadd.f32 %v1374, 1.0
  %v1389 = vadd.f32 %v1376, 1.0
  %v1390 = vadd.f32 %v1378, 1.0
  %v1391 = vadd.f32 %v1380, 1.0
  %v1392 = vadd.f32 %v1382, 1.0
  %v1393 = vadd.f32 %v1384, 1.0
  %v1394 = vadd.f32 %v1386, 1.0
  %v1395 = vrcp.pop %v1387
  %v1396 = vmul.f32 1.0, %v1395
  %v1397 = vrcp.pop %v1388
  %v1398 = vmul.f32 1.0, %v1397
  %v1399 = vrcp.pop %v1389
  %v1400 = vmul.f32 1.0, %v1399
  %v1401 = vrcp.pop %v1390
  %v1402 = vmul.f32 1.0, %v1401
  %v1403 = vrcp.pop %v1391
  %v1404 = vmul.f32 1.0, %v1403
  %v1405 = vrcp.pop %v1392
  %v1406 = vmul.f32 1.0, %v1405
  %v1407 = vrcp.pop %v1393
  %v1408 = vmul.f32 1.0, %v1407
  %v1409 = vrcp.pop %v1394
  %v1410 = vmul.f32 1.0, %v1409
  %v1411 = vld [vmem:[%s3] sm:$0xff]
  %v1412 = vld [vmem:[%s3 + $0x8] sm:$0x3f]
  %v1414 = vsel %vm353, %v1411, 0
  %v1417 = vsel %vm353, %v1412, 0
  %v1420 = vsel %vm360, %v1408, 0
  %v1423 = vsel %vm360, %v1410, 0
  %1425 = vmatprep.subr.mxu0 %v1398
  %1426 = vmatpush1.msra.mxu0 %v1396
  %1427 = vmatprep.subr.mxu0 %v1402
  %1428 = vmatpush1.msra.mxu0 %v1400
  %1429 = vmatprep.subr.mxu0 %v1406
  %1430 = vmatpush1.msra.mxu0 %v1404
  %1431 = vmatprep.subr.mxu0 %v1423
  %1432 = vmatpush1.msra.mxu0 %v1420
  %1433 = vmatprep.subr.mxu0 0.0
  %1434 = vmatpush1.msra.mxu0 0.0
  %1435 = vmatprep.subr.mxu0 0.0
  %1436 = vmatpush1.msra.mxu0 0.0
  %1437 = vmatprep.subr.mxu0 0.0
  %1438 = vmatpush1.msra.mxu0 0.0
  %1439 = vmatprep.subr.mxu0 0.0
  %1440 = vmatpush1.msra.mxu0 0.0
  %1441 = vmatprep.subr.mxu0 0.0
  %1442 = vmatpush1.msra.mxu0 0.0
  %1443 = vmatprep.subr.mxu0 0.0
  %1444 = vmatpush1.msra.mxu0 0.0
  %1445 = vmatprep.subr.mxu0 0.0
  %1446 = vmatpush1.msra.mxu0 0.0
  %1447 = vmatprep.subr.mxu0 0.0
  %1448 = vmatpush1.msra.mxu0 0.0
  %1449 = vmatprep.subr.mxu0 0.0
  %1450 = vmatpush1.msra.mxu0 0.0
  %1451 = vmatprep.subr.mxu0 0.0
  %1452 = vmatpush1.msra.mxu0 0.0
  %1453 = vmatprep.subr.mxu0 0.0
  %1454 = vmatpush1.msra.mxu0 0.0
  %1455 = vmatprep.subr.mxu0 0.0
  %1456 = vmatpush1.msra.mxu0 0.0
  %1457 = vmatprep.subr.mxu0 0.0
  %1458 = vmatpush1.msra.mxu0 0.0
  %1459 = vmatprep.subr.mxu0 0.0
  %1460 = vmatpush1.msra.mxu0 0.0
  %1461 = vmatprep.subr.mxu0 0.0
  %1462 = vmatpush1.msra.mxu0 0.0
  %1463 = vmatprep.subr.mxu0 0.0
  %1464 = vmatpush1.msra.mxu0 0.0
  %1465 = vmatprep.subr.mxu0 0.0
  %1466 = vmatpush1.msra.mxu0 0.0
  %1467 = vmatprep.subr.mxu0 0.0
  %1468 = vmatpush1.msra.mxu0 0.0
  %1469 = vmatprep.subr.mxu0 0.0
  %1470 = vmatpush1.msra.mxu0 0.0
  %1471 = vmatprep.subr.mxu0 0.0
  %1472 = vmatpush1.msra.mxu0 0.0
  %1473 = vmatprep.subr.mxu0 0.0
  %1474 = vmatpush1.msra.mxu0 0.0
  %1475 = vmatprep.subr.mxu0 0.0
  %1476 = vmatpush1.msra.mxu0 0.0
  %1477 = vmatprep.subr.mxu0 0.0
  %1478 = vmatpush1.msra.mxu0 0.0
  %1479 = vmatprep.subr.mxu0 0.0
  %1480 = vmatpush1.msra.mxu0 0.0
  %1481 = vmatprep.subr.mxu0 0.0
  %1482 = vmatpush1.msra.mxu0 0.0
  %1483 = vmatprep.subr.mxu0 0.0
  %1484 = vmatpush1.msra.mxu0 0.0
  %1485 = vmatprep.subr.mxu0 0.0
  %1486 = vmatpush1.msra.mxu0 0.0
  %1487 = vmatprep.subr.mxu0 0.0
  %1488 = vmatpush1.msra.mxu0 0.0
  %1489 = vmatprep.mubr.f32.mxu0 0.0
  %1490 = vmatmul.mubr.f32.gmra.mrb[0].mxu0 %v1414
  %v1491 = vpop.f32.mrb[0].mxu0
  %v1492 = vadd.f32 0.0, %v1491
  %v1493 = vpop.f32.mrb[0].mxu0
  %v1494 = vadd.f32 0.0, %v1493
  %1495 = vmatprep.mubr.f32.mxu0 0.0
  %1496 = vmatmul.mubr.f32.gmra.mrb[0].mxu0 %v1417
  %v1497 = vpop.f32.mrb[0].mxu0
  %v1498 = vadd.f32 0.0, %v1497
  %v1499 = vpop.f32.mrb[0].mxu0
  %v1500 = vadd.f32 0.0, %v1499
  %1501 = vdwg.mxu0
  %v1502 = vld [vmem:[%s4] sm:$0xff]
  %v1503 = vld [vmem:[%s4 + $0x8] sm:$0xff]
  %v1504 = vld [vmem:[%s4 + $0x10] sm:$0xff]
  %v1505 = vld [vmem:[%s4 + $0x18] sm:$0xff]
  %v1506 = vld [vmem:[%s4 + $0x20] sm:$0xff]
  %v1507 = vld [vmem:[%s4 + $0x28] sm:$0xff]
  %v1508 = vld [vmem:[%s4 + $0x30] sm:$0xff]
  %v1509 = vld [vmem:[%s4 + $0x38] sm:$0xff]
  %v1510 = vld [vmem:[%s4 + $0x40] sm:$0xff]
  %v1511 = vld [vmem:[%s4 + $0x48] sm:$0xff]
  %v1512 = vld [vmem:[%s4 + $0x50] sm:$0xff]
  %v1513 = vld [vmem:[%s4 + $0x58] sm:$0xff]
  %v1514 = vld [vmem:[%s4 + $0x60] sm:$0xff]
  %v1515 = vld [vmem:[%s4 + $0x68] sm:$0xff]
  %v1516 = vld [vmem:[%s4 + $0x70] sm:$0xff]
  %v1517 = vld [vmem:[%s4 + $0x78] sm:$0xff]
  %v1518 = vld [vmem:[%s4 + $0x80] sm:$0xff]
  %v1519 = vld [vmem:[%s4 + $0x88] sm:$0xff]
  %v1520 = vld [vmem:[%s4 + $0x90] sm:$0xff]
  %v1521 = vld [vmem:[%s4 + $0x98] sm:$0xff]
  %v1522 = vld [vmem:[%s4 + $0xa0] sm:$0xff]
  %v1524 = vsel %vm465, %v1494, 0
  %v1527 = vsel %vm465, %v1500, 0
  %1529 = vmatprep.subr.mxu0 0.0
  %1530 = vmatpush1.msra.mxu0 %v1502
  %1531 = vmatprep.subr.mxu0 0.0
  %1532 = vmatpush1.msra.mxu0 %v1503
  %1533 = vmatprep.subr.mxu0 0.0
  %1534 = vmatpush1.msra.mxu0 %v1504
  %1535 = vmatprep.subr.mxu0 0.0
  %1536 = vmatpush1.msra.mxu0 %v1505
  %1537 = vmatprep.subr.mxu0 0.0
  %1538 = vmatpush1.msra.mxu0 %v1506
  %1539 = vmatprep.subr.mxu0 0.0
  %1540 = vmatpush1.msra.mxu0 %v1507
  %1541 = vmatprep.subr.mxu0 0.0
  %1542 = vmatpush1.msra.mxu0 %v1508
  %1543 = vmatprep.subr.mxu0 0.0
  %1544 = vmatpush1.msra.mxu0 %v1509
  %1545 = vmatprep.subr.mxu0 0.0
  %1546 = vmatpush1.msra.mxu0 %v1510
  %1547 = vmatprep.subr.mxu0 0.0
  %1548 = vmatpush1.msra.mxu0 %v1511
  %1549 = vmatprep.subr.mxu0 0.0
  %1550 = vmatpush1.msra.mxu0 %v1512
  %1551 = vmatprep.subr.mxu0 0.0
  %1552 = vmatpush1.msra.mxu0 %v1513
  %1553 = vmatprep.subr.mxu0 0.0
  %1554 = vmatpush1.msra.mxu0 %v1514
  %1555 = vmatprep.subr.mxu0 0.0
  %1556 = vmatpush1.msra.mxu0 %v1515
  %1557 = vmatprep.subr.mxu0 0.0
  %1558 = vmatpush1.msra.mxu0 %v1516
  %1559 = vmatprep.subr.mxu0 0.0
  %1560 = vmatpush1.msra.mxu0 %v1517
  %1561 = vmatprep.subr.mxu0 0.0
  %1562 = vmatpush1.msra.mxu0 %v1518
  %1563 = vmatprep.subr.mxu0 0.0
  %1564 = vmatpush1.msra.mxu0 %v1519
  %1565 = vmatprep.subr.mxu0 0.0
  %1566 = vmatpush1.msra.mxu0 %v1520
  %1567 = vmatprep.subr.mxu0 0.0
  %1568 = vmatpush1.msra.mxu0 %v1521
  %1569 = vmatprep.subr.mxu0 0.0
  %1570 = vmatpush1.msra.mxu0 %v1522
  %1571 = vmatprep.subr.mxu0 0.0
  %1572 = vmatpush1.msra.mxu0 0.0
  %1573 = vmatprep.subr.mxu0 0.0
  %1574 = vmatpush1.msra.mxu0 0.0
  %1575 = vmatprep.subr.mxu0 0.0
  %1576 = vmatpush1.msra.mxu0 0.0
  %1577 = vmatprep.subr.mxu0 0.0
  %1578 = vmatpush1.msra.mxu0 0.0
  %1579 = vmatprep.subr.mxu0 0.0
  %1580 = vmatpush1.msra.mxu0 0.0
  %1581 = vmatprep.subr.mxu0 0.0
  %1582 = vmatpush1.msra.mxu0 0.0
  %1583 = vmatprep.subr.mxu0 0.0
  %1584 = vmatpush1.msra.mxu0 0.0
  %1585 = vmatprep.subr.mxu0 0.0
  %1586 = vmatpush1.msra.mxu0 0.0
  %1587 = vmatprep.subr.mxu0 0.0
  %1588 = vmatpush1.msra.mxu0 0.0
  %1589 = vmatprep.subr.mxu0 0.0
  %1590 = vmatpush1.msra.mxu0 0.0
  %1591 = vmatprep.subr.mxu0 0.0
  %1592 = vmatpush1.msra.mxu0 0.0
  %1593 = vmatprep.mubr.f32.mxu0 %v1524
  %1594 = vmatmul.mubr.f32.gmra.mrb[0].mxu0 %v1492
  %v1595 = vpop.f32.mrb[0].mxu0
  %v1596 = vadd.f32 0.0, %v1595
  %v1597 = vpop.f32.mrb[0].mxu0
  %1598 = vmatprep.mubr.f32.mxu0 %v1527
  %1599 = vmatmul.mubr.f32.gmra.mrb[0].mxu0 %v1498
  %v1600 = vpop.f32.mrb[0].mxu0
  %v1601 = vadd.f32 0.0, %v1600
  %v1602 = vpop.f32.mrb[0].mxu0
  %1603 = vdwg.mxu0
  %1604 = vst.msk [vmem:[#allocation3] sm:$0xff] %vm547, %v1596
  %1605 = vst.msk [vmem:[#allocation3 + $0x20] sm:$0x3] %vm549, %v1601
  %v1608 = vrot.slane %v1596, 1
  %v1609 = vrot.slane %v1601, 1
  %v1610 = vsel %vm553, %v1608, %v1609
  %1611 = vrot.lane.b32.xlu0 %v1610, 84
  %v1612 = vpop.permute.xlu0 %1611
  %1613 = vrot.lane.b32.xlu0 %v1609, 84
  %v1614 = vpop.permute.xlu0 %1613
  %1617 = vst.msk [vmem:[#allocation3] sm:$0xff] %vm563, %v1612
  %1618 = vst.msk [vmem:[#allocation3 + $0x8] sm:$0xff] %vm465, %v1612
  %1619 = vst.msk [vmem:[#allocation3 + $0x20] sm:$0x3] %vm566, %v1614
  %1620 = vst.msk [vmem:[#allocation3 + $0x28] sm:$0x3] %vm568, %v1614
  %v1621 = vrot.slane %v1596, 2
  %v1622 = vrot.slane %v1601, 2
  %v1623 = vsel %vm570, %v1621, %v1622
  %1624 = vrot.lane.b32.xlu0 %v1623, 40
  %v1625 = vpop.permute.xlu0 %1624
  %1626 = vrot.lane.b32.xlu0 %v1622, 40
  %v1627 = vpop.permute.xlu0 %1626
  %1630 = vst.msk [vmem:[#allocation3 + $0x8] sm:$0xff] %vm580, %v1625
  %1631 = vst.msk [vmem:[#allocation3 + $0x28] sm:$0x3] %vm582, %v1627
  %v1632 = vrot.slane %v1596, 3
  %v1633 = vrot.slane %v1601, 3
  %v1634 = vsel %vm584, %v1632, %v1633
  %1635 = vrot.lane.b32.xlu0 %v1634, 124
  %v1636 = vpop.permute.xlu0 %1635
  %1637 = vrot.lane.b32.xlu0 %v1633, 124
  %v1638 = vpop.permute.xlu0 %1637
  %1641 = vst.msk [vmem:[#allocation3 + $0x8] sm:$0xff] %vm594, %v1636
  %1642 = vst.msk [vmem:[#allocation3 + $0x10] sm:$0xff] %vm596, %v1636
  %1643 = vst.msk [vmem:[#allocation3 + $0x28] sm:$0x3] %vm598, %v1638
  %1644 = vst.msk [vmem:[#allocation3 + $0x30] sm:$0x3] %vm600, %v1638
  %v1645 = vrot.slane %v1596, 4
  %v1646 = vrot.slane %v1601, 4
  %v1647 = vsel %vm360, %v1645, %v1646
  %1648 = vrot.lane.b32.xlu0 %v1647, 80
  %v1649 = vpop.permute.xlu0 %1648
  %1650 = vrot.lane.b32.xlu0 %v1646, 80
  %v1651 = vpop.permute.xlu0 %1650
  %1654 = vst.msk [vmem:[#allocation3 + $0x10] sm:$0xff] %vm611, %v1649
  %1655 = vst.msk [vmem:[#allocation3 + $0x18] sm:$0xff] %vm613, %v1649
  %1656 = vst.msk [vmem:[#allocation3 + $0x30] sm:$0x3] %vm615, %v1651
  %1657 = vst.msk [vmem:[#allocation3 + $0x38] sm:$0x3] %vm617, %v1651
  %v1658 = vld [vmem:[#allocation3] sm:$0xff]
  %v1659 = vld [vmem:[#allocation3 + $0x8] sm:$0xff]
  %v1660 = vld [vmem:[#allocation3 + $0x10] sm:$0xff]
  %v1661 = vld [vmem:[#allocation3 + $0x18] sm:$0xff]
  %v1662 = vld [vmem:[#allocation3 + $0x20] sm:$0x3]
  %v1663 = vld [vmem:[#allocation3 + $0x28] sm:$0x3]
  %v1664 = vld [vmem:[#allocation3 + $0x30] sm:$0x3]
  %v1665 = vld [vmem:[#allocation3 + $0x38] sm:$0x3]
  %v1666 = vld [vmem:[%s5] sm:$0xff]
  %v1667 = vld [vmem:[%s5 + $0x8] sm:$0xff]
  %v1668 = vld [vmem:[%s5 + $0x10] sm:$0xff]
  %v1669 = vld [vmem:[%s5 + $0x18] sm:$0xff]
  %v1670 = vld [vmem:[%s5 + $0x20] sm:$0xff]
  %v1671 = vld [vmem:[%s5 + $0x28] sm:$0xff]
  %v1672 = vld [vmem:[%s5 + $0x30] sm:$0xff]
  %v1673 = vld [vmem:[%s5 + $0x38] sm:$0xff]
  %v1674 = vld [vmem:[%s5 + $0x40] sm:$0xff]
  %v1675 = vld [vmem:[%s5 + $0x48] sm:$0xff]
  %v1676 = vld [vmem:[%s5 + $0x50] sm:$0xff]
  %v1677 = vld [vmem:[%s5 + $0x58] sm:$0xff]
  %v1678 = vld [vmem:[%s5 + $0x60] sm:$0xff]
  %v1679 = vld [vmem:[%s5 + $0x68] sm:$0xff]
  %v1680 = vld [vmem:[%s5 + $0x70] sm:$0xff]
  %v1681 = vld [vmem:[%s5 + $0x78] sm:$0xff]
  %v1682 = vld [vmem:[%s5 + $0x80] sm:$0xff]
  %v1683 = vld [vmem:[%s5 + $0x88] sm:$0xff]
  %v1684 = vld [vmem:[%s5 + $0x90] sm:$0xff]
  %v1685 = vld [vmem:[%s5 + $0x98] sm:$0xff]
  %v1686 = vld [vmem:[%s5 + $0xa0] sm:$0xff]
  %v1687 = vld [vmem:[%s5 + $0xa8] sm:$0xff]
  %v1688 = vld [vmem:[%s5 + $0xb0] sm:$0xff]
  %v1689 = vld [vmem:[%s5 + $0xb8] sm:$0xff]
  %v1690 = vld [vmem:[%s5 + $0xc0] sm:$0xff]
  %v1691 = vld [vmem:[%s5 + $0xc8] sm:$0xff]
  %v1692 = vld [vmem:[%s5 + $0xd0] sm:$0xff]
  %v1693 = vld [vmem:[%s5 + $0xd8] sm:$0xff]
  %v1694 = vld [vmem:[%s5 + $0xe0] sm:$0xff]
  %v1695 = vld [vmem:[%s5 + $0xe8] sm:$0xff]
  %v1696 = vld [vmem:[%s5 + $0xf0] sm:$0xff]
  %v1697 = vld [vmem:[%s5 + $0xf8] sm:$0xff]
  %v1698 = vld [vmem:[%s5 + $0x100] sm:$0xff]
  %v1699 = vld [vmem:[%s5 + $0x108] sm:$0xff]
  %v1700 = vld [vmem:[%s5 + $0x110] sm:$0xff]
  %v1701 = vld [vmem:[%s5 + $0x118] sm:$0xff]
  %v1702 = vld [vmem:[%s5 + $0x120] sm:$0xff]
  %v1703 = vld [vmem:[%s5 + $0x128] sm:$0xff]
  %v1704 = vld [vmem:[%s5 + $0x130] sm:$0xff]
  %v1705 = vld [vmem:[%s5 + $0x138] sm:$0xff]
  %v1706 = vld [vmem:[%s5 + $0x140] sm:$0xff]
  %v1707 = vld [vmem:[%s5 + $0x148] sm:$0xff]
  %v1708 = vld [vmem:[%s5 + $0x150] sm:$0xff]
  %v1709 = vld [vmem:[%s5 + $0x158] sm:$0xff]
  %v1710 = vld [vmem:[%s5 + $0x160] sm:$0xff]
  %v1711 = vld [vmem:[%s5 + $0x168] sm:$0xff]
  %v1712 = vld [vmem:[%s5 + $0x170] sm:$0xff]
  %v1713 = vld [vmem:[%s5 + $0x178] sm:$0xff]
  %v1714 = vld [vmem:[%s5 + $0x180] sm:$0xff]
  %v1715 = vld [vmem:[%s5 + $0x188] sm:$0xff]
  %v1716 = vld [vmem:[%s5 + $0x190] sm:$0xff]
  %v1717 = vld [vmem:[%s5 + $0x198] sm:$0xff]
  %v1718 = vld [vmem:[%s5 + $0x1a0] sm:$0xff]
  %v1719 = vld [vmem:[%s5 + $0x1a8] sm:$0xff]
  %v1720 = vld [vmem:[%s5 + $0x1b0] sm:$0xff]
  %v1721 = vld [vmem:[%s5 + $0x1b8] sm:$0xff]
  %v1722 = vld [vmem:[%s5 + $0x1c0] sm:$0xff]
  %v1723 = vld [vmem:[%s5 + $0x1c8] sm:$0xff]
  %v1724 = vld [vmem:[%s5 + $0x1d0] sm:$0xff]
  %v1725 = vld [vmem:[%s5 + $0x1d8] sm:$0xff]
  %v1726 = vld [vmem:[%s5 + $0x1e0] sm:$0xff]
  %v1727 = vld [vmem:[%s5 + $0x1e8] sm:$0xff]
  %v1728 = vld [vmem:[%s5 + $0x1f0] sm:$0xff]
  %v1729 = vld [vmem:[%s5 + $0x1f8] sm:$0xff]
  %v1730 = vld [vmem:[%s5 + $0x200] sm:$0xff]
  %v1731 = vld [vmem:[%s5 + $0x208] sm:$0xff]
  %v1732 = vld [vmem:[%s5 + $0x210] sm:$0xff]
  %v1733 = vld [vmem:[%s5 + $0x218] sm:$0xff]
  %v1734 = vld [vmem:[%s5 + $0x220] sm:$0xff]
  %v1735 = vld [vmem:[%s5 + $0x228] sm:$0xff]
  %v1736 = vld [vmem:[%s5 + $0x230] sm:$0xff]
  %v1737 = vld [vmem:[%s5 + $0x238] sm:$0xff]
  %v1738 = vld [vmem:[%s5 + $0x240] sm:$0xff]
  %v1739 = vld [vmem:[%s5 + $0x248] sm:$0xff]
  %v1740 = vld [vmem:[%s5 + $0x250] sm:$0xff]
  %v1741 = vld [vmem:[%s5 + $0x258] sm:$0xff]
  %v1742 = vld [vmem:[%s5 + $0x260] sm:$0xff]
  %v1743 = vld [vmem:[%s5 + $0x268] sm:$0xff]
  %v1744 = vld [vmem:[%s5 + $0x270] sm:$0xff]
  %v1745 = vld [vmem:[%s5 + $0x278] sm:$0xff]
  %v1746 = vld [vmem:[%s5 + $0x280] sm:$0xff]
  %v1747 = vld [vmem:[%s5 + $0x288] sm:$0xff]
  %v1748 = vld [vmem:[%s5 + $0x290] sm:$0xff]
  %v1749 = vld [vmem:[%s5 + $0x298] sm:$0xff]
  %v1750 = vld [vmem:[%s5 + $0x2a0] sm:$0xff]
  %v1751 = vld [vmem:[%s5 + $0x2a8] sm:$0xff]
  %v1752 = vld [vmem:[%s5 + $0x2b0] sm:$0xff]
  %v1753 = vld [vmem:[%s5 + $0x2b8] sm:$0xff]
  %v1754 = vld [vmem:[%s5 + $0x2c0] sm:$0xff]
  %v1755 = vld [vmem:[%s5 + $0x2c8] sm:$0xff]
  %v1756 = vld [vmem:[%s5 + $0x2d0] sm:$0xff]
  %v1757 = vld [vmem:[%s5 + $0x2d8] sm:$0xff]
  %v1758 = vld [vmem:[%s5 + $0x2e0] sm:$0xff]
  %v1759 = vld [vmem:[%s5 + $0x2e8] sm:$0xff]
  %v1760 = vld [vmem:[%s5 + $0x2f0] sm:$0xff]
  %v1761 = vld [vmem:[%s5 + $0x2f8] sm:$0xff]
  %v1762 = vld [vmem:[%s5 + $0x300] sm:$0xff]
  %v1763 = vld [vmem:[%s5 + $0x308] sm:$0xff]
  %v1764 = vld [vmem:[%s5 + $0x310] sm:$0xff]
  %v1765 = vld [vmem:[%s5 + $0x318] sm:$0xff]
  %v1766 = vld [vmem:[%s5 + $0x320] sm:$0xff]
  %v1767 = vld [vmem:[%s5 + $0x328] sm:$0xff]
  %v1768 = vld [vmem:[%s5 + $0x330] sm:$0xff]
  %v1769 = vld [vmem:[%s5 + $0x338] sm:$0xff]
  %v1770 = vld [vmem:[%s5 + $0x340] sm:$0xf]
  %v1771 = vld [vmem:[%s5 + $0x348] sm:$0xf]
  %v1772 = vld [vmem:[%s6] sm:$0xff]
  %v1773 = vld [vmem:[%s6 + $0x8] sm:$0xff]
  %v1774 = vld [vmem:[%s6 + $0x10] sm:$0x3]
  %v1775 = vld [vmem:[%s6 + $0x18] sm:$0x3]
  %v1777 = vsel %vm613, %v1661, 0
  %v1780 = vsel %vm613, %v1665, 0
  %v1783 = vsel %vm360, %v1770, 0
  %v1786 = vsel %vm360, %v1771, 0
  %1788 = vmatprep.subr.mxu0 %v1667
  %1789 = vmatpush1.msra.mxu0 %v1666
  %1790 = vmatprep.subr.mxu0 %v1669
  %1791 = vmatpush1.msra.mxu0 %v1668
  %1792 = vmatprep.subr.mxu0 %v1671
  %1793 = vmatpush1.msra.mxu0 %v1670
  %1794 = vmatprep.subr.mxu0 %v1673
  %1795 = vmatpush1.msra.mxu0 %v1672
  %1796 = vmatprep.subr.mxu0 %v1675
  %1797 = vmatpush1.msra.mxu0 %v1674
  %1798 = vmatprep.subr.mxu0 %v1677
  %1799 = vmatpush1.msra.mxu0 %v1676
  %1800 = vmatprep.subr.mxu0 %v1679
  %1801 = vmatpush1.msra.mxu0 %v1678
  %1802 = vmatprep.subr.mxu0 %v1681
  %1803 = vmatpush1.msra.mxu0 %v1680
  %1804 = vmatprep.subr.mxu0 %v1683
  %1805 = vmatpush1.msra.mxu0 %v1682
  %1806 = vmatprep.subr.mxu0 %v1685
  %1807 = vmatpush1.msra.mxu0 %v1684
  %1808 = vmatprep.subr.mxu0 %v1687
  %1809 = vmatpush1.msra.mxu0 %v1686
  %1810 = vmatprep.subr.mxu0 %v1689
  %1811 = vmatpush1.msra.mxu0 %v1688
  %1812 = vmatprep.subr.mxu0 %v1691
  %1813 = vmatpush1.msra.mxu0 %v1690
  %1814 = vmatprep.subr.mxu0 %v1693
  %1815 = vmatpush1.msra.mxu0 %v1692
  %1816 = vmatprep.subr.mxu0 %v1695
  %1817 = vmatpush1.msra.mxu0 %v1694
  %1818 = vmatprep.subr.mxu0 %v1697
  %1819 = vmatpush1.msra.mxu0 %v1696
  %1820 = vmatprep.subr.mxu0 %v1699
  %1821 = vmatpush1.msra.mxu0 %v1698
  %1822 = vmatprep.subr.mxu0 %v1701
  %1823 = vmatpush1.msra.mxu0 %v1700
  %1824 = vmatprep.subr.mxu0 %v1703
  %1825 = vmatpush1.msra.mxu0 %v1702
  %1826 = vmatprep.subr.mxu0 %v1705
  %1827 = vmatpush1.msra.mxu0 %v1704
  %1828 = vmatprep.subr.mxu0 %v1707
  %1829 = vmatpush1.msra.mxu0 %v1706
  %1830 = vmatprep.subr.mxu0 %v1709
  %1831 = vmatpush1.msra.mxu0 %v1708
  %1832 = vmatprep.subr.mxu0 %v1711
  %1833 = vmatpush1.msra.mxu0 %v1710
  %1834 = vmatprep.subr.mxu0 %v1713
  %1835 = vmatpush1.msra.mxu0 %v1712
  %1836 = vmatprep.subr.mxu0 %v1715
  %1837 = vmatpush1.msra.mxu0 %v1714
  %1838 = vmatprep.subr.mxu0 %v1717
  %1839 = vmatpush1.msra.mxu0 %v1716
  %1840 = vmatprep.subr.mxu0 %v1719
  %1841 = vmatpush1.msra.mxu0 %v1718
  %1842 = vmatprep.subr.mxu0 %v1721
  %1843 = vmatpush1.msra.mxu0 %v1720
  %1844 = vmatprep.subr.mxu0 %v1723
  %1845 = vmatpush1.msra.mxu0 %v1722
  %1846 = vmatprep.subr.mxu0 %v1725
  %1847 = vmatpush1.msra.mxu0 %v1724
  %1848 = vmatprep.subr.mxu0 %v1727
  %1849 = vmatpush1.msra.mxu0 %v1726
  %1850 = vmatprep.subr.mxu0 %v1729
  %1851 = vmatpush1.msra.mxu0 %v1728
  %1852 = vmatprep.mubr.f32.mxu0 %v1659
  %1853 = vmatmul.mubr.f32.gmra.mrb[0].mxu0 %v1658
  %v1854 = vpop.f32.mrb[0].mxu0
  %v1855 = vadd.f32 %v1772, %v1854
  %v1856 = vpop.f32.mrb[0].mxu0
  %v1857 = vadd.f32 %v1773, %v1856
  %1858 = vmatprep.mubr.f32.mxu0 %v1663
  %1859 = vmatmul.mubr.f32.gmra.mrb[0].mxu0 %v1662
  %v1860 = vpop.f32.mrb[0].mxu0
  %v1861 = vadd.f32 %v1774, %v1860
  %v1862 = vpop.f32.mrb[0].mxu0
  %v1863 = vadd.f32 %v1775, %v1862
  %1864 = vdwg.mxu0
  %1865 = vmatprep.subr.mxu0 %v1731
  %1866 = vmatpush1.msra.mxu0 %v1730
  %1867 = vmatprep.subr.mxu0 %v1733
  %1868 = vmatpush1.msra.mxu0 %v1732
  %1869 = vmatprep.subr.mxu0 %v1735
  %1870 = vmatpush1.msra.mxu0 %v1734
  %1871 = vmatprep.subr.mxu0 %v1737
  %1872 = vmatpush1.msra.mxu0 %v1736
  %1873 = vmatprep.subr.mxu0 %v1739
  %1874 = vmatpush1.msra.mxu0 %v1738
  %1875 = vmatprep.subr.mxu0 %v1741
  %1876 = vmatpush1.msra.mxu0 %v1740
  %1877 = vmatprep.subr.mxu0 %v1743
  %1878 = vmatpush1.msra.mxu0 %v1742
  %1879 = vmatprep.subr.mxu0 %v1745
  %1880 = vmatpush1.msra.mxu0 %v1744
  %1881 = vmatprep.subr.mxu0 %v1747
  %1882 = vmatpush1.msra.mxu0 %v1746
  %1883 = vmatprep.subr.mxu0 %v1749
  %1884 = vmatpush1.msra.mxu0 %v1748
  %1885 = vmatprep.subr.mxu0 %v1751
  %1886 = vmatpush1.msra.mxu0 %v1750
  %1887 = vmatprep.subr.mxu0 %v1753
  %1888 = vmatpush1.msra.mxu0 %v1752
  %1889 = vmatprep.subr.mxu0 %v1755
  %1890 = vmatpush1.msra.mxu0 %v1754
  %1891 = vmatprep.subr.mxu0 %v1757
  %1892 = vmatpush1.msra.mxu0 %v1756
  %1893 = vmatprep.subr.mxu0 %v1759
  %1894 = vmatpush1.msra.mxu0 %v1758
  %1895 = vmatprep.subr.mxu0 %v1761
  %1896 = vmatpush1.msra.mxu0 %v1760
  %1897 = vmatprep.subr.mxu0 %v1763
  %1898 = vmatpush1.msra.mxu0 %v1762
  %1899 = vmatprep.subr.mxu0 %v1765
  %1900 = vmatpush1.msra.mxu0 %v1764
  %1901 = vmatprep.subr.mxu0 %v1767
  %1902 = vmatpush1.msra.mxu0 %v1766
  %1903 = vmatprep.subr.mxu0 %v1769
  %1904 = vmatpush1.msra.mxu0 %v1768
  %1905 = vmatprep.subr.mxu0 %v1786
  %1906 = vmatpush1.msra.mxu0 %v1783
  %1907 = vmatprep.subr.mxu0 0.0
  %1908 = vmatpush1.msra.mxu0 0.0
  %1909 = vmatprep.subr.mxu0 0.0
  %1910 = vmatpush1.msra.mxu0 0.0
  %1911 = vmatprep.subr.mxu0 0.0
  %1912 = vmatpush1.msra.mxu0 0.0
  %1913 = vmatprep.subr.mxu0 0.0
  %1914 = vmatpush1.msra.mxu0 0.0
  %1915 = vmatprep.subr.mxu0 0.0
  %1916 = vmatpush1.msra.mxu0 0.0
  %1917 = vmatprep.subr.mxu0 0.0
  %1918 = vmatpush1.msra.mxu0 0.0
  %1919 = vmatprep.subr.mxu0 0.0
  %1920 = vmatpush1.msra.mxu0 0.0
  %1921 = vmatprep.subr.mxu0 0.0
  %1922 = vmatpush1.msra.mxu0 0.0
  %1923 = vmatprep.subr.mxu0 0.0
  %1924 = vmatpush1.msra.mxu0 0.0
  %1925 = vmatprep.subr.mxu0 0.0
  %1926 = vmatpush1.msra.mxu0 0.0
  %1927 = vmatprep.subr.mxu0 0.0
  %1928 = vmatpush1.msra.mxu0 0.0
  %1929 = vmatprep.mubr.f32.mxu0 %v1777
  %1930 = vmatmul.mubr.f32.gmra.mrb[0].mxu0 %v1660
  %v1931 = vpop.f32.mrb[0].mxu0
  %v1932 = vadd.f32 %v1855, %v1931
  %v1933 = vpop.f32.mrb[0].mxu0
  %v1934 = vadd.f32 %v1857, %v1933
  %1935 = vmatprep.mubr.f32.mxu0 %v1780
  %1936 = vmatmul.mubr.f32.gmra.mrb[0].mxu0 %v1664
  %v1937 = vpop.f32.mrb[0].mxu0
  %v1938 = vadd.f32 %v1861, %v1937
  %v1939 = vpop.f32.mrb[0].mxu0
  %v1940 = vadd.f32 %v1863, %v1939
  %1941 = vdwg.mxu0
  %v1942 = vxor.u32 %v1932, 2147483648
  %v1943 = vxor.u32 %v1934, 2147483648
  %v1944 = vxor.u32 %v1938, 2147483648
  %v1945 = vxor.u32 %v1940, 2147483648
  %v1946 = vmul.f32 %v1942, 1.442695
  %v1947 = vpow.pop %v1946
  %v1948 = vmul.f32 %v1943, 1.442695
  %v1949 = vpow.pop %v1948
  %v1950 = vmul.f32 %v1944, 1.442695
  %v1951 = vpow.pop %v1950
  %v1952 = vmul.f32 %v1945, 1.442695
  %v1953 = vpow.pop %v1952
  %v1954 = vadd.f32 %v1947, 1.0
  %v1955 = vadd.f32 %v1949, 1.0
  %v1956 = vadd.f32 %v1951, 1.0
  %v1957 = vadd.f32 %v1953, 1.0
  %v1958 = vrcp.pop %v1954
  %v1959 = vmul.f32 1.0, %v1958
  %v1960 = vrcp.pop %v1955
  %v1961 = vmul.f32 1.0, %v1960
  %v1962 = vrcp.pop %v1956
  %v1963 = vmul.f32 1.0, %v1962
  %v1964 = vrcp.pop %v1957
  %v1965 = vmul.f32 1.0, %v1964
  %v1966 = vld [vmem:[%s7] sm:$0x1f]
  %v1968 = vsel %vm928, %v1966, 0
  %v1971 = vsel %vm932, %v1963, 0
  %v1974 = vsel %vm932, %v1965, 0
  %1976 = vmatprep.subr.mxu0 %v1961
  %1977 = vmatpush1.msra.mxu0 %v1959
  %1978 = vmatprep.subr.mxu0 %v1974
  %1979 = vmatpush1.msra.mxu0 %v1971
  %1980 = vmatprep.subr.mxu0 0.0
  %1981 = vmatpush1.msra.mxu0 0.0
  %1982 = vmatprep.subr.mxu0 0.0
  %1983 = vmatpush1.msra.mxu0 0.0
  %1984 = vmatprep.subr.mxu0 0.0
  %1985 = vmatpush1.msra.mxu0 0.0
  %1986 = vmatprep.subr.mxu0 0.0
  %1987 = vmatpush1.msra.mxu0 0.0
  %1988 = vmatprep.subr.mxu0 0.0
  %1989 = vmatpush1.msra.mxu0 0.0
  %1990 = vmatprep.subr.mxu0 0.0
  %1991 = vmatpush1.msra.mxu0 0.0
  %1992 = vmatprep.subr.mxu0 0.0
  %1993 = vmatpush1.msra.mxu0 0.0
  %1994 = vmatprep.subr.mxu0 0.0
  %1995 = vmatpush1.msra.mxu0 0.0
  %1996 = vmatprep.subr.mxu0 0.0
  %1997 = vmatpush1.msra.mxu0 0.0
  %1998 = vmatprep.subr.mxu0 0.0
  %1999 = vmatpush1.msra.mxu0 0.0
  %2000 = vmatprep.subr.mxu0 0.0
  %2001 = vmatpush1.msra.mxu0 0.0
  %2002 = vmatprep.subr.mxu0 0.0
  %2003 = vmatpush1.msra.mxu0 0.0
  %2004 = vmatprep.subr.mxu0 0.0
  %2005 = vmatpush1.msra.mxu0 0.0
  %2006 = vmatprep.subr.mxu0 0.0
  %2007 = vmatpush1.msra.mxu0 0.0
  %2008 = vmatprep.subr.mxu0 0.0
  %2009 = vmatpush1.msra.mxu0 0.0
  %2010 = vmatprep.subr.mxu0 0.0
  %2011 = vmatpush1.msra.mxu0 0.0
  %2012 = vmatprep.subr.mxu0 0.0
  %2013 = vmatpush1.msra.mxu0 0.0
  %2014 = vmatprep.subr.mxu0 0.0
  %2015 = vmatpush1.msra.mxu0 0.0
  %2016 = vmatprep.subr.mxu0 0.0
  %2017 = vmatpush1.msra.mxu0 0.0
  %2018 = vmatprep.subr.mxu0 0.0
  %2019 = vmatpush1.msra.mxu0 0.0
  %2020 = vmatprep.subr.mxu0 0.0
  %2021 = vmatpush1.msra.mxu0 0.0
  %2022 = vmatprep.subr.mxu0 0.0
  %2023 = vmatpush1.msra.mxu0 0.0
  %2024 = vmatprep.subr.mxu0 0.0
  %2025 = vmatpush1.msra.mxu0 0.0
  %2026 = vmatprep.subr.mxu0 0.0
  %2027 = vmatpush1.msra.mxu0 0.0
  %2028 = vmatprep.subr.mxu0 0.0
  %2029 = vmatpush1.msra.mxu0 0.0
  %2030 = vmatprep.subr.mxu0 0.0
  %2031 = vmatpush1.msra.mxu0 0.0
  %2032 = vmatprep.subr.mxu0 0.0
  %2033 = vmatpush1.msra.mxu0 0.0
  %2034 = vmatprep.subr.mxu0 0.0
  %2035 = vmatpush1.msra.mxu0 0.0
  %2036 = vmatprep.subr.mxu0 0.0
  %2037 = vmatpush1.msra.mxu0 0.0
  %2038 = vmatprep.subr.mxu0 0.0
  %2039 = vmatpush1.msra.mxu0 0.0
  %2040 = vmatprep.mubr.f32.mxu0 0.0
  %2041 = vmatmul.mubr.f32.gmra.mrb[0].mxu0 %v1968
  %v2042 = vpop.f32.mrb[0].mxu0
  %v2043 = vadd.f32 0.0, %v2042
  %v2044 = vpop.f32.mrb[0].mxu0
  %v2045 = vadd.f32 0.0, %v2044
  %2046 = vdwg.mxu0
  %v2047 = vld [vmem:[%s8] sm:$0xff]
  %v2048 = vld [vmem:[%s8 + $0x8] sm:$0xff]
  %v2049 = vld [vmem:[%s8 + $0x10] sm:$0xff]
  %v2050 = vld [vmem:[%s8 + $0x18] sm:$0xff]
  %v2051 = vld [vmem:[%s8 + $0x20] sm:$0xff]
  %v2052 = vld [vmem:[%s8 + $0x28] sm:$0xff]
  %v2053 = vld [vmem:[%s8 + $0x30] sm:$0xff]
  %v2054 = vld [vmem:[%s8 + $0x38] sm:$0xff]
  %v2055 = vld [vmem:[%s8 + $0x40] sm:$0xff]
  %v2056 = vld [vmem:[%s8 + $0x48] sm:$0xff]
  %v2057 = vld [vmem:[%s8 + $0x50] sm:$0xff]
  %v2058 = vld [vmem:[%s8 + $0x58] sm:$0xff]
  %v2059 = vld [vmem:[%s8 + $0x60] sm:$0xff]
  %v2060 = vld [vmem:[%s8 + $0x68] sm:$0xff]
  %v2061 = vld [vmem:[%s8 + $0x70] sm:$0xff]
  %v2062 = vld [vmem:[%s8 + $0x78] sm:$0xff]
  %v2063 = vld [vmem:[%s8 + $0x80] sm:$0xff]
  %v2064 = vld [vmem:[%s8 + $0x88] sm:$0xff]
  %v2065 = vld [vmem:[%s8 + $0x90] sm:$0xff]
  %v2066 = vld [vmem:[%s8 + $0x98] sm:$0xff]
  %v2068 = vsel %vm54, %v2045, 0
  %2070 = vmatprep.subr.mxu0 0.0
  %2071 = vmatpush1.msra.mxu0 %v2047
  %2072 = vmatprep.subr.mxu0 0.0
  %2073 = vmatpush1.msra.mxu0 %v2048
  %2074 = vmatprep.subr.mxu0 0.0
  %2075 = vmatpush1.msra.mxu0 %v2049
  %2076 = vmatprep.subr.mxu0 0.0
  %2077 = vmatpush1.msra.mxu0 %v2050
  %2078 = vmatprep.subr.mxu0 0.0
  %2079 = vmatpush1.msra.mxu0 %v2051
  %2080 = vmatprep.subr.mxu0 0.0
  %2081 = vmatpush1.msra.mxu0 %v2052
  %2082 = vmatprep.subr.mxu0 0.0
  %2083 = vmatpush1.msra.mxu0 %v2053
  %2084 = vmatprep.subr.mxu0 0.0
  %2085 = vmatpush1.msra.mxu0 %v2054
  %2086 = vmatprep.subr.mxu0 0.0
  %2087 = vmatpush1.msra.mxu0 %v2055
  %2088 = vmatprep.subr.mxu0 0.0
  %2089 = vmatpush1.msra.mxu0 %v2056
  %2090 = vmatprep.subr.mxu0 0.0
  %2091 = vmatpush1.msra.mxu0 %v2057
  %2092 = vmatprep.subr.mxu0 0.0
  %2093 = vmatpush1.msra.mxu0 %v2058
  %2094 = vmatprep.subr.mxu0 0.0
  %2095 = vmatpush1.msra.mxu0 %v2059
  %2096 = vmatprep.subr.mxu0 0.0
  %2097 = vmatpush1.msra.mxu0 %v2060
  %2098 = vmatprep.subr.mxu0 0.0
  %2099 = vmatpush1.msra.mxu0 %v2061
  %2100 = vmatprep.subr.mxu0 0.0
  %2101 = vmatpush1.msra.mxu0 %v2062
  %2102 = vmatprep.subr.mxu0 0.0
  %2103 = vmatpush1.msra.mxu0 %v2063
  %2104 = vmatprep.subr.mxu0 0.0
  %2105 = vmatpush1.msra.mxu0 %v2064
  %2106 = vmatprep.subr.mxu0 0.0
  %2107 = vmatpush1.msra.mxu0 %v2065
  %2108 = vmatprep.subr.mxu0 0.0
  %2109 = vmatpush1.msra.mxu0 %v2066
  %2110 = vmatprep.subr.mxu0 0.0
  %2111 = vmatpush1.msra.mxu0 0.0
  %2112 = vmatprep.subr.mxu0 0.0
  %2113 = vmatpush1.msra.mxu0 0.0
  %2114 = vmatprep.subr.mxu0 0.0
  %2115 = vmatpush1.msra.mxu0 0.0
  %2116 = vmatprep.subr.mxu0 0.0
  %2117 = vmatpush1.msra.mxu0 0.0
  %2118 = vmatprep.subr.mxu0 0.0
  %2119 = vmatpush1.msra.mxu0 0.0
  %2120 = vmatprep.subr.mxu0 0.0
  %2121 = vmatpush1.msra.mxu0 0.0
  %2122 = vmatprep.subr.mxu0 0.0
  %2123 = vmatpush1.msra.mxu0 0.0
  %2124 = vmatprep.subr.mxu0 0.0
  %2125 = vmatpush1.msra.mxu0 0.0
  %2126 = vmatprep.subr.mxu0 0.0
  %2127 = vmatpush1.msra.mxu0 0.0
  %2128 = vmatprep.subr.mxu0 0.0
  %2129 = vmatpush1.msra.mxu0 0.0
  %2130 = vmatprep.subr.mxu0 0.0
  %2131 = vmatpush1.msra.mxu0 0.0
  %2132 = vmatprep.subr.mxu0 0.0
  %2133 = vmatpush1.msra.mxu0 0.0
  %2134 = vmatprep.mubr.f32.mxu0 %v2068
  %2135 = vmatmul.mubr.f32.gmra.mrb[0].mxu0 %v2043
  %v2136 = vpop.f32.mrb[0].mxu0
  %v2137 = vadd.f32 0.0, %v2136
  %v2138 = vpop.f32.mrb[0].mxu0
  %2139 = vdwg.mxu0
  %2140 = vst.msk [vmem:[#allocation4 + $0x1] sm:$0x1] %vm1103, %v2137
  %2141 = vst.msk [vmem:[%s1105] sm:$0x2] %vm1106, %v2137
  %2142 = vst.msk [vmem:[%s1108 - $0x1] sm:$0x4] %vm1109, %v2137
  %2143 = vst.msk [vmem:[%s1111 - $0x2] sm:$0x8] %vm1112, %v2137
  %2144 = vst.msk [vmem:[%s1114 - $0x3] sm:$0x10] %vm1115, %v2137
  %s2145 = scalar_lea.vmem %s0, 64
  %v2146 = vld [vmem:[%s2145] sm:$0xff]
  %v2147 = vld [vmem:[%s2145 + $0x8] sm:$0xff]
  %v2148 = vld [vmem:[%s2145 + $0x10] sm:$0xff]
  %v2149 = vld [vmem:[%s2145 + $0x18] sm:$0xf]
  %2150 = vst.msk [vmem:[#allocation2] sm:$0xff] %vm54, %v2146
  %2151 = vst.msk [vmem:[#allocation2 + $0x10] sm:$0xff] %vm54, %v2147
  %2152 = vst.msk [vmem:[#allocation2 + $0x20] sm:$0xff] %vm54, %v2148
  %2153 = vst.msk [vmem:[#allocation2 + $0x30] sm:$0xf] %vm58, %v2149
  %v2154 = vld [vmem:[%s2145 + $0x1] sm:$0xff]
  %v2155 = vld [vmem:[%s2145 + $0x9] sm:$0xff]
  %v2156 = vld [vmem:[%s2145 + $0x11] sm:$0xff]
  %v2157 = vld [vmem:[%s2145 + $0x19] sm:$0xf]
  %2162 = vrot.lane.b32.xlu0 %v2154, 32
  %v2163 = vpop.permute.xlu0 %2162
  %2164 = vrot.lane.b32.xlu0 %v2155, 32
  %v2165 = vpop.permute.xlu0 %2164
  %2166 = vrot.lane.b32.xlu0 %v2156, 32
  %v2167 = vpop.permute.xlu0 %2166
  %2168 = vrot.lane.b32.xlu0 %v2157, 32
  %v2169 = vpop.permute.xlu0 %2168
  %2174 = vst.msk [vmem:[#allocation2] sm:$0xff] %vm80, %v2163
  %2175 = vst.msk [vmem:[#allocation2 + $0x10] sm:$0xff] %vm80, %v2165
  %2176 = vst.msk [vmem:[#allocation2 + $0x20] sm:$0xff] %vm80, %v2167
  %2177 = vst.msk [vmem:[#allocation2 + $0x30] sm:$0xf] %vm84, %v2169
  %v2178 = vld [vmem:[%s2145 + $0x2] sm:$0xff]
  %v2179 = vld [vmem:[%s2145 + $0xa] sm:$0xff]
  %v2180 = vld [vmem:[%s2145 + $0x12] sm:$0xff]
  %v2181 = vld [vmem:[%s2145 + $0x1a] sm:$0xf]
  %2186 = vrot.lane.b32.xlu0 %v2178, 64
  %v2187 = vpop.permute.xlu0 %2186
  %2188 = vrot.lane.b32.xlu0 %v2179, 64
  %v2189 = vpop.permute.xlu0 %2188
  %2190 = vrot.lane.b32.xlu0 %v2180, 64
  %v2191 = vpop.permute.xlu0 %2190
  %2192 = vrot.lane.b32.xlu0 %v2181, 64
  %v2193 = vpop.permute.xlu0 %2192
  %2198 = vst.msk [vmem:[#allocation2] sm:$0xff] %vm106, %v2187
  %2199 = vst.msk [vmem:[#allocation2 + $0x10] sm:$0xff] %vm106, %v2189
  %2200 = vst.msk [vmem:[#allocation2 + $0x20] sm:$0xff] %vm106, %v2191
  %2201 = vst.msk [vmem:[#allocation2 + $0x30] sm:$0xf] %vm110, %v2193
  %v2202 = vld [vmem:[%s2145 + $0x3] sm:$0xff]
  %v2203 = vld [vmem:[%s2145 + $0xb] sm:$0xff]
  %v2204 = vld [vmem:[%s2145 + $0x13] sm:$0xff]
  %v2205 = vld [vmem:[%s2145 + $0x1b] sm:$0xf]
  %2210 = vrot.lane.b32.xlu0 %v2202, 96
  %v2211 = vpop.permute.xlu0 %2210
  %2212 = vrot.lane.b32.xlu0 %v2203, 96
  %v2213 = vpop.permute.xlu0 %2212
  %2214 = vrot.lane.b32.xlu0 %v2204, 96
  %v2215 = vpop.permute.xlu0 %2214
  %2216 = vrot.lane.b32.xlu0 %v2205, 96
  %v2217 = vpop.permute.xlu0 %2216
  %2222 = vst.msk [vmem:[#allocation2] sm:$0xff] %vm132, %v2211
  %2223 = vst.msk [vmem:[#allocation2 + $0x10] sm:$0xff] %vm132, %v2213
  %2224 = vst.msk [vmem:[#allocation2 + $0x20] sm:$0xff] %vm132, %v2215
  %2225 = vst.msk [vmem:[#allocation2 + $0x30] sm:$0xf] %vm136, %v2217
  %v2226 = vld [vmem:[%s2145 + $0x4] sm:$0xff]
  %v2227 = vld [vmem:[%s2145 + $0xc] sm:$0xff]
  %v2228 = vld [vmem:[%s2145 + $0x14] sm:$0xff]
  %v2229 = vld [vmem:[%s2145 + $0x1c] sm:$0xf]
  %2230 = vst.msk [vmem:[#allocation2 + $0x8] sm:$0xff] %vm54, %v2226
  %2231 = vst.msk [vmem:[#allocation2 + $0x18] sm:$0xff] %vm54, %v2227
  %2232 = vst.msk [vmem:[#allocation2 + $0x28] sm:$0xff] %vm54, %v2228
  %2233 = vst.msk [vmem:[#allocation2 + $0x38] sm:$0xf] %vm58, %v2229
  %v2234 = vld [vmem:[#allocation2] sm:$0xff]
  %v2235 = vld [vmem:[#allocation2 + $0x8] sm:$0xff]
  %v2236 = vld [vmem:[#allocation2 + $0x10] sm:$0xff]
  %v2237 = vld [vmem:[#allocation2 + $0x18] sm:$0xff]
  %v2238 = vld [vmem:[#allocation2 + $0x20] sm:$0xff]
  %v2239 = vld [vmem:[#allocation2 + $0x28] sm:$0xff]
  %v2240 = vld [vmem:[#allocation2 + $0x30] sm:$0xf]
  %v2241 = vld [vmem:[#allocation2 + $0x38] sm:$0xf]
  %v2242 = vld [vmem:[%s1] sm:$0xff]
  %v2243 = vld [vmem:[%s1 + $0x8] sm:$0xff]
  %v2244 = vld [vmem:[%s1 + $0x10] sm:$0xff]
  %v2245 = vld [vmem:[%s1 + $0x18] sm:$0xff]
  %v2246 = vld [vmem:[%s1 + $0x20] sm:$0xff]
  %v2247 = vld [vmem:[%s1 + $0x28] sm:$0xff]
  %v2248 = vld [vmem:[%s1 + $0x30] sm:$0xff]
  %v2249 = vld [vmem:[%s1 + $0x38] sm:$0xff]
  %v2250 = vld [vmem:[%s1 + $0x40] sm:$0xff]
  %v2251 = vld [vmem:[%s1 + $0x48] sm:$0xff]
  %v2252 = vld [vmem:[%s1 + $0x50] sm:$0xff]
  %v2253 = vld [vmem:[%s1 + $0x58] sm:$0xff]
  %v2254 = vld [vmem:[%s1 + $0x60] sm:$0xff]
  %v2255 = vld [vmem:[%s1 + $0x68] sm:$0xff]
  %v2256 = vld [vmem:[%s1 + $0x70] sm:$0xff]
  %v2257 = vld [vmem:[%s1 + $0x78] sm:$0xff]
  %v2258 = vld [vmem:[%s1 + $0x80] sm:$0xff]
  %v2259 = vld [vmem:[%s1 + $0x88] sm:$0xff]
  %v2260 = vld [vmem:[%s1 + $0x90] sm:$0xff]
  %v2261 = vld [vmem:[%s1 + $0x98] sm:$0xff]
  %v2262 = vld [vmem:[%s1 + $0xa0] sm:$0xff]
  %v2263 = vld [vmem:[%s1 + $0xa8] sm:$0xff]
  %v2264 = vld [vmem:[%s1 + $0xb0] sm:$0xff]
  %v2265 = vld [vmem:[%s1 + $0xb8] sm:$0xff]
  %v2266 = vld [vmem:[%s1 + $0xc0] sm:$0xff]
  %v2267 = vld [vmem:[%s1 + $0xc8] sm:$0xff]
  %v2268 = vld [vmem:[%s1 + $0xd0] sm:$0xff]
  %v2269 = vld [vmem:[%s1 + $0xd8] sm:$0xff]
  %v2270 = vld [vmem:[%s1 + $0xe0] sm:$0xff]
  %v2271 = vld [vmem:[%s1 + $0xe8] sm:$0xff]
  %v2272 = vld [vmem:[%s1 + $0xf0] sm:$0xff]
  %v2273 = vld [vmem:[%s1 + $0xf8] sm:$0xff]
  %v2274 = vld [vmem:[%s1 + $0x100] sm:$0xff]
  %v2275 = vld [vmem:[%s1 + $0x108] sm:$0xff]
  %v2276 = vld [vmem:[%s1 + $0x110] sm:$0xff]
  %v2277 = vld [vmem:[%s1 + $0x118] sm:$0xff]
  %v2278 = vld [vmem:[%s1 + $0x120] sm:$0xff]
  %v2279 = vld [vmem:[%s1 + $0x128] sm:$0xff]
  %v2280 = vld [vmem:[%s1 + $0x130] sm:$0xff]
  %v2281 = vld [vmem:[%s1 + $0x138] sm:$0xff]
  %v2282 = vld [vmem:[%s2] sm:$0xff]
  %v2283 = vld [vmem:[%s2 + $0x8] sm:$0xff]
  %v2284 = vld [vmem:[%s2 + $0x10] sm:$0xff]
  %v2285 = vld [vmem:[%s2 + $0x18] sm:$0xff]
  %v2286 = vld [vmem:[%s2 + $0x20] sm:$0xff]
  %v2287 = vld [vmem:[%s2 + $0x28] sm:$0xff]
  %v2288 = vld [vmem:[%s2 + $0x30] sm:$0xf]
  %v2289 = vld [vmem:[%s2 + $0x38] sm:$0xf]
  %v2291 = vsel %vm54, %v2235, 0
  %v2294 = vsel %vm54, %v2237, 0
  %v2297 = vsel %vm54, %v2239, 0
  %v2300 = vsel %vm54, %v2241, 0
  %2302 = vmatprep.subr.mxu0 %v2243
  %2303 = vmatpush1.msra.mxu0 %v2242
  %2304 = vmatprep.subr.mxu0 %v2245
  %2305 = vmatpush1.msra.mxu0 %v2244
  %2306 = vmatprep.subr.mxu0 %v2247
  %2307 = vmatpush1.msra.mxu0 %v2246
  %2308 = vmatprep.subr.mxu0 %v2249
  %2309 = vmatpush1.msra.mxu0 %v2248
  %2310 = vmatprep.subr.mxu0 %v2251
  %2311 = vmatpush1.msra.mxu0 %v2250
  %2312 = vmatprep.subr.mxu0 %v2253
  %2313 = vmatpush1.msra.mxu0 %v2252
  %2314 = vmatprep.subr.mxu0 %v2255
  %2315 = vmatpush1.msra.mxu0 %v2254
  %2316 = vmatprep.subr.mxu0 %v2257
  %2317 = vmatpush1.msra.mxu0 %v2256
  %2318 = vmatprep.subr.mxu0 %v2259
  %2319 = vmatpush1.msra.mxu0 %v2258
  %2320 = vmatprep.subr.mxu0 %v2261
  %2321 = vmatpush1.msra.mxu0 %v2260
  %2322 = vmatprep.subr.mxu0 %v2263
  %2323 = vmatpush1.msra.mxu0 %v2262
  %2324 = vmatprep.subr.mxu0 %v2265
  %2325 = vmatpush1.msra.mxu0 %v2264
  %2326 = vmatprep.subr.mxu0 %v2267
  %2327 = vmatpush1.msra.mxu0 %v2266
  %2328 = vmatprep.subr.mxu0 %v2269
  %2329 = vmatpush1.msra.mxu0 %v2268
  %2330 = vmatprep.subr.mxu0 %v2271
  %2331 = vmatpush1.msra.mxu0 %v2270
  %2332 = vmatprep.subr.mxu0 %v2273
  %2333 = vmatpush1.msra.mxu0 %v2272
  %2334 = vmatprep.subr.mxu0 %v2275
  %2335 = vmatpush1.msra.mxu0 %v2274
  %2336 = vmatprep.subr.mxu0 %v2277
  %2337 = vmatpush1.msra.mxu0 %v2276
  %2338 = vmatprep.subr.mxu0 %v2279
  %2339 = vmatpush1.msra.mxu0 %v2278
  %2340 = vmatprep.subr.mxu0 %v2281
  %2341 = vmatpush1.msra.mxu0 %v2280
  %2342 = vmatprep.subr.mxu0 0.0
  %2343 = vmatpush1.msra.mxu0 0.0
  %2344 = vmatprep.subr.mxu0 0.0
  %2345 = vmatpush1.msra.mxu0 0.0
  %2346 = vmatprep.subr.mxu0 0.0
  %2347 = vmatpush1.msra.mxu0 0.0
  %2348 = vmatprep.subr.mxu0 0.0
  %2349 = vmatpush1.msra.mxu0 0.0
  %2350 = vmatprep.subr.mxu0 0.0
  %2351 = vmatpush1.msra.mxu0 0.0
  %2352 = vmatprep.subr.mxu0 0.0
  %2353 = vmatpush1.msra.mxu0 0.0
  %2354 = vmatprep.subr.mxu0 0.0
  %2355 = vmatpush1.msra.mxu0 0.0
  %2356 = vmatprep.subr.mxu0 0.0
  %2357 = vmatpush1.msra.mxu0 0.0
  %2358 = vmatprep.subr.mxu0 0.0
  %2359 = vmatpush1.msra.mxu0 0.0
  %2360 = vmatprep.subr.mxu0 0.0
  %2361 = vmatpush1.msra.mxu0 0.0
  %2362 = vmatprep.subr.mxu0 0.0
  %2363 = vmatpush1.msra.mxu0 0.0
  %2364 = vmatprep.subr.mxu0 0.0
  %2365 = vmatpush1.msra.mxu0 0.0
  %2366 = vmatprep.mubr.f32.mxu0 %v2291
  %2367 = vmatmul.mubr.f32.gmra.mrb[0].mxu0 %v2234
  %v2368 = vpop.f32.mrb[0].mxu0
  %v2369 = vadd.f32 %v2282, %v2368
  %v2370 = vpop.f32.mrb[0].mxu0
  %v2371 = vadd.f32 %v2283, %v2370
  %2372 = vmatprep.mubr.f32.mxu0 %v2294
  %2373 = vmatmul.mubr.f32.gmra.mrb[0].mxu0 %v2236
  %v2374 = vpop.f32.mrb[0].mxu0
  %v2375 = vadd.f32 %v2284, %v2374
  %v2376 = vpop.f32.mrb[0].mxu0
  %v2377 = vadd.f32 %v2285, %v2376
  %2378 = vmatprep.mubr.f32.mxu0 %v2297
  %2379 = vmatmul.mubr.f32.gmra.mrb[0].mxu0 %v2238
  %v2380 = vpop.f32.mrb[0].mxu0
  %v2381 = vadd.f32 %v2286, %v2380
  %v2382 = vpop.f32.mrb[0].mxu0
  %v2383 = vadd.f32 %v2287, %v2382
  %2384 = vmatprep.mubr.f32.mxu0 %v2300
  %2385 = vmatmul.mubr.f32.gmra.mrb[0].mxu0 %v2240
  %v2386 = vpop.f32.mrb[0].mxu0
  %v2387 = vadd.f32 %v2288, %v2386
  %v2388 = vpop.f32.mrb[0].mxu0
  %v2389 = vadd.f32 %v2289, %v2388
  %2390 = vdwg.mxu0
  %v2391 = vxor.u32 %v2369, 2147483648
  %v2392 = vxor.u32 %v2371, 2147483648
  %v2393 = vxor.u32 %v2375, 2147483648
  %v2394 = vxor.u32 %v2377, 2147483648
  %v2395 = vxor.u32 %v2381, 2147483648
  %v2396 = vxor.u32 %v2383, 2147483648
  %v2397 = vxor.u32 %v2387, 2147483648
  %v2398 = vxor.u32 %v2389, 2147483648
  %v2399 = vmul.f32 %v2391, 1.442695
  %v2400 = vpow.pop %v2399
  %v2401 = vmul.f32 %v2392, 1.442695
  %v2402 = vpow.pop %v2401
  %v2403 = vmul.f32 %v2393, 1.442695
  %v2404 = vpow.pop %v2403
  %v2405 = vmul.f32 %v2394, 1.442695
  %v2406 = vpow.pop %v2405
  %v2407 = vmul.f32 %v2395, 1.442695
  %v2408 = vpow.pop %v2407
  %v2409 = vmul.f32 %v2396, 1.442695
  %v2410 = vpow.pop %v2409
  %v2411 = vmul.f32 %v2397, 1.442695
  %v2412 = vpow.pop %v2411
  %v2413 = vmul.f32 %v2398, 1.442695
  %v2414 = vpow.pop %v2413
  %v2415 = vadd.f32 %v2400, 1.0
  %v2416 = vadd.f32 %v2402, 1.0
  %v2417 = vadd.f32 %v2404, 1.0
  %v2418 = vadd.f32 %v2406, 1.0
  %v2419 = vadd.f32 %v2408, 1.0
  %v2420 = vadd.f32 %v2410, 1.0
  %v2421 = vadd.f32 %v2412, 1.0
  %v2422 = vadd.f32 %v2414, 1.0
  %v2423 = vrcp.pop %v2415
  %v2424 = vmul.f32 1.0, %v2423
  %v2425 = vrcp.pop %v2416
  %v2426 = vmul.f32 1.0, %v2425
  %v2427 = vrcp.pop %v2417
  %v2428 = vmul.f32 1.0, %v2427
  %v2429 = vrcp.pop %v2418
  %v2430 = vmul.f32 1.0, %v2429
  %v2431 = vrcp.pop %v2419
  %v2432 = vmul.f32 1.0, %v2431
  %v2433 = vrcp.pop %v2420
  %v2434 = vmul.f32 1.0, %v2433
  %v2435 = vrcp.pop %v2421
  %v2436 = vmul.f32 1.0, %v2435
  %v2437 = vrcp.pop %v2422
  %v2438 = vmul.f32 1.0, %v2437
  %v2439 = vld [vmem:[%s3] sm:$0xff]
  %v2440 = vld [vmem:[%s3 + $0x8] sm:$0x3f]
  %v2442 = vsel %vm353, %v2439, 0
  %v2445 = vsel %vm353, %v2440, 0
  %v2448 = vsel %vm360, %v2436, 0
  %v2451 = vsel %vm360, %v2438, 0
  %2453 = vmatprep.subr.mxu0 %v2426
  %2454 = vmatpush1.msra.mxu0 %v2424
  %2455 = vmatprep.subr.mxu0 %v2430
  %2456 = vmatpush1.msra.mxu0 %v2428
  %2457 = vmatprep.subr.mxu0 %v2434
  %2458 = vmatpush1.msra.mxu0 %v2432
  %2459 = vmatprep.subr.mxu0 %v2451
  %2460 = vmatpush1.msra.mxu0 %v2448
  %2461 = vmatprep.subr.mxu0 0.0
  %2462 = vmatpush1.msra.mxu0 0.0
  %2463 = vmatprep.subr.mxu0 0.0
  %2464 = vmatpush1.msra.mxu0 0.0
  %2465 = vmatprep.subr.mxu0 0.0
  %2466 = vmatpush1.msra.mxu0 0.0
  %2467 = vmatprep.subr.mxu0 0.0
  %2468 = vmatpush1.msra.mxu0 0.0
  %2469 = vmatprep.subr.mxu0 0.0
  %2470 = vmatpush1.msra.mxu0 0.0
  %2471 = vmatprep.subr.mxu0 0.0
  %2472 = vmatpush1.msra.mxu0 0.0
  %2473 = vmatprep.subr.mxu0 0.0
  %2474 = vmatpush1.msra.mxu0 0.0
  %2475 = vmatprep.subr.mxu0 0.0
  %2476 = vmatpush1.msra.mxu0 0.0
  %2477 = vmatprep.subr.mxu0 0.0
  %2478 = vmatpush1.msra.mxu0 0.0
  %2479 = vmatprep.subr.mxu0 0.0
  %2480 = vmatpush1.msra.mxu0 0.0
  %2481 = vmatprep.subr.mxu0 0.0
  %2482 = vmatpush1.msra.mxu0 0.0
  %2483 = vmatprep.subr.mxu0 0.0
  %2484 = vmatpush1.msra.mxu0 0.0
  %2485 = vmatprep.subr.mxu0 0.0
  %2486 = vmatpush1.msra.mxu0 0.0
  %2487 = vmatprep.subr.mxu0 0.0
  %2488 = vmatpush1.msra.mxu0 0.0
  %2489 = vmatprep.subr.mxu0 0.0
  %2490 = vmatpush1.msra.mxu0 0.0
  %2491 = vmatprep.subr.mxu0 0.0
  %2492 = vmatpush1.msra.mxu0 0.0
  %2493 = vmatprep.subr.mxu0 0.0
  %2494 = vmatpush1.msra.mxu0 0.0
  %2495 = vmatprep.subr.mxu0 0.0
  %2496 = vmatpush1.msra.mxu0 0.0
  %2497 = vmatprep.subr.mxu0 0.0
  %2498 = vmatpush1.msra.mxu0 0.0
  %2499 = vmatprep.subr.mxu0 0.0
  %2500 = vmatpush1.msra.mxu0 0.0
  %2501 = vmatprep.subr.mxu0 0.0
  %2502 = vmatpush1.msra.mxu0 0.0
  %2503 = vmatprep.subr.mxu0 0.0
  %2504 = vmatpush1.msra.mxu0 0.0
  %2505 = vmatprep.subr.mxu0 0.0
  %2506 = vmatpush1.msra.mxu0 0.0
  %2507 = vmatprep.subr.mxu0 0.0
  %2508 = vmatpush1.msra.mxu0 0.0
  %2509 = vmatprep.subr.mxu0 0.0
  %2510 = vmatpush1.msra.mxu0 0.0
  %2511 = vmatprep.subr.mxu0 0.0
  %2512 = vmatpush1.msra.mxu0 0.0
  %2513 = vmatprep.subr.mxu0 0.0
  %2514 = vmatpush1.msra.mxu0 0.0
  %2515 = vmatprep.subr.mxu0 0.0
  %2516 = vmatpush1.msra.mxu0 0.0
  %2517 = vmatprep.mubr.f32.mxu0 0.0
  %2518 = vmatmul.mubr.f32.gmra.mrb[0].mxu0 %v2442
  %v2519 = vpop.f32.mrb[0].mxu0
  %v2520 = vadd.f32 0.0, %v2519
  %v2521 = vpop.f32.mrb[0].mxu0
  %v2522 = vadd.f32 0.0, %v2521
  %2523 = vmatprep.mubr.f32.mxu0 0.0
  %2524 = vmatmul.mubr.f32.gmra.mrb[0].mxu0 %v2445
  %v2525 = vpop.f32.mrb[0].mxu0
  %v2526 = vadd.f32 0.0, %v2525
  %v2527 = vpop.f32.mrb[0].mxu0
  %v2528 = vadd.f32 0.0, %v2527
  %2529 = vdwg.mxu0
  %v2530 = vld [vmem:[%s4] sm:$0xff]
  %v2531 = vld [vmem:[%s4 + $0x8] sm:$0xff]
  %v2532 = vld [vmem:[%s4 + $0x10] sm:$0xff]
  %v2533 = vld [vmem:[%s4 + $0x18] sm:$0xff]
  %v2534 = vld [vmem:[%s4 + $0x20] sm:$0xff]
  %v2535 = vld [vmem:[%s4 + $0x28] sm:$0xff]
  %v2536 = vld [vmem:[%s4 + $0x30] sm:$0xff]
  %v2537 = vld [vmem:[%s4 + $0x38] sm:$0xff]
  %v2538 = vld [vmem:[%s4 + $0x40] sm:$0xff]
  %v2539 = vld [vmem:[%s4 + $0x48] sm:$0xff]
  %v2540 = vld [vmem:[%s4 + $0x50] sm:$0xff]
  %v2541 = vld [vmem:[%s4 + $0x58] sm:$0xff]
  %v2542 = vld [vmem:[%s4 + $0x60] sm:$0xff]
  %v2543 = vld [vmem:[%s4 + $0x68] sm:$0xff]
  %v2544 = vld [vmem:[%s4 + $0x70] sm:$0xff]
  %v2545 = vld [vmem:[%s4 + $0x78] sm:$0xff]
  %v2546 = vld [vmem:[%s4 + $0x80] sm:$0xff]
  %v2547 = vld [vmem:[%s4 + $0x88] sm:$0xff]
  %v2548 = vld [vmem:[%s4 + $0x90] sm:$0xff]
  %v2549 = vld [vmem:[%s4 + $0x98] sm:$0xff]
  %v2550 = vld [vmem:[%s4 + $0xa0] sm:$0xff]
  %v2552 = vsel %vm465, %v2522, 0
  %v2555 = vsel %vm465, %v2528, 0
  %2557 = vmatprep.subr.mxu0 0.0
  %2558 = vmatpush1.msra.mxu0 %v2530
  %2559 = vmatprep.subr.mxu0 0.0
  %2560 = vmatpush1.msra.mxu0 %v2531
  %2561 = vmatprep.subr.mxu0 0.0
  %2562 = vmatpush1.msra.mxu0 %v2532
  %2563 = vmatprep.subr.mxu0 0.0
  %2564 = vmatpush1.msra.mxu0 %v2533
  %2565 = vmatprep.subr.mxu0 0.0
  %2566 = vmatpush1.msra.mxu0 %v2534
  %2567 = vmatprep.subr.mxu0 0.0
  %2568 = vmatpush1.msra.mxu0 %v2535
  %2569 = vmatprep.subr.mxu0 0.0
  %2570 = vmatpush1.msra.mxu0 %v2536
  %2571 = vmatprep.subr.mxu0 0.0
  %2572 = vmatpush1.msra.mxu0 %v2537
  %2573 = vmatprep.subr.mxu0 0.0
  %2574 = vmatpush1.msra.mxu0 %v2538
  %2575 = vmatprep.subr.mxu0 0.0
  %2576 = vmatpush1.msra.mxu0 %v2539
  %2577 = vmatprep.subr.mxu0 0.0
  %2578 = vmatpush1.msra.mxu0 %v2540
  %2579 = vmatprep.subr.mxu0 0.0
  %2580 = vmatpush1.msra.mxu0 %v2541
  %2581 = vmatprep.subr.mxu0 0.0
  %2582 = vmatpush1.msra.mxu0 %v2542
  %2583 = vmatprep.subr.mxu0 0.0
  %2584 = vmatpush1.msra.mxu0 %v2543
  %2585 = vmatprep.subr.mxu0 0.0
  %2586 = vmatpush1.msra.mxu0 %v2544
  %2587 = vmatprep.subr.mxu0 0.0
  %2588 = vmatpush1.msra.mxu0 %v2545
  %2589 = vmatprep.subr.mxu0 0.0
  %2590 = vmatpush1.msra.mxu0 %v2546
  %2591 = vmatprep.subr.mxu0 0.0
  %2592 = vmatpush1.msra.mxu0 %v2547
  %2593 = vmatprep.subr.mxu0 0.0
  %2594 = vmatpush1.msra.mxu0 %v2548
  %2595 = vmatprep.subr.mxu0 0.0
  %2596 = vmatpush1.msra.mxu0 %v2549
  %2597 = vmatprep.subr.mxu0 0.0
  %2598 = vmatpush1.msra.mxu0 %v2550
  %2599 = vmatprep.subr.mxu0 0.0
  %2600 = vmatpush1.msra.mxu0 0.0
  %2601 = vmatprep.subr.mxu0 0.0
  %2602 = vmatpush1.msra.mxu0 0.0
  %2603 = vmatprep.subr.mxu0 0.0
  %2604 = vmatpush1.msra.mxu0 0.0
  %2605 = vmatprep.subr.mxu0 0.0
  %2606 = vmatpush1.msra.mxu0 0.0
  %2607 = vmatprep.subr.mxu0 0.0
  %2608 = vmatpush1.msra.mxu0 0.0
  %2609 = vmatprep.subr.mxu0 0.0
  %2610 = vmatpush1.msra.mxu0 0.0
  %2611 = vmatprep.subr.mxu0 0.0
  %2612 = vmatpush1.msra.mxu0 0.0
  %2613 = vmatprep.subr.mxu0 0.0
  %2614 = vmatpush1.msra.mxu0 0.0
  %2615 = vmatprep.subr.mxu0 0.0
  %2616 = vmatpush1.msra.mxu0 0.0
  %2617 = vmatprep.subr.mxu0 0.0
  %2618 = vmatpush1.msra.mxu0 0.0
  %2619 = vmatprep.subr.mxu0 0.0
  %2620 = vmatpush1.msra.mxu0 0.0
  %2621 = vmatprep.mubr.f32.mxu0 %v2552
  %2622 = vmatmul.mubr.f32.gmra.mrb[0].mxu0 %v2520
  %v2623 = vpop.f32.mrb[0].mxu0
  %v2624 = vadd.f32 0.0, %v2623
  %v2625 = vpop.f32.mrb[0].mxu0
  %2626 = vmatprep.mubr.f32.mxu0 %v2555
  %2627 = vmatmul.mubr.f32.gmra.mrb[0].mxu0 %v2526
  %v2628 = vpop.f32.mrb[0].mxu0
  %v2629 = vadd.f32 0.0, %v2628
  %v2630 = vpop.f32.mrb[0].mxu0
  %2631 = vdwg.mxu0
  %2632 = vst.msk [vmem:[#allocation3] sm:$0xff] %vm547, %v2624
  %2633 = vst.msk [vmem:[#allocation3 + $0x20] sm:$0x3] %vm549, %v2629
  %v2636 = vrot.slane %v2624, 1
  %v2637 = vrot.slane %v2629, 1
  %v2638 = vsel %vm553, %v2636, %v2637
  %2639 = vrot.lane.b32.xlu0 %v2638, 84
  %v2640 = vpop.permute.xlu0 %2639
  %2641 = vrot.lane.b32.xlu0 %v2637, 84
  %v2642 = vpop.permute.xlu0 %2641
  %2645 = vst.msk [vmem:[#allocation3] sm:$0xff] %vm563, %v2640
  %2646 = vst.msk [vmem:[#allocation3 + $0x8] sm:$0xff] %vm465, %v2640
  %2647 = vst.msk [vmem:[#allocation3 + $0x20] sm:$0x3] %vm566, %v2642
  %2648 = vst.msk [vmem:[#allocation3 + $0x28] sm:$0x3] %vm568, %v2642
  %v2649 = vrot.slane %v2624, 2
  %v2650 = vrot.slane %v2629, 2
  %v2651 = vsel %vm570, %v2649, %v2650
  %2652 = vrot.lane.b32.xlu0 %v2651, 40
  %v2653 = vpop.permute.xlu0 %2652
  %2654 = vrot.lane.b32.xlu0 %v2650, 40
  %v2655 = vpop.permute.xlu0 %2654
  %2658 = vst.msk [vmem:[#allocation3 + $0x8] sm:$0xff] %vm580, %v2653
  %2659 = vst.msk [vmem:[#allocation3 + $0x28] sm:$0x3] %vm582, %v2655
  %v2660 = vrot.slane %v2624, 3
  %v2661 = vrot.slane %v2629, 3
  %v2662 = vsel %vm584, %v2660, %v2661
  %2663 = vrot.lane.b32.xlu0 %v2662, 124
  %v2664 = vpop.permute.xlu0 %2663
  %2665 = vrot.lane.b32.xlu0 %v2661, 124
  %v2666 = vpop.permute.xlu0 %2665
  %2669 = vst.msk [vmem:[#allocation3 + $0x8] sm:$0xff] %vm594, %v2664
  %2670 = vst.msk [vmem:[#allocation3 + $0x10] sm:$0xff] %vm596, %v2664
  %2671 = vst.msk [vmem:[#allocation3 + $0x28] sm:$0x3] %vm598, %v2666
  %2672 = vst.msk [vmem:[#allocation3 + $0x30] sm:$0x3] %vm600, %v2666
  %v2673 = vrot.slane %v2624, 4
  %v2674 = vrot.slane %v2629, 4
  %v2675 = vsel %vm360, %v2673, %v2674
  %2676 = vrot.lane.b32.xlu0 %v2675, 80
  %v2677 = vpop.permute.xlu0 %2676
  %2678 = vrot.lane.b32.xlu0 %v2674, 80
  %v2679 = vpop.permute.xlu0 %2678
  %2682 = vst.msk [vmem:[#allocation3 + $0x10] sm:$0xff] %vm611, %v2677
  %2683 = vst.msk [vmem:[#allocation3 + $0x18] sm:$0xff] %vm613, %v2677
  %2684 = vst.msk [vmem:[#allocation3 + $0x30] sm:$0x3] %vm615, %v2679
  %2685 = vst.msk [vmem:[#allocation3 + $0x38] sm:$0x3] %vm617, %v2679
  %v2686 = vld [vmem:[#allocation3] sm:$0xff]
  %v2687 = vld [vmem:[#allocation3 + $0x8] sm:$0xff]
  %v2688 = vld [vmem:[#allocation3 + $0x10] sm:$0xff]
  %v2689 = vld [vmem:[#allocation3 + $0x18] sm:$0xff]
  %v2690 = vld [vmem:[#allocation3 + $0x20] sm:$0x3]
  %v2691 = vld [vmem:[#allocation3 + $0x28] sm:$0x3]
  %v2692 = vld [vmem:[#allocation3 + $0x30] sm:$0x3]
  %v2693 = vld [vmem:[#allocation3 + $0x38] sm:$0x3]
  %v2694 = vld [vmem:[%s5] sm:$0xff]
  %v2695 = vld [vmem:[%s5 + $0x8] sm:$0xff]
  %v2696 = vld [vmem:[%s5 + $0x10] sm:$0xff]
  %v2697 = vld [vmem:[%s5 + $0x18] sm:$0xff]
  %v2698 = vld [vmem:[%s5 + $0x20] sm:$0xff]
  %v2699 = vld [vmem:[%s5 + $0x28] sm:$0xff]
  %v2700 = vld [vmem:[%s5 + $0x30] sm:$0xff]
  %v2701 = vld [vmem:[%s5 + $0x38] sm:$0xff]
  %v2702 = vld [vmem:[%s5 + $0x40] sm:$0xff]
  %v2703 = vld [vmem:[%s5 + $0x48] sm:$0xff]
  %v2704 = vld [vmem:[%s5 + $0x50] sm:$0xff]
  %v2705 = vld [vmem:[%s5 + $0x58] sm:$0xff]
  %v2706 = vld [vmem:[%s5 + $0x60] sm:$0xff]
  %v2707 = vld [vmem:[%s5 + $0x68] sm:$0xff]
  %v2708 = vld [vmem:[%s5 + $0x70] sm:$0xff]
  %v2709 = vld [vmem:[%s5 + $0x78] sm:$0xff]
  %v2710 = vld [vmem:[%s5 + $0x80] sm:$0xff]
  %v2711 = vld [vmem:[%s5 + $0x88] sm:$0xff]
  %v2712 = vld [vmem:[%s5 + $0x90] sm:$0xff]
  %v2713 = vld [vmem:[%s5 + $0x98] sm:$0xff]
  %v2714 = vld [vmem:[%s5 + $0xa0] sm:$0xff]
  %v2715 = vld [vmem:[%s5 + $0xa8] sm:$0xff]
  %v2716 = vld [vmem:[%s5 + $0xb0] sm:$0xff]
  %v2717 = vld [vmem:[%s5 + $0xb8] sm:$0xff]
  %v2718 = vld [vmem:[%s5 + $0xc0] sm:$0xff]
  %v2719 = vld [vmem:[%s5 + $0xc8] sm:$0xff]
  %v2720 = vld [vmem:[%s5 + $0xd0] sm:$0xff]
  %v2721 = vld [vmem:[%s5 + $0xd8] sm:$0xff]
  %v2722 = vld [vmem:[%s5 + $0xe0] sm:$0xff]
  %v2723 = vld [vmem:[%s5 + $0xe8] sm:$0xff]
  %v2724 = vld [vmem:[%s5 + $0xf0] sm:$0xff]
  %v2725 = vld [vmem:[%s5 + $0xf8] sm:$0xff]
  %v2726 = vld [vmem:[%s5 + $0x100] sm:$0xff]
  %v2727 = vld [vmem:[%s5 + $0x108] sm:$0xff]
  %v2728 = vld [vmem:[%s5 + $0x110] sm:$0xff]
  %v2729 = vld [vmem:[%s5 + $0x118] sm:$0xff]
  %v2730 = vld [vmem:[%s5 + $0x120] sm:$0xff]
  %v2731 = vld [vmem:[%s5 + $0x128] sm:$0xff]
  %v2732 = vld [vmem:[%s5 + $0x130] sm:$0xff]
  %v2733 = vld [vmem:[%s5 + $0x138] sm:$0xff]
  %v2734 = vld [vmem:[%s5 + $0x140] sm:$0xff]
  %v2735 = vld [vmem:[%s5 + $0x148] sm:$0xff]
  %v2736 = vld [vmem:[%s5 + $0x150] sm:$0xff]
  %v2737 = vld [vmem:[%s5 + $0x158] sm:$0xff]
  %v2738 = vld [vmem:[%s5 + $0x160] sm:$0xff]
  %v2739 = vld [vmem:[%s5 + $0x168] sm:$0xff]
  %v2740 = vld [vmem:[%s5 + $0x170] sm:$0xff]
  %v2741 = vld [vmem:[%s5 + $0x178] sm:$0xff]
  %v2742 = vld [vmem:[%s5 + $0x180] sm:$0xff]
  %v2743 = vld [vmem:[%s5 + $0x188] sm:$0xff]
  %v2744 = vld [vmem:[%s5 + $0x190] sm:$0xff]
  %v2745 = vld [vmem:[%s5 + $0x198] sm:$0xff]
  %v2746 = vld [vmem:[%s5 + $0x1a0] sm:$0xff]
  %v2747 = vld [vmem:[%s5 + $0x1a8] sm:$0xff]
  %v2748 = vld [vmem:[%s5 + $0x1b0] sm:$0xff]
  %v2749 = vld [vmem:[%s5 + $0x1b8] sm:$0xff]
  %v2750 = vld [vmem:[%s5 + $0x1c0] sm:$0xff]
  %v2751 = vld [vmem:[%s5 + $0x1c8] sm:$0xff]
  %v2752 = vld [vmem:[%s5 + $0x1d0] sm:$0xff]
  %v2753 = vld [vmem:[%s5 + $0x1d8] sm:$0xff]
  %v2754 = vld [vmem:[%s5 + $0x1e0] sm:$0xff]
  %v2755 = vld [vmem:[%s5 + $0x1e8] sm:$0xff]
  %v2756 = vld [vmem:[%s5 + $0x1f0] sm:$0xff]
  %v2757 = vld [vmem:[%s5 + $0x1f8] sm:$0xff]
  %v2758 = vld [vmem:[%s5 + $0x200] sm:$0xff]
  %v2759 = vld [vmem:[%s5 + $0x208] sm:$0xff]
  %v2760 = vld [vmem:[%s5 + $0x210] sm:$0xff]
  %v2761 = vld [vmem:[%s5 + $0x218] sm:$0xff]
  %v2762 = vld [vmem:[%s5 + $0x220] sm:$0xff]
  %v2763 = vld [vmem:[%s5 + $0x228] sm:$0xff]
  %v2764 = vld [vmem:[%s5 + $0x230] sm:$0xff]
  %v2765 = vld [vmem:[%s5 + $0x238] sm:$0xff]
  %v2766 = vld [vmem:[%s5 + $0x240] sm:$0xff]
  %v2767 = vld [vmem:[%s5 + $0x248] sm:$0xff]
  %v2768 = vld [vmem:[%s5 + $0x250] sm:$0xff]
  %v2769 = vld [vmem:[%s5 + $0x258] sm:$0xff]
  %v2770 = vld [vmem:[%s5 + $0x260] sm:$0xff]
  %v2771 = vld [vmem:[%s5 + $0x268] sm:$0xff]
  %v2772 = vld [vmem:[%s5 + $0x270] sm:$0xff]
  %v2773 = vld [vmem:[%s5 + $0x278] sm:$0xff]
  %v2774 = vld [vmem:[%s5 + $0x280] sm:$0xff]
  %v2775 = vld [vmem:[%s5 + $0x288] sm:$0xff]
  %v2776 = vld [vmem:[%s5 + $0x290] sm:$0xff]
  %v2777 = vld [vmem:[%s5 + $0x298] sm:$0xff]
  %v2778 = vld [vmem:[%s5 + $0x2a0] sm:$0xff]
  %v2779 = vld [vmem:[%s5 + $0x2a8] sm:$0xff]
  %v2780 = vld [vmem:[%s5 + $0x2b0] sm:$0xff]
  %v2781 = vld [vmem:[%s5 + $0x2b8] sm:$0xff]
  %v2782 = vld [vmem:[%s5 + $0x2c0] sm:$0xff]
  %v2783 = vld [vmem:[%s5 + $0x2c8] sm:$0xff]
  %v2784 = vld [vmem:[%s5 + $0x2d0] sm:$0xff]
  %v2785 = vld [vmem:[%s5 + $0x2d8] sm:$0xff]
  %v2786 = vld [vmem:[%s5 + $0x2e0] sm:$0xff]
  %v2787 = vld [vmem:[%s5 + $0x2e8] sm:$0xff]
  %v2788 = vld [vmem:[%s5 + $0x2f0] sm:$0xff]
  %v2789 = vld [vmem:[%s5 + $0x2f8] sm:$0xff]
  %v2790 = vld [vmem:[%s5 + $0x300] sm:$0xff]
  %v2791 = vld [vmem:[%s5 + $0x308] sm:$0xff]
  %v2792 = vld [vmem:[%s5 + $0x310] sm:$0xff]
  %v2793 = vld [vmem:[%s5 + $0x318] sm:$0xff]
  %v2794 = vld [vmem:[%s5 + $0x320] sm:$0xff]
  %v2795 = vld [vmem:[%s5 + $0x328] sm:$0xff]
  %v2796 = vld [vmem:[%s5 + $0x330] sm:$0xff]
  %v2797 = vld [vmem:[%s5 + $0x338] sm:$0xff]
  %v2798 = vld [vmem:[%s5 + $0x340] sm:$0xf]
  %v2799 = vld [vmem:[%s5 + $0x348] sm:$0xf]
  %v2800 = vld [vmem:[%s6] sm:$0xff]
  %v2801 = vld [vmem:[%s6 + $0x8] sm:$0xff]
  %v2802 = vld [vmem:[%s6 + $0x10] sm:$0x3]
  %v2803 = vld [vmem:[%s6 + $0x18] sm:$0x3]
  %v2805 = vsel %vm613, %v2689, 0
  %v2808 = vsel %vm613, %v2693, 0
  %v2811 = vsel %vm360, %v2798, 0
  %v2814 = vsel %vm360, %v2799, 0
  %2816 = vmatprep.subr.mxu0 %v2695
  %2817 = vmatpush1.msra.mxu0 %v2694
  %2818 = vmatprep.subr.mxu0 %v2697
  %2819 = vmatpush1.msra.mxu0 %v2696
  %2820 = vmatprep.subr.mxu0 %v2699
  %2821 = vmatpush1.msra.mxu0 %v2698
  %2822 = vmatprep.subr.mxu0 %v2701
  %2823 = vmatpush1.msra.mxu0 %v2700
  %2824 = vmatprep.subr.mxu0 %v2703
  %2825 = vmatpush1.msra.mxu0 %v2702
  %2826 = vmatprep.subr.mxu0 %v2705
  %2827 = vmatpush1.msra.mxu0 %v2704
  %2828 = vmatprep.subr.mxu0 %v2707
  %2829 = vmatpush1.msra.mxu0 %v2706
  %2830 = vmatprep.subr.mxu0 %v2709
  %2831 = vmatpush1.msra.mxu0 %v2708
  %2832 = vmatprep.subr.mxu0 %v2711
  %2833 = vmatpush1.msra.mxu0 %v2710
  %2834 = vmatprep.subr.mxu0 %v2713
  %2835 = vmatpush1.msra.mxu0 %v2712
  %2836 = vmatprep.subr.mxu0 %v2715
  %2837 = vmatpush1.msra.mxu0 %v2714
  %2838 = vmatprep.subr.mxu0 %v2717
  %2839 = vmatpush1.msra.mxu0 %v2716
  %2840 = vmatprep.subr.mxu0 %v2719
  %2841 = vmatpush1.msra.mxu0 %v2718
  %2842 = vmatprep.subr.mxu0 %v2721
  %2843 = vmatpush1.msra.mxu0 %v2720
  %2844 = vmatprep.subr.mxu0 %v2723
  %2845 = vmatpush1.msra.mxu0 %v2722
  %2846 = vmatprep.subr.mxu0 %v2725
  %2847 = vmatpush1.msra.mxu0 %v2724
  %2848 = vmatprep.subr.mxu0 %v2727
  %2849 = vmatpush1.msra.mxu0 %v2726
  %2850 = vmatprep.subr.mxu0 %v2729
  %2851 = vmatpush1.msra.mxu0 %v2728
  %2852 = vmatprep.subr.mxu0 %v2731
  %2853 = vmatpush1.msra.mxu0 %v2730
  %2854 = vmatprep.subr.mxu0 %v2733
  %2855 = vmatpush1.msra.mxu0 %v2732
  %2856 = vmatprep.subr.mxu0 %v2735
  %2857 = vmatpush1.msra.mxu0 %v2734
  %2858 = vmatprep.subr.mxu0 %v2737
  %2859 = vmatpush1.msra.mxu0 %v2736
  %2860 = vmatprep.subr.mxu0 %v2739
  %2861 = vmatpush1.msra.mxu0 %v2738
  %2862 = vmatprep.subr.mxu0 %v2741
  %2863 = vmatpush1.msra.mxu0 %v2740
  %2864 = vmatprep.subr.mxu0 %v2743
  %2865 = vmatpush1.msra.mxu0 %v2742
  %2866 = vmatprep.subr.mxu0 %v2745
  %2867 = vmatpush1.msra.mxu0 %v2744
  %2868 = vmatprep.subr.mxu0 %v2747
  %2869 = vmatpush1.msra.mxu0 %v2746
  %2870 = vmatprep.subr.mxu0 %v2749
  %2871 = vmatpush1.msra.mxu0 %v2748
  %2872 = vmatprep.subr.mxu0 %v2751
  %2873 = vmatpush1.msra.mxu0 %v2750
  %2874 = vmatprep.subr.mxu0 %v2753
  %2875 = vmatpush1.msra.mxu0 %v2752
  %2876 = vmatprep.subr.mxu0 %v2755
  %2877 = vmatpush1.msra.mxu0 %v2754
  %2878 = vmatprep.subr.mxu0 %v2757
  %2879 = vmatpush1.msra.mxu0 %v2756
  %2880 = vmatprep.mubr.f32.mxu0 %v2687
  %2881 = vmatmul.mubr.f32.gmra.mrb[0].mxu0 %v2686
  %v2882 = vpop.f32.mrb[0].mxu0
  %v2883 = vadd.f32 %v2800, %v2882
  %v2884 = vpop.f32.mrb[0].mxu0
  %v2885 = vadd.f32 %v2801, %v2884
  %2886 = vmatprep.mubr.f32.mxu0 %v2691
  %2887 = vmatmul.mubr.f32.gmra.mrb[0].mxu0 %v2690
  %v2888 = vpop.f32.mrb[0].mxu0
  %v2889 = vadd.f32 %v2802, %v2888
  %v2890 = vpop.f32.mrb[0].mxu0
  %v2891 = vadd.f32 %v2803, %v2890
  %2892 = vdwg.mxu0
  %2893 = vmatprep.subr.mxu0 %v2759
  %2894 = vmatpush1.msra.mxu0 %v2758
  %2895 = vmatprep.subr.mxu0 %v2761
  %2896 = vmatpush1.msra.mxu0 %v2760
  %2897 = vmatprep.subr.mxu0 %v2763
  %2898 = vmatpush1.msra.mxu0 %v2762
  %2899 = vmatprep.subr.mxu0 %v2765
  %2900 = vmatpush1.msra.mxu0 %v2764
  %2901 = vmatprep.subr.mxu0 %v2767
  %2902 = vmatpush1.msra.mxu0 %v2766
  %2903 = vmatprep.subr.mxu0 %v2769
  %2904 = vmatpush1.msra.mxu0 %v2768
  %2905 = vmatprep.subr.mxu0 %v2771
  %2906 = vmatpush1.msra.mxu0 %v2770
  %2907 = vmatprep.subr.mxu0 %v2773
  %2908 = vmatpush1.msra.mxu0 %v2772
  %2909 = vmatprep.subr.mxu0 %v2775
  %2910 = vmatpush1.msra.mxu0 %v2774
  %2911 = vmatprep.subr.mxu0 %v2777
  %2912 = vmatpush1.msra.mxu0 %v2776
  %2913 = vmatprep.subr.mxu0 %v2779
  %2914 = vmatpush1.msra.mxu0 %v2778
  %2915 = vmatprep.subr.mxu0 %v2781
  %2916 = vmatpush1.msra.mxu0 %v2780
  %2917 = vmatprep.subr.mxu0 %v2783
  %2918 = vmatpush1.msra.mxu0 %v2782
  %2919 = vmatprep.subr.mxu0 %v2785
  %2920 = vmatpush1.msra.mxu0 %v2784
  %2921 = vmatprep.subr.mxu0 %v2787
  %2922 = vmatpush1.msra.mxu0 %v2786
  %2923 = vmatprep.subr.mxu0 %v2789
  %2924 = vmatpush1.msra.mxu0 %v2788
  %2925 = vmatprep.subr.mxu0 %v2791
  %2926 = vmatpush1.msra.mxu0 %v2790
  %2927 = vmatprep.subr.mxu0 %v2793
  %2928 = vmatpush1.msra.mxu0 %v2792
  %2929 = vmatprep.subr.mxu0 %v2795
  %2930 = vmatpush1.msra.mxu0 %v2794
  %2931 = vmatprep.subr.mxu0 %v2797
  %2932 = vmatpush1.msra.mxu0 %v2796
  %2933 = vmatprep.subr.mxu0 %v2814
  %2934 = vmatpush1.msra.mxu0 %v2811
  %2935 = vmatprep.subr.mxu0 0.0
  %2936 = vmatpush1.msra.mxu0 0.0
  %2937 = vmatprep.subr.mxu0 0.0
  %2938 = vmatpush1.msra.mxu0 0.0
  %2939 = vmatprep.subr.mxu0 0.0
  %2940 = vmatpush1.msra.mxu0 0.0
  %2941 = vmatprep.subr.mxu0 0.0
  %2942 = vmatpush1.msra.mxu0 0.0
  %2943 = vmatprep.subr.mxu0 0.0
  %2944 = vmatpush1.msra.mxu0 0.0
  %2945 = vmatprep.subr.mxu0 0.0
  %2946 = vmatpush1.msra.mxu0 0.0
  %2947 = vmatprep.subr.mxu0 0.0
  %2948 = vmatpush1.msra.mxu0 0.0
  %2949 = vmatprep.subr.mxu0 0.0
  %2950 = vmatpush1.msra.mxu0 0.0
  %2951 = vmatprep.subr.mxu0 0.0
  %2952 = vmatpush1.msra.mxu0 0.0
  %2953 = vmatprep.subr.mxu0 0.0
  %2954 = vmatpush1.msra.mxu0 0.0
  %2955 = vmatprep.subr.mxu0 0.0
  %2956 = vmatpush1.msra.mxu0 0.0
  %2957 = vmatprep.mubr.f32.mxu0 %v2805
  %2958 = vmatmul.mubr.f32.gmra.mrb[0].mxu0 %v2688
  %v2959 = vpop.f32.mrb[0].mxu0
  %v2960 = vadd.f32 %v2883, %v2959
  %v2961 = vpop.f32.mrb[0].mxu0
  %v2962 = vadd.f32 %v2885, %v2961
  %2963 = vmatprep.mubr.f32.mxu0 %v2808
  %2964 = vmatmul.mubr.f32.gmra.mrb[0].mxu0 %v2692
  %v2965 = vpop.f32.mrb[0].mxu0
  %v2966 = vadd.f32 %v2889, %v2965
  %v2967 = vpop.f32.mrb[0].mxu0
  %v2968 = vadd.f32 %v2891, %v2967
  %2969 = vdwg.mxu0
  %v2970 = vxor.u32 %v2960, 2147483648
  %v2971 = vxor.u32 %v2962, 2147483648
  %v2972 = vxor.u32 %v2966, 2147483648
  %v2973 = vxor.u32 %v2968, 2147483648
  %v2974 = vmul.f32 %v2970, 1.442695
  %v2975 = vpow.pop %v2974
  %v2976 = vmul.f32 %v2971, 1.442695
  %v2977 = vpow.pop %v2976
  %v2978 = vmul.f32 %v2972, 1.442695
  %v2979 = vpow.pop %v2978
  %v2980 = vmul.f32 %v2973, 1.442695
  %v2981 = vpow.pop %v2980
  %v2982 = vadd.f32 %v2975, 1.0
  %v2983 = vadd.f32 %v2977, 1.0
  %v2984 = vadd.f32 %v2979, 1.0
  %v2985 = vadd.f32 %v2981, 1.0
  %v2986 = vrcp.pop %v2982
  %v2987 = vmul.f32 1.0, %v2986
  %v2988 = vrcp.pop %v2983
  %v2989 = vmul.f32 1.0, %v2988
  %v2990 = vrcp.pop %v2984
  %v2991 = vmul.f32 1.0, %v2990
  %v2992 = vrcp.pop %v2985
  %v2993 = vmul.f32 1.0, %v2992
  %v2994 = vld [vmem:[%s7] sm:$0x1f]
  %v2996 = vsel %vm928, %v2994, 0
  %v2999 = vsel %vm932, %v2991, 0
  %v3002 = vsel %vm932, %v2993, 0
  %3004 = vmatprep.subr.mxu0 %v2989
  %3005 = vmatpush1.msra.mxu0 %v2987
  %3006 = vmatprep.subr.mxu0 %v3002
  %3007 = vmatpush1.msra.mxu0 %v2999
  %3008 = vmatprep.subr.mxu0 0.0
  %3009 = vmatpush1.msra.mxu0 0.0
  %3010 = vmatprep.subr.mxu0 0.0
  %3011 = vmatpush1.msra.mxu0 0.0
  %3012 = vmatprep.subr.mxu0 0.0
  %3013 = vmatpush1.msra.mxu0 0.0
  %3014 = vmatprep.subr.mxu0 0.0
  %3015 = vmatpush1.msra.mxu0 0.0
  %3016 = vmatprep.subr.mxu0 0.0
  %3017 = vmatpush1.msra.mxu0 0.0
  %3018 = vmatprep.subr.mxu0 0.0
  %3019 = vmatpush1.msra.mxu0 0.0
  %3020 = vmatprep.subr.mxu0 0.0
  %3021 = vmatpush1.msra.mxu0 0.0
  %3022 = vmatprep.subr.mxu0 0.0
  %3023 = vmatpush1.msra.mxu0 0.0
  %3024 = vmatprep.subr.mxu0 0.0
  %3025 = vmatpush1.msra.mxu0 0.0
  %3026 = vmatprep.subr.mxu0 0.0
  %3027 = vmatpush1.msra.mxu0 0.0
  %3028 = vmatprep.subr.mxu0 0.0
  %3029 = vmatpush1.msra.mxu0 0.0
  %3030 = vmatprep.subr.mxu0 0.0
  %3031 = vmatpush1.msra.mxu0 0.0
  %3032 = vmatprep.subr.mxu0 0.0
  %3033 = vmatpush1.msra.mxu0 0.0
  %3034 = vmatprep.subr.mxu0 0.0
  %3035 = vmatpush1.msra.mxu0 0.0
  %3036 = vmatprep.subr.mxu0 0.0
  %3037 = vmatpush1.msra.mxu0 0.0
  %3038 = vmatprep.subr.mxu0 0.0
  %3039 = vmatpush1.msra.mxu0 0.0
  %3040 = vmatprep.subr.mxu0 0.0
  %3041 = vmatpush1.msra.mxu0 0.0
  %3042 = vmatprep.subr.mxu0 0.0
  %3043 = vmatpush1.msra.mxu0 0.0
  %3044 = vmatprep.subr.mxu0 0.0
  %3045 = vmatpush1.msra.mxu0 0.0
  %3046 = vmatprep.subr.mxu0 0.0
  %3047 = vmatpush1.msra.mxu0 0.0
  %3048 = vmatprep.subr.mxu0 0.0
  %3049 = vmatpush1.msra.mxu0 0.0
  %3050 = vmatprep.subr.mxu0 0.0
  %3051 = vmatpush1.msra.mxu0 0.0
  %3052 = vmatprep.subr.mxu0 0.0
  %3053 = vmatpush1.msra.mxu0 0.0
  %3054 = vmatprep.subr.mxu0 0.0
  %3055 = vmatpush1.msra.mxu0 0.0
  %3056 = vmatprep.subr.mxu0 0.0
  %3057 = vmatpush1.msra.mxu0 0.0
  %3058 = vmatprep.subr.mxu0 0.0
  %3059 = vmatpush1.msra.mxu0 0.0
  %3060 = vmatprep.subr.mxu0 0.0
  %3061 = vmatpush1.msra.mxu0 0.0
  %3062 = vmatprep.subr.mxu0 0.0
  %3063 = vmatpush1.msra.mxu0 0.0
  %3064 = vmatprep.subr.mxu0 0.0
  %3065 = vmatpush1.msra.mxu0 0.0
  %3066 = vmatprep.subr.mxu0 0.0
  %3067 = vmatpush1.msra.mxu0 0.0
  %3068 = vmatprep.mubr.f32.mxu0 0.0
  %3069 = vmatmul.mubr.f32.gmra.mrb[0].mxu0 %v2996
  %v3070 = vpop.f32.mrb[0].mxu0
  %v3071 = vadd.f32 0.0, %v3070
  %v3072 = vpop.f32.mrb[0].mxu0
  %v3073 = vadd.f32 0.0, %v3072
  %3074 = vdwg.mxu0
  %v3075 = vld [vmem:[%s8] sm:$0xff]
  %v3076 = vld [vmem:[%s8 + $0x8] sm:$0xff]
  %v3077 = vld [vmem:[%s8 + $0x10] sm:$0xff]
  %v3078 = vld [vmem:[%s8 + $0x18] sm:$0xff]
  %v3079 = vld [vmem:[%s8 + $0x20] sm:$0xff]
  %v3080 = vld [vmem:[%s8 + $0x28] sm:$0xff]
  %v3081 = vld [vmem:[%s8 + $0x30] sm:$0xff]
  %v3082 = vld [vmem:[%s8 + $0x38] sm:$0xff]
  %v3083 = vld [vmem:[%s8 + $0x40] sm:$0xff]
  %v3084 = vld [vmem:[%s8 + $0x48] sm:$0xff]
  %v3085 = vld [vmem:[%s8 + $0x50] sm:$0xff]
  %v3086 = vld [vmem:[%s8 + $0x58] sm:$0xff]
  %v3087 = vld [vmem:[%s8 + $0x60] sm:$0xff]
  %v3088 = vld [vmem:[%s8 + $0x68] sm:$0xff]
  %v3089 = vld [vmem:[%s8 + $0x70] sm:$0xff]
  %v3090 = vld [vmem:[%s8 + $0x78] sm:$0xff]
  %v3091 = vld [vmem:[%s8 + $0x80] sm:$0xff]
  %v3092 = vld [vmem:[%s8 + $0x88] sm:$0xff]
  %v3093 = vld [vmem:[%s8 + $0x90] sm:$0xff]
  %v3094 = vld [vmem:[%s8 + $0x98] sm:$0xff]
  %v3096 = vsel %vm54, %v3073, 0
  %3098 = vmatprep.subr.mxu0 0.0
  %3099 = vmatpush1.msra.mxu0 %v3075
  %3100 = vmatprep.subr.mxu0 0.0
  %3101 = vmatpush1.msra.mxu0 %v3076
  %3102 = vmatprep.subr.mxu0 0.0
  %3103 = vmatpush1.msra.mxu0 %v3077
  %3104 = vmatprep.subr.mxu0 0.0
  %3105 = vmatpush1.msra.mxu0 %v3078
  %3106 = vmatprep.subr.mxu0 0.0
  %3107 = vmatpush1.msra.mxu0 %v3079
  %3108 = vmatprep.subr.mxu0 0.0
  %3109 = vmatpush1.msra.mxu0 %v3080
  %3110 = vmatprep.subr.mxu0 0.0
  %3111 = vmatpush1.msra.mxu0 %v3081
  %3112 = vmatprep.subr.mxu0 0.0
  %3113 = vmatpush1.msra.mxu0 %v3082
  %3114 = vmatprep.subr.mxu0 0.0
  %3115 = vmatpush1.msra.mxu0 %v3083
  %3116 = vmatprep.subr.mxu0 0.0
  %3117 = vmatpush1.msra.mxu0 %v3084
  %3118 = vmatprep.subr.mxu0 0.0
  %3119 = vmatpush1.msra.mxu0 %v3085
  %3120 = vmatprep.subr.mxu0 0.0
  %3121 = vmatpush1.msra.mxu0 %v3086
  %3122 = vmatprep.subr.mxu0 0.0
  %3123 = vmatpush1.msra.mxu0 %v3087
  %3124 = vmatprep.subr.mxu0 0.0
  %3125 = vmatpush1.msra.mxu0 %v3088
  %3126 = vmatprep.subr.mxu0 0.0
  %3127 = vmatpush1.msra.mxu0 %v3089
  %3128 = vmatprep.subr.mxu0 0.0
  %3129 = vmatpush1.msra.mxu0 %v3090
  %3130 = vmatprep.subr.mxu0 0.0
  %3131 = vmatpush1.msra.mxu0 %v3091
  %3132 = vmatprep.subr.mxu0 0.0
  %3133 = vmatpush1.msra.mxu0 %v3092
  %3134 = vmatprep.subr.mxu0 0.0
  %3135 = vmatpush1.msra.mxu0 %v3093
  %3136 = vmatprep.subr.mxu0 0.0
  %3137 = vmatpush1.msra.mxu0 %v3094
  %3138 = vmatprep.subr.mxu0 0.0
  %3139 = vmatpush1.msra.mxu0 0.0
  %3140 = vmatprep.subr.mxu0 0.0
  %3141 = vmatpush1.msra.mxu0 0.0
  %3142 = vmatprep.subr.mxu0 0.0
  %3143 = vmatpush1.msra.mxu0 0.0
  %3144 = vmatprep.subr.mxu0 0.0
  %3145 = vmatpush1.msra.mxu0 0.0
  %3146 = vmatprep.subr.mxu0 0.0
  %3147 = vmatpush1.msra.mxu0 0.0
  %3148 = vmatprep.subr.mxu0 0.0
  %3149 = vmatpush1.msra.mxu0 0.0
  %3150 = vmatprep.subr.mxu0 0.0
  %3151 = vmatpush1.msra.mxu0 0.0
  %3152 = vmatprep.subr.mxu0 0.0
  %3153 = vmatpush1.msra.mxu0 0.0
  %3154 = vmatprep.subr.mxu0 0.0
  %3155 = vmatpush1.msra.mxu0 0.0
  %3156 = vmatprep.subr.mxu0 0.0
  %3157 = vmatpush1.msra.mxu0 0.0
  %3158 = vmatprep.subr.mxu0 0.0
  %3159 = vmatpush1.msra.mxu0 0.0
  %3160 = vmatprep.subr.mxu0 0.0
  %3161 = vmatpush1.msra.mxu0 0.0
  %3162 = vmatprep.mubr.f32.mxu0 %v3096
  %3163 = vmatmul.mubr.f32.gmra.mrb[0].mxu0 %v3071
  %v3164 = vpop.f32.mrb[0].mxu0
  %v3165 = vadd.f32 0.0, %v3164
  %v3166 = vpop.f32.mrb[0].mxu0
  %3167 = vdwg.mxu0
  %3168 = vst.msk [vmem:[#allocation4 + $0x2] sm:$0x1] %vm1103, %v3165
  %3169 = vst.msk [vmem:[%s1105 + $0x1] sm:$0x2] %vm1106, %v3165
  %3170 = vst.msk [vmem:[%s1108] sm:$0x4] %vm1109, %v3165
  %3171 = vst.msk [vmem:[%s1111 - $0x1] sm:$0x8] %vm1112, %v3165
  %3172 = vst.msk [vmem:[%s1114 - $0x2] sm:$0x10] %vm1115, %v3165
  %s3173 = scalar_lea.vmem %s0, 96
  %v3174 = vld [vmem:[%s3173] sm:$0xff]
  %v3175 = vld [vmem:[%s3173 + $0x8] sm:$0xff]
  %v3176 = vld [vmem:[%s3173 + $0x10] sm:$0xff]
  %v3177 = vld [vmem:[%s3173 + $0x18] sm:$0xf]
  %3178 = vst.msk [vmem:[#allocation2] sm:$0xff] %vm54, %v3174
  %3179 = vst.msk [vmem:[#allocation2 + $0x10] sm:$0xff] %vm54, %v3175
  %3180 = vst.msk [vmem:[#allocation2 + $0x20] sm:$0xff] %vm54, %v3176
  %3181 = vst.msk [vmem:[#allocation2 + $0x30] sm:$0xf] %vm58, %v3177
  %v3182 = vld [vmem:[%s3173 + $0x1] sm:$0xff]
  %v3183 = vld [vmem:[%s3173 + $0x9] sm:$0xff]
  %v3184 = vld [vmem:[%s3173 + $0x11] sm:$0xff]
  %v3185 = vld [vmem:[%s3173 + $0x19] sm:$0xf]
  %3190 = vrot.lane.b32.xlu0 %v3182, 32
  %v3191 = vpop.permute.xlu0 %3190
  %3192 = vrot.lane.b32.xlu0 %v3183, 32
  %v3193 = vpop.permute.xlu0 %3192
  %3194 = vrot.lane.b32.xlu0 %v3184, 32
  %v3195 = vpop.permute.xlu0 %3194
  %3196 = vrot.lane.b32.xlu0 %v3185, 32
  %v3197 = vpop.permute.xlu0 %3196
  %3202 = vst.msk [vmem:[#allocation2] sm:$0xff] %vm80, %v3191
  %3203 = vst.msk [vmem:[#allocation2 + $0x10] sm:$0xff] %vm80, %v3193
  %3204 = vst.msk [vmem:[#allocation2 + $0x20] sm:$0xff] %vm80, %v3195
  %3205 = vst.msk [vmem:[#allocation2 + $0x30] sm:$0xf] %vm84, %v3197
  %v3206 = vld [vmem:[%s3173 + $0x2] sm:$0xff]
  %v3207 = vld [vmem:[%s3173 + $0xa] sm:$0xff]
  %v3208 = vld [vmem:[%s3173 + $0x12] sm:$0xff]
  %v3209 = vld [vmem:[%s3173 + $0x1a] sm:$0xf]
  %3214 = vrot.lane.b32.xlu0 %v3206, 64
  %v3215 = vpop.permute.xlu0 %3214
  %3216 = vrot.lane.b32.xlu0 %v3207, 64
  %v3217 = vpop.permute.xlu0 %3216
  %3218 = vrot.lane.b32.xlu0 %v3208, 64
  %v3219 = vpop.permute.xlu0 %3218
  %3220 = vrot.lane.b32.xlu0 %v3209, 64
  %v3221 = vpop.permute.xlu0 %3220
  %3226 = vst.msk [vmem:[#allocation2] sm:$0xff] %vm106, %v3215
  %3227 = vst.msk [vmem:[#allocation2 + $0x10] sm:$0xff] %vm106, %v3217
  %3228 = vst.msk [vmem:[#allocation2 + $0x20] sm:$0xff] %vm106, %v3219
  %3229 = vst.msk [vmem:[#allocation2 + $0x30] sm:$0xf] %vm110, %v3221
  %v3230 = vld [vmem:[%s3173 + $0x3] sm:$0xff]
  %v3231 = vld [vmem:[%s3173 + $0xb] sm:$0xff]
  %v3232 = vld [vmem:[%s3173 + $0x13] sm:$0xff]
  %v3233 = vld [vmem:[%s3173 + $0x1b] sm:$0xf]
  %3238 = vrot.lane.b32.xlu0 %v3230, 96
  %v3239 = vpop.permute.xlu0 %3238
  %3240 = vrot.lane.b32.xlu0 %v3231, 96
  %v3241 = vpop.permute.xlu0 %3240
  %3242 = vrot.lane.b32.xlu0 %v3232, 96
  %v3243 = vpop.permute.xlu0 %3242
  %3244 = vrot.lane.b32.xlu0 %v3233, 96
  %v3245 = vpop.permute.xlu0 %3244
  %3250 = vst.msk [vmem:[#allocation2] sm:$0xff] %vm132, %v3239
  %3251 = vst.msk [vmem:[#allocation2 + $0x10] sm:$0xff] %vm132, %v3241
  %3252 = vst.msk [vmem:[#allocation2 + $0x20] sm:$0xff] %vm132, %v3243
  %3253 = vst.msk [vmem:[#allocation2 + $0x30] sm:$0xf] %vm136, %v3245
  %v3254 = vld [vmem:[%s3173 + $0x4] sm:$0xff]
  %v3255 = vld [vmem:[%s3173 + $0xc] sm:$0xff]
  %v3256 = vld [vmem:[%s3173 + $0x14] sm:$0xff]
  %v3257 = vld [vmem:[%s3173 + $0x1c] sm:$0xf]
  %3258 = vst.msk [vmem:[#allocation2 + $0x8] sm:$0xff] %vm54, %v3254
  %3259 = vst.msk [vmem:[#allocation2 + $0x18] sm:$0xff] %vm54, %v3255
  %3260 = vst.msk [vmem:[#allocation2 + $0x28] sm:$0xff] %vm54, %v3256
  %3261 = vst.msk [vmem:[#allocation2 + $0x38] sm:$0xf] %vm58, %v3257
  %v3262 = vld [vmem:[#allocation2] sm:$0xff]
  %v3263 = vld [vmem:[#allocation2 + $0x8] sm:$0xff]
  %v3264 = vld [vmem:[#allocation2 + $0x10] sm:$0xff]
  %v3265 = vld [vmem:[#allocation2 + $0x18] sm:$0xff]
  %v3266 = vld [vmem:[#allocation2 + $0x20] sm:$0xff]
  %v3267 = vld [vmem:[#allocation2 + $0x28] sm:$0xff]
  %v3268 = vld [vmem:[#allocation2 + $0x30] sm:$0xf]
  %v3269 = vld [vmem:[#allocation2 + $0x38] sm:$0xf]
  %v3270 = vld [vmem:[%s1] sm:$0xff]
  %v3271 = vld [vmem:[%s1 + $0x8] sm:$0xff]
  %v3272 = vld [vmem:[%s1 + $0x10] sm:$0xff]
  %v3273 = vld [vmem:[%s1 + $0x18] sm:$0xff]
  %v3274 = vld [vmem:[%s1 + $0x20] sm:$0xff]
  %v3275 = vld [vmem:[%s1 + $0x28] sm:$0xff]
  %v3276 = vld [vmem:[%s1 + $0x30] sm:$0xff]
  %v3277 = vld [vmem:[%s1 + $0x38] sm:$0xff]
  %v3278 = vld [vmem:[%s1 + $0x40] sm:$0xff]
  %v3279 = vld [vmem:[%s1 + $0x48] sm:$0xff]
  %v3280 = vld [vmem:[%s1 + $0x50] sm:$0xff]
  %v3281 = vld [vmem:[%s1 + $0x58] sm:$0xff]
  %v3282 = vld [vmem:[%s1 + $0x60] sm:$0xff]
  %v3283 = vld [vmem:[%s1 + $0x68] sm:$0xff]
  %v3284 = vld [vmem:[%s1 + $0x70] sm:$0xff]
  %v3285 = vld [vmem:[%s1 + $0x78] sm:$0xff]
  %v3286 = vld [vmem:[%s1 + $0x80] sm:$0xff]
  %v3287 = vld [vmem:[%s1 + $0x88] sm:$0xff]
  %v3288 = vld [vmem:[%s1 + $0x90] sm:$0xff]
  %v3289 = vld [vmem:[%s1 + $0x98] sm:$0xff]
  %v3290 = vld [vmem:[%s1 + $0xa0] sm:$0xff]
  %v3291 = vld [vmem:[%s1 + $0xa8] sm:$0xff]
  %v3292 = vld [vmem:[%s1 + $0xb0] sm:$0xff]
  %v3293 = vld [vmem:[%s1 + $0xb8] sm:$0xff]
  %v3294 = vld [vmem:[%s1 + $0xc0] sm:$0xff]
  %v3295 = vld [vmem:[%s1 + $0xc8] sm:$0xff]
  %v3296 = vld [vmem:[%s1 + $0xd0] sm:$0xff]
  %v3297 = vld [vmem:[%s1 + $0xd8] sm:$0xff]
  %v3298 = vld [vmem:[%s1 + $0xe0] sm:$0xff]
  %v3299 = vld [vmem:[%s1 + $0xe8] sm:$0xff]
  %v3300 = vld [vmem:[%s1 + $0xf0] sm:$0xff]
  %v3301 = vld [vmem:[%s1 + $0xf8] sm:$0xff]
  %v3302 = vld [vmem:[%s1 + $0x100] sm:$0xff]
  %v3303 = vld [vmem:[%s1 + $0x108] sm:$0xff]
  %v3304 = vld [vmem:[%s1 + $0x110] sm:$0xff]
  %v3305 = vld [vmem:[%s1 + $0x118] sm:$0xff]
  %v3306 = vld [vmem:[%s1 + $0x120] sm:$0xff]
  %v3307 = vld [vmem:[%s1 + $0x128] sm:$0xff]
  %v3308 = vld [vmem:[%s1 + $0x130] sm:$0xff]
  %v3309 = vld [vmem:[%s1 + $0x138] sm:$0xff]
  %v3310 = vld [vmem:[%s2] sm:$0xff]
  %v3311 = vld [vmem:[%s2 + $0x8] sm:$0xff]
  %v3312 = vld [vmem:[%s2 + $0x10] sm:$0xff]
  %v3313 = vld [vmem:[%s2 + $0x18] sm:$0xff]
  %v3314 = vld [vmem:[%s2 + $0x20] sm:$0xff]
  %v3315 = vld [vmem:[%s2 + $0x28] sm:$0xff]
  %v3316 = vld [vmem:[%s2 + $0x30] sm:$0xf]
  %v3317 = vld [vmem:[%s2 + $0x38] sm:$0xf]
  %v3319 = vsel %vm54, %v3263, 0
  %v3322 = vsel %vm54, %v3265, 0
  %v3325 = vsel %vm54, %v3267, 0
  %v3328 = vsel %vm54, %v3269, 0
  %3330 = vmatprep.subr.mxu0 %v3271
  %3331 = vmatpush1.msra.mxu0 %v3270
  %3332 = vmatprep.subr.mxu0 %v3273
  %3333 = vmatpush1.msra.mxu0 %v3272
  %3334 = vmatprep.subr.mxu0 %v3275
  %3335 = vmatpush1.msra.mxu0 %v3274
  %3336 = vmatprep.subr.mxu0 %v3277
  %3337 = vmatpush1.msra.mxu0 %v3276
  %3338 = vmatprep.subr.mxu0 %v3279
  %3339 = vmatpush1.msra.mxu0 %v3278
  %3340 = vmatprep.subr.mxu0 %v3281
  %3341 = vmatpush1.msra.mxu0 %v3280
  %3342 = vmatprep.subr.mxu0 %v3283
  %3343 = vmatpush1.msra.mxu0 %v3282
  %3344 = vmatprep.subr.mxu0 %v3285
  %3345 = vmatpush1.msra.mxu0 %v3284
  %3346 = vmatprep.subr.mxu0 %v3287
  %3347 = vmatpush1.msra.mxu0 %v3286
  %3348 = vmatprep.subr.mxu0 %v3289
  %3349 = vmatpush1.msra.mxu0 %v3288
  %3350 = vmatprep.subr.mxu0 %v3291
  %3351 = vmatpush1.msra.mxu0 %v3290
  %3352 = vmatprep.subr.mxu0 %v3293
  %3353 = vmatpush1.msra.mxu0 %v3292
  %3354 = vmatprep.subr.mxu0 %v3295
  %3355 = vmatpush1.msra.mxu0 %v3294
  %3356 = vmatprep.subr.mxu0 %v3297
  %3357 = vmatpush1.msra.mxu0 %v3296
  %3358 = vmatprep.subr.mxu0 %v3299
  %3359 = vmatpush1.msra.mxu0 %v3298
  %3360 = vmatprep.subr.mxu0 %v3301
  %3361 = vmatpush1.msra.mxu0 %v3300
  %3362 = vmatprep.subr.mxu0 %v3303
  %3363 = vmatpush1.msra.mxu0 %v3302
  %3364 = vmatprep.subr.mxu0 %v3305
  %3365 = vmatpush1.msra.mxu0 %v3304
  %3366 = vmatprep.subr.mxu0 %v3307
  %3367 = vmatpush1.msra.mxu0 %v3306
  %3368 = vmatprep.subr.mxu0 %v3309
  %3369 = vmatpush1.msra.mxu0 %v3308
  %3370 = vmatprep.subr.mxu0 0.0
  %3371 = vmatpush1.msra.mxu0 0.0
  %3372 = vmatprep.subr.mxu0 0.0
  %3373 = vmatpush1.msra.mxu0 0.0
  %3374 = vmatprep.subr.mxu0 0.0
  %3375 = vmatpush1.msra.mxu0 0.0
  %3376 = vmatprep.subr.mxu0 0.0
  %3377 = vmatpush1.msra.mxu0 0.0
  %3378 = vmatprep.subr.mxu0 0.0
  %3379 = vmatpush1.msra.mxu0 0.0
  %3380 = vmatprep.subr.mxu0 0.0
  %3381 = vmatpush1.msra.mxu0 0.0
  %3382 = vmatprep.subr.mxu0 0.0
  %3383 = vmatpush1.msra.mxu0 0.0
  %3384 = vmatprep.subr.mxu0 0.0
  %3385 = vmatpush1.msra.mxu0 0.0
  %3386 = vmatprep.subr.mxu0 0.0
  %3387 = vmatpush1.msra.mxu0 0.0
  %3388 = vmatprep.subr.mxu0 0.0
  %3389 = vmatpush1.msra.mxu0 0.0
  %3390 = vmatprep.subr.mxu0 0.0
  %3391 = vmatpush1.msra.mxu0 0.0
  %3392 = vmatprep.subr.mxu0 0.0
  %3393 = vmatpush1.msra.mxu0 0.0
  %3394 = vmatprep.mubr.f32.mxu0 %v3319
  %3395 = vmatmul.mubr.f32.gmra.mrb[0].mxu0 %v3262
  %v3396 = vpop.f32.mrb[0].mxu0
  %v3397 = vadd.f32 %v3310, %v3396
  %v3398 = vpop.f32.mrb[0].mxu0
  %v3399 = vadd.f32 %v3311, %v3398
  %3400 = vmatprep.mubr.f32.mxu0 %v3322
  %3401 = vmatmul.mubr.f32.gmra.mrb[0].mxu0 %v3264
  %v3402 = vpop.f32.mrb[0].mxu0
  %v3403 = vadd.f32 %v3312, %v3402
  %v3404 = vpop.f32.mrb[0].mxu0
  %v3405 = vadd.f32 %v3313, %v3404
  %3406 = vmatprep.mubr.f32.mxu0 %v3325
  %3407 = vmatmul.mubr.f32.gmra.mrb[0].mxu0 %v3266
  %v3408 = vpop.f32.mrb[0].mxu0
  %v3409 = vadd.f32 %v3314, %v3408
  %v3410 = vpop.f32.mrb[0].mxu0
  %v3411 = vadd.f32 %v3315, %v3410
  %3412 = vmatprep.mubr.f32.mxu0 %v3328
  %3413 = vmatmul.mubr.f32.gmra.mrb[0].mxu0 %v3268
  %v3414 = vpop.f32.mrb[0].mxu0
  %v3415 = vadd.f32 %v3316, %v3414
  %v3416 = vpop.f32.mrb[0].mxu0
  %v3417 = vadd.f32 %v3317, %v3416
  %3418 = vdwg.mxu0
  %v3419 = vxor.u32 %v3397, 2147483648
  %v3420 = vxor.u32 %v3399, 2147483648
  %v3421 = vxor.u32 %v3403, 2147483648
  %v3422 = vxor.u32 %v3405, 2147483648
  %v3423 = vxor.u32 %v3409, 2147483648
  %v3424 = vxor.u32 %v3411, 2147483648
  %v3425 = vxor.u32 %v3415, 2147483648
  %v3426 = vxor.u32 %v3417, 2147483648
  %v3427 = vmul.f32 %v3419, 1.442695
  %v3428 = vpow.pop %v3427
  %v3429 = vmul.f32 %v3420, 1.442695
  %v3430 = vpow.pop %v3429
  %v3431 = vmul.f32 %v3421, 1.442695
  %v3432 = vpow.pop %v3431
  %v3433 = vmul.f32 %v3422, 1.442695
  %v3434 = vpow.pop %v3433
  %v3435 = vmul.f32 %v3423, 1.442695
  %v3436 = vpow.pop %v3435
  %v3437 = vmul.f32 %v3424, 1.442695
  %v3438 = vpow.pop %v3437
  %v3439 = vmul.f32 %v3425, 1.442695
  %v3440 = vpow.pop %v3439
  %v3441 = vmul.f32 %v3426, 1.442695
  %v3442 = vpow.pop %v3441
  %v3443 = vadd.f32 %v3428, 1.0
  %v3444 = vadd.f32 %v3430, 1.0
  %v3445 = vadd.f32 %v3432, 1.0
  %v3446 = vadd.f32 %v3434, 1.0
  %v3447 = vadd.f32 %v3436, 1.0
  %v3448 = vadd.f32 %v3438, 1.0
  %v3449 = vadd.f32 %v3440, 1.0
  %v3450 = vadd.f32 %v3442, 1.0
  %v3451 = vrcp.pop %v3443
  %v3452 = vmul.f32 1.0, %v3451
  %v3453 = vrcp.pop %v3444
  %v3454 = vmul.f32 1.0, %v3453
  %v3455 = vrcp.pop %v3445
  %v3456 = vmul.f32 1.0, %v3455
  %v3457 = vrcp.pop %v3446
  %v3458 = vmul.f32 1.0, %v3457
  %v3459 = vrcp.pop %v3447
  %v3460 = vmul.f32 1.0, %v3459
  %v3461 = vrcp.pop %v3448
  %v3462 = vmul.f32 1.0, %v3461
  %v3463 = vrcp.pop %v3449
  %v3464 = vmul.f32 1.0, %v3463
  %v3465 = vrcp.pop %v3450
  %v3466 = vmul.f32 1.0, %v3465
  %v3467 = vld [vmem:[%s3] sm:$0xff]
  %v3468 = vld [vmem:[%s3 + $0x8] sm:$0x3f]
  %v3470 = vsel %vm353, %v3467, 0
  %v3473 = vsel %vm353, %v3468, 0
  %v3476 = vsel %vm360, %v3464, 0
  %v3479 = vsel %vm360, %v3466, 0
  %3481 = vmatprep.subr.mxu0 %v3454
  %3482 = vmatpush1.msra.mxu0 %v3452
  %3483 = vmatprep.subr.mxu0 %v3458
  %3484 = vmatpush1.msra.mxu0 %v3456
  %3485 = vmatprep.subr.mxu0 %v3462
  %3486 = vmatpush1.msra.mxu0 %v3460
  %3487 = vmatprep.subr.mxu0 %v3479
  %3488 = vmatpush1.msra.mxu0 %v3476
  %3489 = vmatprep.subr.mxu0 0.0
  %3490 = vmatpush1.msra.mxu0 0.0
  %3491 = vmatprep.subr.mxu0 0.0
  %3492 = vmatpush1.msra.mxu0 0.0
  %3493 = vmatprep.subr.mxu0 0.0
  %3494 = vmatpush1.msra.mxu0 0.0
  %3495 = vmatprep.subr.mxu0 0.0
  %3496 = vmatpush1.msra.mxu0 0.0
  %3497 = vmatprep.subr.mxu0 0.0
  %3498 = vmatpush1.msra.mxu0 0.0
  %3499 = vmatprep.subr.mxu0 0.0
  %3500 = vmatpush1.msra.mxu0 0.0
  %3501 = vmatprep.subr.mxu0 0.0
  %3502 = vmatpush1.msra.mxu0 0.0
  %3503 = vmatprep.subr.mxu0 0.0
  %3504 = vmatpush1.msra.mxu0 0.0
  %3505 = vmatprep.subr.mxu0 0.0
  %3506 = vmatpush1.msra.mxu0 0.0
  %3507 = vmatprep.subr.mxu0 0.0
  %3508 = vmatpush1.msra.mxu0 0.0
  %3509 = vmatprep.subr.mxu0 0.0
  %3510 = vmatpush1.msra.mxu0 0.0
  %3511 = vmatprep.subr.mxu0 0.0
  %3512 = vmatpush1.msra.mxu0 0.0
  %3513 = vmatprep.subr.mxu0 0.0
  %3514 = vmatpush1.msra.mxu0 0.0
  %3515 = vmatprep.subr.mxu0 0.0
  %3516 = vmatpush1.msra.mxu0 0.0
  %3517 = vmatprep.subr.mxu0 0.0
  %3518 = vmatpush1.msra.mxu0 0.0
  %3519 = vmatprep.subr.mxu0 0.0
  %3520 = vmatpush1.msra.mxu0 0.0
  %3521 = vmatprep.subr.mxu0 0.0
  %3522 = vmatpush1.msra.mxu0 0.0
  %3523 = vmatprep.subr.mxu0 0.0
  %3524 = vmatpush1.msra.mxu0 0.0
  %3525 = vmatprep.subr.mxu0 0.0
  %3526 = vmatpush1.msra.mxu0 0.0
  %3527 = vmatprep.subr.mxu0 0.0
  %3528 = vmatpush1.msra.mxu0 0.0
  %3529 = vmatprep.subr.mxu0 0.0
  %3530 = vmatpush1.msra.mxu0 0.0
  %3531 = vmatprep.subr.mxu0 0.0
  %3532 = vmatpush1.msra.mxu0 0.0
  %3533 = vmatprep.subr.mxu0 0.0
  %3534 = vmatpush1.msra.mxu0 0.0
  %3535 = vmatprep.subr.mxu0 0.0
  %3536 = vmatpush1.msra.mxu0 0.0
  %3537 = vmatprep.subr.mxu0 0.0
  %3538 = vmatpush1.msra.mxu0 0.0
  %3539 = vmatprep.subr.mxu0 0.0
  %3540 = vmatpush1.msra.mxu0 0.0
  %3541 = vmatprep.subr.mxu0 0.0
  %3542 = vmatpush1.msra.mxu0 0.0
  %3543 = vmatprep.subr.mxu0 0.0
  %3544 = vmatpush1.msra.mxu0 0.0
  %3545 = vmatprep.mubr.f32.mxu0 0.0
  %3546 = vmatmul.mubr.f32.gmra.mrb[0].mxu0 %v3470
  %v3547 = vpop.f32.mrb[0].mxu0
  %v3548 = vadd.f32 0.0, %v3547
  %v3549 = vpop.f32.mrb[0].mxu0
  %v3550 = vadd.f32 0.0, %v3549
  %3551 = vmatprep.mubr.f32.mxu0 0.0
  %3552 = vmatmul.mubr.f32.gmra.mrb[0].mxu0 %v3473
  %v3553 = vpop.f32.mrb[0].mxu0
  %v3554 = vadd.f32 0.0, %v3553
  %v3555 = vpop.f32.mrb[0].mxu0
  %v3556 = vadd.f32 0.0, %v3555
  %3557 = vdwg.mxu0
  %v3558 = vld [vmem:[%s4] sm:$0xff]
  %v3559 = vld [vmem:[%s4 + $0x8] sm:$0xff]
  %v3560 = vld [vmem:[%s4 + $0x10] sm:$0xff]
  %v3561 = vld [vmem:[%s4 + $0x18] sm:$0xff]
  %v3562 = vld [vmem:[%s4 + $0x20] sm:$0xff]
  %v3563 = vld [vmem:[%s4 + $0x28] sm:$0xff]
  %v3564 = vld [vmem:[%s4 + $0x30] sm:$0xff]
  %v3565 = vld [vmem:[%s4 + $0x38] sm:$0xff]
  %v3566 = vld [vmem:[%s4 + $0x40] sm:$0xff]
  %v3567 = vld [vmem:[%s4 + $0x48] sm:$0xff]
  %v3568 = vld [vmem:[%s4 + $0x50] sm:$0xff]
  %v3569 = vld [vmem:[%s4 + $0x58] sm:$0xff]
  %v3570 = vld [vmem:[%s4 + $0x60] sm:$0xff]
  %v3571 = vld [vmem:[%s4 + $0x68] sm:$0xff]
  %v3572 = vld [vmem:[%s4 + $0x70] sm:$0xff]
  %v3573 = vld [vmem:[%s4 + $0x78] sm:$0xff]
  %v3574 = vld [vmem:[%s4 + $0x80] sm:$0xff]
  %v3575 = vld [vmem:[%s4 + $0x88] sm:$0xff]
  %v3576 = vld [vmem:[%s4 + $0x90] sm:$0xff]
  %v3577 = vld [vmem:[%s4 + $0x98] sm:$0xff]
  %v3578 = vld [vmem:[%s4 + $0xa0] sm:$0xff]
  %v3580 = vsel %vm465, %v3550, 0
  %v3583 = vsel %vm465, %v3556, 0
  %3585 = vmatprep.subr.mxu0 0.0
  %3586 = vmatpush1.msra.mxu0 %v3558
  %3587 = vmatprep.subr.mxu0 0.0
  %3588 = vmatpush1.msra.mxu0 %v3559
  %3589 = vmatprep.subr.mxu0 0.0
  %3590 = vmatpush1.msra.mxu0 %v3560
  %3591 = vmatprep.subr.mxu0 0.0
  %3592 = vmatpush1.msra.mxu0 %v3561
  %3593 = vmatprep.subr.mxu0 0.0
  %3594 = vmatpush1.msra.mxu0 %v3562
  %3595 = vmatprep.subr.mxu0 0.0
  %3596 = vmatpush1.msra.mxu0 %v3563
  %3597 = vmatprep.subr.mxu0 0.0
  %3598 = vmatpush1.msra.mxu0 %v3564
  %3599 = vmatprep.subr.mxu0 0.0
  %3600 = vmatpush1.msra.mxu0 %v3565
  %3601 = vmatprep.subr.mxu0 0.0
  %3602 = vmatpush1.msra.mxu0 %v3566
  %3603 = vmatprep.subr.mxu0 0.0
  %3604 = vmatpush1.msra.mxu0 %v3567
  %3605 = vmatprep.subr.mxu0 0.0
  %3606 = vmatpush1.msra.mxu0 %v3568
  %3607 = vmatprep.subr.mxu0 0.0
  %3608 = vmatpush1.msra.mxu0 %v3569
  %3609 = vmatprep.subr.mxu0 0.0
  %3610 = vmatpush1.msra.mxu0 %v3570
  %3611 = vmatprep.subr.mxu0 0.0
  %3612 = vmatpush1.msra.mxu0 %v3571
  %3613 = vmatprep.subr.mxu0 0.0
  %3614 = vmatpush1.msra.mxu0 %v3572
  %3615 = vmatprep.subr.mxu0 0.0
  %3616 = vmatpush1.msra.mxu0 %v3573
  %3617 = vmatprep.subr.mxu0 0.0
  %3618 = vmatpush1.msra.mxu0 %v3574
  %3619 = vmatprep.subr.mxu0 0.0
  %3620 = vmatpush1.msra.mxu0 %v3575
  %3621 = vmatprep.subr.mxu0 0.0
  %3622 = vmatpush1.msra.mxu0 %v3576
  %3623 = vmatprep.subr.mxu0 0.0
  %3624 = vmatpush1.msra.mxu0 %v3577
  %3625 = vmatprep.subr.mxu0 0.0
  %3626 = vmatpush1.msra.mxu0 %v3578
  %3627 = vmatprep.subr.mxu0 0.0
  %3628 = vmatpush1.msra.mxu0 0.0
  %3629 = vmatprep.subr.mxu0 0.0
  %3630 = vmatpush1.msra.mxu0 0.0
  %3631 = vmatprep.subr.mxu0 0.0
  %3632 = vmatpush1.msra.mxu0 0.0
  %3633 = vmatprep.subr.mxu0 0.0
  %3634 = vmatpush1.msra.mxu0 0.0
  %3635 = vmatprep.subr.mxu0 0.0
  %3636 = vmatpush1.msra.mxu0 0.0
  %3637 = vmatprep.subr.mxu0 0.0
  %3638 = vmatpush1.msra.mxu0 0.0
  %3639 = vmatprep.subr.mxu0 0.0
  %3640 = vmatpush1.msra.mxu0 0.0
  %3641 = vmatprep.subr.mxu0 0.0
  %3642 = vmatpush1.msra.mxu0 0.0
  %3643 = vmatprep.subr.mxu0 0.0
  %3644 = vmatpush1.msra.mxu0 0.0
  %3645 = vmatprep.subr.mxu0 0.0
  %3646 = vmatpush1.msra.mxu0 0.0
  %3647 = vmatprep.subr.mxu0 0.0
  %3648 = vmatpush1.msra.mxu0 0.0
  %3649 = vmatprep.mubr.f32.mxu0 %v3580
  %3650 = vmatmul.mubr.f32.gmra.mrb[0].mxu0 %v3548
  %v3651 = vpop.f32.mrb[0].mxu0
  %v3652 = vadd.f32 0.0, %v3651
  %v3653 = vpop.f32.mrb[0].mxu0
  %3654 = vmatprep.mubr.f32.mxu0 %v3583
  %3655 = vmatmul.mubr.f32.gmra.mrb[0].mxu0 %v3554
  %v3656 = vpop.f32.mrb[0].mxu0
  %v3657 = vadd.f32 0.0, %v3656
  %v3658 = vpop.f32.mrb[0].mxu0
  %3659 = vdwg.mxu0
  %3660 = vst.msk [vmem:[#allocation3] sm:$0xff] %vm547, %v3652
  %3661 = vst.msk [vmem:[#allocation3 + $0x20] sm:$0x3] %vm549, %v3657
  %v3664 = vrot.slane %v3652, 1
  %v3665 = vrot.slane %v3657, 1
  %v3666 = vsel %vm553, %v3664, %v3665
  %3667 = vrot.lane.b32.xlu0 %v3666, 84
  %v3668 = vpop.permute.xlu0 %3667
  %3669 = vrot.lane.b32.xlu0 %v3665, 84
  %v3670 = vpop.permute.xlu0 %3669
  %3673 = vst.msk [vmem:[#allocation3] sm:$0xff] %vm563, %v3668
  %3674 = vst.msk [vmem:[#allocation3 + $0x8] sm:$0xff] %vm465, %v3668
  %3675 = vst.msk [vmem:[#allocation3 + $0x20] sm:$0x3] %vm566, %v3670
  %3676 = vst.msk [vmem:[#allocation3 + $0x28] sm:$0x3] %vm568, %v3670
  %v3677 = vrot.slane %v3652, 2
  %v3678 = vrot.slane %v3657, 2
  %v3679 = vsel %vm570, %v3677, %v3678
  %3680 = vrot.lane.b32.xlu0 %v3679, 40
  %v3681 = vpop.permute.xlu0 %3680
  %3682 = vrot.lane.b32.xlu0 %v3678, 40
  %v3683 = vpop.permute.xlu0 %3682
  %3686 = vst.msk [vmem:[#allocation3 + $0x8] sm:$0xff] %vm580, %v3681
  %3687 = vst.msk [vmem:[#allocation3 + $0x28] sm:$0x3] %vm582, %v3683
  %v3688 = vrot.slane %v3652, 3
  %v3689 = vrot.slane %v3657, 3
  %v3690 = vsel %vm584, %v3688, %v3689
  %3691 = vrot.lane.b32.xlu0 %v3690, 124
  %v3692 = vpop.permute.xlu0 %3691
  %3693 = vrot.lane.b32.xlu0 %v3689, 124
  %v3694 = vpop.permute.xlu0 %3693
  %3697 = vst.msk [vmem:[#allocation3 + $0x8] sm:$0xff] %vm594, %v3692
  %3698 = vst.msk [vmem:[#allocation3 + $0x10] sm:$0xff] %vm596, %v3692
  %3699 = vst.msk [vmem:[#allocation3 + $0x28] sm:$0x3] %vm598, %v3694
  %3700 = vst.msk [vmem:[#allocation3 + $0x30] sm:$0x3] %vm600, %v3694
  %v3701 = vrot.slane %v3652, 4
  %v3702 = vrot.slane %v3657, 4
  %v3703 = vsel %vm360, %v3701, %v3702
  %3704 = vrot.lane.b32.xlu0 %v3703, 80
  %v3705 = vpop.permute.xlu0 %3704
  %3706 = vrot.lane.b32.xlu0 %v3702, 80
  %v3707 = vpop.permute.xlu0 %3706
  %3710 = vst.msk [vmem:[#allocation3 + $0x10] sm:$0xff] %vm611, %v3705
  %3711 = vst.msk [vmem:[#allocation3 + $0x18] sm:$0xff] %vm613, %v3705
  %3712 = vst.msk [vmem:[#allocation3 + $0x30] sm:$0x3] %vm615, %v3707
  %3713 = vst.msk [vmem:[#allocation3 + $0x38] sm:$0x3] %vm617, %v3707
  %v3714 = vld [vmem:[#allocation3] sm:$0xff]
  %v3715 = vld [vmem:[#allocation3 + $0x8] sm:$0xff]
  %v3716 = vld [vmem:[#allocation3 + $0x10] sm:$0xff]
  %v3717 = vld [vmem:[#allocation3 + $0x18] sm:$0xff]
  %v3718 = vld [vmem:[#allocation3 + $0x20] sm:$0x3]
  %v3719 = vld [vmem:[#allocation3 + $0x28] sm:$0x3]
  %v3720 = vld [vmem:[#allocation3 + $0x30] sm:$0x3]
  %v3721 = vld [vmem:[#allocation3 + $0x38] sm:$0x3]
  %v3722 = vld [vmem:[%s5] sm:$0xff]
  %v3723 = vld [vmem:[%s5 + $0x8] sm:$0xff]
  %v3724 = vld [vmem:[%s5 + $0x10] sm:$0xff]
  %v3725 = vld [vmem:[%s5 + $0x18] sm:$0xff]
  %v3726 = vld [vmem:[%s5 + $0x20] sm:$0xff]
  %v3727 = vld [vmem:[%s5 + $0x28] sm:$0xff]
  %v3728 = vld [vmem:[%s5 + $0x30] sm:$0xff]
  %v3729 = vld [vmem:[%s5 + $0x38] sm:$0xff]
  %v3730 = vld [vmem:[%s5 + $0x40] sm:$0xff]
  %v3731 = vld [vmem:[%s5 + $0x48] sm:$0xff]
  %v3732 = vld [vmem:[%s5 + $0x50] sm:$0xff]
  %v3733 = vld [vmem:[%s5 + $0x58] sm:$0xff]
  %v3734 = vld [vmem:[%s5 + $0x60] sm:$0xff]
  %v3735 = vld [vmem:[%s5 + $0x68] sm:$0xff]
  %v3736 = vld [vmem:[%s5 + $0x70] sm:$0xff]
  %v3737 = vld [vmem:[%s5 + $0x78] sm:$0xff]
  %v3738 = vld [vmem:[%s5 + $0x80] sm:$0xff]
  %v3739 = vld [vmem:[%s5 + $0x88] sm:$0xff]
  %v3740 = vld [vmem:[%s5 + $0x90] sm:$0xff]
  %v3741 = vld [vmem:[%s5 + $0x98] sm:$0xff]
  %v3742 = vld [vmem:[%s5 + $0xa0] sm:$0xff]
  %v3743 = vld [vmem:[%s5 + $0xa8] sm:$0xff]
  %v3744 = vld [vmem:[%s5 + $0xb0] sm:$0xff]
  %v3745 = vld [vmem:[%s5 + $0xb8] sm:$0xff]
  %v3746 = vld [vmem:[%s5 + $0xc0] sm:$0xff]
  %v3747 = vld [vmem:[%s5 + $0xc8] sm:$0xff]
  %v3748 = vld [vmem:[%s5 + $0xd0] sm:$0xff]
  %v3749 = vld [vmem:[%s5 + $0xd8] sm:$0xff]
  %v3750 = vld [vmem:[%s5 + $0xe0] sm:$0xff]
  %v3751 = vld [vmem:[%s5 + $0xe8] sm:$0xff]
  %v3752 = vld [vmem:[%s5 + $0xf0] sm:$0xff]
  %v3753 = vld [vmem:[%s5 + $0xf8] sm:$0xff]
  %v3754 = vld [vmem:[%s5 + $0x100] sm:$0xff]
  %v3755 = vld [vmem:[%s5 + $0x108] sm:$0xff]
  %v3756 = vld [vmem:[%s5 + $0x110] sm:$0xff]
  %v3757 = vld [vmem:[%s5 + $0x118] sm:$0xff]
  %v3758 = vld [vmem:[%s5 + $0x120] sm:$0xff]
  %v3759 = vld [vmem:[%s5 + $0x128] sm:$0xff]
  %v3760 = vld [vmem:[%s5 + $0x130] sm:$0xff]
  %v3761 = vld [vmem:[%s5 + $0x138] sm:$0xff]
  %v3762 = vld [vmem:[%s5 + $0x140] sm:$0xff]
  %v3763 = vld [vmem:[%s5 + $0x148] sm:$0xff]
  %v3764 = vld [vmem:[%s5 + $0x150] sm:$0xff]
  %v3765 = vld [vmem:[%s5 + $0x158] sm:$0xff]
  %v3766 = vld [vmem:[%s5 + $0x160] sm:$0xff]
  %v3767 = vld [vmem:[%s5 + $0x168] sm:$0xff]
  %v3768 = vld [vmem:[%s5 + $0x170] sm:$0xff]
  %v3769 = vld [vmem:[%s5 + $0x178] sm:$0xff]
  %v3770 = vld [vmem:[%s5 + $0x180] sm:$0xff]
  %v3771 = vld [vmem:[%s5 + $0x188] sm:$0xff]
  %v3772 = vld [vmem:[%s5 + $0x190] sm:$0xff]
  %v3773 = vld [vmem:[%s5 + $0x198] sm:$0xff]
  %v3774 = vld [vmem:[%s5 + $0x1a0] sm:$0xff]
  %v3775 = vld [vmem:[%s5 + $0x1a8] sm:$0xff]
  %v3776 = vld [vmem:[%s5 + $0x1b0] sm:$0xff]
  %v3777 = vld [vmem:[%s5 + $0x1b8] sm:$0xff]
  %v3778 = vld [vmem:[%s5 + $0x1c0] sm:$0xff]
  %v3779 = vld [vmem:[%s5 + $0x1c8] sm:$0xff]
  %v3780 = vld [vmem:[%s5 + $0x1d0] sm:$0xff]
  %v3781 = vld [vmem:[%s5 + $0x1d8] sm:$0xff]
  %v3782 = vld [vmem:[%s5 + $0x1e0] sm:$0xff]
  %v3783 = vld [vmem:[%s5 + $0x1e8] sm:$0xff]
  %v3784 = vld [vmem:[%s5 + $0x1f0] sm:$0xff]
  %v3785 = vld [vmem:[%s5 + $0x1f8] sm:$0xff]
  %v3786 = vld [vmem:[%s5 + $0x200] sm:$0xff]
  %v3787 = vld [vmem:[%s5 + $0x208] sm:$0xff]
  %v3788 = vld [vmem:[%s5 + $0x210] sm:$0xff]
  %v3789 = vld [vmem:[%s5 + $0x218] sm:$0xff]
  %v3790 = vld [vmem:[%s5 + $0x220] sm:$0xff]
  %v3791 = vld [vmem:[%s5 + $0x228] sm:$0xff]
  %v3792 = vld [vmem:[%s5 + $0x230] sm:$0xff]
  %v3793 = vld [vmem:[%s5 + $0x238] sm:$0xff]
  %v3794 = vld [vmem:[%s5 + $0x240] sm:$0xff]
  %v3795 = vld [vmem:[%s5 + $0x248] sm:$0xff]
  %v3796 = vld [vmem:[%s5 + $0x250] sm:$0xff]
  %v3797 = vld [vmem:[%s5 + $0x258] sm:$0xff]
  %v3798 = vld [vmem:[%s5 + $0x260] sm:$0xff]
  %v3799 = vld [vmem:[%s5 + $0x268] sm:$0xff]
  %v3800 = vld [vmem:[%s5 + $0x270] sm:$0xff]
  %v3801 = vld [vmem:[%s5 + $0x278] sm:$0xff]
  %v3802 = vld [vmem:[%s5 + $0x280] sm:$0xff]
  %v3803 = vld [vmem:[%s5 + $0x288] sm:$0xff]
  %v3804 = vld [vmem:[%s5 + $0x290] sm:$0xff]
  %v3805 = vld [vmem:[%s5 + $0x298] sm:$0xff]
  %v3806 = vld [vmem:[%s5 + $0x2a0] sm:$0xff]
  %v3807 = vld [vmem:[%s5 + $0x2a8] sm:$0xff]
  %v3808 = vld [vmem:[%s5 + $0x2b0] sm:$0xff]
  %v3809 = vld [vmem:[%s5 + $0x2b8] sm:$0xff]
  %v3810 = vld [vmem:[%s5 + $0x2c0] sm:$0xff]
  %v3811 = vld [vmem:[%s5 + $0x2c8] sm:$0xff]
  %v3812 = vld [vmem:[%s5 + $0x2d0] sm:$0xff]
  %v3813 = vld [vmem:[%s5 + $0x2d8] sm:$0xff]
  %v3814 = vld [vmem:[%s5 + $0x2e0] sm:$0xff]
  %v3815 = vld [vmem:[%s5 + $0x2e8] sm:$0xff]
  %v3816 = vld [vmem:[%s5 + $0x2f0] sm:$0xff]
  %v3817 = vld [vmem:[%s5 + $0x2f8] sm:$0xff]
  %v3818 = vld [vmem:[%s5 + $0x300] sm:$0xff]
  %v3819 = vld [vmem:[%s5 + $0x308] sm:$0xff]
  %v3820 = vld [vmem:[%s5 + $0x310] sm:$0xff]
  %v3821 = vld [vmem:[%s5 + $0x318] sm:$0xff]
  %v3822 = vld [vmem:[%s5 + $0x320] sm:$0xff]
  %v3823 = vld [vmem:[%s5 + $0x328] sm:$0xff]
  %v3824 = vld [vmem:[%s5 + $0x330] sm:$0xff]
  %v3825 = vld [vmem:[%s5 + $0x338] sm:$0xff]
  %v3826 = vld [vmem:[%s5 + $0x340] sm:$0xf]
  %v3827 = vld [vmem:[%s5 + $0x348] sm:$0xf]
  %v3828 = vld [vmem:[%s6] sm:$0xff]
  %v3829 = vld [vmem:[%s6 + $0x8] sm:$0xff]
  %v3830 = vld [vmem:[%s6 + $0x10] sm:$0x3]
  %v3831 = vld [vmem:[%s6 + $0x18] sm:$0x3]
  %v3833 = vsel %vm613, %v3717, 0
  %v3836 = vsel %vm613, %v3721, 0
  %v3839 = vsel %vm360, %v3826, 0
  %v3842 = vsel %vm360, %v3827, 0
  %3844 = vmatprep.subr.mxu0 %v3723
  %3845 = vmatpush1.msra.mxu0 %v3722
  %3846 = vmatprep.subr.mxu0 %v3725
  %3847 = vmatpush1.msra.mxu0 %v3724
  %3848 = vmatprep.subr.mxu0 %v3727
  %3849 = vmatpush1.msra.mxu0 %v3726
  %3850 = vmatprep.subr.mxu0 %v3729
  %3851 = vmatpush1.msra.mxu0 %v3728
  %3852 = vmatprep.subr.mxu0 %v3731
  %3853 = vmatpush1.msra.mxu0 %v3730
  %3854 = vmatprep.subr.mxu0 %v3733
  %3855 = vmatpush1.msra.mxu0 %v3732
  %3856 = vmatprep.subr.mxu0 %v3735
  %3857 = vmatpush1.msra.mxu0 %v3734
  %3858 = vmatprep.subr.mxu0 %v3737
  %3859 = vmatpush1.msra.mxu0 %v3736
  %3860 = vmatprep.subr.mxu0 %v3739
  %3861 = vmatpush1.msra.mxu0 %v3738
  %3862 = vmatprep.subr.mxu0 %v3741
  %3863 = vmatpush1.msra.mxu0 %v3740
  %3864 = vmatprep.subr.mxu0 %v3743
  %3865 = vmatpush1.msra.mxu0 %v3742
  %3866 = vmatprep.subr.mxu0 %v3745
  %3867 = vmatpush1.msra.mxu0 %v3744
  %3868 = vmatprep.subr.mxu0 %v3747
  %3869 = vmatpush1.msra.mxu0 %v3746
  %3870 = vmatprep.subr.mxu0 %v3749
  %3871 = vmatpush1.msra.mxu0 %v3748
  %3872 = vmatprep.subr.mxu0 %v3751
  %3873 = vmatpush1.msra.mxu0 %v3750
  %3874 = vmatprep.subr.mxu0 %v3753
  %3875 = vmatpush1.msra.mxu0 %v3752
  %3876 = vmatprep.subr.mxu0 %v3755
  %3877 = vmatpush1.msra.mxu0 %v3754
  %3878 = vmatprep.subr.mxu0 %v3757
  %3879 = vmatpush1.msra.mxu0 %v3756
  %3880 = vmatprep.subr.mxu0 %v3759
  %3881 = vmatpush1.msra.mxu0 %v3758
  %3882 = vmatprep.subr.mxu0 %v3761
  %3883 = vmatpush1.msra.mxu0 %v3760
  %3884 = vmatprep.subr.mxu0 %v3763
  %3885 = vmatpush1.msra.mxu0 %v3762
  %3886 = vmatprep.subr.mxu0 %v3765
  %3887 = vmatpush1.msra.mxu0 %v3764
  %3888 = vmatprep.subr.mxu0 %v3767
  %3889 = vmatpush1.msra.mxu0 %v3766
  %3890 = vmatprep.subr.mxu0 %v3769
  %3891 = vmatpush1.msra.mxu0 %v3768
  %3892 = vmatprep.subr.mxu0 %v3771
  %3893 = vmatpush1.msra.mxu0 %v3770
  %3894 = vmatprep.subr.mxu0 %v3773
  %3895 = vmatpush1.msra.mxu0 %v3772
  %3896 = vmatprep.subr.mxu0 %v3775
  %3897 = vmatpush1.msra.mxu0 %v3774
  %3898 = vmatprep.subr.mxu0 %v3777
  %3899 = vmatpush1.msra.mxu0 %v3776
  %3900 = vmatprep.subr.mxu0 %v3779
  %3901 = vmatpush1.msra.mxu0 %v3778
  %3902 = vmatprep.subr.mxu0 %v3781
  %3903 = vmatpush1.msra.mxu0 %v3780
  %3904 = vmatprep.subr.mxu0 %v3783
  %3905 = vmatpush1.msra.mxu0 %v3782
  %3906 = vmatprep.subr.mxu0 %v3785
  %3907 = vmatpush1.msra.mxu0 %v3784
  %3908 = vmatprep.mubr.f32.mxu0 %v3715
  %3909 = vmatmul.mubr.f32.gmra.mrb[0].mxu0 %v3714
  %v3910 = vpop.f32.mrb[0].mxu0
  %v3911 = vadd.f32 %v3828, %v3910
  %v3912 = vpop.f32.mrb[0].mxu0
  %v3913 = vadd.f32 %v3829, %v3912
  %3914 = vmatprep.mubr.f32.mxu0 %v3719
  %3915 = vmatmul.mubr.f32.gmra.mrb[0].mxu0 %v3718
  %v3916 = vpop.f32.mrb[0].mxu0
  %v3917 = vadd.f32 %v3830, %v3916
  %v3918 = vpop.f32.mrb[0].mxu0
  %v3919 = vadd.f32 %v3831, %v3918
  %3920 = vdwg.mxu0
  %3921 = vmatprep.subr.mxu0 %v3787
  %3922 = vmatpush1.msra.mxu0 %v3786
  %3923 = vmatprep.subr.mxu0 %v3789
  %3924 = vmatpush1.msra.mxu0 %v3788
  %3925 = vmatprep.subr.mxu0 %v3791
  %3926 = vmatpush1.msra.mxu0 %v3790
  %3927 = vmatprep.subr.mxu0 %v3793
  %3928 = vmatpush1.msra.mxu0 %v3792
  %3929 = vmatprep.subr.mxu0 %v3795
  %3930 = vmatpush1.msra.mxu0 %v3794
  %3931 = vmatprep.subr.mxu0 %v3797
  %3932 = vmatpush1.msra.mxu0 %v3796
  %3933 = vmatprep.subr.mxu0 %v3799
  %3934 = vmatpush1.msra.mxu0 %v3798
  %3935 = vmatprep.subr.mxu0 %v3801
  %3936 = vmatpush1.msra.mxu0 %v3800
  %3937 = vmatprep.subr.mxu0 %v3803
  %3938 = vmatpush1.msra.mxu0 %v3802
  %3939 = vmatprep.subr.mxu0 %v3805
  %3940 = vmatpush1.msra.mxu0 %v3804
  %3941 = vmatprep.subr.mxu0 %v3807
  %3942 = vmatpush1.msra.mxu0 %v3806
  %3943 = vmatprep.subr.mxu0 %v3809
  %3944 = vmatpush1.msra.mxu0 %v3808
  %3945 = vmatprep.subr.mxu0 %v3811
  %3946 = vmatpush1.msra.mxu0 %v3810
  %3947 = vmatprep.subr.mxu0 %v3813
  %3948 = vmatpush1.msra.mxu0 %v3812
  %3949 = vmatprep.subr.mxu0 %v3815
  %3950 = vmatpush1.msra.mxu0 %v3814
  %3951 = vmatprep.subr.mxu0 %v3817
  %3952 = vmatpush1.msra.mxu0 %v3816
  %3953 = vmatprep.subr.mxu0 %v3819
  %3954 = vmatpush1.msra.mxu0 %v3818
  %3955 = vmatprep.subr.mxu0 %v3821
  %3956 = vmatpush1.msra.mxu0 %v3820
  %3957 = vmatprep.subr.mxu0 %v3823
  %3958 = vmatpush1.msra.mxu0 %v3822
  %3959 = vmatprep.subr.mxu0 %v3825
  %3960 = vmatpush1.msra.mxu0 %v3824
  %3961 = vmatprep.subr.mxu0 %v3842
  %3962 = vmatpush1.msra.mxu0 %v3839
  %3963 = vmatprep.subr.mxu0 0.0
  %3964 = vmatpush1.msra.mxu0 0.0
  %3965 = vmatprep.subr.mxu0 0.0
  %3966 = vmatpush1.msra.mxu0 0.0
  %3967 = vmatprep.subr.mxu0 0.0
  %3968 = vmatpush1.msra.mxu0 0.0
  %3969 = vmatprep.subr.mxu0 0.0
  %3970 = vmatpush1.msra.mxu0 0.0
  %3971 = vmatprep.subr.mxu0 0.0
  %3972 = vmatpush1.msra.mxu0 0.0
  %3973 = vmatprep.subr.mxu0 0.0
  %3974 = vmatpush1.msra.mxu0 0.0
  %3975 = vmatprep.subr.mxu0 0.0
  %3976 = vmatpush1.msra.mxu0 0.0
  %3977 = vmatprep.subr.mxu0 0.0
  %3978 = vmatpush1.msra.mxu0 0.0
  %3979 = vmatprep.subr.mxu0 0.0
  %3980 = vmatpush1.msra.mxu0 0.0
  %3981 = vmatprep.subr.mxu0 0.0
  %3982 = vmatpush1.msra.mxu0 0.0
  %3983 = vmatprep.subr.mxu0 0.0
  %3984 = vmatpush1.msra.mxu0 0.0
  %3985 = vmatprep.mubr.f32.mxu0 %v3833
  %3986 = vmatmul.mubr.f32.gmra.mrb[0].mxu0 %v3716
  %v3987 = vpop.f32.mrb[0].mxu0
  %v3988 = vadd.f32 %v3911, %v3987
  %v3989 = vpop.f32.mrb[0].mxu0
  %v3990 = vadd.f32 %v3913, %v3989
  %3991 = vmatprep.mubr.f32.mxu0 %v3836
  %3992 = vmatmul.mubr.f32.gmra.mrb[0].mxu0 %v3720
  %v3993 = vpop.f32.mrb[0].mxu0
  %v3994 = vadd.f32 %v3917, %v3993
  %v3995 = vpop.f32.mrb[0].mxu0
  %v3996 = vadd.f32 %v3919, %v3995
  %3997 = vdwg.mxu0
  %v3998 = vxor.u32 %v3988, 2147483648
  %v3999 = vxor.u32 %v3990, 2147483648
  %v4000 = vxor.u32 %v3994, 2147483648
  %v4001 = vxor.u32 %v3996, 2147483648
  %v4002 = vmul.f32 %v3998, 1.442695
  %v4003 = vpow.pop %v4002
  %v4004 = vmul.f32 %v3999, 1.442695
  %v4005 = vpow.pop %v4004
  %v4006 = vmul.f32 %v4000, 1.442695
  %v4007 = vpow.pop %v4006
  %v4008 = vmul.f32 %v4001, 1.442695
  %v4009 = vpow.pop %v4008
  %v4010 = vadd.f32 %v4003, 1.0
  %v4011 = vadd.f32 %v4005, 1.0
  %v4012 = vadd.f32 %v4007, 1.0
  %v4013 = vadd.f32 %v4009, 1.0
  %v4014 = vrcp.pop %v4010
  %v4015 = vmul.f32 1.0, %v4014
  %v4016 = vrcp.pop %v4011
  %v4017 = vmul.f32 1.0, %v4016
  %v4018 = vrcp.pop %v4012
  %v4019 = vmul.f32 1.0, %v4018
  %v4020 = vrcp.pop %v4013
  %v4021 = vmul.f32 1.0, %v4020
  %v4022 = vld [vmem:[%s7] sm:$0x1f]
  %v4024 = vsel %vm928, %v4022, 0
  %v4027 = vsel %vm932, %v4019, 0
  %v4030 = vsel %vm932, %v4021, 0
  %4032 = vmatprep.subr.mxu0 %v4017
  %4033 = vmatpush1.msra.mxu0 %v4015
  %4034 = vmatprep.subr.mxu0 %v4030
  %4035 = vmatpush1.msra.mxu0 %v4027
  %4036 = vmatprep.subr.mxu0 0.0
  %4037 = vmatpush1.msra.mxu0 0.0
  %4038 = vmatprep.subr.mxu0 0.0
  %4039 = vmatpush1.msra.mxu0 0.0
  %4040 = vmatprep.subr.mxu0 0.0
  %4041 = vmatpush1.msra.mxu0 0.0
  %4042 = vmatprep.subr.mxu0 0.0
  %4043 = vmatpush1.msra.mxu0 0.0
  %4044 = vmatprep.subr.mxu0 0.0
  %4045 = vmatpush1.msra.mxu0 0.0
  %4046 = vmatprep.subr.mxu0 0.0
  %4047 = vmatpush1.msra.mxu0 0.0
  %4048 = vmatprep.subr.mxu0 0.0
  %4049 = vmatpush1.msra.mxu0 0.0
  %4050 = vmatprep.subr.mxu0 0.0
  %4051 = vmatpush1.msra.mxu0 0.0
  %4052 = vmatprep.subr.mxu0 0.0
  %4053 = vmatpush1.msra.mxu0 0.0
  %4054 = vmatprep.subr.mxu0 0.0
  %4055 = vmatpush1.msra.mxu0 0.0
  %4056 = vmatprep.subr.mxu0 0.0
  %4057 = vmatpush1.msra.mxu0 0.0
  %4058 = vmatprep.subr.mxu0 0.0
  %4059 = vmatpush1.msra.mxu0 0.0
  %4060 = vmatprep.subr.mxu0 0.0
  %4061 = vmatpush1.msra.mxu0 0.0
  %4062 = vmatprep.subr.mxu0 0.0
  %4063 = vmatpush1.msra.mxu0 0.0
  %4064 = vmatprep.subr.mxu0 0.0
  %4065 = vmatpush1.msra.mxu0 0.0
  %4066 = vmatprep.subr.mxu0 0.0
  %4067 = vmatpush1.msra.mxu0 0.0
  %4068 = vmatprep.subr.mxu0 0.0
  %4069 = vmatpush1.msra.mxu0 0.0
  %4070 = vmatprep.subr.mxu0 0.0
  %4071 = vmatpush1.msra.mxu0 0.0
  %4072 = vmatprep.subr.mxu0 0.0
  %4073 = vmatpush1.msra.mxu0 0.0
  %4074 = vmatprep.subr.mxu0 0.0
  %4075 = vmatpush1.msra.mxu0 0.0
  %4076 = vmatprep.subr.mxu0 0.0
  %4077 = vmatpush1.msra.mxu0 0.0
  %4078 = vmatprep.subr.mxu0 0.0
  %4079 = vmatpush1.msra.mxu0 0.0
  %4080 = vmatprep.subr.mxu0 0.0
  %4081 = vmatpush1.msra.mxu0 0.0
  %4082 = vmatprep.subr.mxu0 0.0
  %4083 = vmatpush1.msra.mxu0 0.0
  %4084 = vmatprep.subr.mxu0 0.0
  %4085 = vmatpush1.msra.mxu0 0.0
  %4086 = vmatprep.subr.mxu0 0.0
  %4087 = vmatpush1.msra.mxu0 0.0
  %4088 = vmatprep.subr.mxu0 0.0
  %4089 = vmatpush1.msra.mxu0 0.0
  %4090 = vmatprep.subr.mxu0 0.0
  %4091 = vmatpush1.msra.mxu0 0.0
  %4092 = vmatprep.subr.mxu0 0.0
  %4093 = vmatpush1.msra.mxu0 0.0
  %4094 = vmatprep.subr.mxu0 0.0
  %4095 = vmatpush1.msra.mxu0 0.0
  %4096 = vmatprep.mubr.f32.mxu0 0.0
  %4097 = vmatmul.mubr.f32.gmra.mrb[0].mxu0 %v4024
  %v4098 = vpop.f32.mrb[0].mxu0
  %v4099 = vadd.f32 0.0, %v4098
  %v4100 = vpop.f32.mrb[0].mxu0
  %v4101 = vadd.f32 0.0, %v4100
  %4102 = vdwg.mxu0
  %v4103 = vld [vmem:[%s8] sm:$0xff]
  %v4104 = vld [vmem:[%s8 + $0x8] sm:$0xff]
  %v4105 = vld [vmem:[%s8 + $0x10] sm:$0xff]
  %v4106 = vld [vmem:[%s8 + $0x18] sm:$0xff]
  %v4107 = vld [vmem:[%s8 + $0x20] sm:$0xff]
  %v4108 = vld [vmem:[%s8 + $0x28] sm:$0xff]
  %v4109 = vld [vmem:[%s8 + $0x30] sm:$0xff]
  %v4110 = vld [vmem:[%s8 + $0x38] sm:$0xff]
  %v4111 = vld [vmem:[%s8 + $0x40] sm:$0xff]
  %v4112 = vld [vmem:[%s8 + $0x48] sm:$0xff]
  %v4113 = vld [vmem:[%s8 + $0x50] sm:$0xff]
  %v4114 = vld [vmem:[%s8 + $0x58] sm:$0xff]
  %v4115 = vld [vmem:[%s8 + $0x60] sm:$0xff]
  %v4116 = vld [vmem:[%s8 + $0x68] sm:$0xff]
  %v4117 = vld [vmem:[%s8 + $0x70] sm:$0xff]
  %v4118 = vld [vmem:[%s8 + $0x78] sm:$0xff]
  %v4119 = vld [vmem:[%s8 + $0x80] sm:$0xff]
  %v4120 = vld [vmem:[%s8 + $0x88] sm:$0xff]
  %v4121 = vld [vmem:[%s8 + $0x90] sm:$0xff]
  %v4122 = vld [vmem:[%s8 + $0x98] sm:$0xff]
  %v4124 = vsel %vm54, %v4101, 0
  %4126 = vmatprep.subr.mxu0 0.0
  %4127 = vmatpush1.msra.mxu0 %v4103
  %4128 = vmatprep.subr.mxu0 0.0
  %4129 = vmatpush1.msra.mxu0 %v4104
  %4130 = vmatprep.subr.mxu0 0.0
  %4131 = vmatpush1.msra.mxu0 %v4105
  %4132 = vmatprep.subr.mxu0 0.0
  %4133 = vmatpush1.msra.mxu0 %v4106
  %4134 = vmatprep.subr.mxu0 0.0
  %4135 = vmatpush1.msra.mxu0 %v4107
  %4136 = vmatprep.subr.mxu0 0.0
  %4137 = vmatpush1.msra.mxu0 %v4108
  %4138 = vmatprep.subr.mxu0 0.0
  %4139 = vmatpush1.msra.mxu0 %v4109
  %4140 = vmatprep.subr.mxu0 0.0
  %4141 = vmatpush1.msra.mxu0 %v4110
  %4142 = vmatprep.subr.mxu0 0.0
  %4143 = vmatpush1.msra.mxu0 %v4111
  %4144 = vmatprep.subr.mxu0 0.0
  %4145 = vmatpush1.msra.mxu0 %v4112
  %4146 = vmatprep.subr.mxu0 0.0
  %4147 = vmatpush1.msra.mxu0 %v4113
  %4148 = vmatprep.subr.mxu0 0.0
  %4149 = vmatpush1.msra.mxu0 %v4114
  %4150 = vmatprep.subr.mxu0 0.0
  %4151 = vmatpush1.msra.mxu0 %v4115
  %4152 = vmatprep.subr.mxu0 0.0
  %4153 = vmatpush1.msra.mxu0 %v4116
  %4154 = vmatprep.subr.mxu0 0.0
  %4155 = vmatpush1.msra.mxu0 %v4117
  %4156 = vmatprep.subr.mxu0 0.0
  %4157 = vmatpush1.msra.mxu0 %v4118
  %4158 = vmatprep.subr.mxu0 0.0
  %4159 = vmatpush1.msra.mxu0 %v4119
  %4160 = vmatprep.subr.mxu0 0.0
  %4161 = vmatpush1.msra.mxu0 %v4120
  %4162 = vmatprep.subr.mxu0 0.0
  %4163 = vmatpush1.msra.mxu0 %v4121
  %4164 = vmatprep.subr.mxu0 0.0
  %4165 = vmatpush1.msra.mxu0 %v4122
  %4166 = vmatprep.subr.mxu0 0.0
  %4167 = vmatpush1.msra.mxu0 0.0
  %4168 = vmatprep.subr.mxu0 0.0
  %4169 = vmatpush1.msra.mxu0 0.0
  %4170 = vmatprep.subr.mxu0 0.0
  %4171 = vmatpush1.msra.mxu0 0.0
  %4172 = vmatprep.subr.mxu0 0.0
  %4173 = vmatpush1.msra.mxu0 0.0
  %4174 = vmatprep.subr.mxu0 0.0
  %4175 = vmatpush1.msra.mxu0 0.0
  %4176 = vmatprep.subr.mxu0 0.0
  %4177 = vmatpush1.msra.mxu0 0.0
  %4178 = vmatprep.subr.mxu0 0.0
  %4179 = vmatpush1.msra.mxu0 0.0
  %4180 = vmatprep.subr.mxu0 0.0
  %4181 = vmatpush1.msra.mxu0 0.0
  %4182 = vmatprep.subr.mxu0 0.0
  %4183 = vmatpush1.msra.mxu0 0.0
  %4184 = vmatprep.subr.mxu0 0.0
  %4185 = vmatpush1.msra.mxu0 0.0
  %4186 = vmatprep.subr.mxu0 0.0
  %4187 = vmatpush1.msra.mxu0 0.0
  %4188 = vmatprep.subr.mxu0 0.0
  %4189 = vmatpush1.msra.mxu0 0.0
  %4190 = vmatprep.mubr.f32.mxu0 %v4124
  %4191 = vmatmul.mubr.f32.gmra.mrb[0].mxu0 %v4099
  %v4192 = vpop.f32.mrb[0].mxu0
  %v4193 = vadd.f32 0.0, %v4192
  %v4194 = vpop.f32.mrb[0].mxu0
  %4195 = vdwg.mxu0
  %4196 = vst.msk [vmem:[#allocation4 + $0x3] sm:$0x1] %vm1103, %v4193
  %4197 = vst.msk [vmem:[%s1105 + $0x2] sm:$0x2] %vm1106, %v4193
  %4198 = vst.msk [vmem:[%s1108 + $0x1] sm:$0x4] %vm1109, %v4193
  %4199 = vst.msk [vmem:[%s1111] sm:$0x8] %vm1112, %v4193
  %4200 = vst.msk [vmem:[%s1114 - $0x1] sm:$0x10] %vm1115, %v4193
  %s4201 = scalar_lea.vmem %s0, 128
  %v4202 = vld [vmem:[%s4201] sm:$0xff]
  %v4203 = vld [vmem:[%s4201 + $0x8] sm:$0xff]
  %v4204 = vld [vmem:[%s4201 + $0x10] sm:$0xff]
  %v4205 = vld [vmem:[%s4201 + $0x18] sm:$0xf]
  %4206 = vst.msk [vmem:[#allocation2] sm:$0xff] %vm54, %v4202
  %4207 = vst.msk [vmem:[#allocation2 + $0x10] sm:$0xff] %vm54, %v4203
  %4208 = vst.msk [vmem:[#allocation2 + $0x20] sm:$0xff] %vm54, %v4204
  %4209 = vst.msk [vmem:[#allocation2 + $0x30] sm:$0xf] %vm58, %v4205
  %v4210 = vld [vmem:[%s4201 + $0x1] sm:$0xff]
  %v4211 = vld [vmem:[%s4201 + $0x9] sm:$0xff]
  %v4212 = vld [vmem:[%s4201 + $0x11] sm:$0xff]
  %v4213 = vld [vmem:[%s4201 + $0x19] sm:$0xf]
  %4218 = vrot.lane.b32.xlu0 %v4210, 32
  %v4219 = vpop.permute.xlu0 %4218
  %4220 = vrot.lane.b32.xlu0 %v4211, 32
  %v4221 = vpop.permute.xlu0 %4220
  %4222 = vrot.lane.b32.xlu0 %v4212, 32
  %v4223 = vpop.permute.xlu0 %4222
  %4224 = vrot.lane.b32.xlu0 %v4213, 32
  %v4225 = vpop.permute.xlu0 %4224
  %4230 = vst.msk [vmem:[#allocation2] sm:$0xff] %vm80, %v4219
  %4231 = vst.msk [vmem:[#allocation2 + $0x10] sm:$0xff] %vm80, %v4221
  %4232 = vst.msk [vmem:[#allocation2 + $0x20] sm:$0xff] %vm80, %v4223
  %4233 = vst.msk [vmem:[#allocation2 + $0x30] sm:$0xf] %vm84, %v4225
  %v4234 = vld [vmem:[%s4201 + $0x2] sm:$0xff]
  %v4235 = vld [vmem:[%s4201 + $0xa] sm:$0xff]
  %v4236 = vld [vmem:[%s4201 + $0x12] sm:$0xff]
  %v4237 = vld [vmem:[%s4201 + $0x1a] sm:$0xf]
  %4242 = vrot.lane.b32.xlu0 %v4234, 64
  %v4243 = vpop.permute.xlu0 %4242
  %4244 = vrot.lane.b32.xlu0 %v4235, 64
  %v4245 = vpop.permute.xlu0 %4244
  %4246 = vrot.lane.b32.xlu0 %v4236, 64
  %v4247 = vpop.permute.xlu0 %4246
  %4248 = vrot.lane.b32.xlu0 %v4237, 64
  %v4249 = vpop.permute.xlu0 %4248
  %4254 = vst.msk [vmem:[#allocation2] sm:$0xff] %vm106, %v4243
  %4255 = vst.msk [vmem:[#allocation2 + $0x10] sm:$0xff] %vm106, %v4245
  %4256 = vst.msk [vmem:[#allocation2 + $0x20] sm:$0xff] %vm106, %v4247
  %4257 = vst.msk [vmem:[#allocation2 + $0x30] sm:$0xf] %vm110, %v4249
  %v4258 = vld [vmem:[%s4201 + $0x3] sm:$0xff]
  %v4259 = vld [vmem:[%s4201 + $0xb] sm:$0xff]
  %v4260 = vld [vmem:[%s4201 + $0x13] sm:$0xff]
  %v4261 = vld [vmem:[%s4201 + $0x1b] sm:$0xf]
  %4266 = vrot.lane.b32.xlu0 %v4258, 96
  %v4267 = vpop.permute.xlu0 %4266
  %4268 = vrot.lane.b32.xlu0 %v4259, 96
  %v4269 = vpop.permute.xlu0 %4268
  %4270 = vrot.lane.b32.xlu0 %v4260, 96
  %v4271 = vpop.permute.xlu0 %4270
  %4272 = vrot.lane.b32.xlu0 %v4261, 96
  %v4273 = vpop.permute.xlu0 %4272
  %4278 = vst.msk [vmem:[#allocation2] sm:$0xff] %vm132, %v4267
  %4279 = vst.msk [vmem:[#allocation2 + $0x10] sm:$0xff] %vm132, %v4269
  %4280 = vst.msk [vmem:[#allocation2 + $0x20] sm:$0xff] %vm132, %v4271
  %4281 = vst.msk [vmem:[#allocation2 + $0x30] sm:$0xf] %vm136, %v4273
  %v4282 = vld [vmem:[%s4201 + $0x4] sm:$0xff]
  %v4283 = vld [vmem:[%s4201 + $0xc] sm:$0xff]
  %v4284 = vld [vmem:[%s4201 + $0x14] sm:$0xff]
  %v4285 = vld [vmem:[%s4201 + $0x1c] sm:$0xf]
  %4286 = vst.msk [vmem:[#allocation2 + $0x8] sm:$0xff] %vm54, %v4282
  %4287 = vst.msk [vmem:[#allocation2 + $0x18] sm:$0xff] %vm54, %v4283
  %4288 = vst.msk [vmem:[#allocation2 + $0x28] sm:$0xff] %vm54, %v4284
  %4289 = vst.msk [vmem:[#allocation2 + $0x38] sm:$0xf] %vm58, %v4285
  %v4290 = vld [vmem:[#allocation2] sm:$0xff]
  %v4291 = vld [vmem:[#allocation2 + $0x8] sm:$0xff]
  %v4292 = vld [vmem:[#allocation2 + $0x10] sm:$0xff]
  %v4293 = vld [vmem:[#allocation2 + $0x18] sm:$0xff]
  %v4294 = vld [vmem:[#allocation2 + $0x20] sm:$0xff]
  %v4295 = vld [vmem:[#allocation2 + $0x28] sm:$0xff]
  %v4296 = vld [vmem:[#allocation2 + $0x30] sm:$0xf]
  %v4297 = vld [vmem:[#allocation2 + $0x38] sm:$0xf]
  %v4298 = vld [vmem:[%s1] sm:$0xff]
  %v4299 = vld [vmem:[%s1 + $0x8] sm:$0xff]
  %v4300 = vld [vmem:[%s1 + $0x10] sm:$0xff]
  %v4301 = vld [vmem:[%s1 + $0x18] sm:$0xff]
  %v4302 = vld [vmem:[%s1 + $0x20] sm:$0xff]
  %v4303 = vld [vmem:[%s1 + $0x28] sm:$0xff]
  %v4304 = vld [vmem:[%s1 + $0x30] sm:$0xff]
  %v4305 = vld [vmem:[%s1 + $0x38] sm:$0xff]
  %v4306 = vld [vmem:[%s1 + $0x40] sm:$0xff]
  %v4307 = vld [vmem:[%s1 + $0x48] sm:$0xff]
  %v4308 = vld [vmem:[%s1 + $0x50] sm:$0xff]
  %v4309 = vld [vmem:[%s1 + $0x58] sm:$0xff]
  %v4310 = vld [vmem:[%s1 + $0x60] sm:$0xff]
  %v4311 = vld [vmem:[%s1 + $0x68] sm:$0xff]
  %v4312 = vld [vmem:[%s1 + $0x70] sm:$0xff]
  %v4313 = vld [vmem:[%s1 + $0x78] sm:$0xff]
  %v4314 = vld [vmem:[%s1 + $0x80] sm:$0xff]
  %v4315 = vld [vmem:[%s1 + $0x88] sm:$0xff]
  %v4316 = vld [vmem:[%s1 + $0x90] sm:$0xff]
  %v4317 = vld [vmem:[%s1 + $0x98] sm:$0xff]
  %v4318 = vld [vmem:[%s1 + $0xa0] sm:$0xff]
  %v4319 = vld [vmem:[%s1 + $0xa8] sm:$0xff]
  %v4320 = vld [vmem:[%s1 + $0xb0] sm:$0xff]
  %v4321 = vld [vmem:[%s1 + $0xb8] sm:$0xff]
  %v4322 = vld [vmem:[%s1 + $0xc0] sm:$0xff]
  %v4323 = vld [vmem:[%s1 + $0xc8] sm:$0xff]
  %v4324 = vld [vmem:[%s1 + $0xd0] sm:$0xff]
  %v4325 = vld [vmem:[%s1 + $0xd8] sm:$0xff]
  %v4326 = vld [vmem:[%s1 + $0xe0] sm:$0xff]
  %v4327 = vld [vmem:[%s1 + $0xe8] sm:$0xff]
  %v4328 = vld [vmem:[%s1 + $0xf0] sm:$0xff]
  %v4329 = vld [vmem:[%s1 + $0xf8] sm:$0xff]
  %v4330 = vld [vmem:[%s1 + $0x100] sm:$0xff]
  %v4331 = vld [vmem:[%s1 + $0x108] sm:$0xff]
  %v4332 = vld [vmem:[%s1 + $0x110] sm:$0xff]
  %v4333 = vld [vmem:[%s1 + $0x118] sm:$0xff]
  %v4334 = vld [vmem:[%s1 + $0x120] sm:$0xff]
  %v4335 = vld [vmem:[%s1 + $0x128] sm:$0xff]
  %v4336 = vld [vmem:[%s1 + $0x130] sm:$0xff]
  %v4337 = vld [vmem:[%s1 + $0x138] sm:$0xff]
  %v4338 = vld [vmem:[%s2] sm:$0xff]
  %v4339 = vld [vmem:[%s2 + $0x8] sm:$0xff]
  %v4340 = vld [vmem:[%s2 + $0x10] sm:$0xff]
  %v4341 = vld [vmem:[%s2 + $0x18] sm:$0xff]
  %v4342 = vld [vmem:[%s2 + $0x20] sm:$0xff]
  %v4343 = vld [vmem:[%s2 + $0x28] sm:$0xff]
  %v4344 = vld [vmem:[%s2 + $0x30] sm:$0xf]
  %v4345 = vld [vmem:[%s2 + $0x38] sm:$0xf]
  %v4347 = vsel %vm54, %v4291, 0
  %v4350 = vsel %vm54, %v4293, 0
  %v4353 = vsel %vm54, %v4295, 0
  %v4356 = vsel %vm54, %v4297, 0
  %4358 = vmatprep.subr.mxu0 %v4299
  %4359 = vmatpush1.msra.mxu0 %v4298
  %4360 = vmatprep.subr.mxu0 %v4301
  %4361 = vmatpush1.msra.mxu0 %v4300
  %4362 = vmatprep.subr.mxu0 %v4303
  %4363 = vmatpush1.msra.mxu0 %v4302
  %4364 = vmatprep.subr.mxu0 %v4305
  %4365 = vmatpush1.msra.mxu0 %v4304
  %4366 = vmatprep.subr.mxu0 %v4307
  %4367 = vmatpush1.msra.mxu0 %v4306
  %4368 = vmatprep.subr.mxu0 %v4309
  %4369 = vmatpush1.msra.mxu0 %v4308
  %4370 = vmatprep.subr.mxu0 %v4311
  %4371 = vmatpush1.msra.mxu0 %v4310
  %4372 = vmatprep.subr.mxu0 %v4313
  %4373 = vmatpush1.msra.mxu0 %v4312
  %4374 = vmatprep.subr.mxu0 %v4315
  %4375 = vmatpush1.msra.mxu0 %v4314
  %4376 = vmatprep.subr.mxu0 %v4317
  %4377 = vmatpush1.msra.mxu0 %v4316
  %4378 = vmatprep.subr.mxu0 %v4319
  %4379 = vmatpush1.msra.mxu0 %v4318
  %4380 = vmatprep.subr.mxu0 %v4321
  %4381 = vmatpush1.msra.mxu0 %v4320
  %4382 = vmatprep.subr.mxu0 %v4323
  %4383 = vmatpush1.msra.mxu0 %v4322
  %4384 = vmatprep.subr.mxu0 %v4325
  %4385 = vmatpush1.msra.mxu0 %v4324
  %4386 = vmatprep.subr.mxu0 %v4327
  %4387 = vmatpush1.msra.mxu0 %v4326
  %4388 = vmatprep.subr.mxu0 %v4329
  %4389 = vmatpush1.msra.mxu0 %v4328
  %4390 = vmatprep.subr.mxu0 %v4331
  %4391 = vmatpush1.msra.mxu0 %v4330
  %4392 = vmatprep.subr.mxu0 %v4333
  %4393 = vmatpush1.msra.mxu0 %v4332
  %4394 = vmatprep.subr.mxu0 %v4335
  %4395 = vmatpush1.msra.mxu0 %v4334
  %4396 = vmatprep.subr.mxu0 %v4337
  %4397 = vmatpush1.msra.mxu0 %v4336
  %4398 = vmatprep.subr.mxu0 0.0
  %4399 = vmatpush1.msra.mxu0 0.0
  %4400 = vmatprep.subr.mxu0 0.0
  %4401 = vmatpush1.msra.mxu0 0.0
  %4402 = vmatprep.subr.mxu0 0.0
  %4403 = vmatpush1.msra.mxu0 0.0
  %4404 = vmatprep.subr.mxu0 0.0
  %4405 = vmatpush1.msra.mxu0 0.0
  %4406 = vmatprep.subr.mxu0 0.0
  %4407 = vmatpush1.msra.mxu0 0.0
  %4408 = vmatprep.subr.mxu0 0.0
  %4409 = vmatpush1.msra.mxu0 0.0
  %4410 = vmatprep.subr.mxu0 0.0
  %4411 = vmatpush1.msra.mxu0 0.0
  %4412 = vmatprep.subr.mxu0 0.0
  %4413 = vmatpush1.msra.mxu0 0.0
  %4414 = vmatprep.subr.mxu0 0.0
  %4415 = vmatpush1.msra.mxu0 0.0
  %4416 = vmatprep.subr.mxu0 0.0
  %4417 = vmatpush1.msra.mxu0 0.0
  %4418 = vmatprep.subr.mxu0 0.0
  %4419 = vmatpush1.msra.mxu0 0.0
  %4420 = vmatprep.subr.mxu0 0.0
  %4421 = vmatpush1.msra.mxu0 0.0
  %4422 = vmatprep.mubr.f32.mxu0 %v4347
  %4423 = vmatmul.mubr.f32.gmra.mrb[0].mxu0 %v4290
  %v4424 = vpop.f32.mrb[0].mxu0
  %v4425 = vadd.f32 %v4338, %v4424
  %v4426 = vpop.f32.mrb[0].mxu0
  %v4427 = vadd.f32 %v4339, %v4426
  %4428 = vmatprep.mubr.f32.mxu0 %v4350
  %4429 = vmatmul.mubr.f32.gmra.mrb[0].mxu0 %v4292
  %v4430 = vpop.f32.mrb[0].mxu0
  %v4431 = vadd.f32 %v4340, %v4430
  %v4432 = vpop.f32.mrb[0].mxu0
  %v4433 = vadd.f32 %v4341, %v4432
  %4434 = vmatprep.mubr.f32.mxu0 %v4353
  %4435 = vmatmul.mubr.f32.gmra.mrb[0].mxu0 %v4294
  %v4436 = vpop.f32.mrb[0].mxu0
  %v4437 = vadd.f32 %v4342, %v4436
  %v4438 = vpop.f32.mrb[0].mxu0
  %v4439 = vadd.f32 %v4343, %v4438
  %4440 = vmatprep.mubr.f32.mxu0 %v4356
  %4441 = vmatmul.mubr.f32.gmra.mrb[0].mxu0 %v4296
  %v4442 = vpop.f32.mrb[0].mxu0
  %v4443 = vadd.f32 %v4344, %v4442
  %v4444 = vpop.f32.mrb[0].mxu0
  %v4445 = vadd.f32 %v4345, %v4444
  %4446 = vdwg.mxu0
  %v4447 = vxor.u32 %v4425, 2147483648
  %v4448 = vxor.u32 %v4427, 2147483648
  %v4449 = vxor.u32 %v4431, 2147483648
  %v4450 = vxor.u32 %v4433, 2147483648
  %v4451 = vxor.u32 %v4437, 2147483648
  %v4452 = vxor.u32 %v4439, 2147483648
  %v4453 = vxor.u32 %v4443, 2147483648
  %v4454 = vxor.u32 %v4445, 2147483648
  %v4455 = vmul.f32 %v4447, 1.442695
  %v4456 = vpow.pop %v4455
  %v4457 = vmul.f32 %v4448, 1.442695
  %v4458 = vpow.pop %v4457
  %v4459 = vmul.f32 %v4449, 1.442695
  %v4460 = vpow.pop %v4459
  %v4461 = vmul.f32 %v4450, 1.442695
  %v4462 = vpow.pop %v4461
  %v4463 = vmul.f32 %v4451, 1.442695
  %v4464 = vpow.pop %v4463
  %v4465 = vmul.f32 %v4452, 1.442695
  %v4466 = vpow.pop %v4465
  %v4467 = vmul.f32 %v4453, 1.442695
  %v4468 = vpow.pop %v4467
  %v4469 = vmul.f32 %v4454, 1.442695
  %v4470 = vpow.pop %v4469
  %v4471 = vadd.f32 %v4456, 1.0
  %v4472 = vadd.f32 %v4458, 1.0
  %v4473 = vadd.f32 %v4460, 1.0
  %v4474 = vadd.f32 %v4462, 1.0
  %v4475 = vadd.f32 %v4464, 1.0
  %v4476 = vadd.f32 %v4466, 1.0
  %v4477 = vadd.f32 %v4468, 1.0
  %v4478 = vadd.f32 %v4470, 1.0
  %v4479 = vrcp.pop %v4471
  %v4480 = vmul.f32 1.0, %v4479
  %v4481 = vrcp.pop %v4472
  %v4482 = vmul.f32 1.0, %v4481
  %v4483 = vrcp.pop %v4473
  %v4484 = vmul.f32 1.0, %v4483
  %v4485 = vrcp.pop %v4474
  %v4486 = vmul.f32 1.0, %v4485
  %v4487 = vrcp.pop %v4475
  %v4488 = vmul.f32 1.0, %v4487
  %v4489 = vrcp.pop %v4476
  %v4490 = vmul.f32 1.0, %v4489
  %v4491 = vrcp.pop %v4477
  %v4492 = vmul.f32 1.0, %v4491
  %v4493 = vrcp.pop %v4478
  %v4494 = vmul.f32 1.0, %v4493
  %v4495 = vld [vmem:[%s3] sm:$0xff]
  %v4496 = vld [vmem:[%s3 + $0x8] sm:$0x3f]
  %v4498 = vsel %vm353, %v4495, 0
  %v4501 = vsel %vm353, %v4496, 0
  %v4504 = vsel %vm360, %v4492, 0
  %v4507 = vsel %vm360, %v4494, 0
  %4509 = vmatprep.subr.mxu0 %v4482
  %4510 = vmatpush1.msra.mxu0 %v4480
  %4511 = vmatprep.subr.mxu0 %v4486
  %4512 = vmatpush1.msra.mxu0 %v4484
  %4513 = vmatprep.subr.mxu0 %v4490
  %4514 = vmatpush1.msra.mxu0 %v4488
  %4515 = vmatprep.subr.mxu0 %v4507
  %4516 = vmatpush1.msra.mxu0 %v4504
  %4517 = vmatprep.subr.mxu0 0.0
  %4518 = vmatpush1.msra.mxu0 0.0
  %4519 = vmatprep.subr.mxu0 0.0
  %4520 = vmatpush1.msra.mxu0 0.0
  %4521 = vmatprep.subr.mxu0 0.0
  %4522 = vmatpush1.msra.mxu0 0.0
  %4523 = vmatprep.subr.mxu0 0.0
  %4524 = vmatpush1.msra.mxu0 0.0
  %4525 = vmatprep.subr.mxu0 0.0
  %4526 = vmatpush1.msra.mxu0 0.0
  %4527 = vmatprep.subr.mxu0 0.0
  %4528 = vmatpush1.msra.mxu0 0.0
  %4529 = vmatprep.subr.mxu0 0.0
  %4530 = vmatpush1.msra.mxu0 0.0
  %4531 = vmatprep.subr.mxu0 0.0
  %4532 = vmatpush1.msra.mxu0 0.0
  %4533 = vmatprep.subr.mxu0 0.0
  %4534 = vmatpush1.msra.mxu0 0.0
  %4535 = vmatprep.subr.mxu0 0.0
  %4536 = vmatpush1.msra.mxu0 0.0
  %4537 = vmatprep.subr.mxu0 0.0
  %4538 = vmatpush1.msra.mxu0 0.0
  %4539 = vmatprep.subr.mxu0 0.0
  %4540 = vmatpush1.msra.mxu0 0.0
  %4541 = vmatprep.subr.mxu0 0.0
  %4542 = vmatpush1.msra.mxu0 0.0
  %4543 = vmatprep.subr.mxu0 0.0
  %4544 = vmatpush1.msra.mxu0 0.0
  %4545 = vmatprep.subr.mxu0 0.0
  %4546 = vmatpush1.msra.mxu0 0.0
  %4547 = vmatprep.subr.mxu0 0.0
  %4548 = vmatpush1.msra.mxu0 0.0
  %4549 = vmatprep.subr.mxu0 0.0
  %4550 = vmatpush1.msra.mxu0 0.0
  %4551 = vmatprep.subr.mxu0 0.0
  %4552 = vmatpush1.msra.mxu0 0.0
  %4553 = vmatprep.subr.mxu0 0.0
  %4554 = vmatpush1.msra.mxu0 0.0
  %4555 = vmatprep.subr.mxu0 0.0
  %4556 = vmatpush1.msra.mxu0 0.0
  %4557 = vmatprep.subr.mxu0 0.0
  %4558 = vmatpush1.msra.mxu0 0.0
  %4559 = vmatprep.subr.mxu0 0.0
  %4560 = vmatpush1.msra.mxu0 0.0
  %4561 = vmatprep.subr.mxu0 0.0
  %4562 = vmatpush1.msra.mxu0 0.0
  %4563 = vmatprep.subr.mxu0 0.0
  %4564 = vmatpush1.msra.mxu0 0.0
  %4565 = vmatprep.subr.mxu0 0.0
  %4566 = vmatpush1.msra.mxu0 0.0
  %4567 = vmatprep.subr.mxu0 0.0
  %4568 = vmatpush1.msra.mxu0 0.0
  %4569 = vmatprep.subr.mxu0 0.0
  %4570 = vmatpush1.msra.mxu0 0.0
  %4571 = vmatprep.subr.mxu0 0.0
  %4572 = vmatpush1.msra.mxu0 0.0
  %4573 = vmatprep.mubr.f32.mxu0 0.0
  %4574 = vmatmul.mubr.f32.gmra.mrb[0].mxu0 %v4498
  %v4575 = vpop.f32.mrb[0].mxu0
  %v4576 = vadd.f32 0.0, %v4575
  %v4577 = vpop.f32.mrb[0].mxu0
  %v4578 = vadd.f32 0.0, %v4577
  %4579 = vmatprep.mubr.f32.mxu0 0.0
  %4580 = vmatmul.mubr.f32.gmra.mrb[0].mxu0 %v4501
  %v4581 = vpop.f32.mrb[0].mxu0
  %v4582 = vadd.f32 0.0, %v4581
  %v4583 = vpop.f32.mrb[0].mxu0
  %v4584 = vadd.f32 0.0, %v4583
  %4585 = vdwg.mxu0
  %v4586 = vld [vmem:[%s4] sm:$0xff]
  %v4587 = vld [vmem:[%s4 + $0x8] sm:$0xff]
  %v4588 = vld [vmem:[%s4 + $0x10] sm:$0xff]
  %v4589 = vld [vmem:[%s4 + $0x18] sm:$0xff]
  %v4590 = vld [vmem:[%s4 + $0x20] sm:$0xff]
  %v4591 = vld [vmem:[%s4 + $0x28] sm:$0xff]
  %v4592 = vld [vmem:[%s4 + $0x30] sm:$0xff]
  %v4593 = vld [vmem:[%s4 + $0x38] sm:$0xff]
  %v4594 = vld [vmem:[%s4 + $0x40] sm:$0xff]
  %v4595 = vld [vmem:[%s4 + $0x48] sm:$0xff]
  %v4596 = vld [vmem:[%s4 + $0x50] sm:$0xff]
  %v4597 = vld [vmem:[%s4 + $0x58] sm:$0xff]
  %v4598 = vld [vmem:[%s4 + $0x60] sm:$0xff]
  %v4599 = vld [vmem:[%s4 + $0x68] sm:$0xff]
  %v4600 = vld [vmem:[%s4 + $0x70] sm:$0xff]
  %v4601 = vld [vmem:[%s4 + $0x78] sm:$0xff]
  %v4602 = vld [vmem:[%s4 + $0x80] sm:$0xff]
  %v4603 = vld [vmem:[%s4 + $0x88] sm:$0xff]
  %v4604 = vld [vmem:[%s4 + $0x90] sm:$0xff]
  %v4605 = vld [vmem:[%s4 + $0x98] sm:$0xff]
  %v4606 = vld [vmem:[%s4 + $0xa0] sm:$0xff]
  %v4608 = vsel %vm465, %v4578, 0
  %v4611 = vsel %vm465, %v4584, 0
  %4613 = vmatprep.subr.mxu0 0.0
  %4614 = vmatpush1.msra.mxu0 %v4586
  %4615 = vmatprep.subr.mxu0 0.0
  %4616 = vmatpush1.msra.mxu0 %v4587
  %4617 = vmatprep.subr.mxu0 0.0
  %4618 = vmatpush1.msra.mxu0 %v4588
  %4619 = vmatprep.subr.mxu0 0.0
  %4620 = vmatpush1.msra.mxu0 %v4589
  %4621 = vmatprep.subr.mxu0 0.0
  %4622 = vmatpush1.msra.mxu0 %v4590
  %4623 = vmatprep.subr.mxu0 0.0
  %4624 = vmatpush1.msra.mxu0 %v4591
  %4625 = vmatprep.subr.mxu0 0.0
  %4626 = vmatpush1.msra.mxu0 %v4592
  %4627 = vmatprep.subr.mxu0 0.0
  %4628 = vmatpush1.msra.mxu0 %v4593
  %4629 = vmatprep.subr.mxu0 0.0
  %4630 = vmatpush1.msra.mxu0 %v4594
  %4631 = vmatprep.subr.mxu0 0.0
  %4632 = vmatpush1.msra.mxu0 %v4595
  %4633 = vmatprep.subr.mxu0 0.0
  %4634 = vmatpush1.msra.mxu0 %v4596
  %4635 = vmatprep.subr.mxu0 0.0
  %4636 = vmatpush1.msra.mxu0 %v4597
  %4637 = vmatprep.subr.mxu0 0.0
  %4638 = vmatpush1.msra.mxu0 %v4598
  %4639 = vmatprep.subr.mxu0 0.0
  %4640 = vmatpush1.msra.mxu0 %v4599
  %4641 = vmatprep.subr.mxu0 0.0
  %4642 = vmatpush1.msra.mxu0 %v4600
  %4643 = vmatprep.subr.mxu0 0.0
  %4644 = vmatpush1.msra.mxu0 %v4601
  %4645 = vmatprep.subr.mxu0 0.0
  %4646 = vmatpush1.msra.mxu0 %v4602
  %4647 = vmatprep.subr.mxu0 0.0
  %4648 = vmatpush1.msra.mxu0 %v4603
  %4649 = vmatprep.subr.mxu0 0.0
  %4650 = vmatpush1.msra.mxu0 %v4604
  %4651 = vmatprep.subr.mxu0 0.0
  %4652 = vmatpush1.msra.mxu0 %v4605
  %4653 = vmatprep.subr.mxu0 0.0
  %4654 = vmatpush1.msra.mxu0 %v4606
  %4655 = vmatprep.subr.mxu0 0.0
  %4656 = vmatpush1.msra.mxu0 0.0
  %4657 = vmatprep.subr.mxu0 0.0
  %4658 = vmatpush1.msra.mxu0 0.0
  %4659 = vmatprep.subr.mxu0 0.0
  %4660 = vmatpush1.msra.mxu0 0.0
  %4661 = vmatprep.subr.mxu0 0.0
  %4662 = vmatpush1.msra.mxu0 0.0
  %4663 = vmatprep.subr.mxu0 0.0
  %4664 = vmatpush1.msra.mxu0 0.0
  %4665 = vmatprep.subr.mxu0 0.0
  %4666 = vmatpush1.msra.mxu0 0.0
  %4667 = vmatprep.subr.mxu0 0.0
  %4668 = vmatpush1.msra.mxu0 0.0
  %4669 = vmatprep.subr.mxu0 0.0
  %4670 = vmatpush1.msra.mxu0 0.0
  %4671 = vmatprep.subr.mxu0 0.0
  %4672 = vmatpush1.msra.mxu0 0.0
  %4673 = vmatprep.subr.mxu0 0.0
  %4674 = vmatpush1.msra.mxu0 0.0
  %4675 = vmatprep.subr.mxu0 0.0
  %4676 = vmatpush1.msra.mxu0 0.0
  %4677 = vmatprep.mubr.f32.mxu0 %v4608
  %4678 = vmatmul.mubr.f32.gmra.mrb[0].mxu0 %v4576
  %v4679 = vpop.f32.mrb[0].mxu0
  %v4680 = vadd.f32 0.0, %v4679
  %v4681 = vpop.f32.mrb[0].mxu0
  %4682 = vmatprep.mubr.f32.mxu0 %v4611
  %4683 = vmatmul.mubr.f32.gmra.mrb[0].mxu0 %v4582
  %v4684 = vpop.f32.mrb[0].mxu0
  %v4685 = vadd.f32 0.0, %v4684
  %v4686 = vpop.f32.mrb[0].mxu0
  %4687 = vdwg.mxu0
  %4688 = vst.msk [vmem:[#allocation3] sm:$0xff] %vm547, %v4680
  %4689 = vst.msk [vmem:[#allocation3 + $0x20] sm:$0x3] %vm549, %v4685
  %v4692 = vrot.slane %v4680, 1
  %v4693 = vrot.slane %v4685, 1
  %v4694 = vsel %vm553, %v4692, %v4693
  %4695 = vrot.lane.b32.xlu0 %v4694, 84
  %v4696 = vpop.permute.xlu0 %4695
  %4697 = vrot.lane.b32.xlu0 %v4693, 84
  %v4698 = vpop.permute.xlu0 %4697
  %4701 = vst.msk [vmem:[#allocation3] sm:$0xff] %vm563, %v4696
  %4702 = vst.msk [vmem:[#allocation3 + $0x8] sm:$0xff] %vm465, %v4696
  %4703 = vst.msk [vmem:[#allocation3 + $0x20] sm:$0x3] %vm566, %v4698
  %4704 = vst.msk [vmem:[#allocation3 + $0x28] sm:$0x3] %vm568, %v4698
  %v4705 = vrot.slane %v4680, 2
  %v4706 = vrot.slane %v4685, 2
  %v4707 = vsel %vm570, %v4705, %v4706
  %4708 = vrot.lane.b32.xlu0 %v4707, 40
  %v4709 = vpop.permute.xlu0 %4708
  %4710 = vrot.lane.b32.xlu0 %v4706, 40
  %v4711 = vpop.permute.xlu0 %4710
  %4714 = vst.msk [vmem:[#allocation3 + $0x8] sm:$0xff] %vm580, %v4709
  %4715 = vst.msk [vmem:[#allocation3 + $0x28] sm:$0x3] %vm582, %v4711
  %v4716 = vrot.slane %v4680, 3
  %v4717 = vrot.slane %v4685, 3
  %v4718 = vsel %vm584, %v4716, %v4717
  %4719 = vrot.lane.b32.xlu0 %v4718, 124
  %v4720 = vpop.permute.xlu0 %4719
  %4721 = vrot.lane.b32.xlu0 %v4717, 124
  %v4722 = vpop.permute.xlu0 %4721
  %4725 = vst.msk [vmem:[#allocation3 + $0x8] sm:$0xff] %vm594, %v4720
  %4726 = vst.msk [vmem:[#allocation3 + $0x10] sm:$0xff] %vm596, %v4720
  %4727 = vst.msk [vmem:[#allocation3 + $0x28] sm:$0x3] %vm598, %v4722
  %4728 = vst.msk [vmem:[#allocation3 + $0x30] sm:$0x3] %vm600, %v4722
  %v4729 = vrot.slane %v4680, 4
  %v4730 = vrot.slane %v4685, 4
  %v4731 = vsel %vm360, %v4729, %v4730
  %4732 = vrot.lane.b32.xlu0 %v4731, 80
  %v4733 = vpop.permute.xlu0 %4732
  %4734 = vrot.lane.b32.xlu0 %v4730, 80
  %v4735 = vpop.permute.xlu0 %4734
  %4738 = vst.msk [vmem:[#allocation3 + $0x10] sm:$0xff] %vm611, %v4733
  %4739 = vst.msk [vmem:[#allocation3 + $0x18] sm:$0xff] %vm613, %v4733
  %4740 = vst.msk [vmem:[#allocation3 + $0x30] sm:$0x3] %vm615, %v4735
  %4741 = vst.msk [vmem:[#allocation3 + $0x38] sm:$0x3] %vm617, %v4735
  %v4742 = vld [vmem:[#allocation3] sm:$0xff]
  %v4743 = vld [vmem:[#allocation3 + $0x8] sm:$0xff]
  %v4744 = vld [vmem:[#allocation3 + $0x10] sm:$0xff]
  %v4745 = vld [vmem:[#allocation3 + $0x18] sm:$0xff]
  %v4746 = vld [vmem:[#allocation3 + $0x20] sm:$0x3]
  %v4747 = vld [vmem:[#allocation3 + $0x28] sm:$0x3]
  %v4748 = vld [vmem:[#allocation3 + $0x30] sm:$0x3]
  %v4749 = vld [vmem:[#allocation3 + $0x38] sm:$0x3]
  %v4750 = vld [vmem:[%s5] sm:$0xff]
  %v4751 = vld [vmem:[%s5 + $0x8] sm:$0xff]
  %v4752 = vld [vmem:[%s5 + $0x10] sm:$0xff]
  %v4753 = vld [vmem:[%s5 + $0x18] sm:$0xff]
  %v4754 = vld [vmem:[%s5 + $0x20] sm:$0xff]
  %v4755 = vld [vmem:[%s5 + $0x28] sm:$0xff]
  %v4756 = vld [vmem:[%s5 + $0x30] sm:$0xff]
  %v4757 = vld [vmem:[%s5 + $0x38] sm:$0xff]
  %v4758 = vld [vmem:[%s5 + $0x40] sm:$0xff]
  %v4759 = vld [vmem:[%s5 + $0x48] sm:$0xff]
  %v4760 = vld [vmem:[%s5 + $0x50] sm:$0xff]
  %v4761 = vld [vmem:[%s5 + $0x58] sm:$0xff]
  %v4762 = vld [vmem:[%s5 + $0x60] sm:$0xff]
  %v4763 = vld [vmem:[%s5 + $0x68] sm:$0xff]
  %v4764 = vld [vmem:[%s5 + $0x70] sm:$0xff]
  %v4765 = vld [vmem:[%s5 + $0x78] sm:$0xff]
  %v4766 = vld [vmem:[%s5 + $0x80] sm:$0xff]
  %v4767 = vld [vmem:[%s5 + $0x88] sm:$0xff]
  %v4768 = vld [vmem:[%s5 + $0x90] sm:$0xff]
  %v4769 = vld [vmem:[%s5 + $0x98] sm:$0xff]
  %v4770 = vld [vmem:[%s5 + $0xa0] sm:$0xff]
  %v4771 = vld [vmem:[%s5 + $0xa8] sm:$0xff]
  %v4772 = vld [vmem:[%s5 + $0xb0] sm:$0xff]
  %v4773 = vld [vmem:[%s5 + $0xb8] sm:$0xff]
  %v4774 = vld [vmem:[%s5 + $0xc0] sm:$0xff]
  %v4775 = vld [vmem:[%s5 + $0xc8] sm:$0xff]
  %v4776 = vld [vmem:[%s5 + $0xd0] sm:$0xff]
  %v4777 = vld [vmem:[%s5 + $0xd8] sm:$0xff]
  %v4778 = vld [vmem:[%s5 + $0xe0] sm:$0xff]
  %v4779 = vld [vmem:[%s5 + $0xe8] sm:$0xff]
  %v4780 = vld [vmem:[%s5 + $0xf0] sm:$0xff]
  %v4781 = vld [vmem:[%s5 + $0xf8] sm:$0xff]
  %v4782 = vld [vmem:[%s5 + $0x100] sm:$0xff]
  %v4783 = vld [vmem:[%s5 + $0x108] sm:$0xff]
  %v4784 = vld [vmem:[%s5 + $0x110] sm:$0xff]
  %v4785 = vld [vmem:[%s5 + $0x118] sm:$0xff]
  %v4786 = vld [vmem:[%s5 + $0x120] sm:$0xff]
  %v4787 = vld [vmem:[%s5 + $0x128] sm:$0xff]
  %v4788 = vld [vmem:[%s5 + $0x130] sm:$0xff]
  %v4789 = vld [vmem:[%s5 + $0x138] sm:$0xff]
  %v4790 = vld [vmem:[%s5 + $0x140] sm:$0xff]
  %v4791 = vld [vmem:[%s5 + $0x148] sm:$0xff]
  %v4792 = vld [vmem:[%s5 + $0x150] sm:$0xff]
  %v4793 = vld [vmem:[%s5 + $0x158] sm:$0xff]
  %v4794 = vld [vmem:[%s5 + $0x160] sm:$0xff]
  %v4795 = vld [vmem:[%s5 + $0x168] sm:$0xff]
  %v4796 = vld [vmem:[%s5 + $0x170] sm:$0xff]
  %v4797 = vld [vmem:[%s5 + $0x178] sm:$0xff]
  %v4798 = vld [vmem:[%s5 + $0x180] sm:$0xff]
  %v4799 = vld [vmem:[%s5 + $0x188] sm:$0xff]
  %v4800 = vld [vmem:[%s5 + $0x190] sm:$0xff]
  %v4801 = vld [vmem:[%s5 + $0x198] sm:$0xff]
  %v4802 = vld [vmem:[%s5 + $0x1a0] sm:$0xff]
  %v4803 = vld [vmem:[%s5 + $0x1a8] sm:$0xff]
  %v4804 = vld [vmem:[%s5 + $0x1b0] sm:$0xff]
  %v4805 = vld [vmem:[%s5 + $0x1b8] sm:$0xff]
  %v4806 = vld [vmem:[%s5 + $0x1c0] sm:$0xff]
  %v4807 = vld [vmem:[%s5 + $0x1c8] sm:$0xff]
  %v4808 = vld [vmem:[%s5 + $0x1d0] sm:$0xff]
  %v4809 = vld [vmem:[%s5 + $0x1d8] sm:$0xff]
  %v4810 = vld [vmem:[%s5 + $0x1e0] sm:$0xff]
  %v4811 = vld [vmem:[%s5 + $0x1e8] sm:$0xff]
  %v4812 = vld [vmem:[%s5 + $0x1f0] sm:$0xff]
  %v4813 = vld [vmem:[%s5 + $0x1f8] sm:$0xff]
  %v4814 = vld [vmem:[%s5 + $0x200] sm:$0xff]
  %v4815 = vld [vmem:[%s5 + $0x208] sm:$0xff]
  %v4816 = vld [vmem:[%s5 + $0x210] sm:$0xff]
  %v4817 = vld [vmem:[%s5 + $0x218] sm:$0xff]
  %v4818 = vld [vmem:[%s5 + $0x220] sm:$0xff]
  %v4819 = vld [vmem:[%s5 + $0x228] sm:$0xff]
  %v4820 = vld [vmem:[%s5 + $0x230] sm:$0xff]
  %v4821 = vld [vmem:[%s5 + $0x238] sm:$0xff]
  %v4822 = vld [vmem:[%s5 + $0x240] sm:$0xff]
  %v4823 = vld [vmem:[%s5 + $0x248] sm:$0xff]
  %v4824 = vld [vmem:[%s5 + $0x250] sm:$0xff]
  %v4825 = vld [vmem:[%s5 + $0x258] sm:$0xff]
  %v4826 = vld [vmem:[%s5 + $0x260] sm:$0xff]
  %v4827 = vld [vmem:[%s5 + $0x268] sm:$0xff]
  %v4828 = vld [vmem:[%s5 + $0x270] sm:$0xff]
  %v4829 = vld [vmem:[%s5 + $0x278] sm:$0xff]
  %v4830 = vld [vmem:[%s5 + $0x280] sm:$0xff]
  %v4831 = vld [vmem:[%s5 + $0x288] sm:$0xff]
  %v4832 = vld [vmem:[%s5 + $0x290] sm:$0xff]
  %v4833 = vld [vmem:[%s5 + $0x298] sm:$0xff]
  %v4834 = vld [vmem:[%s5 + $0x2a0] sm:$0xff]
  %v4835 = vld [vmem:[%s5 + $0x2a8] sm:$0xff]
  %v4836 = vld [vmem:[%s5 + $0x2b0] sm:$0xff]
  %v4837 = vld [vmem:[%s5 + $0x2b8] sm:$0xff]
  %v4838 = vld [vmem:[%s5 + $0x2c0] sm:$0xff]
  %v4839 = vld [vmem:[%s5 + $0x2c8] sm:$0xff]
  %v4840 = vld [vmem:[%s5 + $0x2d0] sm:$0xff]
  %v4841 = vld [vmem:[%s5 + $0x2d8] sm:$0xff]
  %v4842 = vld [vmem:[%s5 + $0x2e0] sm:$0xff]
  %v4843 = vld [vmem:[%s5 + $0x2e8] sm:$0xff]
  %v4844 = vld [vmem:[%s5 + $0x2f0] sm:$0xff]
  %v4845 = vld [vmem:[%s5 + $0x2f8] sm:$0xff]
  %v4846 = vld [vmem:[%s5 + $0x300] sm:$0xff]
  %v4847 = vld [vmem:[%s5 + $0x308] sm:$0xff]
  %v4848 = vld [vmem:[%s5 + $0x310] sm:$0xff]
  %v4849 = vld [vmem:[%s5 + $0x318] sm:$0xff]
  %v4850 = vld [vmem:[%s5 + $0x320] sm:$0xff]
  %v4851 = vld [vmem:[%s5 + $0x328] sm:$0xff]
  %v4852 = vld [vmem:[%s5 + $0x330] sm:$0xff]
  %v4853 = vld [vmem:[%s5 + $0x338] sm:$0xff]
  %v4854 = vld [vmem:[%s5 + $0x340] sm:$0xf]
  %v4855 = vld [vmem:[%s5 + $0x348] sm:$0xf]
  %v4856 = vld [vmem:[%s6] sm:$0xff]
  %v4857 = vld [vmem:[%s6 + $0x8] sm:$0xff]
  %v4858 = vld [vmem:[%s6 + $0x10] sm:$0x3]
  %v4859 = vld [vmem:[%s6 + $0x18] sm:$0x3]
  %v4861 = vsel %vm613, %v4745, 0
  %v4864 = vsel %vm613, %v4749, 0
  %v4867 = vsel %vm360, %v4854, 0
  %v4870 = vsel %vm360, %v4855, 0
  %4872 = vmatprep.subr.mxu0 %v4751
  %4873 = vmatpush1.msra.mxu0 %v4750
  %4874 = vmatprep.subr.mxu0 %v4753
  %4875 = vmatpush1.msra.mxu0 %v4752
  %4876 = vmatprep.subr.mxu0 %v4755
  %4877 = vmatpush1.msra.mxu0 %v4754
  %4878 = vmatprep.subr.mxu0 %v4757
  %4879 = vmatpush1.msra.mxu0 %v4756
  %4880 = vmatprep.subr.mxu0 %v4759
  %4881 = vmatpush1.msra.mxu0 %v4758
  %4882 = vmatprep.subr.mxu0 %v4761
  %4883 = vmatpush1.msra.mxu0 %v4760
  %4884 = vmatprep.subr.mxu0 %v4763
  %4885 = vmatpush1.msra.mxu0 %v4762
  %4886 = vmatprep.subr.mxu0 %v4765
  %4887 = vmatpush1.msra.mxu0 %v4764
  %4888 = vmatprep.subr.mxu0 %v4767
  %4889 = vmatpush1.msra.mxu0 %v4766
  %4890 = vmatprep.subr.mxu0 %v4769
  %4891 = vmatpush1.msra.mxu0 %v4768
  %4892 = vmatprep.subr.mxu0 %v4771
  %4893 = vmatpush1.msra.mxu0 %v4770
  %4894 = vmatprep.subr.mxu0 %v4773
  %4895 = vmatpush1.msra.mxu0 %v4772
  %4896 = vmatprep.subr.mxu0 %v4775
  %4897 = vmatpush1.msra.mxu0 %v4774
  %4898 = vmatprep.subr.mxu0 %v4777
  %4899 = vmatpush1.msra.mxu0 %v4776
  %4900 = vmatprep.subr.mxu0 %v4779
  %4901 = vmatpush1.msra.mxu0 %v4778
  %4902 = vmatprep.subr.mxu0 %v4781
  %4903 = vmatpush1.msra.mxu0 %v4780
  %4904 = vmatprep.subr.mxu0 %v4783
  %4905 = vmatpush1.msra.mxu0 %v4782
  %4906 = vmatprep.subr.mxu0 %v4785
  %4907 = vmatpush1.msra.mxu0 %v4784
  %4908 = vmatprep.subr.mxu0 %v4787
  %4909 = vmatpush1.msra.mxu0 %v4786
  %4910 = vmatprep.subr.mxu0 %v4789
  %4911 = vmatpush1.msra.mxu0 %v4788
  %4912 = vmatprep.subr.mxu0 %v4791
  %4913 = vmatpush1.msra.mxu0 %v4790
  %4914 = vmatprep.subr.mxu0 %v4793
  %4915 = vmatpush1.msra.mxu0 %v4792
  %4916 = vmatprep.subr.mxu0 %v4795
  %4917 = vmatpush1.msra.mxu0 %v4794
  %4918 = vmatprep.subr.mxu0 %v4797
  %4919 = vmatpush1.msra.mxu0 %v4796
  %4920 = vmatprep.subr.mxu0 %v4799
  %4921 = vmatpush1.msra.mxu0 %v4798
  %4922 = vmatprep.subr.mxu0 %v4801
  %4923 = vmatpush1.msra.mxu0 %v4800
  %4924 = vmatprep.subr.mxu0 %v4803
  %4925 = vmatpush1.msra.mxu0 %v4802
  %4926 = vmatprep.subr.mxu0 %v4805
  %4927 = vmatpush1.msra.mxu0 %v4804
  %4928 = vmatprep.subr.mxu0 %v4807
  %4929 = vmatpush1.msra.mxu0 %v4806
  %4930 = vmatprep.subr.mxu0 %v4809
  %4931 = vmatpush1.msra.mxu0 %v4808
  %4932 = vmatprep.subr.mxu0 %v4811
  %4933 = vmatpush1.msra.mxu0 %v4810
  %4934 = vmatprep.subr.mxu0 %v4813
  %4935 = vmatpush1.msra.mxu0 %v4812
  %4936 = vmatprep.mubr.f32.mxu0 %v4743
  %4937 = vmatmul.mubr.f32.gmra.mrb[0].mxu0 %v4742
  %v4938 = vpop.f32.mrb[0].mxu0
  %v4939 = vadd.f32 %v4856, %v4938
  %v4940 = vpop.f32.mrb[0].mxu0
  %v4941 = vadd.f32 %v4857, %v4940
  %4942 = vmatprep.mubr.f32.mxu0 %v4747
  %4943 = vmatmul.mubr.f32.gmra.mrb[0].mxu0 %v4746
  %v4944 = vpop.f32.mrb[0].mxu0
  %v4945 = vadd.f32 %v4858, %v4944
  %v4946 = vpop.f32.mrb[0].mxu0
  %v4947 = vadd.f32 %v4859, %v4946
  %4948 = vdwg.mxu0
  %4949 = vmatprep.subr.mxu0 %v4815
  %4950 = vmatpush1.msra.mxu0 %v4814
  %4951 = vmatprep.subr.mxu0 %v4817
  %4952 = vmatpush1.msra.mxu0 %v4816
  %4953 = vmatprep.subr.mxu0 %v4819
  %4954 = vmatpush1.msra.mxu0 %v4818
  %4955 = vmatprep.subr.mxu0 %v4821
  %4956 = vmatpush1.msra.mxu0 %v4820
  %4957 = vmatprep.subr.mxu0 %v4823
  %4958 = vmatpush1.msra.mxu0 %v4822
  %4959 = vmatprep.subr.mxu0 %v4825
  %4960 = vmatpush1.msra.mxu0 %v4824
  %4961 = vmatprep.subr.mxu0 %v4827
  %4962 = vmatpush1.msra.mxu0 %v4826
  %4963 = vmatprep.subr.mxu0 %v4829
  %4964 = vmatpush1.msra.mxu0 %v4828
  %4965 = vmatprep.subr.mxu0 %v4831
  %4966 = vmatpush1.msra.mxu0 %v4830
  %4967 = vmatprep.subr.mxu0 %v4833
  %4968 = vmatpush1.msra.mxu0 %v4832
  %4969 = vmatprep.subr.mxu0 %v4835
  %4970 = vmatpush1.msra.mxu0 %v4834
  %4971 = vmatprep.subr.mxu0 %v4837
  %4972 = vmatpush1.msra.mxu0 %v4836
  %4973 = vmatprep.subr.mxu0 %v4839
  %4974 = vmatpush1.msra.mxu0 %v4838
  %4975 = vmatprep.subr.mxu0 %v4841
  %4976 = vmatpush1.msra.mxu0 %v4840
  %4977 = vmatprep.subr.mxu0 %v4843
  %4978 = vmatpush1.msra.mxu0 %v4842
  %4979 = vmatprep.subr.mxu0 %v4845
  %4980 = vmatpush1.msra.mxu0 %v4844
  %4981 = vmatprep.subr.mxu0 %v4847
  %4982 = vmatpush1.msra.mxu0 %v4846
  %4983 = vmatprep.subr.mxu0 %v4849
  %4984 = vmatpush1.msra.mxu0 %v4848
  %4985 = vmatprep.subr.mxu0 %v4851
  %4986 = vmatpush1.msra.mxu0 %v4850
  %4987 = vmatprep.subr.mxu0 %v4853
  %4988 = vmatpush1.msra.mxu0 %v4852
  %4989 = vmatprep.subr.mxu0 %v4870
  %4990 = vmatpush1.msra.mxu0 %v4867
  %4991 = vmatprep.subr.mxu0 0.0
  %4992 = vmatpush1.msra.mxu0 0.0
  %4993 = vmatprep.subr.mxu0 0.0
  %4994 = vmatpush1.msra.mxu0 0.0
  %4995 = vmatprep.subr.mxu0 0.0
  %4996 = vmatpush1.msra.mxu0 0.0
  %4997 = vmatprep.subr.mxu0 0.0
  %4998 = vmatpush1.msra.mxu0 0.0
  %4999 = vmatprep.subr.mxu0 0.0
  %5000 = vmatpush1.msra.mxu0 0.0
  %5001 = vmatprep.subr.mxu0 0.0
  %5002 = vmatpush1.msra.mxu0 0.0
  %5003 = vmatprep.subr.mxu0 0.0
  %5004 = vmatpush1.msra.mxu0 0.0
  %5005 = vmatprep.subr.mxu0 0.0
  %5006 = vmatpush1.msra.mxu0 0.0
  %5007 = vmatprep.subr.mxu0 0.0
  %5008 = vmatpush1.msra.mxu0 0.0
  %5009 = vmatprep.subr.mxu0 0.0
  %5010 = vmatpush1.msra.mxu0 0.0
  %5011 = vmatprep.subr.mxu0 0.0
  %5012 = vmatpush1.msra.mxu0 0.0
  %5013 = vmatprep.mubr.f32.mxu0 %v4861
  %5014 = vmatmul.mubr.f32.gmra.mrb[0].mxu0 %v4744
  %v5015 = vpop.f32.mrb[0].mxu0
  %v5016 = vadd.f32 %v4939, %v5015
  %v5017 = vpop.f32.mrb[0].mxu0
  %v5018 = vadd.f32 %v4941, %v5017
  %5019 = vmatprep.mubr.f32.mxu0 %v4864
  %5020 = vmatmul.mubr.f32.gmra.mrb[0].mxu0 %v4748
  %v5021 = vpop.f32.mrb[0].mxu0
  %v5022 = vadd.f32 %v4945, %v5021
  %v5023 = vpop.f32.mrb[0].mxu0
  %v5024 = vadd.f32 %v4947, %v5023
  %5025 = vdwg.mxu0
  %v5026 = vxor.u32 %v5016, 2147483648
  %v5027 = vxor.u32 %v5018, 2147483648
  %v5028 = vxor.u32 %v5022, 2147483648
  %v5029 = vxor.u32 %v5024, 2147483648
  %v5030 = vmul.f32 %v5026, 1.442695
  %v5031 = vpow.pop %v5030
  %v5032 = vmul.f32 %v5027, 1.442695
  %v5033 = vpow.pop %v5032
  %v5034 = vmul.f32 %v5028, 1.442695
  %v5035 = vpow.pop %v5034
  %v5036 = vmul.f32 %v5029, 1.442695
  %v5037 = vpow.pop %v5036
  %v5038 = vadd.f32 %v5031, 1.0
  %v5039 = vadd.f32 %v5033, 1.0
  %v5040 = vadd.f32 %v5035, 1.0
  %v5041 = vadd.f32 %v5037, 1.0
  %v5042 = vrcp.pop %v5038
  %v5043 = vmul.f32 1.0, %v5042
  %v5044 = vrcp.pop %v5039
  %v5045 = vmul.f32 1.0, %v5044
  %v5046 = vrcp.pop %v5040
  %v5047 = vmul.f32 1.0, %v5046
  %v5048 = vrcp.pop %v5041
  %v5049 = vmul.f32 1.0, %v5048
  %v5050 = vld [vmem:[%s7] sm:$0x1f]
  %v5052 = vsel %vm928, %v5050, 0
  %v5055 = vsel %vm932, %v5047, 0
  %v5058 = vsel %vm932, %v5049, 0
  %5060 = vmatprep.subr.mxu0 %v5045
  %5061 = vmatpush1.msra.mxu0 %v5043
  %5062 = vmatprep.subr.mxu0 %v5058
  %5063 = vmatpush1.msra.mxu0 %v5055
  %5064 = vmatprep.subr.mxu0 0.0
  %5065 = vmatpush1.msra.mxu0 0.0
  %5066 = vmatprep.subr.mxu0 0.0
  %5067 = vmatpush1.msra.mxu0 0.0
  %5068 = vmatprep.subr.mxu0 0.0
  %5069 = vmatpush1.msra.mxu0 0.0
  %5070 = vmatprep.subr.mxu0 0.0
  %5071 = vmatpush1.msra.mxu0 0.0
  %5072 = vmatprep.subr.mxu0 0.0
  %5073 = vmatpush1.msra.mxu0 0.0
  %5074 = vmatprep.subr.mxu0 0.0
  %5075 = vmatpush1.msra.mxu0 0.0
  %5076 = vmatprep.subr.mxu0 0.0
  %5077 = vmatpush1.msra.mxu0 0.0
  %5078 = vmatprep.subr.mxu0 0.0
  %5079 = vmatpush1.msra.mxu0 0.0
  %5080 = vmatprep.subr.mxu0 0.0
  %5081 = vmatpush1.msra.mxu0 0.0
  %5082 = vmatprep.subr.mxu0 0.0
  %5083 = vmatpush1.msra.mxu0 0.0
  %5084 = vmatprep.subr.mxu0 0.0
  %5085 = vmatpush1.msra.mxu0 0.0
  %5086 = vmatprep.subr.mxu0 0.0
  %5087 = vmatpush1.msra.mxu0 0.0
  %5088 = vmatprep.subr.mxu0 0.0
  %5089 = vmatpush1.msra.mxu0 0.0
  %5090 = vmatprep.subr.mxu0 0.0
  %5091 = vmatpush1.msra.mxu0 0.0
  %5092 = vmatprep.subr.mxu0 0.0
  %5093 = vmatpush1.msra.mxu0 0.0
  %5094 = vmatprep.subr.mxu0 0.0
  %5095 = vmatpush1.msra.mxu0 0.0
  %5096 = vmatprep.subr.mxu0 0.0
  %5097 = vmatpush1.msra.mxu0 0.0
  %5098 = vmatprep.subr.mxu0 0.0
  %5099 = vmatpush1.msra.mxu0 0.0
  %5100 = vmatprep.subr.mxu0 0.0
  %5101 = vmatpush1.msra.mxu0 0.0
  %5102 = vmatprep.subr.mxu0 0.0
  %5103 = vmatpush1.msra.mxu0 0.0
  %5104 = vmatprep.subr.mxu0 0.0
  %5105 = vmatpush1.msra.mxu0 0.0
  %5106 = vmatprep.subr.mxu0 0.0
  %5107 = vmatpush1.msra.mxu0 0.0
  %5108 = vmatprep.subr.mxu0 0.0
  %5109 = vmatpush1.msra.mxu0 0.0
  %5110 = vmatprep.subr.mxu0 0.0
  %5111 = vmatpush1.msra.mxu0 0.0
  %5112 = vmatprep.subr.mxu0 0.0
  %5113 = vmatpush1.msra.mxu0 0.0
  %5114 = vmatprep.subr.mxu0 0.0
  %5115 = vmatpush1.msra.mxu0 0.0
  %5116 = vmatprep.subr.mxu0 0.0
  %5117 = vmatpush1.msra.mxu0 0.0
  %5118 = vmatprep.subr.mxu0 0.0
  %5119 = vmatpush1.msra.mxu0 0.0
  %5120 = vmatprep.subr.mxu0 0.0
  %5121 = vmatpush1.msra.mxu0 0.0
  %5122 = vmatprep.subr.mxu0 0.0
  %5123 = vmatpush1.msra.mxu0 0.0
  %5124 = vmatprep.mubr.f32.mxu0 0.0
  %5125 = vmatmul.mubr.f32.gmra.mrb[0].mxu0 %v5052
  %v5126 = vpop.f32.mrb[0].mxu0
  %v5127 = vadd.f32 0.0, %v5126
  %v5128 = vpop.f32.mrb[0].mxu0
  %v5129 = vadd.f32 0.0, %v5128
  %5130 = vdwg.mxu0
  %v5131 = vld [vmem:[%s8] sm:$0xff]
  %v5132 = vld [vmem:[%s8 + $0x8] sm:$0xff]
  %v5133 = vld [vmem:[%s8 + $0x10] sm:$0xff]
  %v5134 = vld [vmem:[%s8 + $0x18] sm:$0xff]
  %v5135 = vld [vmem:[%s8 + $0x20] sm:$0xff]
  %v5136 = vld [vmem:[%s8 + $0x28] sm:$0xff]
  %v5137 = vld [vmem:[%s8 + $0x30] sm:$0xff]
  %v5138 = vld [vmem:[%s8 + $0x38] sm:$0xff]
  %v5139 = vld [vmem:[%s8 + $0x40] sm:$0xff]
  %v5140 = vld [vmem:[%s8 + $0x48] sm:$0xff]
  %v5141 = vld [vmem:[%s8 + $0x50] sm:$0xff]
  %v5142 = vld [vmem:[%s8 + $0x58] sm:$0xff]
  %v5143 = vld [vmem:[%s8 + $0x60] sm:$0xff]
  %v5144 = vld [vmem:[%s8 + $0x68] sm:$0xff]
  %v5145 = vld [vmem:[%s8 + $0x70] sm:$0xff]
  %v5146 = vld [vmem:[%s8 + $0x78] sm:$0xff]
  %v5147 = vld [vmem:[%s8 + $0x80] sm:$0xff]
  %v5148 = vld [vmem:[%s8 + $0x88] sm:$0xff]
  %v5149 = vld [vmem:[%s8 + $0x90] sm:$0xff]
  %v5150 = vld [vmem:[%s8 + $0x98] sm:$0xff]
  %v5152 = vsel %vm54, %v5129, 0
  %5154 = vmatprep.subr.mxu0 0.0
  %5155 = vmatpush1.msra.mxu0 %v5131
  %5156 = vmatprep.subr.mxu0 0.0
  %5157 = vmatpush1.msra.mxu0 %v5132
  %5158 = vmatprep.subr.mxu0 0.0
  %5159 = vmatpush1.msra.mxu0 %v5133
  %5160 = vmatprep.subr.mxu0 0.0
  %5161 = vmatpush1.msra.mxu0 %v5134
  %5162 = vmatprep.subr.mxu0 0.0
  %5163 = vmatpush1.msra.mxu0 %v5135
  %5164 = vmatprep.subr.mxu0 0.0
  %5165 = vmatpush1.msra.mxu0 %v5136
  %5166 = vmatprep.subr.mxu0 0.0
  %5167 = vmatpush1.msra.mxu0 %v5137
  %5168 = vmatprep.subr.mxu0 0.0
  %5169 = vmatpush1.msra.mxu0 %v5138
  %5170 = vmatprep.subr.mxu0 0.0
  %5171 = vmatpush1.msra.mxu0 %v5139
  %5172 = vmatprep.subr.mxu0 0.0
  %5173 = vmatpush1.msra.mxu0 %v5140
  %5174 = vmatprep.subr.mxu0 0.0
  %5175 = vmatpush1.msra.mxu0 %v5141
  %5176 = vmatprep.subr.mxu0 0.0
  %5177 = vmatpush1.msra.mxu0 %v5142
  %5178 = vmatprep.subr.mxu0 0.0
  %5179 = vmatpush1.msra.mxu0 %v5143
  %5180 = vmatprep.subr.mxu0 0.0
  %5181 = vmatpush1.msra.mxu0 %v5144
  %5182 = vmatprep.subr.mxu0 0.0
  %5183 = vmatpush1.msra.mxu0 %v5145
  %5184 = vmatprep.subr.mxu0 0.0
  %5185 = vmatpush1.msra.mxu0 %v5146
  %5186 = vmatprep.subr.mxu0 0.0
  %5187 = vmatpush1.msra.mxu0 %v5147
  %5188 = vmatprep.subr.mxu0 0.0
  %5189 = vmatpush1.msra.mxu0 %v5148
  %5190 = vmatprep.subr.mxu0 0.0
  %5191 = vmatpush1.msra.mxu0 %v5149
  %5192 = vmatprep.subr.mxu0 0.0
  %5193 = vmatpush1.msra.mxu0 %v5150
  %5194 = vmatprep.subr.mxu0 0.0
  %5195 = vmatpush1.msra.mxu0 0.0
  %5196 = vmatprep.subr.mxu0 0.0
  %5197 = vmatpush1.msra.mxu0 0.0
  %5198 = vmatprep.subr.mxu0 0.0
  %5199 = vmatpush1.msra.mxu0 0.0
  %5200 = vmatprep.subr.mxu0 0.0
  %5201 = vmatpush1.msra.mxu0 0.0
  %5202 = vmatprep.subr.mxu0 0.0
  %5203 = vmatpush1.msra.mxu0 0.0
  %5204 = vmatprep.subr.mxu0 0.0
  %5205 = vmatpush1.msra.mxu0 0.0
  %5206 = vmatprep.subr.mxu0 0.0
  %5207 = vmatpush1.msra.mxu0 0.0
  %5208 = vmatprep.subr.mxu0 0.0
  %5209 = vmatpush1.msra.mxu0 0.0
  %5210 = vmatprep.subr.mxu0 0.0
  %5211 = vmatpush1.msra.mxu0 0.0
  %5212 = vmatprep.subr.mxu0 0.0
  %5213 = vmatpush1.msra.mxu0 0.0
  %5214 = vmatprep.subr.mxu0 0.0
  %5215 = vmatpush1.msra.mxu0 0.0
  %5216 = vmatprep.subr.mxu0 0.0
  %5217 = vmatpush1.msra.mxu0 0.0
  %5218 = vmatprep.mubr.f32.mxu0 %v5152
  %5219 = vmatmul.mubr.f32.gmra.mrb[0].mxu0 %v5127
  %v5220 = vpop.f32.mrb[0].mxu0
  %v5221 = vadd.f32 0.0, %v5220
  %v5222 = vpop.f32.mrb[0].mxu0
  %5223 = vdwg.mxu0
  %5224 = vst.msk [vmem:[#allocation4 + $0x4] sm:$0x1] %vm1103, %v5221
  %5225 = vst.msk [vmem:[%s1105 + $0x3] sm:$0x2] %vm1106, %v5221
  %5226 = vst.msk [vmem:[%s1108 + $0x2] sm:$0x4] %vm1109, %v5221
  %5227 = vst.msk [vmem:[%s1111 + $0x1] sm:$0x8] %vm1112, %v5221
  %5228 = vst.msk [vmem:[%s1114] sm:$0x10] %vm1115, %v5221
  %s5229 = scalar_lea.vmem %s0, 160
  %v5230 = vld [vmem:[%s5229] sm:$0xff]
  %v5231 = vld [vmem:[%s5229 + $0x8] sm:$0xff]
  %v5232 = vld [vmem:[%s5229 + $0x10] sm:$0xff]
  %v5233 = vld [vmem:[%s5229 + $0x18] sm:$0xf]
  %5234 = vst.msk [vmem:[#allocation2] sm:$0xff] %vm54, %v5230
  %5235 = vst.msk [vmem:[#allocation2 + $0x10] sm:$0xff] %vm54, %v5231
  %5236 = vst.msk [vmem:[#allocation2 + $0x20] sm:$0xff] %vm54, %v5232
  %5237 = vst.msk [vmem:[#allocation2 + $0x30] sm:$0xf] %vm58, %v5233
  %v5238 = vld [vmem:[%s5229 + $0x1] sm:$0xff]
  %v5239 = vld [vmem:[%s5229 + $0x9] sm:$0xff]
  %v5240 = vld [vmem:[%s5229 + $0x11] sm:$0xff]
  %v5241 = vld [vmem:[%s5229 + $0x19] sm:$0xf]
  %5246 = vrot.lane.b32.xlu0 %v5238, 32
  %v5247 = vpop.permute.xlu0 %5246
  %5248 = vrot.lane.b32.xlu0 %v5239, 32
  %v5249 = vpop.permute.xlu0 %5248
  %5250 = vrot.lane.b32.xlu0 %v5240, 32
  %v5251 = vpop.permute.xlu0 %5250
  %5252 = vrot.lane.b32.xlu0 %v5241, 32
  %v5253 = vpop.permute.xlu0 %5252
  %5258 = vst.msk [vmem:[#allocation2] sm:$0xff] %vm80, %v5247
  %5259 = vst.msk [vmem:[#allocation2 + $0x10] sm:$0xff] %vm80, %v5249
  %5260 = vst.msk [vmem:[#allocation2 + $0x20] sm:$0xff] %vm80, %v5251
  %5261 = vst.msk [vmem:[#allocation2 + $0x30] sm:$0xf] %vm84, %v5253
  %v5262 = vld [vmem:[%s5229 + $0x2] sm:$0xff]
  %v5263 = vld [vmem:[%s5229 + $0xa] sm:$0xff]
  %v5264 = vld [vmem:[%s5229 + $0x12] sm:$0xff]
  %v5265 = vld [vmem:[%s5229 + $0x1a] sm:$0xf]
  %5270 = vrot.lane.b32.xlu0 %v5262, 64
  %v5271 = vpop.permute.xlu0 %5270
  %5272 = vrot.lane.b32.xlu0 %v5263, 64
  %v5273 = vpop.permute.xlu0 %5272
  %5274 = vrot.lane.b32.xlu0 %v5264, 64
  %v5275 = vpop.permute.xlu0 %5274
  %5276 = vrot.lane.b32.xlu0 %v5265, 64
  %v5277 = vpop.permute.xlu0 %5276
  %5282 = vst.msk [vmem:[#allocation2] sm:$0xff] %vm106, %v5271
  %5283 = vst.msk [vmem:[#allocation2 + $0x10] sm:$0xff] %vm106, %v5273
  %5284 = vst.msk [vmem:[#allocation2 + $0x20] sm:$0xff] %vm106, %v5275
  %5285 = vst.msk [vmem:[#allocation2 + $0x30] sm:$0xf] %vm110, %v5277
  %v5286 = vld [vmem:[%s5229 + $0x3] sm:$0xff]
  %v5287 = vld [vmem:[%s5229 + $0xb] sm:$0xff]
  %v5288 = vld [vmem:[%s5229 + $0x13] sm:$0xff]
  %v5289 = vld [vmem:[%s5229 + $0x1b] sm:$0xf]
  %5294 = vrot.lane.b32.xlu0 %v5286, 96
  %v5295 = vpop.permute.xlu0 %5294
  %5296 = vrot.lane.b32.xlu0 %v5287, 96
  %v5297 = vpop.permute.xlu0 %5296
  %5298 = vrot.lane.b32.xlu0 %v5288, 96
  %v5299 = vpop.permute.xlu0 %5298
  %5300 = vrot.lane.b32.xlu0 %v5289, 96
  %v5301 = vpop.permute.xlu0 %5300
  %5306 = vst.msk [vmem:[#allocation2] sm:$0xff] %vm132, %v5295
  %5307 = vst.msk [vmem:[#allocation2 + $0x10] sm:$0xff] %vm132, %v5297
  %5308 = vst.msk [vmem:[#allocation2 + $0x20] sm:$0xff] %vm132, %v5299
  %5309 = vst.msk [vmem:[#allocation2 + $0x30] sm:$0xf] %vm136, %v5301
  %v5310 = vld [vmem:[%s5229 + $0x4] sm:$0xff]
  %v5311 = vld [vmem:[%s5229 + $0xc] sm:$0xff]
  %v5312 = vld [vmem:[%s5229 + $0x14] sm:$0xff]
  %v5313 = vld [vmem:[%s5229 + $0x1c] sm:$0xf]
  %5314 = vst.msk [vmem:[#allocation2 + $0x8] sm:$0xff] %vm54, %v5310
  %5315 = vst.msk [vmem:[#allocation2 + $0x18] sm:$0xff] %vm54, %v5311
  %5316 = vst.msk [vmem:[#allocation2 + $0x28] sm:$0xff] %vm54, %v5312
  %5317 = vst.msk [vmem:[#allocation2 + $0x38] sm:$0xf] %vm58, %v5313
  %v5318 = vld [vmem:[#allocation2] sm:$0xff]
  %v5319 = vld [vmem:[#allocation2 + $0x8] sm:$0xff]
  %v5320 = vld [vmem:[#allocation2 + $0x10] sm:$0xff]
  %v5321 = vld [vmem:[#allocation2 + $0x18] sm:$0xff]
  %v5322 = vld [vmem:[#allocation2 + $0x20] sm:$0xff]
  %v5323 = vld [vmem:[#allocation2 + $0x28] sm:$0xff]
  %v5324 = vld [vmem:[#allocation2 + $0x30] sm:$0xf]
  %v5325 = vld [vmem:[#allocation2 + $0x38] sm:$0xf]
  %v5326 = vld [vmem:[%s1] sm:$0xff]
  %v5327 = vld [vmem:[%s1 + $0x8] sm:$0xff]
  %v5328 = vld [vmem:[%s1 + $0x10] sm:$0xff]
  %v5329 = vld [vmem:[%s1 + $0x18] sm:$0xff]
  %v5330 = vld [vmem:[%s1 + $0x20] sm:$0xff]
  %v5331 = vld [vmem:[%s1 + $0x28] sm:$0xff]
  %v5332 = vld [vmem:[%s1 + $0x30] sm:$0xff]
  %v5333 = vld [vmem:[%s1 + $0x38] sm:$0xff]
  %v5334 = vld [vmem:[%s1 + $0x40] sm:$0xff]
  %v5335 = vld [vmem:[%s1 + $0x48] sm:$0xff]
  %v5336 = vld [vmem:[%s1 + $0x50] sm:$0xff]
  %v5337 = vld [vmem:[%s1 + $0x58] sm:$0xff]
  %v5338 = vld [vmem:[%s1 + $0x60] sm:$0xff]
  %v5339 = vld [vmem:[%s1 + $0x68] sm:$0xff]
  %v5340 = vld [vmem:[%s1 + $0x70] sm:$0xff]
  %v5341 = vld [vmem:[%s1 + $0x78] sm:$0xff]
  %v5342 = vld [vmem:[%s1 + $0x80] sm:$0xff]
  %v5343 = vld [vmem:[%s1 + $0x88] sm:$0xff]
  %v5344 = vld [vmem:[%s1 + $0x90] sm:$0xff]
  %v5345 = vld [vmem:[%s1 + $0x98] sm:$0xff]
  %v5346 = vld [vmem:[%s1 + $0xa0] sm:$0xff]
  %v5347 = vld [vmem:[%s1 + $0xa8] sm:$0xff]
  %v5348 = vld [vmem:[%s1 + $0xb0] sm:$0xff]
  %v5349 = vld [vmem:[%s1 + $0xb8] sm:$0xff]
  %v5350 = vld [vmem:[%s1 + $0xc0] sm:$0xff]
  %v5351 = vld [vmem:[%s1 + $0xc8] sm:$0xff]
  %v5352 = vld [vmem:[%s1 + $0xd0] sm:$0xff]
  %v5353 = vld [vmem:[%s1 + $0xd8] sm:$0xff]
  %v5354 = vld [vmem:[%s1 + $0xe0] sm:$0xff]
  %v5355 = vld [vmem:[%s1 + $0xe8] sm:$0xff]
  %v5356 = vld [vmem:[%s1 + $0xf0] sm:$0xff]
  %v5357 = vld [vmem:[%s1 + $0xf8] sm:$0xff]
  %v5358 = vld [vmem:[%s1 + $0x100] sm:$0xff]
  %v5359 = vld [vmem:[%s1 + $0x108] sm:$0xff]
  %v5360 = vld [vmem:[%s1 + $0x110] sm:$0xff]
  %v5361 = vld [vmem:[%s1 + $0x118] sm:$0xff]
  %v5362 = vld [vmem:[%s1 + $0x120] sm:$0xff]
  %v5363 = vld [vmem:[%s1 + $0x128] sm:$0xff]
  %v5364 = vld [vmem:[%s1 + $0x130] sm:$0xff]
  %v5365 = vld [vmem:[%s1 + $0x138] sm:$0xff]
  %v5366 = vld [vmem:[%s2] sm:$0xff]
  %v5367 = vld [vmem:[%s2 + $0x8] sm:$0xff]
  %v5368 = vld [vmem:[%s2 + $0x10] sm:$0xff]
  %v5369 = vld [vmem:[%s2 + $0x18] sm:$0xff]
  %v5370 = vld [vmem:[%s2 + $0x20] sm:$0xff]
  %v5371 = vld [vmem:[%s2 + $0x28] sm:$0xff]
  %v5372 = vld [vmem:[%s2 + $0x30] sm:$0xf]
  %v5373 = vld [vmem:[%s2 + $0x38] sm:$0xf]
  %v5375 = vsel %vm54, %v5319, 0
  %v5378 = vsel %vm54, %v5321, 0
  %v5381 = vsel %vm54, %v5323, 0
  %v5384 = vsel %vm54, %v5325, 0
  %5386 = vmatprep.subr.mxu0 %v5327
  %5387 = vmatpush1.msra.mxu0 %v5326
  %5388 = vmatprep.subr.mxu0 %v5329
  %5389 = vmatpush1.msra.mxu0 %v5328
  %5390 = vmatprep.subr.mxu0 %v5331
  %5391 = vmatpush1.msra.mxu0 %v5330
  %5392 = vmatprep.subr.mxu0 %v5333
  %5393 = vmatpush1.msra.mxu0 %v5332
  %5394 = vmatprep.subr.mxu0 %v5335
  %5395 = vmatpush1.msra.mxu0 %v5334
  %5396 = vmatprep.subr.mxu0 %v5337
  %5397 = vmatpush1.msra.mxu0 %v5336
  %5398 = vmatprep.subr.mxu0 %v5339
  %5399 = vmatpush1.msra.mxu0 %v5338
  %5400 = vmatprep.subr.mxu0 %v5341
  %5401 = vmatpush1.msra.mxu0 %v5340
  %5402 = vmatprep.subr.mxu0 %v5343
  %5403 = vmatpush1.msra.mxu0 %v5342
  %5404 = vmatprep.subr.mxu0 %v5345
  %5405 = vmatpush1.msra.mxu0 %v5344
  %5406 = vmatprep.subr.mxu0 %v5347
  %5407 = vmatpush1.msra.mxu0 %v5346
  %5408 = vmatprep.subr.mxu0 %v5349
  %5409 = vmatpush1.msra.mxu0 %v5348
  %5410 = vmatprep.subr.mxu0 %v5351
  %5411 = vmatpush1.msra.mxu0 %v5350
  %5412 = vmatprep.subr.mxu0 %v5353
  %5413 = vmatpush1.msra.mxu0 %v5352
  %5414 = vmatprep.subr.mxu0 %v5355
  %5415 = vmatpush1.msra.mxu0 %v5354
  %5416 = vmatprep.subr.mxu0 %v5357
  %5417 = vmatpush1.msra.mxu0 %v5356
  %5418 = vmatprep.subr.mxu0 %v5359
  %5419 = vmatpush1.msra.mxu0 %v5358
  %5420 = vmatprep.subr.mxu0 %v5361
  %5421 = vmatpush1.msra.mxu0 %v5360
  %5422 = vmatprep.subr.mxu0 %v5363
  %5423 = vmatpush1.msra.mxu0 %v5362
  %5424 = vmatprep.subr.mxu0 %v5365
  %5425 = vmatpush1.msra.mxu0 %v5364
  %5426 = vmatprep.subr.mxu0 0.0
  %5427 = vmatpush1.msra.mxu0 0.0
  %5428 = vmatprep.subr.mxu0 0.0
  %5429 = vmatpush1.msra.mxu0 0.0
  %5430 = vmatprep.subr.mxu0 0.0
  %5431 = vmatpush1.msra.mxu0 0.0
  %5432 = vmatprep.subr.mxu0 0.0
  %5433 = vmatpush1.msra.mxu0 0.0
  %5434 = vmatprep.subr.mxu0 0.0
  %5435 = vmatpush1.msra.mxu0 0.0
  %5436 = vmatprep.subr.mxu0 0.0
  %5437 = vmatpush1.msra.mxu0 0.0
  %5438 = vmatprep.subr.mxu0 0.0
  %5439 = vmatpush1.msra.mxu0 0.0
  %5440 = vmatprep.subr.mxu0 0.0
  %5441 = vmatpush1.msra.mxu0 0.0
  %5442 = vmatprep.subr.mxu0 0.0
  %5443 = vmatpush1.msra.mxu0 0.0
  %5444 = vmatprep.subr.mxu0 0.0
  %5445 = vmatpush1.msra.mxu0 0.0
  %5446 = vmatprep.subr.mxu0 0.0
  %5447 = vmatpush1.msra.mxu0 0.0
  %5448 = vmatprep.subr.mxu0 0.0
  %5449 = vmatpush1.msra.mxu0 0.0
  %5450 = vmatprep.mubr.f32.mxu0 %v5375
  %5451 = vmatmul.mubr.f32.gmra.mrb[0].mxu0 %v5318
  %v5452 = vpop.f32.mrb[0].mxu0
  %v5453 = vadd.f32 %v5366, %v5452
  %v5454 = vpop.f32.mrb[0].mxu0
  %v5455 = vadd.f32 %v5367, %v5454
  %5456 = vmatprep.mubr.f32.mxu0 %v5378
  %5457 = vmatmul.mubr.f32.gmra.mrb[0].mxu0 %v5320
  %v5458 = vpop.f32.mrb[0].mxu0
  %v5459 = vadd.f32 %v5368, %v5458
  %v5460 = vpop.f32.mrb[0].mxu0
  %v5461 = vadd.f32 %v5369, %v5460
  %5462 = vmatprep.mubr.f32.mxu0 %v5381
  %5463 = vmatmul.mubr.f32.gmra.mrb[0].mxu0 %v5322
  %v5464 = vpop.f32.mrb[0].mxu0
  %v5465 = vadd.f32 %v5370, %v5464
  %v5466 = vpop.f32.mrb[0].mxu0
  %v5467 = vadd.f32 %v5371, %v5466
  %5468 = vmatprep.mubr.f32.mxu0 %v5384
  %5469 = vmatmul.mubr.f32.gmra.mrb[0].mxu0 %v5324
  %v5470 = vpop.f32.mrb[0].mxu0
  %v5471 = vadd.f32 %v5372, %v5470
  %v5472 = vpop.f32.mrb[0].mxu0
  %v5473 = vadd.f32 %v5373, %v5472
  %5474 = vdwg.mxu0
  %v5475 = vxor.u32 %v5453, 2147483648
  %v5476 = vxor.u32 %v5455, 2147483648
  %v5477 = vxor.u32 %v5459, 2147483648
  %v5478 = vxor.u32 %v5461, 2147483648
  %v5479 = vxor.u32 %v5465, 2147483648
  %v5480 = vxor.u32 %v5467, 2147483648
  %v5481 = vxor.u32 %v5471, 2147483648
  %v5482 = vxor.u32 %v5473, 2147483648
  %v5483 = vmul.f32 %v5475, 1.442695
  %v5484 = vpow.pop %v5483
  %v5485 = vmul.f32 %v5476, 1.442695
  %v5486 = vpow.pop %v5485
  %v5487 = vmul.f32 %v5477, 1.442695
  %v5488 = vpow.pop %v5487
  %v5489 = vmul.f32 %v5478, 1.442695
  %v5490 = vpow.pop %v5489
  %v5491 = vmul.f32 %v5479, 1.442695
  %v5492 = vpow.pop %v5491
  %v5493 = vmul.f32 %v5480, 1.442695
  %v5494 = vpow.pop %v5493
  %v5495 = vmul.f32 %v5481, 1.442695
  %v5496 = vpow.pop %v5495
  %v5497 = vmul.f32 %v5482, 1.442695
  %v5498 = vpow.pop %v5497
  %v5499 = vadd.f32 %v5484, 1.0
  %v5500 = vadd.f32 %v5486, 1.0
  %v5501 = vadd.f32 %v5488, 1.0
  %v5502 = vadd.f32 %v5490, 1.0
  %v5503 = vadd.f32 %v5492, 1.0
  %v5504 = vadd.f32 %v5494, 1.0
  %v5505 = vadd.f32 %v5496, 1.0
  %v5506 = vadd.f32 %v5498, 1.0
  %v5507 = vrcp.pop %v5499
  %v5508 = vmul.f32 1.0, %v5507
  %v5509 = vrcp.pop %v5500
  %v5510 = vmul.f32 1.0, %v5509
  %v5511 = vrcp.pop %v5501
  %v5512 = vmul.f32 1.0, %v5511
  %v5513 = vrcp.pop %v5502
  %v5514 = vmul.f32 1.0, %v5513
  %v5515 = vrcp.pop %v5503
  %v5516 = vmul.f32 1.0, %v5515
  %v5517 = vrcp.pop %v5504
  %v5518 = vmul.f32 1.0, %v5517
  %v5519 = vrcp.pop %v5505
  %v5520 = vmul.f32 1.0, %v5519
  %v5521 = vrcp.pop %v5506
  %v5522 = vmul.f32 1.0, %v5521
  %v5523 = vld [vmem:[%s3] sm:$0xff]
  %v5524 = vld [vmem:[%s3 + $0x8] sm:$0x3f]
  %v5526 = vsel %vm353, %v5523, 0
  %v5529 = vsel %vm353, %v5524, 0
  %v5532 = vsel %vm360, %v5520, 0
  %v5535 = vsel %vm360, %v5522, 0
  %5537 = vmatprep.subr.mxu0 %v5510
  %5538 = vmatpush1.msra.mxu0 %v5508
  %5539 = vmatprep.subr.mxu0 %v5514
  %5540 = vmatpush1.msra.mxu0 %v5512
  %5541 = vmatprep.subr.mxu0 %v5518
  %5542 = vmatpush1.msra.mxu0 %v5516
  %5543 = vmatprep.subr.mxu0 %v5535
  %5544 = vmatpush1.msra.mxu0 %v5532
  %5545 = vmatprep.subr.mxu0 0.0
  %5546 = vmatpush1.msra.mxu0 0.0
  %5547 = vmatprep.subr.mxu0 0.0
  %5548 = vmatpush1.msra.mxu0 0.0
  %5549 = vmatprep.subr.mxu0 0.0
  %5550 = vmatpush1.msra.mxu0 0.0
  %5551 = vmatprep.subr.mxu0 0.0
  %5552 = vmatpush1.msra.mxu0 0.0
  %5553 = vmatprep.subr.mxu0 0.0
  %5554 = vmatpush1.msra.mxu0 0.0
  %5555 = vmatprep.subr.mxu0 0.0
  %5556 = vmatpush1.msra.mxu0 0.0
  %5557 = vmatprep.subr.mxu0 0.0
  %5558 = vmatpush1.msra.mxu0 0.0
  %5559 = vmatprep.subr.mxu0 0.0
  %5560 = vmatpush1.msra.mxu0 0.0
  %5561 = vmatprep.subr.mxu0 0.0
  %5562 = vmatpush1.msra.mxu0 0.0
  %5563 = vmatprep.subr.mxu0 0.0
  %5564 = vmatpush1.msra.mxu0 0.0
  %5565 = vmatprep.subr.mxu0 0.0
  %5566 = vmatpush1.msra.mxu0 0.0
  %5567 = vmatprep.subr.mxu0 0.0
  %5568 = vmatpush1.msra.mxu0 0.0
  %5569 = vmatprep.subr.mxu0 0.0
  %5570 = vmatpush1.msra.mxu0 0.0
  %5571 = vmatprep.subr.mxu0 0.0
  %5572 = vmatpush1.msra.mxu0 0.0
  %5573 = vmatprep.subr.mxu0 0.0
  %5574 = vmatpush1.msra.mxu0 0.0
  %5575 = vmatprep.subr.mxu0 0.0
  %5576 = vmatpush1.msra.mxu0 0.0
  %5577 = vmatprep.subr.mxu0 0.0
  %5578 = vmatpush1.msra.mxu0 0.0
  %5579 = vmatprep.subr.mxu0 0.0
  %5580 = vmatpush1.msra.mxu0 0.0
  %5581 = vmatprep.subr.mxu0 0.0
  %5582 = vmatpush1.msra.mxu0 0.0
  %5583 = vmatprep.subr.mxu0 0.0
  %5584 = vmatpush1.msra.mxu0 0.0
  %5585 = vmatprep.subr.mxu0 0.0
  %5586 = vmatpush1.msra.mxu0 0.0
  %5587 = vmatprep.subr.mxu0 0.0
  %5588 = vmatpush1.msra.mxu0 0.0
  %5589 = vmatprep.subr.mxu0 0.0
  %5590 = vmatpush1.msra.mxu0 0.0
  %5591 = vmatprep.subr.mxu0 0.0
  %5592 = vmatpush1.msra.mxu0 0.0
  %5593 = vmatprep.subr.mxu0 0.0
  %5594 = vmatpush1.msra.mxu0 0.0
  %5595 = vmatprep.subr.mxu0 0.0
  %5596 = vmatpush1.msra.mxu0 0.0
  %5597 = vmatprep.subr.mxu0 0.0
  %5598 = vmatpush1.msra.mxu0 0.0
  %5599 = vmatprep.subr.mxu0 0.0
  %5600 = vmatpush1.msra.mxu0 0.0
  %5601 = vmatprep.mubr.f32.mxu0 0.0
  %5602 = vmatmul.mubr.f32.gmra.mrb[0].mxu0 %v5526
  %v5603 = vpop.f32.mrb[0].mxu0
  %v5604 = vadd.f32 0.0, %v5603
  %v5605 = vpop.f32.mrb[0].mxu0
  %v5606 = vadd.f32 0.0, %v5605
  %5607 = vmatprep.mubr.f32.mxu0 0.0
  %5608 = vmatmul.mubr.f32.gmra.mrb[0].mxu0 %v5529
  %v5609 = vpop.f32.mrb[0].mxu0
  %v5610 = vadd.f32 0.0, %v5609
  %v5611 = vpop.f32.mrb[0].mxu0
  %v5612 = vadd.f32 0.0, %v5611
  %5613 = vdwg.mxu0
  %v5614 = vld [vmem:[%s4] sm:$0xff]
  %v5615 = vld [vmem:[%s4 + $0x8] sm:$0xff]
  %v5616 = vld [vmem:[%s4 + $0x10] sm:$0xff]
  %v5617 = vld [vmem:[%s4 + $0x18] sm:$0xff]
  %v5618 = vld [vmem:[%s4 + $0x20] sm:$0xff]
  %v5619 = vld [vmem:[%s4 + $0x28] sm:$0xff]
  %v5620 = vld [vmem:[%s4 + $0x30] sm:$0xff]
  %v5621 = vld [vmem:[%s4 + $0x38] sm:$0xff]
  %v5622 = vld [vmem:[%s4 + $0x40] sm:$0xff]
  %v5623 = vld [vmem:[%s4 + $0x48] sm:$0xff]
  %v5624 = vld [vmem:[%s4 + $0x50] sm:$0xff]
  %v5625 = vld [vmem:[%s4 + $0x58] sm:$0xff]
  %v5626 = vld [vmem:[%s4 + $0x60] sm:$0xff]
  %v5627 = vld [vmem:[%s4 + $0x68] sm:$0xff]
  %v5628 = vld [vmem:[%s4 + $0x70] sm:$0xff]
  %v5629 = vld [vmem:[%s4 + $0x78] sm:$0xff]
  %v5630 = vld [vmem:[%s4 + $0x80] sm:$0xff]
  %v5631 = vld [vmem:[%s4 + $0x88] sm:$0xff]
  %v5632 = vld [vmem:[%s4 + $0x90] sm:$0xff]
  %v5633 = vld [vmem:[%s4 + $0x98] sm:$0xff]
  %v5634 = vld [vmem:[%s4 + $0xa0] sm:$0xff]
  %v5636 = vsel %vm465, %v5606, 0
  %v5639 = vsel %vm465, %v5612, 0
  %5641 = vmatprep.subr.mxu0 0.0
  %5642 = vmatpush1.msra.mxu0 %v5614
  %5643 = vmatprep.subr.mxu0 0.0
  %5644 = vmatpush1.msra.mxu0 %v5615
  %5645 = vmatprep.subr.mxu0 0.0
  %5646 = vmatpush1.msra.mxu0 %v5616
  %5647 = vmatprep.subr.mxu0 0.0
  %5648 = vmatpush1.msra.mxu0 %v5617
  %5649 = vmatprep.subr.mxu0 0.0
  %5650 = vmatpush1.msra.mxu0 %v5618
  %5651 = vmatprep.subr.mxu0 0.0
  %5652 = vmatpush1.msra.mxu0 %v5619
  %5653 = vmatprep.subr.mxu0 0.0
  %5654 = vmatpush1.msra.mxu0 %v5620
  %5655 = vmatprep.subr.mxu0 0.0
  %5656 = vmatpush1.msra.mxu0 %v5621
  %5657 = vmatprep.subr.mxu0 0.0
  %5658 = vmatpush1.msra.mxu0 %v5622
  %5659 = vmatprep.subr.mxu0 0.0
  %5660 = vmatpush1.msra.mxu0 %v5623
  %5661 = vmatprep.subr.mxu0 0.0
  %5662 = vmatpush1.msra.mxu0 %v5624
  %5663 = vmatprep.subr.mxu0 0.0
  %5664 = vmatpush1.msra.mxu0 %v5625
  %5665 = vmatprep.subr.mxu0 0.0
  %5666 = vmatpush1.msra.mxu0 %v5626
  %5667 = vmatprep.subr.mxu0 0.0
  %5668 = vmatpush1.msra.mxu0 %v5627
  %5669 = vmatprep.subr.mxu0 0.0
  %5670 = vmatpush1.msra.mxu0 %v5628
  %5671 = vmatprep.subr.mxu0 0.0
  %5672 = vmatpush1.msra.mxu0 %v5629
  %5673 = vmatprep.subr.mxu0 0.0
  %5674 = vmatpush1.msra.mxu0 %v5630
  %5675 = vmatprep.subr.mxu0 0.0
  %5676 = vmatpush1.msra.mxu0 %v5631
  %5677 = vmatprep.subr.mxu0 0.0
  %5678 = vmatpush1.msra.mxu0 %v5632
  %5679 = vmatprep.subr.mxu0 0.0
  %5680 = vmatpush1.msra.mxu0 %v5633
  %5681 = vmatprep.subr.mxu0 0.0
  %5682 = vmatpush1.msra.mxu0 %v5634
  %5683 = vmatprep.subr.mxu0 0.0
  %5684 = vmatpush1.msra.mxu0 0.0
  %5685 = vmatprep.subr.mxu0 0.0
  %5686 = vmatpush1.msra.mxu0 0.0
  %5687 = vmatprep.subr.mxu0 0.0
  %5688 = vmatpush1.msra.mxu0 0.0
  %5689 = vmatprep.subr.mxu0 0.0
  %5690 = vmatpush1.msra.mxu0 0.0
  %5691 = vmatprep.subr.mxu0 0.0
  %5692 = vmatpush1.msra.mxu0 0.0
  %5693 = vmatprep.subr.mxu0 0.0
  %5694 = vmatpush1.msra.mxu0 0.0
  %5695 = vmatprep.subr.mxu0 0.0
  %5696 = vmatpush1.msra.mxu0 0.0
  %5697 = vmatprep.subr.mxu0 0.0
  %5698 = vmatpush1.msra.mxu0 0.0
  %5699 = vmatprep.subr.mxu0 0.0
  %5700 = vmatpush1.msra.mxu0 0.0
  %5701 = vmatprep.subr.mxu0 0.0
  %5702 = vmatpush1.msra.mxu0 0.0
  %5703 = vmatprep.subr.mxu0 0.0
  %5704 = vmatpush1.msra.mxu0 0.0
  %5705 = vmatprep.mubr.f32.mxu0 %v5636
  %5706 = vmatmul.mubr.f32.gmra.mrb[0].mxu0 %v5604
  %v5707 = vpop.f32.mrb[0].mxu0
  %v5708 = vadd.f32 0.0, %v5707
  %v5709 = vpop.f32.mrb[0].mxu0
  %5710 = vmatprep.mubr.f32.mxu0 %v5639
  %5711 = vmatmul.mubr.f32.gmra.mrb[0].mxu0 %v5610
  %v5712 = vpop.f32.mrb[0].mxu0
  %v5713 = vadd.f32 0.0, %v5712
  %v5714 = vpop.f32.mrb[0].mxu0
  %5715 = vdwg.mxu0
  %5716 = vst.msk [vmem:[#allocation3] sm:$0xff] %vm547, %v5708
  %5717 = vst.msk [vmem:[#allocation3 + $0x20] sm:$0x3] %vm549, %v5713
  %v5720 = vrot.slane %v5708, 1
  %v5721 = vrot.slane %v5713, 1
  %v5722 = vsel %vm553, %v5720, %v5721
  %5723 = vrot.lane.b32.xlu0 %v5722, 84
  %v5724 = vpop.permute.xlu0 %5723
  %5725 = vrot.lane.b32.xlu0 %v5721, 84
  %v5726 = vpop.permute.xlu0 %5725
  %5729 = vst.msk [vmem:[#allocation3] sm:$0xff] %vm563, %v5724
  %5730 = vst.msk [vmem:[#allocation3 + $0x8] sm:$0xff] %vm465, %v5724
  %5731 = vst.msk [vmem:[#allocation3 + $0x20] sm:$0x3] %vm566, %v5726
  %5732 = vst.msk [vmem:[#allocation3 + $0x28] sm:$0x3] %vm568, %v5726
  %v5733 = vrot.slane %v5708, 2
  %v5734 = vrot.slane %v5713, 2
  %v5735 = vsel %vm570, %v5733, %v5734
  %5736 = vrot.lane.b32.xlu0 %v5735, 40
  %v5737 = vpop.permute.xlu0 %5736
  %5738 = vrot.lane.b32.xlu0 %v5734, 40
  %v5739 = vpop.permute.xlu0 %5738
  %5742 = vst.msk [vmem:[#allocation3 + $0x8] sm:$0xff] %vm580, %v5737
  %5743 = vst.msk [vmem:[#allocation3 + $0x28] sm:$0x3] %vm582, %v5739
  %v5744 = vrot.slane %v5708, 3
  %v5745 = vrot.slane %v5713, 3
  %v5746 = vsel %vm584, %v5744, %v5745
  %5747 = vrot.lane.b32.xlu0 %v5746, 124
  %v5748 = vpop.permute.xlu0 %5747
  %5749 = vrot.lane.b32.xlu0 %v5745, 124
  %v5750 = vpop.permute.xlu0 %5749
  %5753 = vst.msk [vmem:[#allocation3 + $0x8] sm:$0xff] %vm594, %v5748
  %5754 = vst.msk [vmem:[#allocation3 + $0x10] sm:$0xff] %vm596, %v5748
  %5755 = vst.msk [vmem:[#allocation3 + $0x28] sm:$0x3] %vm598, %v5750
  %5756 = vst.msk [vmem:[#allocation3 + $0x30] sm:$0x3] %vm600, %v5750
  %v5757 = vrot.slane %v5708, 4
  %v5758 = vrot.slane %v5713, 4
  %v5759 = vsel %vm360, %v5757, %v5758
  %5760 = vrot.lane.b32.xlu0 %v5759, 80
  %v5761 = vpop.permute.xlu0 %5760
  %5762 = vrot.lane.b32.xlu0 %v5758, 80
  %v5763 = vpop.permute.xlu0 %5762
  %5766 = vst.msk [vmem:[#allocation3 + $0x10] sm:$0xff] %vm611, %v5761
  %5767 = vst.msk [vmem:[#allocation3 + $0x18] sm:$0xff] %vm613, %v5761
  %5768 = vst.msk [vmem:[#allocation3 + $0x30] sm:$0x3] %vm615, %v5763
  %5769 = vst.msk [vmem:[#allocation3 + $0x38] sm:$0x3] %vm617, %v5763
  %v5770 = vld [vmem:[#allocation3] sm:$0xff]
  %v5771 = vld [vmem:[#allocation3 + $0x8] sm:$0xff]
  %v5772 = vld [vmem:[#allocation3 + $0x10] sm:$0xff]
  %v5773 = vld [vmem:[#allocation3 + $0x18] sm:$0xff]
  %v5774 = vld [vmem:[#allocation3 + $0x20] sm:$0x3]
  %v5775 = vld [vmem:[#allocation3 + $0x28] sm:$0x3]
  %v5776 = vld [vmem:[#allocation3 + $0x30] sm:$0x3]
  %v5777 = vld [vmem:[#allocation3 + $0x38] sm:$0x3]
  %v5778 = vld [vmem:[%s5] sm:$0xff]
  %v5779 = vld [vmem:[%s5 + $0x8] sm:$0xff]
  %v5780 = vld [vmem:[%s5 + $0x10] sm:$0xff]
  %v5781 = vld [vmem:[%s5 + $0x18] sm:$0xff]
  %v5782 = vld [vmem:[%s5 + $0x20] sm:$0xff]
  %v5783 = vld [vmem:[%s5 + $0x28] sm:$0xff]
  %v5784 = vld [vmem:[%s5 + $0x30] sm:$0xff]
  %v5785 = vld [vmem:[%s5 + $0x38] sm:$0xff]
  %v5786 = vld [vmem:[%s5 + $0x40] sm:$0xff]
  %v5787 = vld [vmem:[%s5 + $0x48] sm:$0xff]
  %v5788 = vld [vmem:[%s5 + $0x50] sm:$0xff]
  %v5789 = vld [vmem:[%s5 + $0x58] sm:$0xff]
  %v5790 = vld [vmem:[%s5 + $0x60] sm:$0xff]
  %v5791 = vld [vmem:[%s5 + $0x68] sm:$0xff]
  %v5792 = vld [vmem:[%s5 + $0x70] sm:$0xff]
  %v5793 = vld [vmem:[%s5 + $0x78] sm:$0xff]
  %v5794 = vld [vmem:[%s5 + $0x80] sm:$0xff]
  %v5795 = vld [vmem:[%s5 + $0x88] sm:$0xff]
  %v5796 = vld [vmem:[%s5 + $0x90] sm:$0xff]
  %v5797 = vld [vmem:[%s5 + $0x98] sm:$0xff]
  %v5798 = vld [vmem:[%s5 + $0xa0] sm:$0xff]
  %v5799 = vld [vmem:[%s5 + $0xa8] sm:$0xff]
  %v5800 = vld [vmem:[%s5 + $0xb0] sm:$0xff]
  %v5801 = vld [vmem:[%s5 + $0xb8] sm:$0xff]
  %v5802 = vld [vmem:[%s5 + $0xc0] sm:$0xff]
  %v5803 = vld [vmem:[%s5 + $0xc8] sm:$0xff]
  %v5804 = vld [vmem:[%s5 + $0xd0] sm:$0xff]
  %v5805 = vld [vmem:[%s5 + $0xd8] sm:$0xff]
  %v5806 = vld [vmem:[%s5 + $0xe0] sm:$0xff]
  %v5807 = vld [vmem:[%s5 + $0xe8] sm:$0xff]
  %v5808 = vld [vmem:[%s5 + $0xf0] sm:$0xff]
  %v5809 = vld [vmem:[%s5 + $0xf8] sm:$0xff]
  %v5810 = vld [vmem:[%s5 + $0x100] sm:$0xff]
  %v5811 = vld [vmem:[%s5 + $0x108] sm:$0xff]
  %v5812 = vld [vmem:[%s5 + $0x110] sm:$0xff]
  %v5813 = vld [vmem:[%s5 + $0x118] sm:$0xff]
  %v5814 = vld [vmem:[%s5 + $0x120] sm:$0xff]
  %v5815 = vld [vmem:[%s5 + $0x128] sm:$0xff]
  %v5816 = vld [vmem:[%s5 + $0x130] sm:$0xff]
  %v5817 = vld [vmem:[%s5 + $0x138] sm:$0xff]
  %v5818 = vld [vmem:[%s5 + $0x140] sm:$0xff]
  %v5819 = vld [vmem:[%s5 + $0x148] sm:$0xff]
  %v5820 = vld [vmem:[%s5 + $0x150] sm:$0xff]
  %v5821 = vld [vmem:[%s5 + $0x158] sm:$0xff]
  %v5822 = vld [vmem:[%s5 + $0x160] sm:$0xff]
  %v5823 = vld [vmem:[%s5 + $0x168] sm:$0xff]
  %v5824 = vld [vmem:[%s5 + $0x170] sm:$0xff]
  %v5825 = vld [vmem:[%s5 + $0x178] sm:$0xff]
  %v5826 = vld [vmem:[%s5 + $0x180] sm:$0xff]
  %v5827 = vld [vmem:[%s5 + $0x188] sm:$0xff]
  %v5828 = vld [vmem:[%s5 + $0x190] sm:$0xff]
  %v5829 = vld [vmem:[%s5 + $0x198] sm:$0xff]
  %v5830 = vld [vmem:[%s5 + $0x1a0] sm:$0xff]
  %v5831 = vld [vmem:[%s5 + $0x1a8] sm:$0xff]
  %v5832 = vld [vmem:[%s5 + $0x1b0] sm:$0xff]
  %v5833 = vld [vmem:[%s5 + $0x1b8] sm:$0xff]
  %v5834 = vld [vmem:[%s5 + $0x1c0] sm:$0xff]
  %v5835 = vld [vmem:[%s5 + $0x1c8] sm:$0xff]
  %v5836 = vld [vmem:[%s5 + $0x1d0] sm:$0xff]
  %v5837 = vld [vmem:[%s5 + $0x1d8] sm:$0xff]
  %v5838 = vld [vmem:[%s5 + $0x1e0] sm:$0xff]
  %v5839 = vld [vmem:[%s5 + $0x1e8] sm:$0xff]
  %v5840 = vld [vmem:[%s5 + $0x1f0] sm:$0xff]
  %v5841 = vld [vmem:[%s5 + $0x1f8] sm:$0xff]
  %v5842 = vld [vmem:[%s5 + $0x200] sm:$0xff]
  %v5843 = vld [vmem:[%s5 + $0x208] sm:$0xff]
  %v5844 = vld [vmem:[%s5 + $0x210] sm:$0xff]
  %v5845 = vld [vmem:[%s5 + $0x218] sm:$0xff]
  %v5846 = vld [vmem:[%s5 + $0x220] sm:$0xff]
  %v5847 = vld [vmem:[%s5 + $0x228] sm:$0xff]
  %v5848 = vld [vmem:[%s5 + $0x230] sm:$0xff]
  %v5849 = vld [vmem:[%s5 + $0x238] sm:$0xff]
  %v5850 = vld [vmem:[%s5 + $0x240] sm:$0xff]
  %v5851 = vld [vmem:[%s5 + $0x248] sm:$0xff]
  %v5852 = vld [vmem:[%s5 + $0x250] sm:$0xff]
  %v5853 = vld [vmem:[%s5 + $0x258] sm:$0xff]
  %v5854 = vld [vmem:[%s5 + $0x260] sm:$0xff]
  %v5855 = vld [vmem:[%s5 + $0x268] sm:$0xff]
  %v5856 = vld [vmem:[%s5 + $0x270] sm:$0xff]
  %v5857 = vld [vmem:[%s5 + $0x278] sm:$0xff]
  %v5858 = vld [vmem:[%s5 + $0x280] sm:$0xff]
  %v5859 = vld [vmem:[%s5 + $0x288] sm:$0xff]
  %v5860 = vld [vmem:[%s5 + $0x290] sm:$0xff]
  %v5861 = vld [vmem:[%s5 + $0x298] sm:$0xff]
  %v5862 = vld [vmem:[%s5 + $0x2a0] sm:$0xff]
  %v5863 = vld [vmem:[%s5 + $0x2a8] sm:$0xff]
  %v5864 = vld [vmem:[%s5 + $0x2b0] sm:$0xff]
  %v5865 = vld [vmem:[%s5 + $0x2b8] sm:$0xff]
  %v5866 = vld [vmem:[%s5 + $0x2c0] sm:$0xff]
  %v5867 = vld [vmem:[%s5 + $0x2c8] sm:$0xff]
  %v5868 = vld [vmem:[%s5 + $0x2d0] sm:$0xff]
  %v5869 = vld [vmem:[%s5 + $0x2d8] sm:$0xff]
  %v5870 = vld [vmem:[%s5 + $0x2e0] sm:$0xff]
  %v5871 = vld [vmem:[%s5 + $0x2e8] sm:$0xff]
  %v5872 = vld [vmem:[%s5 + $0x2f0] sm:$0xff]
  %v5873 = vld [vmem:[%s5 + $0x2f8] sm:$0xff]
  %v5874 = vld [vmem:[%s5 + $0x300] sm:$0xff]
  %v5875 = vld [vmem:[%s5 + $0x308] sm:$0xff]
  %v5876 = vld [vmem:[%s5 + $0x310] sm:$0xff]
  %v5877 = vld [vmem:[%s5 + $0x318] sm:$0xff]
  %v5878 = vld [vmem:[%s5 + $0x320] sm:$0xff]
  %v5879 = vld [vmem:[%s5 + $0x328] sm:$0xff]
  %v5880 = vld [vmem:[%s5 + $0x330] sm:$0xff]
  %v5881 = vld [vmem:[%s5 + $0x338] sm:$0xff]
  %v5882 = vld [vmem:[%s5 + $0x340] sm:$0xf]
  %v5883 = vld [vmem:[%s5 + $0x348] sm:$0xf]
  %v5884 = vld [vmem:[%s6] sm:$0xff]
  %v5885 = vld [vmem:[%s6 + $0x8] sm:$0xff]
  %v5886 = vld [vmem:[%s6 + $0x10] sm:$0x3]
  %v5887 = vld [vmem:[%s6 + $0x18] sm:$0x3]
  %v5889 = vsel %vm613, %v5773, 0
  %v5892 = vsel %vm613, %v5777, 0
  %v5895 = vsel %vm360, %v5882, 0
  %v5898 = vsel %vm360, %v5883, 0
  %5900 = vmatprep.subr.mxu0 %v5779
  %5901 = vmatpush1.msra.mxu0 %v5778
  %5902 = vmatprep.subr.mxu0 %v5781
  %5903 = vmatpush1.msra.mxu0 %v5780
  %5904 = vmatprep.subr.mxu0 %v5783
  %5905 = vmatpush1.msra.mxu0 %v5782
  %5906 = vmatprep.subr.mxu0 %v5785
  %5907 = vmatpush1.msra.mxu0 %v5784
  %5908 = vmatprep.subr.mxu0 %v5787
  %5909 = vmatpush1.msra.mxu0 %v5786
  %5910 = vmatprep.subr.mxu0 %v5789
  %5911 = vmatpush1.msra.mxu0 %v5788
  %5912 = vmatprep.subr.mxu0 %v5791
  %5913 = vmatpush1.msra.mxu0 %v5790
  %5914 = vmatprep.subr.mxu0 %v5793
  %5915 = vmatpush1.msra.mxu0 %v5792
  %5916 = vmatprep.subr.mxu0 %v5795
  %5917 = vmatpush1.msra.mxu0 %v5794
  %5918 = vmatprep.subr.mxu0 %v5797
  %5919 = vmatpush1.msra.mxu0 %v5796
  %5920 = vmatprep.subr.mxu0 %v5799
  %5921 = vmatpush1.msra.mxu0 %v5798
  %5922 = vmatprep.subr.mxu0 %v5801
  %5923 = vmatpush1.msra.mxu0 %v5800
  %5924 = vmatprep.subr.mxu0 %v5803
  %5925 = vmatpush1.msra.mxu0 %v5802
  %5926 = vmatprep.subr.mxu0 %v5805
  %5927 = vmatpush1.msra.mxu0 %v5804
  %5928 = vmatprep.subr.mxu0 %v5807
  %5929 = vmatpush1.msra.mxu0 %v5806
  %5930 = vmatprep.subr.mxu0 %v5809
  %5931 = vmatpush1.msra.mxu0 %v5808
  %5932 = vmatprep.subr.mxu0 %v5811
  %5933 = vmatpush1.msra.mxu0 %v5810
  %5934 = vmatprep.subr.mxu0 %v5813
  %5935 = vmatpush1.msra.mxu0 %v5812
  %5936 = vmatprep.subr.mxu0 %v5815
  %5937 = vmatpush1.msra.mxu0 %v5814
  %5938 = vmatprep.subr.mxu0 %v5817
  %5939 = vmatpush1.msra.mxu0 %v5816
  %5940 = vmatprep.subr.mxu0 %v5819
  %5941 = vmatpush1.msra.mxu0 %v5818
  %5942 = vmatprep.subr.mxu0 %v5821
  %5943 = vmatpush1.msra.mxu0 %v5820
  %5944 = vmatprep.subr.mxu0 %v5823
  %5945 = vmatpush1.msra.mxu0 %v5822
  %5946 = vmatprep.subr.mxu0 %v5825
  %5947 = vmatpush1.msra.mxu0 %v5824
  %5948 = vmatprep.subr.mxu0 %v5827
  %5949 = vmatpush1.msra.mxu0 %v5826
  %5950 = vmatprep.subr.mxu0 %v5829
  %5951 = vmatpush1.msra.mxu0 %v5828
  %5952 = vmatprep.subr.mxu0 %v5831
  %5953 = vmatpush1.msra.mxu0 %v5830
  %5954 = vmatprep.subr.mxu0 %v5833
  %5955 = vmatpush1.msra.mxu0 %v5832
  %5956 = vmatprep.subr.mxu0 %v5835
  %5957 = vmatpush1.msra.mxu0 %v5834
  %5958 = vmatprep.subr.mxu0 %v5837
  %5959 = vmatpush1.msra.mxu0 %v5836
  %5960 = vmatprep.subr.mxu0 %v5839
  %5961 = vmatpush1.msra.mxu0 %v5838
  %5962 = vmatprep.subr.mxu0 %v5841
  %5963 = vmatpush1.msra.mxu0 %v5840
  %5964 = vmatprep.mubr.f32.mxu0 %v5771
  %5965 = vmatmul.mubr.f32.gmra.mrb[0].mxu0 %v5770
  %v5966 = vpop.f32.mrb[0].mxu0
  %v5967 = vadd.f32 %v5884, %v5966
  %v5968 = vpop.f32.mrb[0].mxu0
  %v5969 = vadd.f32 %v5885, %v5968
  %5970 = vmatprep.mubr.f32.mxu0 %v5775
  %5971 = vmatmul.mubr.f32.gmra.mrb[0].mxu0 %v5774
  %v5972 = vpop.f32.mrb[0].mxu0
  %v5973 = vadd.f32 %v5886, %v5972
  %v5974 = vpop.f32.mrb[0].mxu0
  %v5975 = vadd.f32 %v5887, %v5974
  %5976 = vdwg.mxu0
  %5977 = vmatprep.subr.mxu0 %v5843
  %5978 = vmatpush1.msra.mxu0 %v5842
  %5979 = vmatprep.subr.mxu0 %v5845
  %5980 = vmatpush1.msra.mxu0 %v5844
  %5981 = vmatprep.subr.mxu0 %v5847
  %5982 = vmatpush1.msra.mxu0 %v5846
  %5983 = vmatprep.subr.mxu0 %v5849
  %5984 = vmatpush1.msra.mxu0 %v5848
  %5985 = vmatprep.subr.mxu0 %v5851
  %5986 = vmatpush1.msra.mxu0 %v5850
  %5987 = vmatprep.subr.mxu0 %v5853
  %5988 = vmatpush1.msra.mxu0 %v5852
  %5989 = vmatprep.subr.mxu0 %v5855
  %5990 = vmatpush1.msra.mxu0 %v5854
  %5991 = vmatprep.subr.mxu0 %v5857
  %5992 = vmatpush1.msra.mxu0 %v5856
  %5993 = vmatprep.subr.mxu0 %v5859
  %5994 = vmatpush1.msra.mxu0 %v5858
  %5995 = vmatprep.subr.mxu0 %v5861
  %5996 = vmatpush1.msra.mxu0 %v5860
  %5997 = vmatprep.subr.mxu0 %v5863
  %5998 = vmatpush1.msra.mxu0 %v5862
  %5999 = vmatprep.subr.mxu0 %v5865
  %6000 = vmatpush1.msra.mxu0 %v5864
  %6001 = vmatprep.subr.mxu0 %v5867
  %6002 = vmatpush1.msra.mxu0 %v5866
  %6003 = vmatprep.subr.mxu0 %v5869
  %6004 = vmatpush1.msra.mxu0 %v5868
  %6005 = vmatprep.subr.mxu0 %v5871
  %6006 = vmatpush1.msra.mxu0 %v5870
  %6007 = vmatprep.subr.mxu0 %v5873
  %6008 = vmatpush1.msra.mxu0 %v5872
  %6009 = vmatprep.subr.mxu0 %v5875
  %6010 = vmatpush1.msra.mxu0 %v5874
  %6011 = vmatprep.subr.mxu0 %v5877
  %6012 = vmatpush1.msra.mxu0 %v5876
  %6013 = vmatprep.subr.mxu0 %v5879
  %6014 = vmatpush1.msra.mxu0 %v5878
  %6015 = vmatprep.subr.mxu0 %v5881
  %6016 = vmatpush1.msra.mxu0 %v5880
  %6017 = vmatprep.subr.mxu0 %v5898
  %6018 = vmatpush1.msra.mxu0 %v5895
  %6019 = vmatprep.subr.mxu0 0.0
  %6020 = vmatpush1.msra.mxu0 0.0
  %6021 = vmatprep.subr.mxu0 0.0
  %6022 = vmatpush1.msra.mxu0 0.0
  %6023 = vmatprep.subr.mxu0 0.0
  %6024 = vmatpush1.msra.mxu0 0.0
  %6025 = vmatprep.subr.mxu0 0.0
  %6026 = vmatpush1.msra.mxu0 0.0
  %6027 = vmatprep.subr.mxu0 0.0
  %6028 = vmatpush1.msra.mxu0 0.0
  %6029 = vmatprep.subr.mxu0 0.0
  %6030 = vmatpush1.msra.mxu0 0.0
  %6031 = vmatprep.subr.mxu0 0.0
  %6032 = vmatpush1.msra.mxu0 0.0
  %6033 = vmatprep.subr.mxu0 0.0
  %6034 = vmatpush1.msra.mxu0 0.0
  %6035 = vmatprep.subr.mxu0 0.0
  %6036 = vmatpush1.msra.mxu0 0.0
  %6037 = vmatprep.subr.mxu0 0.0
  %6038 = vmatpush1.msra.mxu0 0.0
  %6039 = vmatprep.subr.mxu0 0.0
  %6040 = vmatpush1.msra.mxu0 0.0
  %6041 = vmatprep.mubr.f32.mxu0 %v5889
  %6042 = vmatmul.mubr.f32.gmra.mrb[0].mxu0 %v5772
  %v6043 = vpop.f32.mrb[0].mxu0
  %v6044 = vadd.f32 %v5967, %v6043
  %v6045 = vpop.f32.mrb[0].mxu0
  %v6046 = vadd.f32 %v5969, %v6045
  %6047 = vmatprep.mubr.f32.mxu0 %v5892
  %6048 = vmatmul.mubr.f32.gmra.mrb[0].mxu0 %v5776
  %v6049 = vpop.f32.mrb[0].mxu0
  %v6050 = vadd.f32 %v5973, %v6049
  %v6051 = vpop.f32.mrb[0].mxu0
  %v6052 = vadd.f32 %v5975, %v6051
  %6053 = vdwg.mxu0
  %v6054 = vxor.u32 %v6044, 2147483648
  %v6055 = vxor.u32 %v6046, 2147483648
  %v6056 = vxor.u32 %v6050, 2147483648
  %v6057 = vxor.u32 %v6052, 2147483648
  %v6058 = vmul.f32 %v6054, 1.442695
  %v6059 = vpow.pop %v6058
  %v6060 = vmul.f32 %v6055, 1.442695
  %v6061 = vpow.pop %v6060
  %v6062 = vmul.f32 %v6056, 1.442695
  %v6063 = vpow.pop %v6062
  %v6064 = vmul.f32 %v6057, 1.442695
  %v6065 = vpow.pop %v6064
  %v6066 = vadd.f32 %v6059, 1.0
  %v6067 = vadd.f32 %v6061, 1.0
  %v6068 = vadd.f32 %v6063, 1.0
  %v6069 = vadd.f32 %v6065, 1.0
  %v6070 = vrcp.pop %v6066
  %v6071 = vmul.f32 1.0, %v6070
  %v6072 = vrcp.pop %v6067
  %v6073 = vmul.f32 1.0, %v6072
  %v6074 = vrcp.pop %v6068
  %v6075 = vmul.f32 1.0, %v6074
  %v6076 = vrcp.pop %v6069
  %v6077 = vmul.f32 1.0, %v6076
  %v6078 = vld [vmem:[%s7] sm:$0x1f]
  %v6080 = vsel %vm928, %v6078, 0
  %v6083 = vsel %vm932, %v6075, 0
  %v6086 = vsel %vm932, %v6077, 0
  %6088 = vmatprep.subr.mxu0 %v6073
  %6089 = vmatpush1.msra.mxu0 %v6071
  %6090 = vmatprep.subr.mxu0 %v6086
  %6091 = vmatpush1.msra.mxu0 %v6083
  %6092 = vmatprep.subr.mxu0 0.0
  %6093 = vmatpush1.msra.mxu0 0.0
  %6094 = vmatprep.subr.mxu0 0.0
  %6095 = vmatpush1.msra.mxu0 0.0
  %6096 = vmatprep.subr.mxu0 0.0
  %6097 = vmatpush1.msra.mxu0 0.0
  %6098 = vmatprep.subr.mxu0 0.0
  %6099 = vmatpush1.msra.mxu0 0.0
  %6100 = vmatprep.subr.mxu0 0.0
  %6101 = vmatpush1.msra.mxu0 0.0
  %6102 = vmatprep.subr.mxu0 0.0
  %6103 = vmatpush1.msra.mxu0 0.0
  %6104 = vmatprep.subr.mxu0 0.0
  %6105 = vmatpush1.msra.mxu0 0.0
  %6106 = vmatprep.subr.mxu0 0.0
  %6107 = vmatpush1.msra.mxu0 0.0
  %6108 = vmatprep.subr.mxu0 0.0
  %6109 = vmatpush1.msra.mxu0 0.0
  %6110 = vmatprep.subr.mxu0 0.0
  %6111 = vmatpush1.msra.mxu0 0.0
  %6112 = vmatprep.subr.mxu0 0.0
  %6113 = vmatpush1.msra.mxu0 0.0
  %6114 = vmatprep.subr.mxu0 0.0
  %6115 = vmatpush1.msra.mxu0 0.0
  %6116 = vmatprep.subr.mxu0 0.0
  %6117 = vmatpush1.msra.mxu0 0.0
  %6118 = vmatprep.subr.mxu0 0.0
  %6119 = vmatpush1.msra.mxu0 0.0
  %6120 = vmatprep.subr.mxu0 0.0
  %6121 = vmatpush1.msra.mxu0 0.0
  %6122 = vmatprep.subr.mxu0 0.0
  %6123 = vmatpush1.msra.mxu0 0.0
  %6124 = vmatprep.subr.mxu0 0.0
  %6125 = vmatpush1.msra.mxu0 0.0
  %6126 = vmatprep.subr.mxu0 0.0
  %6127 = vmatpush1.msra.mxu0 0.0
  %6128 = vmatprep.subr.mxu0 0.0
  %6129 = vmatpush1.msra.mxu0 0.0
  %6130 = vmatprep.subr.mxu0 0.0
  %6131 = vmatpush1.msra.mxu0 0.0
  %6132 = vmatprep.subr.mxu0 0.0
  %6133 = vmatpush1.msra.mxu0 0.0
  %6134 = vmatprep.subr.mxu0 0.0
  %6135 = vmatpush1.msra.mxu0 0.0
  %6136 = vmatprep.subr.mxu0 0.0
  %6137 = vmatpush1.msra.mxu0 0.0
  %6138 = vmatprep.subr.mxu0 0.0
  %6139 = vmatpush1.msra.mxu0 0.0
  %6140 = vmatprep.subr.mxu0 0.0
  %6141 = vmatpush1.msra.mxu0 0.0
  %6142 = vmatprep.subr.mxu0 0.0
  %6143 = vmatpush1.msra.mxu0 0.0
  %6144 = vmatprep.subr.mxu0 0.0
  %6145 = vmatpush1.msra.mxu0 0.0
  %6146 = vmatprep.subr.mxu0 0.0
  %6147 = vmatpush1.msra.mxu0 0.0
  %6148 = vmatprep.subr.mxu0 0.0
  %6149 = vmatpush1.msra.mxu0 0.0
  %6150 = vmatprep.subr.mxu0 0.0
  %6151 = vmatpush1.msra.mxu0 0.0
  %6152 = vmatprep.mubr.f32.mxu0 0.0
  %6153 = vmatmul.mubr.f32.gmra.mrb[0].mxu0 %v6080
  %v6154 = vpop.f32.mrb[0].mxu0
  %v6155 = vadd.f32 0.0, %v6154
  %v6156 = vpop.f32.mrb[0].mxu0
  %v6157 = vadd.f32 0.0, %v6156
  %6158 = vdwg.mxu0
  %v6159 = vld [vmem:[%s8] sm:$0xff]
  %v6160 = vld [vmem:[%s8 + $0x8] sm:$0xff]
  %v6161 = vld [vmem:[%s8 + $0x10] sm:$0xff]
  %v6162 = vld [vmem:[%s8 + $0x18] sm:$0xff]
  %v6163 = vld [vmem:[%s8 + $0x20] sm:$0xff]
  %v6164 = vld [vmem:[%s8 + $0x28] sm:$0xff]
  %v6165 = vld [vmem:[%s8 + $0x30] sm:$0xff]
  %v6166 = vld [vmem:[%s8 + $0x38] sm:$0xff]
  %v6167 = vld [vmem:[%s8 + $0x40] sm:$0xff]
  %v6168 = vld [vmem:[%s8 + $0x48] sm:$0xff]
  %v6169 = vld [vmem:[%s8 + $0x50] sm:$0xff]
  %v6170 = vld [vmem:[%s8 + $0x58] sm:$0xff]
  %v6171 = vld [vmem:[%s8 + $0x60] sm:$0xff]
  %v6172 = vld [vmem:[%s8 + $0x68] sm:$0xff]
  %v6173 = vld [vmem:[%s8 + $0x70] sm:$0xff]
  %v6174 = vld [vmem:[%s8 + $0x78] sm:$0xff]
  %v6175 = vld [vmem:[%s8 + $0x80] sm:$0xff]
  %v6176 = vld [vmem:[%s8 + $0x88] sm:$0xff]
  %v6177 = vld [vmem:[%s8 + $0x90] sm:$0xff]
  %v6178 = vld [vmem:[%s8 + $0x98] sm:$0xff]
  %v6180 = vsel %vm54, %v6157, 0
  %6182 = vmatprep.subr.mxu0 0.0
  %6183 = vmatpush1.msra.mxu0 %v6159
  %6184 = vmatprep.subr.mxu0 0.0
  %6185 = vmatpush1.msra.mxu0 %v6160
  %6186 = vmatprep.subr.mxu0 0.0
  %6187 = vmatpush1.msra.mxu0 %v6161
  %6188 = vmatprep.subr.mxu0 0.0
  %6189 = vmatpush1.msra.mxu0 %v6162
  %6190 = vmatprep.subr.mxu0 0.0
  %6191 = vmatpush1.msra.mxu0 %v6163
  %6192 = vmatprep.subr.mxu0 0.0
  %6193 = vmatpush1.msra.mxu0 %v6164
  %6194 = vmatprep.subr.mxu0 0.0
  %6195 = vmatpush1.msra.mxu0 %v6165
  %6196 = vmatprep.subr.mxu0 0.0
  %6197 = vmatpush1.msra.mxu0 %v6166
  %6198 = vmatprep.subr.mxu0 0.0
  %6199 = vmatpush1.msra.mxu0 %v6167
  %6200 = vmatprep.subr.mxu0 0.0
  %6201 = vmatpush1.msra.mxu0 %v6168
  %6202 = vmatprep.subr.mxu0 0.0
  %6203 = vmatpush1.msra.mxu0 %v6169
  %6204 = vmatprep.subr.mxu0 0.0
  %6205 = vmatpush1.msra.mxu0 %v6170
  %6206 = vmatprep.subr.mxu0 0.0
  %6207 = vmatpush1.msra.mxu0 %v6171
  %6208 = vmatprep.subr.mxu0 0.0
  %6209 = vmatpush1.msra.mxu0 %v6172
  %6210 = vmatprep.subr.mxu0 0.0
  %6211 = vmatpush1.msra.mxu0 %v6173
  %6212 = vmatprep.subr.mxu0 0.0
  %6213 = vmatpush1.msra.mxu0 %v6174
  %6214 = vmatprep.subr.mxu0 0.0
  %6215 = vmatpush1.msra.mxu0 %v6175
  %6216 = vmatprep.subr.mxu0 0.0
  %6217 = vmatpush1.msra.mxu0 %v6176
  %6218 = vmatprep.subr.mxu0 0.0
  %6219 = vmatpush1.msra.mxu0 %v6177
  %6220 = vmatprep.subr.mxu0 0.0
  %6221 = vmatpush1.msra.mxu0 %v6178
  %6222 = vmatprep.subr.mxu0 0.0
  %6223 = vmatpush1.msra.mxu0 0.0
  %6224 = vmatprep.subr.mxu0 0.0
  %6225 = vmatpush1.msra.mxu0 0.0
  %6226 = vmatprep.subr.mxu0 0.0
  %6227 = vmatpush1.msra.mxu0 0.0
  %6228 = vmatprep.subr.mxu0 0.0
  %6229 = vmatpush1.msra.mxu0 0.0
  %6230 = vmatprep.subr.mxu0 0.0
  %6231 = vmatpush1.msra.mxu0 0.0
  %6232 = vmatprep.subr.mxu0 0.0
  %6233 = vmatpush1.msra.mxu0 0.0
  %6234 = vmatprep.subr.mxu0 0.0
  %6235 = vmatpush1.msra.mxu0 0.0
  %6236 = vmatprep.subr.mxu0 0.0
  %6237 = vmatpush1.msra.mxu0 0.0
  %6238 = vmatprep.subr.mxu0 0.0
  %6239 = vmatpush1.msra.mxu0 0.0
  %6240 = vmatprep.subr.mxu0 0.0
  %6241 = vmatpush1.msra.mxu0 0.0
  %6242 = vmatprep.subr.mxu0 0.0
  %6243 = vmatpush1.msra.mxu0 0.0
  %6244 = vmatprep.subr.mxu0 0.0
  %6245 = vmatpush1.msra.mxu0 0.0
  %6246 = vmatprep.mubr.f32.mxu0 %v6180
  %6247 = vmatmul.mubr.f32.gmra.mrb[0].mxu0 %v6155
  %v6248 = vpop.f32.mrb[0].mxu0
  %v6249 = vadd.f32 0.0, %v6248
  %v6250 = vpop.f32.mrb[0].mxu0
  %6251 = vdwg.mxu0
  %6252 = vst.msk [vmem:[#allocation4 + $0x5] sm:$0x1] %vm1103, %v6249
  %6253 = vst.msk [vmem:[%s1105 + $0x4] sm:$0x2] %vm1106, %v6249
  %6254 = vst.msk [vmem:[%s1108 + $0x3] sm:$0x4] %vm1109, %v6249
  %6255 = vst.msk [vmem:[%s1111 + $0x2] sm:$0x8] %vm1112, %v6249
  %6256 = vst.msk [vmem:[%s1114 + $0x1] sm:$0x10] %vm1115, %v6249
  %s6257 = scalar_lea.vmem %s0, 192
  %v6258 = vld [vmem:[%s6257] sm:$0xff]
  %v6259 = vld [vmem:[%s6257 + $0x8] sm:$0xff]
  %v6260 = vld [vmem:[%s6257 + $0x10] sm:$0xff]
  %v6261 = vld [vmem:[%s6257 + $0x18] sm:$0xf]
  %6262 = vst.msk [vmem:[#allocation2] sm:$0xff] %vm54, %v6258
  %6263 = vst.msk [vmem:[#allocation2 + $0x10] sm:$0xff] %vm54, %v6259
  %6264 = vst.msk [vmem:[#allocation2 + $0x20] sm:$0xff] %vm54, %v6260
  %6265 = vst.msk [vmem:[#allocation2 + $0x30] sm:$0xf] %vm58, %v6261
  %v6266 = vld [vmem:[%s6257 + $0x1] sm:$0xff]
  %v6267 = vld [vmem:[%s6257 + $0x9] sm:$0xff]
  %v6268 = vld [vmem:[%s6257 + $0x11] sm:$0xff]
  %v6269 = vld [vmem:[%s6257 + $0x19] sm:$0xf]
  %6274 = vrot.lane.b32.xlu0 %v6266, 32
  %v6275 = vpop.permute.xlu0 %6274
  %6276 = vrot.lane.b32.xlu0 %v6267, 32
  %v6277 = vpop.permute.xlu0 %6276
  %6278 = vrot.lane.b32.xlu0 %v6268, 32
  %v6279 = vpop.permute.xlu0 %6278
  %6280 = vrot.lane.b32.xlu0 %v6269, 32
  %v6281 = vpop.permute.xlu0 %6280
  %6286 = vst.msk [vmem:[#allocation2] sm:$0xff] %vm80, %v6275
  %6287 = vst.msk [vmem:[#allocation2 + $0x10] sm:$0xff] %vm80, %v6277
  %6288 = vst.msk [vmem:[#allocation2 + $0x20] sm:$0xff] %vm80, %v6279
  %6289 = vst.msk [vmem:[#allocation2 + $0x30] sm:$0xf] %vm84, %v6281
  %v6290 = vld [vmem:[%s6257 + $0x2] sm:$0xff]
  %v6291 = vld [vmem:[%s6257 + $0xa] sm:$0xff]
  %v6292 = vld [vmem:[%s6257 + $0x12] sm:$0xff]
  %v6293 = vld [vmem:[%s6257 + $0x1a] sm:$0xf]
  %6298 = vrot.lane.b32.xlu0 %v6290, 64
  %v6299 = vpop.permute.xlu0 %6298
  %6300 = vrot.lane.b32.xlu0 %v6291, 64
  %v6301 = vpop.permute.xlu0 %6300
  %6302 = vrot.lane.b32.xlu0 %v6292, 64
  %v6303 = vpop.permute.xlu0 %6302
  %6304 = vrot.lane.b32.xlu0 %v6293, 64
  %v6305 = vpop.permute.xlu0 %6304
  %6310 = vst.msk [vmem:[#allocation2] sm:$0xff] %vm106, %v6299
  %6311 = vst.msk [vmem:[#allocation2 + $0x10] sm:$0xff] %vm106, %v6301
  %6312 = vst.msk [vmem:[#allocation2 + $0x20] sm:$0xff] %vm106, %v6303
  %6313 = vst.msk [vmem:[#allocation2 + $0x30] sm:$0xf] %vm110, %v6305
  %v6314 = vld [vmem:[%s6257 + $0x3] sm:$0xff]
  %v6315 = vld [vmem:[%s6257 + $0xb] sm:$0xff]
  %v6316 = vld [vmem:[%s6257 + $0x13] sm:$0xff]
  %v6317 = vld [vmem:[%s6257 + $0x1b] sm:$0xf]
  %6322 = vrot.lane.b32.xlu0 %v6314, 96
  %v6323 = vpop.permute.xlu0 %6322
  %6324 = vrot.lane.b32.xlu0 %v6315, 96
  %v6325 = vpop.permute.xlu0 %6324
  %6326 = vrot.lane.b32.xlu0 %v6316, 96
  %v6327 = vpop.permute.xlu0 %6326
  %6328 = vrot.lane.b32.xlu0 %v6317, 96
  %v6329 = vpop.permute.xlu0 %6328
  %6334 = vst.msk [vmem:[#allocation2] sm:$0xff] %vm132, %v6323
  %6335 = vst.msk [vmem:[#allocation2 + $0x10] sm:$0xff] %vm132, %v6325
  %6336 = vst.msk [vmem:[#allocation2 + $0x20] sm:$0xff] %vm132, %v6327
  %6337 = vst.msk [vmem:[#allocation2 + $0x30] sm:$0xf] %vm136, %v6329
  %v6338 = vld [vmem:[%s6257 + $0x4] sm:$0xff]
  %v6339 = vld [vmem:[%s6257 + $0xc] sm:$0xff]
  %v6340 = vld [vmem:[%s6257 + $0x14] sm:$0xff]
  %v6341 = vld [vmem:[%s6257 + $0x1c] sm:$0xf]
  %6342 = vst.msk [vmem:[#allocation2 + $0x8] sm:$0xff] %vm54, %v6338
  %6343 = vst.msk [vmem:[#allocation2 + $0x18] sm:$0xff] %vm54, %v6339
  %6344 = vst.msk [vmem:[#allocation2 + $0x28] sm:$0xff] %vm54, %v6340
  %6345 = vst.msk [vmem:[#allocation2 + $0x38] sm:$0xf] %vm58, %v6341
  %v6346 = vld [vmem:[#allocation2] sm:$0xff]
  %v6347 = vld [vmem:[#allocation2 + $0x8] sm:$0xff]
  %v6348 = vld [vmem:[#allocation2 + $0x10] sm:$0xff]
  %v6349 = vld [vmem:[#allocation2 + $0x18] sm:$0xff]
  %v6350 = vld [vmem:[#allocation2 + $0x20] sm:$0xff]
  %v6351 = vld [vmem:[#allocation2 + $0x28] sm:$0xff]
  %v6352 = vld [vmem:[#allocation2 + $0x30] sm:$0xf]
  %v6353 = vld [vmem:[#allocation2 + $0x38] sm:$0xf]
  %v6354 = vld [vmem:[%s1] sm:$0xff]
  %v6355 = vld [vmem:[%s1 + $0x8] sm:$0xff]
  %v6356 = vld [vmem:[%s1 + $0x10] sm:$0xff]
  %v6357 = vld [vmem:[%s1 + $0x18] sm:$0xff]
  %v6358 = vld [vmem:[%s1 + $0x20] sm:$0xff]
  %v6359 = vld [vmem:[%s1 + $0x28] sm:$0xff]
  %v6360 = vld [vmem:[%s1 + $0x30] sm:$0xff]
  %v6361 = vld [vmem:[%s1 + $0x38] sm:$0xff]
  %v6362 = vld [vmem:[%s1 + $0x40] sm:$0xff]
  %v6363 = vld [vmem:[%s1 + $0x48] sm:$0xff]
  %v6364 = vld [vmem:[%s1 + $0x50] sm:$0xff]
  %v6365 = vld [vmem:[%s1 + $0x58] sm:$0xff]
  %v6366 = vld [vmem:[%s1 + $0x60] sm:$0xff]
  %v6367 = vld [vmem:[%s1 + $0x68] sm:$0xff]
  %v6368 = vld [vmem:[%s1 + $0x70] sm:$0xff]
  %v6369 = vld [vmem:[%s1 + $0x78] sm:$0xff]
  %v6370 = vld [vmem:[%s1 + $0x80] sm:$0xff]
  %v6371 = vld [vmem:[%s1 + $0x88] sm:$0xff]
  %v6372 = vld [vmem:[%s1 + $0x90] sm:$0xff]
  %v6373 = vld [vmem:[%s1 + $0x98] sm:$0xff]
  %v6374 = vld [vmem:[%s1 + $0xa0] sm:$0xff]
  %v6375 = vld [vmem:[%s1 + $0xa8] sm:$0xff]
  %v6376 = vld [vmem:[%s1 + $0xb0] sm:$0xff]
  %v6377 = vld [vmem:[%s1 + $0xb8] sm:$0xff]
  %v6378 = vld [vmem:[%s1 + $0xc0] sm:$0xff]
  %v6379 = vld [vmem:[%s1 + $0xc8] sm:$0xff]
  %v6380 = vld [vmem:[%s1 + $0xd0] sm:$0xff]
  %v6381 = vld [vmem:[%s1 + $0xd8] sm:$0xff]
  %v6382 = vld [vmem:[%s1 + $0xe0] sm:$0xff]
  %v6383 = vld [vmem:[%s1 + $0xe8] sm:$0xff]
  %v6384 = vld [vmem:[%s1 + $0xf0] sm:$0xff]
  %v6385 = vld [vmem:[%s1 + $0xf8] sm:$0xff]
  %v6386 = vld [vmem:[%s1 + $0x100] sm:$0xff]
  %v6387 = vld [vmem:[%s1 + $0x108] sm:$0xff]
  %v6388 = vld [vmem:[%s1 + $0x110] sm:$0xff]
  %v6389 = vld [vmem:[%s1 + $0x118] sm:$0xff]
  %v6390 = vld [vmem:[%s1 + $0x120] sm:$0xff]
  %v6391 = vld [vmem:[%s1 + $0x128] sm:$0xff]
  %v6392 = vld [vmem:[%s1 + $0x130] sm:$0xff]
  %v6393 = vld [vmem:[%s1 + $0x138] sm:$0xff]
  %v6394 = vld [vmem:[%s2] sm:$0xff]
  %v6395 = vld [vmem:[%s2 + $0x8] sm:$0xff]
  %v6396 = vld [vmem:[%s2 + $0x10] sm:$0xff]
  %v6397 = vld [vmem:[%s2 + $0x18] sm:$0xff]
  %v6398 = vld [vmem:[%s2 + $0x20] sm:$0xff]
  %v6399 = vld [vmem:[%s2 + $0x28] sm:$0xff]
  %v6400 = vld [vmem:[%s2 + $0x30] sm:$0xf]
  %v6401 = vld [vmem:[%s2 + $0x38] sm:$0xf]
  %v6403 = vsel %vm54, %v6347, 0
  %v6406 = vsel %vm54, %v6349, 0
  %v6409 = vsel %vm54, %v6351, 0
  %v6412 = vsel %vm54, %v6353, 0
  %6414 = vmatprep.subr.mxu0 %v6355
  %6415 = vmatpush1.msra.mxu0 %v6354
  %6416 = vmatprep.subr.mxu0 %v6357
  %6417 = vmatpush1.msra.mxu0 %v6356
  %6418 = vmatprep.subr.mxu0 %v6359
  %6419 = vmatpush1.msra.mxu0 %v6358
  %6420 = vmatprep.subr.mxu0 %v6361
  %6421 = vmatpush1.msra.mxu0 %v6360
  %6422 = vmatprep.subr.mxu0 %v6363
  %6423 = vmatpush1.msra.mxu0 %v6362
  %6424 = vmatprep.subr.mxu0 %v6365
  %6425 = vmatpush1.msra.mxu0 %v6364
  %6426 = vmatprep.subr.mxu0 %v6367
  %6427 = vmatpush1.msra.mxu0 %v6366
  %6428 = vmatprep.subr.mxu0 %v6369
  %6429 = vmatpush1.msra.mxu0 %v6368
  %6430 = vmatprep.subr.mxu0 %v6371
  %6431 = vmatpush1.msra.mxu0 %v6370
  %6432 = vmatprep.subr.mxu0 %v6373
  %6433 = vmatpush1.msra.mxu0 %v6372
  %6434 = vmatprep.subr.mxu0 %v6375
  %6435 = vmatpush1.msra.mxu0 %v6374
  %6436 = vmatprep.subr.mxu0 %v6377
  %6437 = vmatpush1.msra.mxu0 %v6376
  %6438 = vmatprep.subr.mxu0 %v6379
  %6439 = vmatpush1.msra.mxu0 %v6378
  %6440 = vmatprep.subr.mxu0 %v6381
  %6441 = vmatpush1.msra.mxu0 %v6380
  %6442 = vmatprep.subr.mxu0 %v6383
  %6443 = vmatpush1.msra.mxu0 %v6382
  %6444 = vmatprep.subr.mxu0 %v6385
  %6445 = vmatpush1.msra.mxu0 %v6384
  %6446 = vmatprep.subr.mxu0 %v6387
  %6447 = vmatpush1.msra.mxu0 %v6386
  %6448 = vmatprep.subr.mxu0 %v6389
  %6449 = vmatpush1.msra.mxu0 %v6388
  %6450 = vmatprep.subr.mxu0 %v6391
  %6451 = vmatpush1.msra.mxu0 %v6390
  %6452 = vmatprep.subr.mxu0 %v6393
  %6453 = vmatpush1.msra.mxu0 %v6392
  %6454 = vmatprep.subr.mxu0 0.0
  %6455 = vmatpush1.msra.mxu0 0.0
  %6456 = vmatprep.subr.mxu0 0.0
  %6457 = vmatpush1.msra.mxu0 0.0
  %6458 = vmatprep.subr.mxu0 0.0
  %6459 = vmatpush1.msra.mxu0 0.0
  %6460 = vmatprep.subr.mxu0 0.0
  %6461 = vmatpush1.msra.mxu0 0.0
  %6462 = vmatprep.subr.mxu0 0.0
  %6463 = vmatpush1.msra.mxu0 0.0
  %6464 = vmatprep.subr.mxu0 0.0
  %6465 = vmatpush1.msra.mxu0 0.0
  %6466 = vmatprep.subr.mxu0 0.0
  %6467 = vmatpush1.msra.mxu0 0.0
  %6468 = vmatprep.subr.mxu0 0.0
  %6469 = vmatpush1.msra.mxu0 0.0
  %6470 = vmatprep.subr.mxu0 0.0
  %6471 = vmatpush1.msra.mxu0 0.0
  %6472 = vmatprep.subr.mxu0 0.0
  %6473 = vmatpush1.msra.mxu0 0.0
  %6474 = vmatprep.subr.mxu0 0.0
  %6475 = vmatpush1.msra.mxu0 0.0
  %6476 = vmatprep.subr.mxu0 0.0
  %6477 = vmatpush1.msra.mxu0 0.0
  %6478 = vmatprep.mubr.f32.mxu0 %v6403
  %6479 = vmatmul.mubr.f32.gmra.mrb[0].mxu0 %v6346
  %v6480 = vpop.f32.mrb[0].mxu0
  %v6481 = vadd.f32 %v6394, %v6480
  %v6482 = vpop.f32.mrb[0].mxu0
  %v6483 = vadd.f32 %v6395, %v6482
  %6484 = vmatprep.mubr.f32.mxu0 %v6406
  %6485 = vmatmul.mubr.f32.gmra.mrb[0].mxu0 %v6348
  %v6486 = vpop.f32.mrb[0].mxu0
  %v6487 = vadd.f32 %v6396, %v6486
  %v6488 = vpop.f32.mrb[0].mxu0
  %v6489 = vadd.f32 %v6397, %v6488
  %6490 = vmatprep.mubr.f32.mxu0 %v6409
  %6491 = vmatmul.mubr.f32.gmra.mrb[0].mxu0 %v6350
  %v6492 = vpop.f32.mrb[0].mxu0
  %v6493 = vadd.f32 %v6398, %v6492
  %v6494 = vpop.f32.mrb[0].mxu0
  %v6495 = vadd.f32 %v6399, %v6494
  %6496 = vmatprep.mubr.f32.mxu0 %v6412
  %6497 = vmatmul.mubr.f32.gmra.mrb[0].mxu0 %v6352
  %v6498 = vpop.f32.mrb[0].mxu0
  %v6499 = vadd.f32 %v6400, %v6498
  %v6500 = vpop.f32.mrb[0].mxu0
  %v6501 = vadd.f32 %v6401, %v6500
  %6502 = vdwg.mxu0
  %v6503 = vxor.u32 %v6481, 2147483648
  %v6504 = vxor.u32 %v6483, 2147483648
  %v6505 = vxor.u32 %v6487, 2147483648
  %v6506 = vxor.u32 %v6489, 2147483648
  %v6507 = vxor.u32 %v6493, 2147483648
  %v6508 = vxor.u32 %v6495, 2147483648
  %v6509 = vxor.u32 %v6499, 2147483648
  %v6510 = vxor.u32 %v6501, 2147483648
  %v6511 = vmul.f32 %v6503, 1.442695
  %v6512 = vpow.pop %v6511
  %v6513 = vmul.f32 %v6504, 1.442695
  %v6514 = vpow.pop %v6513
  %v6515 = vmul.f32 %v6505, 1.442695
  %v6516 = vpow.pop %v6515
  %v6517 = vmul.f32 %v6506, 1.442695
  %v6518 = vpow.pop %v6517
  %v6519 = vmul.f32 %v6507, 1.442695
  %v6520 = vpow.pop %v6519
  %v6521 = vmul.f32 %v6508, 1.442695
  %v6522 = vpow.pop %v6521
  %v6523 = vmul.f32 %v6509, 1.442695
  %v6524 = vpow.pop %v6523
  %v6525 = vmul.f32 %v6510, 1.442695
  %v6526 = vpow.pop %v6525
  %v6527 = vadd.f32 %v6512, 1.0
  %v6528 = vadd.f32 %v6514, 1.0
  %v6529 = vadd.f32 %v6516, 1.0
  %v6530 = vadd.f32 %v6518, 1.0
  %v6531 = vadd.f32 %v6520, 1.0
  %v6532 = vadd.f32 %v6522, 1.0
  %v6533 = vadd.f32 %v6524, 1.0
  %v6534 = vadd.f32 %v6526, 1.0
  %v6535 = vrcp.pop %v6527
  %v6536 = vmul.f32 1.0, %v6535
  %v6537 = vrcp.pop %v6528
  %v6538 = vmul.f32 1.0, %v6537
  %v6539 = vrcp.pop %v6529
  %v6540 = vmul.f32 1.0, %v6539
  %v6541 = vrcp.pop %v6530
  %v6542 = vmul.f32 1.0, %v6541
  %v6543 = vrcp.pop %v6531
  %v6544 = vmul.f32 1.0, %v6543
  %v6545 = vrcp.pop %v6532
  %v6546 = vmul.f32 1.0, %v6545
  %v6547 = vrcp.pop %v6533
  %v6548 = vmul.f32 1.0, %v6547
  %v6549 = vrcp.pop %v6534
  %v6550 = vmul.f32 1.0, %v6549
  %v6551 = vld [vmem:[%s3] sm:$0xff]
  %v6552 = vld [vmem:[%s3 + $0x8] sm:$0x3f]
  %v6554 = vsel %vm353, %v6551, 0
  %v6557 = vsel %vm353, %v6552, 0
  %v6560 = vsel %vm360, %v6548, 0
  %v6563 = vsel %vm360, %v6550, 0
  %6565 = vmatprep.subr.mxu0 %v6538
  %6566 = vmatpush1.msra.mxu0 %v6536
  %6567 = vmatprep.subr.mxu0 %v6542
  %6568 = vmatpush1.msra.mxu0 %v6540
  %6569 = vmatprep.subr.mxu0 %v6546
  %6570 = vmatpush1.msra.mxu0 %v6544
  %6571 = vmatprep.subr.mxu0 %v6563
  %6572 = vmatpush1.msra.mxu0 %v6560
  %6573 = vmatprep.subr.mxu0 0.0
  %6574 = vmatpush1.msra.mxu0 0.0
  %6575 = vmatprep.subr.mxu0 0.0
  %6576 = vmatpush1.msra.mxu0 0.0
  %6577 = vmatprep.subr.mxu0 0.0
  %6578 = vmatpush1.msra.mxu0 0.0
  %6579 = vmatprep.subr.mxu0 0.0
  %6580 = vmatpush1.msra.mxu0 0.0
  %6581 = vmatprep.subr.mxu0 0.0
  %6582 = vmatpush1.msra.mxu0 0.0
  %6583 = vmatprep.subr.mxu0 0.0
  %6584 = vmatpush1.msra.mxu0 0.0
  %6585 = vmatprep.subr.mxu0 0.0
  %6586 = vmatpush1.msra.mxu0 0.0
  %6587 = vmatprep.subr.mxu0 0.0
  %6588 = vmatpush1.msra.mxu0 0.0
  %6589 = vmatprep.subr.mxu0 0.0
  %6590 = vmatpush1.msra.mxu0 0.0
  %6591 = vmatprep.subr.mxu0 0.0
  %6592 = vmatpush1.msra.mxu0 0.0
  %6593 = vmatprep.subr.mxu0 0.0
  %6594 = vmatpush1.msra.mxu0 0.0
  %6595 = vmatprep.subr.mxu0 0.0
  %6596 = vmatpush1.msra.mxu0 0.0
  %6597 = vmatprep.subr.mxu0 0.0
  %6598 = vmatpush1.msra.mxu0 0.0
  %6599 = vmatprep.subr.mxu0 0.0
  %6600 = vmatpush1.msra.mxu0 0.0
  %6601 = vmatprep.subr.mxu0 0.0
  %6602 = vmatpush1.msra.mxu0 0.0
  %6603 = vmatprep.subr.mxu0 0.0
  %6604 = vmatpush1.msra.mxu0 0.0
  %6605 = vmatprep.subr.mxu0 0.0
  %6606 = vmatpush1.msra.mxu0 0.0
  %6607 = vmatprep.subr.mxu0 0.0
  %6608 = vmatpush1.msra.mxu0 0.0
  %6609 = vmatprep.subr.mxu0 0.0
  %6610 = vmatpush1.msra.mxu0 0.0
  %6611 = vmatprep.subr.mxu0 0.0
  %6612 = vmatpush1.msra.mxu0 0.0
  %6613 = vmatprep.subr.mxu0 0.0
  %6614 = vmatpush1.msra.mxu0 0.0
  %6615 = vmatprep.subr.mxu0 0.0
  %6616 = vmatpush1.msra.mxu0 0.0
  %6617 = vmatprep.subr.mxu0 0.0
  %6618 = vmatpush1.msra.mxu0 0.0
  %6619 = vmatprep.subr.mxu0 0.0
  %6620 = vmatpush1.msra.mxu0 0.0
  %6621 = vmatprep.subr.mxu0 0.0
  %6622 = vmatpush1.msra.mxu0 0.0
  %6623 = vmatprep.subr.mxu0 0.0
  %6624 = vmatpush1.msra.mxu0 0.0
  %6625 = vmatprep.subr.mxu0 0.0
  %6626 = vmatpush1.msra.mxu0 0.0
  %6627 = vmatprep.subr.mxu0 0.0
  %6628 = vmatpush1.msra.mxu0 0.0
  %6629 = vmatprep.mubr.f32.mxu0 0.0
  %6630 = vmatmul.mubr.f32.gmra.mrb[0].mxu0 %v6554
  %v6631 = vpop.f32.mrb[0].mxu0
  %v6632 = vadd.f32 0.0, %v6631
  %v6633 = vpop.f32.mrb[0].mxu0
  %v6634 = vadd.f32 0.0, %v6633
  %6635 = vmatprep.mubr.f32.mxu0 0.0
  %6636 = vmatmul.mubr.f32.gmra.mrb[0].mxu0 %v6557
  %v6637 = vpop.f32.mrb[0].mxu0
  %v6638 = vadd.f32 0.0, %v6637
  %v6639 = vpop.f32.mrb[0].mxu0
  %v6640 = vadd.f32 0.0, %v6639
  %6641 = vdwg.mxu0
  %v6642 = vld [vmem:[%s4] sm:$0xff]
  %v6643 = vld [vmem:[%s4 + $0x8] sm:$0xff]
  %v6644 = vld [vmem:[%s4 + $0x10] sm:$0xff]
  %v6645 = vld [vmem:[%s4 + $0x18] sm:$0xff]
  %v6646 = vld [vmem:[%s4 + $0x20] sm:$0xff]
  %v6647 = vld [vmem:[%s4 + $0x28] sm:$0xff]
  %v6648 = vld [vmem:[%s4 + $0x30] sm:$0xff]
  %v6649 = vld [vmem:[%s4 + $0x38] sm:$0xff]
  %v6650 = vld [vmem:[%s4 + $0x40] sm:$0xff]
  %v6651 = vld [vmem:[%s4 + $0x48] sm:$0xff]
  %v6652 = vld [vmem:[%s4 + $0x50] sm:$0xff]
  %v6653 = vld [vmem:[%s4 + $0x58] sm:$0xff]
  %v6654 = vld [vmem:[%s4 + $0x60] sm:$0xff]
  %v6655 = vld [vmem:[%s4 + $0x68] sm:$0xff]
  %v6656 = vld [vmem:[%s4 + $0x70] sm:$0xff]
  %v6657 = vld [vmem:[%s4 + $0x78] sm:$0xff]
  %v6658 = vld [vmem:[%s4 + $0x80] sm:$0xff]
  %v6659 = vld [vmem:[%s4 + $0x88] sm:$0xff]
  %v6660 = vld [vmem:[%s4 + $0x90] sm:$0xff]
  %v6661 = vld [vmem:[%s4 + $0x98] sm:$0xff]
  %v6662 = vld [vmem:[%s4 + $0xa0] sm:$0xff]
  %v6664 = vsel %vm465, %v6634, 0
  %v6667 = vsel %vm465, %v6640, 0
  %6669 = vmatprep.subr.mxu0 0.0
  %6670 = vmatpush1.msra.mxu0 %v6642
  %6671 = vmatprep.subr.mxu0 0.0
  %6672 = vmatpush1.msra.mxu0 %v6643
  %6673 = vmatprep.subr.mxu0 0.0
  %6674 = vmatpush1.msra.mxu0 %v6644
  %6675 = vmatprep.subr.mxu0 0.0
  %6676 = vmatpush1.msra.mxu0 %v6645
  %6677 = vmatprep.subr.mxu0 0.0
  %6678 = vmatpush1.msra.mxu0 %v6646
  %6679 = vmatprep.subr.mxu0 0.0
  %6680 = vmatpush1.msra.mxu0 %v6647
  %6681 = vmatprep.subr.mxu0 0.0
  %6682 = vmatpush1.msra.mxu0 %v6648
  %6683 = vmatprep.subr.mxu0 0.0
  %6684 = vmatpush1.msra.mxu0 %v6649
  %6685 = vmatprep.subr.mxu0 0.0
  %6686 = vmatpush1.msra.mxu0 %v6650
  %6687 = vmatprep.subr.mxu0 0.0
  %6688 = vmatpush1.msra.mxu0 %v6651
  %6689 = vmatprep.subr.mxu0 0.0
  %6690 = vmatpush1.msra.mxu0 %v6652
  %6691 = vmatprep.subr.mxu0 0.0
  %6692 = vmatpush1.msra.mxu0 %v6653
  %6693 = vmatprep.subr.mxu0 0.0
  %6694 = vmatpush1.msra.mxu0 %v6654
  %6695 = vmatprep.subr.mxu0 0.0
  %6696 = vmatpush1.msra.mxu0 %v6655
  %6697 = vmatprep.subr.mxu0 0.0
  %6698 = vmatpush1.msra.mxu0 %v6656
  %6699 = vmatprep.subr.mxu0 0.0
  %6700 = vmatpush1.msra.mxu0 %v6657
  %6701 = vmatprep.subr.mxu0 0.0
  %6702 = vmatpush1.msra.mxu0 %v6658
  %6703 = vmatprep.subr.mxu0 0.0
  %6704 = vmatpush1.msra.mxu0 %v6659
  %6705 = vmatprep.subr.mxu0 0.0
  %6706 = vmatpush1.msra.mxu0 %v6660
  %6707 = vmatprep.subr.mxu0 0.0
  %6708 = vmatpush1.msra.mxu0 %v6661
  %6709 = vmatprep.subr.mxu0 0.0
  %6710 = vmatpush1.msra.mxu0 %v6662
  %6711 = vmatprep.subr.mxu0 0.0
  %6712 = vmatpush1.msra.mxu0 0.0
  %6713 = vmatprep.subr.mxu0 0.0
  %6714 = vmatpush1.msra.mxu0 0.0
  %6715 = vmatprep.subr.mxu0 0.0
  %6716 = vmatpush1.msra.mxu0 0.0
  %6717 = vmatprep.subr.mxu0 0.0
  %6718 = vmatpush1.msra.mxu0 0.0
  %6719 = vmatprep.subr.mxu0 0.0
  %6720 = vmatpush1.msra.mxu0 0.0
  %6721 = vmatprep.subr.mxu0 0.0
  %6722 = vmatpush1.msra.mxu0 0.0
  %6723 = vmatprep.subr.mxu0 0.0
  %6724 = vmatpush1.msra.mxu0 0.0
  %6725 = vmatprep.subr.mxu0 0.0
  %6726 = vmatpush1.msra.mxu0 0.0
  %6727 = vmatprep.subr.mxu0 0.0
  %6728 = vmatpush1.msra.mxu0 0.0
  %6729 = vmatprep.subr.mxu0 0.0
  %6730 = vmatpush1.msra.mxu0 0.0
  %6731 = vmatprep.subr.mxu0 0.0
  %6732 = vmatpush1.msra.mxu0 0.0
  %6733 = vmatprep.mubr.f32.mxu0 %v6664
  %6734 = vmatmul.mubr.f32.gmra.mrb[0].mxu0 %v6632
  %v6735 = vpop.f32.mrb[0].mxu0
  %v6736 = vadd.f32 0.0, %v6735
  %v6737 = vpop.f32.mrb[0].mxu0
  %6738 = vmatprep.mubr.f32.mxu0 %v6667
  %6739 = vmatmul.mubr.f32.gmra.mrb[0].mxu0 %v6638
  %v6740 = vpop.f32.mrb[0].mxu0
  %v6741 = vadd.f32 0.0, %v6740
  %v6742 = vpop.f32.mrb[0].mxu0
  %6743 = vdwg.mxu0
  %6744 = vst.msk [vmem:[#allocation3] sm:$0xff] %vm547, %v6736
  %6745 = vst.msk [vmem:[#allocation3 + $0x20] sm:$0x3] %vm549, %v6741
  %v6748 = vrot.slane %v6736, 1
  %v6749 = vrot.slane %v6741, 1
  %v6750 = vsel %vm553, %v6748, %v6749
  %6751 = vrot.lane.b32.xlu0 %v6750, 84
  %v6752 = vpop.permute.xlu0 %6751
  %6753 = vrot.lane.b32.xlu0 %v6749, 84
  %v6754 = vpop.permute.xlu0 %6753
  %6757 = vst.msk [vmem:[#allocation3] sm:$0xff] %vm563, %v6752
  %6758 = vst.msk [vmem:[#allocation3 + $0x8] sm:$0xff] %vm465, %v6752
  %6759 = vst.msk [vmem:[#allocation3 + $0x20] sm:$0x3] %vm566, %v6754
  %6760 = vst.msk [vmem:[#allocation3 + $0x28] sm:$0x3] %vm568, %v6754
  %v6761 = vrot.slane %v6736, 2
  %v6762 = vrot.slane %v6741, 2
  %v6763 = vsel %vm570, %v6761, %v6762
  %6764 = vrot.lane.b32.xlu0 %v6763, 40
  %v6765 = vpop.permute.xlu0 %6764
  %6766 = vrot.lane.b32.xlu0 %v6762, 40
  %v6767 = vpop.permute.xlu0 %6766
  %6770 = vst.msk [vmem:[#allocation3 + $0x8] sm:$0xff] %vm580, %v6765
  %6771 = vst.msk [vmem:[#allocation3 + $0x28] sm:$0x3] %vm582, %v6767
  %v6772 = vrot.slane %v6736, 3
  %v6773 = vrot.slane %v6741, 3
  %v6774 = vsel %vm584, %v6772, %v6773
  %6775 = vrot.lane.b32.xlu0 %v6774, 124
  %v6776 = vpop.permute.xlu0 %6775
  %6777 = vrot.lane.b32.xlu0 %v6773, 124
  %v6778 = vpop.permute.xlu0 %6777
  %6781 = vst.msk [vmem:[#allocation3 + $0x8] sm:$0xff] %vm594, %v6776
  %6782 = vst.msk [vmem:[#allocation3 + $0x10] sm:$0xff] %vm596, %v6776
  %6783 = vst.msk [vmem:[#allocation3 + $0x28] sm:$0x3] %vm598, %v6778
  %6784 = vst.msk [vmem:[#allocation3 + $0x30] sm:$0x3] %vm600, %v6778
  %v6785 = vrot.slane %v6736, 4
  %v6786 = vrot.slane %v6741, 4
  %v6787 = vsel %vm360, %v6785, %v6786
  %6788 = vrot.lane.b32.xlu0 %v6787, 80
  %v6789 = vpop.permute.xlu0 %6788
  %6790 = vrot.lane.b32.xlu0 %v6786, 80
  %v6791 = vpop.permute.xlu0 %6790
  %6794 = vst.msk [vmem:[#allocation3 + $0x10] sm:$0xff] %vm611, %v6789
  %6795 = vst.msk [vmem:[#allocation3 + $0x18] sm:$0xff] %vm613, %v6789
  %6796 = vst.msk [vmem:[#allocation3 + $0x30] sm:$0x3] %vm615, %v6791
  %6797 = vst.msk [vmem:[#allocation3 + $0x38] sm:$0x3] %vm617, %v6791
  %v6798 = vld [vmem:[#allocation3] sm:$0xff]
  %v6799 = vld [vmem:[#allocation3 + $0x8] sm:$0xff]
  %v6800 = vld [vmem:[#allocation3 + $0x10] sm:$0xff]
  %v6801 = vld [vmem:[#allocation3 + $0x18] sm:$0xff]
  %v6802 = vld [vmem:[#allocation3 + $0x20] sm:$0x3]
  %v6803 = vld [vmem:[#allocation3 + $0x28] sm:$0x3]
  %v6804 = vld [vmem:[#allocation3 + $0x30] sm:$0x3]
  %v6805 = vld [vmem:[#allocation3 + $0x38] sm:$0x3]
  %v6806 = vld [vmem:[%s5] sm:$0xff]
  %v6807 = vld [vmem:[%s5 + $0x8] sm:$0xff]
  %v6808 = vld [vmem:[%s5 + $0x10] sm:$0xff]
  %v6809 = vld [vmem:[%s5 + $0x18] sm:$0xff]
  %v6810 = vld [vmem:[%s5 + $0x20] sm:$0xff]
  %v6811 = vld [vmem:[%s5 + $0x28] sm:$0xff]
  %v6812 = vld [vmem:[%s5 + $0x30] sm:$0xff]
  %v6813 = vld [vmem:[%s5 + $0x38] sm:$0xff]
  %v6814 = vld [vmem:[%s5 + $0x40] sm:$0xff]
  %v6815 = vld [vmem:[%s5 + $0x48] sm:$0xff]
  %v6816 = vld [vmem:[%s5 + $0x50] sm:$0xff]
  %v6817 = vld [vmem:[%s5 + $0x58] sm:$0xff]
  %v6818 = vld [vmem:[%s5 + $0x60] sm:$0xff]
  %v6819 = vld [vmem:[%s5 + $0x68] sm:$0xff]
  %v6820 = vld [vmem:[%s5 + $0x70] sm:$0xff]
  %v6821 = vld [vmem:[%s5 + $0x78] sm:$0xff]
  %v6822 = vld [vmem:[%s5 + $0x80] sm:$0xff]
  %v6823 = vld [vmem:[%s5 + $0x88] sm:$0xff]
  %v6824 = vld [vmem:[%s5 + $0x90] sm:$0xff]
  %v6825 = vld [vmem:[%s5 + $0x98] sm:$0xff]
  %v6826 = vld [vmem:[%s5 + $0xa0] sm:$0xff]
  %v6827 = vld [vmem:[%s5 + $0xa8] sm:$0xff]
  %v6828 = vld [vmem:[%s5 + $0xb0] sm:$0xff]
  %v6829 = vld [vmem:[%s5 + $0xb8] sm:$0xff]
  %v6830 = vld [vmem:[%s5 + $0xc0] sm:$0xff]
  %v6831 = vld [vmem:[%s5 + $0xc8] sm:$0xff]
  %v6832 = vld [vmem:[%s5 + $0xd0] sm:$0xff]
  %v6833 = vld [vmem:[%s5 + $0xd8] sm:$0xff]
  %v6834 = vld [vmem:[%s5 + $0xe0] sm:$0xff]
  %v6835 = vld [vmem:[%s5 + $0xe8] sm:$0xff]
  %v6836 = vld [vmem:[%s5 + $0xf0] sm:$0xff]
  %v6837 = vld [vmem:[%s5 + $0xf8] sm:$0xff]
  %v6838 = vld [vmem:[%s5 + $0x100] sm:$0xff]
  %v6839 = vld [vmem:[%s5 + $0x108] sm:$0xff]
  %v6840 = vld [vmem:[%s5 + $0x110] sm:$0xff]
  %v6841 = vld [vmem:[%s5 + $0x118] sm:$0xff]
  %v6842 = vld [vmem:[%s5 + $0x120] sm:$0xff]
  %v6843 = vld [vmem:[%s5 + $0x128] sm:$0xff]
  %v6844 = vld [vmem:[%s5 + $0x130] sm:$0xff]
  %v6845 = vld [vmem:[%s5 + $0x138] sm:$0xff]
  %v6846 = vld [vmem:[%s5 + $0x140] sm:$0xff]
  %v6847 = vld [vmem:[%s5 + $0x148] sm:$0xff]
  %v6848 = vld [vmem:[%s5 + $0x150] sm:$0xff]
  %v6849 = vld [vmem:[%s5 + $0x158] sm:$0xff]
  %v6850 = vld [vmem:[%s5 + $0x160] sm:$0xff]
  %v6851 = vld [vmem:[%s5 + $0x168] sm:$0xff]
  %v6852 = vld [vmem:[%s5 + $0x170] sm:$0xff]
  %v6853 = vld [vmem:[%s5 + $0x178] sm:$0xff]
  %v6854 = vld [vmem:[%s5 + $0x180] sm:$0xff]
  %v6855 = vld [vmem:[%s5 + $0x188] sm:$0xff]
  %v6856 = vld [vmem:[%s5 + $0x190] sm:$0xff]
  %v6857 = vld [vmem:[%s5 + $0x198] sm:$0xff]
  %v6858 = vld [vmem:[%s5 + $0x1a0] sm:$0xff]
  %v6859 = vld [vmem:[%s5 + $0x1a8] sm:$0xff]
  %v6860 = vld [vmem:[%s5 + $0x1b0] sm:$0xff]
  %v6861 = vld [vmem:[%s5 + $0x1b8] sm:$0xff]
  %v6862 = vld [vmem:[%s5 + $0x1c0] sm:$0xff]
  %v6863 = vld [vmem:[%s5 + $0x1c8] sm:$0xff]
  %v6864 = vld [vmem:[%s5 + $0x1d0] sm:$0xff]
  %v6865 = vld [vmem:[%s5 + $0x1d8] sm:$0xff]
  %v6866 = vld [vmem:[%s5 + $0x1e0] sm:$0xff]
  %v6867 = vld [vmem:[%s5 + $0x1e8] sm:$0xff]
  %v6868 = vld [vmem:[%s5 + $0x1f0] sm:$0xff]
  %v6869 = vld [vmem:[%s5 + $0x1f8] sm:$0xff]
  %v6870 = vld [vmem:[%s5 + $0x200] sm:$0xff]
  %v6871 = vld [vmem:[%s5 + $0x208] sm:$0xff]
  %v6872 = vld [vmem:[%s5 + $0x210] sm:$0xff]
  %v6873 = vld [vmem:[%s5 + $0x218] sm:$0xff]
  %v6874 = vld [vmem:[%s5 + $0x220] sm:$0xff]
  %v6875 = vld [vmem:[%s5 + $0x228] sm:$0xff]
  %v6876 = vld [vmem:[%s5 + $0x230] sm:$0xff]
  %v6877 = vld [vmem:[%s5 + $0x238] sm:$0xff]
  %v6878 = vld [vmem:[%s5 + $0x240] sm:$0xff]
  %v6879 = vld [vmem:[%s5 + $0x248] sm:$0xff]
  %v6880 = vld [vmem:[%s5 + $0x250] sm:$0xff]
  %v6881 = vld [vmem:[%s5 + $0x258] sm:$0xff]
  %v6882 = vld [vmem:[%s5 + $0x260] sm:$0xff]
  %v6883 = vld [vmem:[%s5 + $0x268] sm:$0xff]
  %v6884 = vld [vmem:[%s5 + $0x270] sm:$0xff]
  %v6885 = vld [vmem:[%s5 + $0x278] sm:$0xff]
  %v6886 = vld [vmem:[%s5 + $0x280] sm:$0xff]
  %v6887 = vld [vmem:[%s5 + $0x288] sm:$0xff]
  %v6888 = vld [vmem:[%s5 + $0x290] sm:$0xff]
  %v6889 = vld [vmem:[%s5 + $0x298] sm:$0xff]
  %v6890 = vld [vmem:[%s5 + $0x2a0] sm:$0xff]
  %v6891 = vld [vmem:[%s5 + $0x2a8] sm:$0xff]
  %v6892 = vld [vmem:[%s5 + $0x2b0] sm:$0xff]
  %v6893 = vld [vmem:[%s5 + $0x2b8] sm:$0xff]
  %v6894 = vld [vmem:[%s5 + $0x2c0] sm:$0xff]
  %v6895 = vld [vmem:[%s5 + $0x2c8] sm:$0xff]
  %v6896 = vld [vmem:[%s5 + $0x2d0] sm:$0xff]
  %v6897 = vld [vmem:[%s5 + $0x2d8] sm:$0xff]
  %v6898 = vld [vmem:[%s5 + $0x2e0] sm:$0xff]
  %v6899 = vld [vmem:[%s5 + $0x2e8] sm:$0xff]
  %v6900 = vld [vmem:[%s5 + $0x2f0] sm:$0xff]
  %v6901 = vld [vmem:[%s5 + $0x2f8] sm:$0xff]
  %v6902 = vld [vmem:[%s5 + $0x300] sm:$0xff]
  %v6903 = vld [vmem:[%s5 + $0x308] sm:$0xff]
  %v6904 = vld [vmem:[%s5 + $0x310] sm:$0xff]
  %v6905 = vld [vmem:[%s5 + $0x318] sm:$0xff]
  %v6906 = vld [vmem:[%s5 + $0x320] sm:$0xff]
  %v6907 = vld [vmem:[%s5 + $0x328] sm:$0xff]
  %v6908 = vld [vmem:[%s5 + $0x330] sm:$0xff]
  %v6909 = vld [vmem:[%s5 + $0x338] sm:$0xff]
  %v6910 = vld [vmem:[%s5 + $0x340] sm:$0xf]
  %v6911 = vld [vmem:[%s5 + $0x348] sm:$0xf]
  %v6912 = vld [vmem:[%s6] sm:$0xff]
  %v6913 = vld [vmem:[%s6 + $0x8] sm:$0xff]
  %v6914 = vld [vmem:[%s6 + $0x10] sm:$0x3]
  %v6915 = vld [vmem:[%s6 + $0x18] sm:$0x3]
  %v6917 = vsel %vm613, %v6801, 0
  %v6920 = vsel %vm613, %v6805, 0
  %v6923 = vsel %vm360, %v6910, 0
  %v6926 = vsel %vm360, %v6911, 0
  %6928 = vmatprep.subr.mxu0 %v6807
  %6929 = vmatpush1.msra.mxu0 %v6806
  %6930 = vmatprep.subr.mxu0 %v6809
  %6931 = vmatpush1.msra.mxu0 %v6808
  %6932 = vmatprep.subr.mxu0 %v6811
  %6933 = vmatpush1.msra.mxu0 %v6810
  %6934 = vmatprep.subr.mxu0 %v6813
  %6935 = vmatpush1.msra.mxu0 %v6812
  %6936 = vmatprep.subr.mxu0 %v6815
  %6937 = vmatpush1.msra.mxu0 %v6814
  %6938 = vmatprep.subr.mxu0 %v6817
  %6939 = vmatpush1.msra.mxu0 %v6816
  %6940 = vmatprep.subr.mxu0 %v6819
  %6941 = vmatpush1.msra.mxu0 %v6818
  %6942 = vmatprep.subr.mxu0 %v6821
  %6943 = vmatpush1.msra.mxu0 %v6820
  %6944 = vmatprep.subr.mxu0 %v6823
  %6945 = vmatpush1.msra.mxu0 %v6822
  %6946 = vmatprep.subr.mxu0 %v6825
  %6947 = vmatpush1.msra.mxu0 %v6824
  %6948 = vmatprep.subr.mxu0 %v6827
  %6949 = vmatpush1.msra.mxu0 %v6826
  %6950 = vmatprep.subr.mxu0 %v6829
  %6951 = vmatpush1.msra.mxu0 %v6828
  %6952 = vmatprep.subr.mxu0 %v6831
  %6953 = vmatpush1.msra.mxu0 %v6830
  %6954 = vmatprep.subr.mxu0 %v6833
  %6955 = vmatpush1.msra.mxu0 %v6832
  %6956 = vmatprep.subr.mxu0 %v6835
  %6957 = vmatpush1.msra.mxu0 %v6834
  %6958 = vmatprep.subr.mxu0 %v6837
  %6959 = vmatpush1.msra.mxu0 %v6836
  %6960 = vmatprep.subr.mxu0 %v6839
  %6961 = vmatpush1.msra.mxu0 %v6838
  %6962 = vmatprep.subr.mxu0 %v6841
  %6963 = vmatpush1.msra.mxu0 %v6840
  %6964 = vmatprep.subr.mxu0 %v6843
  %6965 = vmatpush1.msra.mxu0 %v6842
  %6966 = vmatprep.subr.mxu0 %v6845
  %6967 = vmatpush1.msra.mxu0 %v6844
  %6968 = vmatprep.subr.mxu0 %v6847
  %6969 = vmatpush1.msra.mxu0 %v6846
  %6970 = vmatprep.subr.mxu0 %v6849
  %6971 = vmatpush1.msra.mxu0 %v6848
  %6972 = vmatprep.subr.mxu0 %v6851
  %6973 = vmatpush1.msra.mxu0 %v6850
  %6974 = vmatprep.subr.mxu0 %v6853
  %6975 = vmatpush1.msra.mxu0 %v6852
  %6976 = vmatprep.subr.mxu0 %v6855
  %6977 = vmatpush1.msra.mxu0 %v6854
  %6978 = vmatprep.subr.mxu0 %v6857
  %6979 = vmatpush1.msra.mxu0 %v6856
  %6980 = vmatprep.subr.mxu0 %v6859
  %6981 = vmatpush1.msra.mxu0 %v6858
  %6982 = vmatprep.subr.mxu0 %v6861
  %6983 = vmatpush1.msra.mxu0 %v6860
  %6984 = vmatprep.subr.mxu0 %v6863
  %6985 = vmatpush1.msra.mxu0 %v6862
  %6986 = vmatprep.subr.mxu0 %v6865
  %6987 = vmatpush1.msra.mxu0 %v6864
  %6988 = vmatprep.subr.mxu0 %v6867
  %6989 = vmatpush1.msra.mxu0 %v6866
  %6990 = vmatprep.subr.mxu0 %v6869
  %6991 = vmatpush1.msra.mxu0 %v6868
  %6992 = vmatprep.mubr.f32.mxu0 %v6799
  %6993 = vmatmul.mubr.f32.gmra.mrb[0].mxu0 %v6798
  %v6994 = vpop.f32.mrb[0].mxu0
  %v6995 = vadd.f32 %v6912, %v6994
  %v6996 = vpop.f32.mrb[0].mxu0
  %v6997 = vadd.f32 %v6913, %v6996
  %6998 = vmatprep.mubr.f32.mxu0 %v6803
  %6999 = vmatmul.mubr.f32.gmra.mrb[0].mxu0 %v6802
  %v7000 = vpop.f32.mrb[0].mxu0
  %v7001 = vadd.f32 %v6914, %v7000
  %v7002 = vpop.f32.mrb[0].mxu0
  %v7003 = vadd.f32 %v6915, %v7002
  %7004 = vdwg.mxu0
  %7005 = vmatprep.subr.mxu0 %v6871
  %7006 = vmatpush1.msra.mxu0 %v6870
  %7007 = vmatprep.subr.mxu0 %v6873
  %7008 = vmatpush1.msra.mxu0 %v6872
  %7009 = vmatprep.subr.mxu0 %v6875
  %7010 = vmatpush1.msra.mxu0 %v6874
  %7011 = vmatprep.subr.mxu0 %v6877
  %7012 = vmatpush1.msra.mxu0 %v6876
  %7013 = vmatprep.subr.mxu0 %v6879
  %7014 = vmatpush1.msra.mxu0 %v6878
  %7015 = vmatprep.subr.mxu0 %v6881
  %7016 = vmatpush1.msra.mxu0 %v6880
  %7017 = vmatprep.subr.mxu0 %v6883
  %7018 = vmatpush1.msra.mxu0 %v6882
  %7019 = vmatprep.subr.mxu0 %v6885
  %7020 = vmatpush1.msra.mxu0 %v6884
  %7021 = vmatprep.subr.mxu0 %v6887
  %7022 = vmatpush1.msra.mxu0 %v6886
  %7023 = vmatprep.subr.mxu0 %v6889
  %7024 = vmatpush1.msra.mxu0 %v6888
  %7025 = vmatprep.subr.mxu0 %v6891
  %7026 = vmatpush1.msra.mxu0 %v6890
  %7027 = vmatprep.subr.mxu0 %v6893
  %7028 = vmatpush1.msra.mxu0 %v6892
  %7029 = vmatprep.subr.mxu0 %v6895
  %7030 = vmatpush1.msra.mxu0 %v6894
  %7031 = vmatprep.subr.mxu0 %v6897
  %7032 = vmatpush1.msra.mxu0 %v6896
  %7033 = vmatprep.subr.mxu0 %v6899
  %7034 = vmatpush1.msra.mxu0 %v6898
  %7035 = vmatprep.subr.mxu0 %v6901
  %7036 = vmatpush1.msra.mxu0 %v6900
  %7037 = vmatprep.subr.mxu0 %v6903
  %7038 = vmatpush1.msra.mxu0 %v6902
  %7039 = vmatprep.subr.mxu0 %v6905
  %7040 = vmatpush1.msra.mxu0 %v6904
  %7041 = vmatprep.subr.mxu0 %v6907
  %7042 = vmatpush1.msra.mxu0 %v6906
  %7043 = vmatprep.subr.mxu0 %v6909
  %7044 = vmatpush1.msra.mxu0 %v6908
  %7045 = vmatprep.subr.mxu0 %v6926
  %7046 = vmatpush1.msra.mxu0 %v6923
  %7047 = vmatprep.subr.mxu0 0.0
  %7048 = vmatpush1.msra.mxu0 0.0
  %7049 = vmatprep.subr.mxu0 0.0
  %7050 = vmatpush1.msra.mxu0 0.0
  %7051 = vmatprep.subr.mxu0 0.0
  %7052 = vmatpush1.msra.mxu0 0.0
  %7053 = vmatprep.subr.mxu0 0.0
  %7054 = vmatpush1.msra.mxu0 0.0
  %7055 = vmatprep.subr.mxu0 0.0
  %7056 = vmatpush1.msra.mxu0 0.0
  %7057 = vmatprep.subr.mxu0 0.0
  %7058 = vmatpush1.msra.mxu0 0.0
  %7059 = vmatprep.subr.mxu0 0.0
  %7060 = vmatpush1.msra.mxu0 0.0
  %7061 = vmatprep.subr.mxu0 0.0
  %7062 = vmatpush1.msra.mxu0 0.0
  %7063 = vmatprep.subr.mxu0 0.0
  %7064 = vmatpush1.msra.mxu0 0.0
  %7065 = vmatprep.subr.mxu0 0.0
  %7066 = vmatpush1.msra.mxu0 0.0
  %7067 = vmatprep.subr.mxu0 0.0
  %7068 = vmatpush1.msra.mxu0 0.0
  %7069 = vmatprep.mubr.f32.mxu0 %v6917
  %7070 = vmatmul.mubr.f32.gmra.mrb[0].mxu0 %v6800
  %v7071 = vpop.f32.mrb[0].mxu0
  %v7072 = vadd.f32 %v6995, %v7071
  %v7073 = vpop.f32.mrb[0].mxu0
  %v7074 = vadd.f32 %v6997, %v7073
  %7075 = vmatprep.mubr.f32.mxu0 %v6920
  %7076 = vmatmul.mubr.f32.gmra.mrb[0].mxu0 %v6804
  %v7077 = vpop.f32.mrb[0].mxu0
  %v7078 = vadd.f32 %v7001, %v7077
  %v7079 = vpop.f32.mrb[0].mxu0
  %v7080 = vadd.f32 %v7003, %v7079
  %7081 = vdwg.mxu0
  %v7082 = vxor.u32 %v7072, 2147483648
  %v7083 = vxor.u32 %v7074, 2147483648
  %v7084 = vxor.u32 %v7078, 2147483648
  %v7085 = vxor.u32 %v7080, 2147483648
  %v7086 = vmul.f32 %v7082, 1.442695
  %v7087 = vpow.pop %v7086
  %v7088 = vmul.f32 %v7083, 1.442695
  %v7089 = vpow.pop %v7088
  %v7090 = vmul.f32 %v7084, 1.442695
  %v7091 = vpow.pop %v7090
  %v7092 = vmul.f32 %v7085, 1.442695
  %v7093 = vpow.pop %v7092
  %v7094 = vadd.f32 %v7087, 1.0
  %v7095 = vadd.f32 %v7089, 1.0
  %v7096 = vadd.f32 %v7091, 1.0
  %v7097 = vadd.f32 %v7093, 1.0
  %v7098 = vrcp.pop %v7094
  %v7099 = vmul.f32 1.0, %v7098
  %v7100 = vrcp.pop %v7095
  %v7101 = vmul.f32 1.0, %v7100
  %v7102 = vrcp.pop %v7096
  %v7103 = vmul.f32 1.0, %v7102
  %v7104 = vrcp.pop %v7097
  %v7105 = vmul.f32 1.0, %v7104
  %v7106 = vld [vmem:[%s7] sm:$0x1f]
  %v7108 = vsel %vm928, %v7106, 0
  %v7111 = vsel %vm932, %v7103, 0
  %v7114 = vsel %vm932, %v7105, 0
  %7116 = vmatprep.subr.mxu0 %v7101
  %7117 = vmatpush1.msra.mxu0 %v7099
  %7118 = vmatprep.subr.mxu0 %v7114
  %7119 = vmatpush1.msra.mxu0 %v7111
  %7120 = vmatprep.subr.mxu0 0.0
  %7121 = vmatpush1.msra.mxu0 0.0
  %7122 = vmatprep.subr.mxu0 0.0
  %7123 = vmatpush1.msra.mxu0 0.0
  %7124 = vmatprep.subr.mxu0 0.0
  %7125 = vmatpush1.msra.mxu0 0.0
  %7126 = vmatprep.subr.mxu0 0.0
  %7127 = vmatpush1.msra.mxu0 0.0
  %7128 = vmatprep.subr.mxu0 0.0
  %7129 = vmatpush1.msra.mxu0 0.0
  %7130 = vmatprep.subr.mxu0 0.0
  %7131 = vmatpush1.msra.mxu0 0.0
  %7132 = vmatprep.subr.mxu0 0.0
  %7133 = vmatpush1.msra.mxu0 0.0
  %7134 = vmatprep.subr.mxu0 0.0
  %7135 = vmatpush1.msra.mxu0 0.0
  %7136 = vmatprep.subr.mxu0 0.0
  %7137 = vmatpush1.msra.mxu0 0.0
  %7138 = vmatprep.subr.mxu0 0.0
  %7139 = vmatpush1.msra.mxu0 0.0
  %7140 = vmatprep.subr.mxu0 0.0
  %7141 = vmatpush1.msra.mxu0 0.0
  %7142 = vmatprep.subr.mxu0 0.0
  %7143 = vmatpush1.msra.mxu0 0.0
  %7144 = vmatprep.subr.mxu0 0.0
  %7145 = vmatpush1.msra.mxu0 0.0
  %7146 = vmatprep.subr.mxu0 0.0
  %7147 = vmatpush1.msra.mxu0 0.0
  %7148 = vmatprep.subr.mxu0 0.0
  %7149 = vmatpush1.msra.mxu0 0.0
  %7150 = vmatprep.subr.mxu0 0.0
  %7151 = vmatpush1.msra.mxu0 0.0
  %7152 = vmatprep.subr.mxu0 0.0
  %7153 = vmatpush1.msra.mxu0 0.0
  %7154 = vmatprep.subr.mxu0 0.0
  %7155 = vmatpush1.msra.mxu0 0.0
  %7156 = vmatprep.subr.mxu0 0.0
  %7157 = vmatpush1.msra.mxu0 0.0
  %7158 = vmatprep.subr.mxu0 0.0
  %7159 = vmatpush1.msra.mxu0 0.0
  %7160 = vmatprep.subr.mxu0 0.0
  %7161 = vmatpush1.msra.mxu0 0.0
  %7162 = vmatprep.subr.mxu0 0.0
  %7163 = vmatpush1.msra.mxu0 0.0
  %7164 = vmatprep.subr.mxu0 0.0
  %7165 = vmatpush1.msra.mxu0 0.0
  %7166 = vmatprep.subr.mxu0 0.0
  %7167 = vmatpush1.msra.mxu0 0.0
  %7168 = vmatprep.subr.mxu0 0.0
  %7169 = vmatpush1.msra.mxu0 0.0
  %7170 = vmatprep.subr.mxu0 0.0
  %7171 = vmatpush1.msra.mxu0 0.0
  %7172 = vmatprep.subr.mxu0 0.0
  %7173 = vmatpush1.msra.mxu0 0.0
  %7174 = vmatprep.subr.mxu0 0.0
  %7175 = vmatpush1.msra.mxu0 0.0
  %7176 = vmatprep.subr.mxu0 0.0
  %7177 = vmatpush1.msra.mxu0 0.0
  %7178 = vmatprep.subr.mxu0 0.0
  %7179 = vmatpush1.msra.mxu0 0.0
  %7180 = vmatprep.mubr.f32.mxu0 0.0
  %7181 = vmatmul.mubr.f32.gmra.mrb[0].mxu0 %v7108
  %v7182 = vpop.f32.mrb[0].mxu0
  %v7183 = vadd.f32 0.0, %v7182
  %v7184 = vpop.f32.mrb[0].mxu0
  %v7185 = vadd.f32 0.0, %v7184
  %7186 = vdwg.mxu0
  %v7187 = vld [vmem:[%s8] sm:$0xff]
  %v7188 = vld [vmem:[%s8 + $0x8] sm:$0xff]
  %v7189 = vld [vmem:[%s8 + $0x10] sm:$0xff]
  %v7190 = vld [vmem:[%s8 + $0x18] sm:$0xff]
  %v7191 = vld [vmem:[%s8 + $0x20] sm:$0xff]
  %v7192 = vld [vmem:[%s8 + $0x28] sm:$0xff]
  %v7193 = vld [vmem:[%s8 + $0x30] sm:$0xff]
  %v7194 = vld [vmem:[%s8 + $0x38] sm:$0xff]
  %v7195 = vld [vmem:[%s8 + $0x40] sm:$0xff]
  %v7196 = vld [vmem:[%s8 + $0x48] sm:$0xff]
  %v7197 = vld [vmem:[%s8 + $0x50] sm:$0xff]
  %v7198 = vld [vmem:[%s8 + $0x58] sm:$0xff]
  %v7199 = vld [vmem:[%s8 + $0x60] sm:$0xff]
  %v7200 = vld [vmem:[%s8 + $0x68] sm:$0xff]
  %v7201 = vld [vmem:[%s8 + $0x70] sm:$0xff]
  %v7202 = vld [vmem:[%s8 + $0x78] sm:$0xff]
  %v7203 = vld [vmem:[%s8 + $0x80] sm:$0xff]
  %v7204 = vld [vmem:[%s8 + $0x88] sm:$0xff]
  %v7205 = vld [vmem:[%s8 + $0x90] sm:$0xff]
  %v7206 = vld [vmem:[%s8 + $0x98] sm:$0xff]
  %v7208 = vsel %vm54, %v7185, 0
  %7210 = vmatprep.subr.mxu0 0.0
  %7211 = vmatpush1.msra.mxu0 %v7187
  %7212 = vmatprep.subr.mxu0 0.0
  %7213 = vmatpush1.msra.mxu0 %v7188
  %7214 = vmatprep.subr.mxu0 0.0
  %7215 = vmatpush1.msra.mxu0 %v7189
  %7216 = vmatprep.subr.mxu0 0.0
  %7217 = vmatpush1.msra.mxu0 %v7190
  %7218 = vmatprep.subr.mxu0 0.0
  %7219 = vmatpush1.msra.mxu0 %v7191
  %7220 = vmatprep.subr.mxu0 0.0
  %7221 = vmatpush1.msra.mxu0 %v7192
  %7222 = vmatprep.subr.mxu0 0.0
  %7223 = vmatpush1.msra.mxu0 %v7193
  %7224 = vmatprep.subr.mxu0 0.0
  %7225 = vmatpush1.msra.mxu0 %v7194
  %7226 = vmatprep.subr.mxu0 0.0
  %7227 = vmatpush1.msra.mxu0 %v7195
  %7228 = vmatprep.subr.mxu0 0.0
  %7229 = vmatpush1.msra.mxu0 %v7196
  %7230 = vmatprep.subr.mxu0 0.0
  %7231 = vmatpush1.msra.mxu0 %v7197
  %7232 = vmatprep.subr.mxu0 0.0
  %7233 = vmatpush1.msra.mxu0 %v7198
  %7234 = vmatprep.subr.mxu0 0.0
  %7235 = vmatpush1.msra.mxu0 %v7199
  %7236 = vmatprep.subr.mxu0 0.0
  %7237 = vmatpush1.msra.mxu0 %v7200
  %7238 = vmatprep.subr.mxu0 0.0
  %7239 = vmatpush1.msra.mxu0 %v7201
  %7240 = vmatprep.subr.mxu0 0.0
  %7241 = vmatpush1.msra.mxu0 %v7202
  %7242 = vmatprep.subr.mxu0 0.0
  %7243 = vmatpush1.msra.mxu0 %v7203
  %7244 = vmatprep.subr.mxu0 0.0
  %7245 = vmatpush1.msra.mxu0 %v7204
  %7246 = vmatprep.subr.mxu0 0.0
  %7247 = vmatpush1.msra.mxu0 %v7205
  %7248 = vmatprep.subr.mxu0 0.0
  %7249 = vmatpush1.msra.mxu0 %v7206
  %7250 = vmatprep.subr.mxu0 0.0
  %7251 = vmatpush1.msra.mxu0 0.0
  %7252 = vmatprep.subr.mxu0 0.0
  %7253 = vmatpush1.msra.mxu0 0.0
  %7254 = vmatprep.subr.mxu0 0.0
  %7255 = vmatpush1.msra.mxu0 0.0
  %7256 = vmatprep.subr.mxu0 0.0
  %7257 = vmatpush1.msra.mxu0 0.0
  %7258 = vmatprep.subr.mxu0 0.0
  %7259 = vmatpush1.msra.mxu0 0.0
  %7260 = vmatprep.subr.mxu0 0.0
  %7261 = vmatpush1.msra.mxu0 0.0
  %7262 = vmatprep.subr.mxu0 0.0
  %7263 = vmatpush1.msra.mxu0 0.0
  %7264 = vmatprep.subr.mxu0 0.0
  %7265 = vmatpush1.msra.mxu0 0.0
  %7266 = vmatprep.subr.mxu0 0.0
  %7267 = vmatpush1.msra.mxu0 0.0
  %7268 = vmatprep.subr.mxu0 0.0
  %7269 = vmatpush1.msra.mxu0 0.0
  %7270 = vmatprep.subr.mxu0 0.0
  %7271 = vmatpush1.msra.mxu0 0.0
  %7272 = vmatprep.subr.mxu0 0.0
  %7273 = vmatpush1.msra.mxu0 0.0
  %7274 = vmatprep.mubr.f32.mxu0 %v7208
  %7275 = vmatmul.mubr.f32.gmra.mrb[0].mxu0 %v7183
  %v7276 = vpop.f32.mrb[0].mxu0
  %v7277 = vadd.f32 0.0, %v7276
  %v7278 = vpop.f32.mrb[0].mxu0
  %7279 = vdwg.mxu0
  %7280 = vst.msk [vmem:[#allocation4 + $0x6] sm:$0x1] %vm1103, %v7277
  %7281 = vst.msk [vmem:[%s1105 + $0x5] sm:$0x2] %vm1106, %v7277
  %7282 = vst.msk [vmem:[%s1108 + $0x4] sm:$0x4] %vm1109, %v7277
  %7283 = vst.msk [vmem:[%s1111 + $0x3] sm:$0x8] %vm1112, %v7277
  %7284 = vst.msk [vmem:[%s1114 + $0x2] sm:$0x10] %vm1115, %v7277
  %s7285 = scalar_lea.vmem %s0, 224
  %v7286 = vld [vmem:[%s7285] sm:$0xff]
  %v7287 = vld [vmem:[%s7285 + $0x8] sm:$0xff]
  %v7288 = vld [vmem:[%s7285 + $0x10] sm:$0xff]
  %v7289 = vld [vmem:[%s7285 + $0x18] sm:$0xf]
  %7290 = vst.msk [vmem:[#allocation2] sm:$0xff] %vm54, %v7286
  %7291 = vst.msk [vmem:[#allocation2 + $0x10] sm:$0xff] %vm54, %v7287
  %7292 = vst.msk [vmem:[#allocation2 + $0x20] sm:$0xff] %vm54, %v7288
  %7293 = vst.msk [vmem:[#allocation2 + $0x30] sm:$0xf] %vm58, %v7289
  %v7294 = vld [vmem:[%s7285 + $0x1] sm:$0xff]
  %v7295 = vld [vmem:[%s7285 + $0x9] sm:$0xff]
  %v7296 = vld [vmem:[%s7285 + $0x11] sm:$0xff]
  %v7297 = vld [vmem:[%s7285 + $0x19] sm:$0xf]
  %7302 = vrot.lane.b32.xlu0 %v7294, 32
  %v7303 = vpop.permute.xlu0 %7302
  %7304 = vrot.lane.b32.xlu0 %v7295, 32
  %v7305 = vpop.permute.xlu0 %7304
  %7306 = vrot.lane.b32.xlu0 %v7296, 32
  %v7307 = vpop.permute.xlu0 %7306
  %7308 = vrot.lane.b32.xlu0 %v7297, 32
  %v7309 = vpop.permute.xlu0 %7308
  %7314 = vst.msk [vmem:[#allocation2] sm:$0xff] %vm80, %v7303
  %7315 = vst.msk [vmem:[#allocation2 + $0x10] sm:$0xff] %vm80, %v7305
  %7316 = vst.msk [vmem:[#allocation2 + $0x20] sm:$0xff] %vm80, %v7307
  %7317 = vst.msk [vmem:[#allocation2 + $0x30] sm:$0xf] %vm84, %v7309
  %v7318 = vld [vmem:[%s7285 + $0x2] sm:$0xff]
  %v7319 = vld [vmem:[%s7285 + $0xa] sm:$0xff]
  %v7320 = vld [vmem:[%s7285 + $0x12] sm:$0xff]
  %v7321 = vld [vmem:[%s7285 + $0x1a] sm:$0xf]
  %7326 = vrot.lane.b32.xlu0 %v7318, 64
  %v7327 = vpop.permute.xlu0 %7326
  %7328 = vrot.lane.b32.xlu0 %v7319, 64
  %v7329 = vpop.permute.xlu0 %7328
  %7330 = vrot.lane.b32.xlu0 %v7320, 64
  %v7331 = vpop.permute.xlu0 %7330
  %7332 = vrot.lane.b32.xlu0 %v7321, 64
  %v7333 = vpop.permute.xlu0 %7332
  %7338 = vst.msk [vmem:[#allocation2] sm:$0xff] %vm106, %v7327
  %7339 = vst.msk [vmem:[#allocation2 + $0x10] sm:$0xff] %vm106, %v7329
  %7340 = vst.msk [vmem:[#allocation2 + $0x20] sm:$0xff] %vm106, %v7331
  %7341 = vst.msk [vmem:[#allocation2 + $0x30] sm:$0xf] %vm110, %v7333
  %v7342 = vld [vmem:[%s7285 + $0x3] sm:$0xff]
  %v7343 = vld [vmem:[%s7285 + $0xb] sm:$0xff]
  %v7344 = vld [vmem:[%s7285 + $0x13] sm:$0xff]
  %v7345 = vld [vmem:[%s7285 + $0x1b] sm:$0xf]
  %7350 = vrot.lane.b32.xlu0 %v7342, 96
  %v7351 = vpop.permute.xlu0 %7350
  %7352 = vrot.lane.b32.xlu0 %v7343, 96
  %v7353 = vpop.permute.xlu0 %7352
  %7354 = vrot.lane.b32.xlu0 %v7344, 96
  %v7355 = vpop.permute.xlu0 %7354
  %7356 = vrot.lane.b32.xlu0 %v7345, 96
  %v7357 = vpop.permute.xlu0 %7356
  %7362 = vst.msk [vmem:[#allocation2] sm:$0xff] %vm132, %v7351
  %7363 = vst.msk [vmem:[#allocation2 + $0x10] sm:$0xff] %vm132, %v7353
  %7364 = vst.msk [vmem:[#allocation2 + $0x20] sm:$0xff] %vm132, %v7355
  %7365 = vst.msk [vmem:[#allocation2 + $0x30] sm:$0xf] %vm136, %v7357
  %v7366 = vld [vmem:[%s7285 + $0x4] sm:$0xff]
  %v7367 = vld [vmem:[%s7285 + $0xc] sm:$0xff]
  %v7368 = vld [vmem:[%s7285 + $0x14] sm:$0xff]
  %v7369 = vld [vmem:[%s7285 + $0x1c] sm:$0xf]
  %7370 = vst.msk [vmem:[#allocation2 + $0x8] sm:$0xff] %vm54, %v7366
  %7371 = vst.msk [vmem:[#allocation2 + $0x18] sm:$0xff] %vm54, %v7367
  %7372 = vst.msk [vmem:[#allocation2 + $0x28] sm:$0xff] %vm54, %v7368
  %7373 = vst.msk [vmem:[#allocation2 + $0x38] sm:$0xf] %vm58, %v7369
  %v7374 = vld [vmem:[#allocation2] sm:$0xff]
  %v7375 = vld [vmem:[#allocation2 + $0x8] sm:$0xff]
  %v7376 = vld [vmem:[#allocation2 + $0x10] sm:$0xff]
  %v7377 = vld [vmem:[#allocation2 + $0x18] sm:$0xff]
  %v7378 = vld [vmem:[#allocation2 + $0x20] sm:$0xff]
  %v7379 = vld [vmem:[#allocation2 + $0x28] sm:$0xff]
  %v7380 = vld [vmem:[#allocation2 + $0x30] sm:$0xf]
  %v7381 = vld [vmem:[#allocation2 + $0x38] sm:$0xf]
  %v7382 = vld [vmem:[%s1] sm:$0xff]
  %v7383 = vld [vmem:[%s1 + $0x8] sm:$0xff]
  %v7384 = vld [vmem:[%s1 + $0x10] sm:$0xff]
  %v7385 = vld [vmem:[%s1 + $0x18] sm:$0xff]
  %v7386 = vld [vmem:[%s1 + $0x20] sm:$0xff]
  %v7387 = vld [vmem:[%s1 + $0x28] sm:$0xff]
  %v7388 = vld [vmem:[%s1 + $0x30] sm:$0xff]
  %v7389 = vld [vmem:[%s1 + $0x38] sm:$0xff]
  %v7390 = vld [vmem:[%s1 + $0x40] sm:$0xff]
  %v7391 = vld [vmem:[%s1 + $0x48] sm:$0xff]
  %v7392 = vld [vmem:[%s1 + $0x50] sm:$0xff]
  %v7393 = vld [vmem:[%s1 + $0x58] sm:$0xff]
  %v7394 = vld [vmem:[%s1 + $0x60] sm:$0xff]
  %v7395 = vld [vmem:[%s1 + $0x68] sm:$0xff]
  %v7396 = vld [vmem:[%s1 + $0x70] sm:$0xff]
  %v7397 = vld [vmem:[%s1 + $0x78] sm:$0xff]
  %v7398 = vld [vmem:[%s1 + $0x80] sm:$0xff]
  %v7399 = vld [vmem:[%s1 + $0x88] sm:$0xff]
  %v7400 = vld [vmem:[%s1 + $0x90] sm:$0xff]
  %v7401 = vld [vmem:[%s1 + $0x98] sm:$0xff]
  %v7402 = vld [vmem:[%s1 + $0xa0] sm:$0xff]
  %v7403 = vld [vmem:[%s1 + $0xa8] sm:$0xff]
  %v7404 = vld [vmem:[%s1 + $0xb0] sm:$0xff]
  %v7405 = vld [vmem:[%s1 + $0xb8] sm:$0xff]
  %v7406 = vld [vmem:[%s1 + $0xc0] sm:$0xff]
  %v7407 = vld [vmem:[%s1 + $0xc8] sm:$0xff]
  %v7408 = vld [vmem:[%s1 + $0xd0] sm:$0xff]
  %v7409 = vld [vmem:[%s1 + $0xd8] sm:$0xff]
  %v7410 = vld [vmem:[%s1 + $0xe0] sm:$0xff]
  %v7411 = vld [vmem:[%s1 + $0xe8] sm:$0xff]
  %v7412 = vld [vmem:[%s1 + $0xf0] sm:$0xff]
  %v7413 = vld [vmem:[%s1 + $0xf8] sm:$0xff]
  %v7414 = vld [vmem:[%s1 + $0x100] sm:$0xff]
  %v7415 = vld [vmem:[%s1 + $0x108] sm:$0xff]
  %v7416 = vld [vmem:[%s1 + $0x110] sm:$0xff]
  %v7417 = vld [vmem:[%s1 + $0x118] sm:$0xff]
  %v7418 = vld [vmem:[%s1 + $0x120] sm:$0xff]
  %v7419 = vld [vmem:[%s1 + $0x128] sm:$0xff]
  %v7420 = vld [vmem:[%s1 + $0x130] sm:$0xff]
  %v7421 = vld [vmem:[%s1 + $0x138] sm:$0xff]
  %v7422 = vld [vmem:[%s2] sm:$0xff]
  %v7423 = vld [vmem:[%s2 + $0x8] sm:$0xff]
  %v7424 = vld [vmem:[%s2 + $0x10] sm:$0xff]
  %v7425 = vld [vmem:[%s2 + $0x18] sm:$0xff]
  %v7426 = vld [vmem:[%s2 + $0x20] sm:$0xff]
  %v7427 = vld [vmem:[%s2 + $0x28] sm:$0xff]
  %v7428 = vld [vmem:[%s2 + $0x30] sm:$0xf]
  %v7429 = vld [vmem:[%s2 + $0x38] sm:$0xf]
  %v7431 = vsel %vm54, %v7375, 0
  %v7434 = vsel %vm54, %v7377, 0
  %v7437 = vsel %vm54, %v7379, 0
  %v7440 = vsel %vm54, %v7381, 0
  %7442 = vmatprep.subr.mxu0 %v7383
  %7443 = vmatpush1.msra.mxu0 %v7382
  %7444 = vmatprep.subr.mxu0 %v7385
  %7445 = vmatpush1.msra.mxu0 %v7384
  %7446 = vmatprep.subr.mxu0 %v7387
  %7447 = vmatpush1.msra.mxu0 %v7386
  %7448 = vmatprep.subr.mxu0 %v7389
  %7449 = vmatpush1.msra.mxu0 %v7388
  %7450 = vmatprep.subr.mxu0 %v7391
  %7451 = vmatpush1.msra.mxu0 %v7390
  %7452 = vmatprep.subr.mxu0 %v7393
  %7453 = vmatpush1.msra.mxu0 %v7392
  %7454 = vmatprep.subr.mxu0 %v7395
  %7455 = vmatpush1.msra.mxu0 %v7394
  %7456 = vmatprep.subr.mxu0 %v7397
  %7457 = vmatpush1.msra.mxu0 %v7396
  %7458 = vmatprep.subr.mxu0 %v7399
  %7459 = vmatpush1.msra.mxu0 %v7398
  %7460 = vmatprep.subr.mxu0 %v7401
  %7461 = vmatpush1.msra.mxu0 %v7400
  %7462 = vmatprep.subr.mxu0 %v7403
  %7463 = vmatpush1.msra.mxu0 %v7402
  %7464 = vmatprep.subr.mxu0 %v7405
  %7465 = vmatpush1.msra.mxu0 %v7404
  %7466 = vmatprep.subr.mxu0 %v7407
  %7467 = vmatpush1.msra.mxu0 %v7406
  %7468 = vmatprep.subr.mxu0 %v7409
  %7469 = vmatpush1.msra.mxu0 %v7408
  %7470 = vmatprep.subr.mxu0 %v7411
  %7471 = vmatpush1.msra.mxu0 %v7410
  %7472 = vmatprep.subr.mxu0 %v7413
  %7473 = vmatpush1.msra.mxu0 %v7412
  %7474 = vmatprep.subr.mxu0 %v7415
  %7475 = vmatpush1.msra.mxu0 %v7414
  %7476 = vmatprep.subr.mxu0 %v7417
  %7477 = vmatpush1.msra.mxu0 %v7416
  %7478 = vmatprep.subr.mxu0 %v7419
  %7479 = vmatpush1.msra.mxu0 %v7418
  %7480 = vmatprep.subr.mxu0 %v7421
  %7481 = vmatpush1.msra.mxu0 %v7420
  %7482 = vmatprep.subr.mxu0 0.0
  %7483 = vmatpush1.msra.mxu0 0.0
  %7484 = vmatprep.subr.mxu0 0.0
  %7485 = vmatpush1.msra.mxu0 0.0
  %7486 = vmatprep.subr.mxu0 0.0
  %7487 = vmatpush1.msra.mxu0 0.0
  %7488 = vmatprep.subr.mxu0 0.0
  %7489 = vmatpush1.msra.mxu0 0.0
  %7490 = vmatprep.subr.mxu0 0.0
  %7491 = vmatpush1.msra.mxu0 0.0
  %7492 = vmatprep.subr.mxu0 0.0
  %7493 = vmatpush1.msra.mxu0 0.0
  %7494 = vmatprep.subr.mxu0 0.0
  %7495 = vmatpush1.msra.mxu0 0.0
  %7496 = vmatprep.subr.mxu0 0.0
  %7497 = vmatpush1.msra.mxu0 0.0
  %7498 = vmatprep.subr.mxu0 0.0
  %7499 = vmatpush1.msra.mxu0 0.0
  %7500 = vmatprep.subr.mxu0 0.0
  %7501 = vmatpush1.msra.mxu0 0.0
  %7502 = vmatprep.subr.mxu0 0.0
  %7503 = vmatpush1.msra.mxu0 0.0
  %7504 = vmatprep.subr.mxu0 0.0
  %7505 = vmatpush1.msra.mxu0 0.0
  %7506 = vmatprep.mubr.f32.mxu0 %v7431
  %7507 = vmatmul.mubr.f32.gmra.mrb[0].mxu0 %v7374
  %v7508 = vpop.f32.mrb[0].mxu0
  %v7509 = vadd.f32 %v7422, %v7508
  %v7510 = vpop.f32.mrb[0].mxu0
  %v7511 = vadd.f32 %v7423, %v7510
  %7512 = vmatprep.mubr.f32.mxu0 %v7434
  %7513 = vmatmul.mubr.f32.gmra.mrb[0].mxu0 %v7376
  %v7514 = vpop.f32.mrb[0].mxu0
  %v7515 = vadd.f32 %v7424, %v7514
  %v7516 = vpop.f32.mrb[0].mxu0
  %v7517 = vadd.f32 %v7425, %v7516
  %7518 = vmatprep.mubr.f32.mxu0 %v7437
  %7519 = vmatmul.mubr.f32.gmra.mrb[0].mxu0 %v7378
  %v7520 = vpop.f32.mrb[0].mxu0
  %v7521 = vadd.f32 %v7426, %v7520
  %v7522 = vpop.f32.mrb[0].mxu0
  %v7523 = vadd.f32 %v7427, %v7522
  %7524 = vmatprep.mubr.f32.mxu0 %v7440
  %7525 = vmatmul.mubr.f32.gmra.mrb[0].mxu0 %v7380
  %v7526 = vpop.f32.mrb[0].mxu0
  %v7527 = vadd.f32 %v7428, %v7526
  %v7528 = vpop.f32.mrb[0].mxu0
  %v7529 = vadd.f32 %v7429, %v7528
  %7530 = vdwg.mxu0
  %v7531 = vxor.u32 %v7509, 2147483648
  %v7532 = vxor.u32 %v7511, 2147483648
  %v7533 = vxor.u32 %v7515, 2147483648
  %v7534 = vxor.u32 %v7517, 2147483648
  %v7535 = vxor.u32 %v7521, 2147483648
  %v7536 = vxor.u32 %v7523, 2147483648
  %v7537 = vxor.u32 %v7527, 2147483648
  %v7538 = vxor.u32 %v7529, 2147483648
  %v7539 = vmul.f32 %v7531, 1.442695
  %v7540 = vpow.pop %v7539
  %v7541 = vmul.f32 %v7532, 1.442695
  %v7542 = vpow.pop %v7541
  %v7543 = vmul.f32 %v7533, 1.442695
  %v7544 = vpow.pop %v7543
  %v7545 = vmul.f32 %v7534, 1.442695
  %v7546 = vpow.pop %v7545
  %v7547 = vmul.f32 %v7535, 1.442695
  %v7548 = vpow.pop %v7547
  %v7549 = vmul.f32 %v7536, 1.442695
  %v7550 = vpow.pop %v7549
  %v7551 = vmul.f32 %v7537, 1.442695
  %v7552 = vpow.pop %v7551
  %v7553 = vmul.f32 %v7538, 1.442695
  %v7554 = vpow.pop %v7553
  %v7555 = vadd.f32 %v7540, 1.0
  %v7556 = vadd.f32 %v7542, 1.0
  %v7557 = vadd.f32 %v7544, 1.0
  %v7558 = vadd.f32 %v7546, 1.0
  %v7559 = vadd.f32 %v7548, 1.0
  %v7560 = vadd.f32 %v7550, 1.0
  %v7561 = vadd.f32 %v7552, 1.0
  %v7562 = vadd.f32 %v7554, 1.0
  %v7563 = vrcp.pop %v7555
  %v7564 = vmul.f32 1.0, %v7563
  %v7565 = vrcp.pop %v7556
  %v7566 = vmul.f32 1.0, %v7565
  %v7567 = vrcp.pop %v7557
  %v7568 = vmul.f32 1.0, %v7567
  %v7569 = vrcp.pop %v7558
  %v7570 = vmul.f32 1.0, %v7569
  %v7571 = vrcp.pop %v7559
  %v7572 = vmul.f32 1.0, %v7571
  %v7573 = vrcp.pop %v7560
  %v7574 = vmul.f32 1.0, %v7573
  %v7575 = vrcp.pop %v7561
  %v7576 = vmul.f32 1.0, %v7575
  %v7577 = vrcp.pop %v7562
  %v7578 = vmul.f32 1.0, %v7577
  %v7579 = vld [vmem:[%s3] sm:$0xff]
  %v7580 = vld [vmem:[%s3 + $0x8] sm:$0x3f]
  %v7582 = vsel %vm353, %v7579, 0
  %v7585 = vsel %vm353, %v7580, 0
  %v7588 = vsel %vm360, %v7576, 0
  %v7591 = vsel %vm360, %v7578, 0
  %7593 = vmatprep.subr.mxu0 %v7566
  %7594 = vmatpush1.msra.mxu0 %v7564
  %7595 = vmatprep.subr.mxu0 %v7570
  %7596 = vmatpush1.msra.mxu0 %v7568
  %7597 = vmatprep.subr.mxu0 %v7574
  %7598 = vmatpush1.msra.mxu0 %v7572
  %7599 = vmatprep.subr.mxu0 %v7591
  %7600 = vmatpush1.msra.mxu0 %v7588
  %7601 = vmatprep.subr.mxu0 0.0
  %7602 = vmatpush1.msra.mxu0 0.0
  %7603 = vmatprep.subr.mxu0 0.0
  %7604 = vmatpush1.msra.mxu0 0.0
  %7605 = vmatprep.subr.mxu0 0.0
  %7606 = vmatpush1.msra.mxu0 0.0
  %7607 = vmatprep.subr.mxu0 0.0
  %7608 = vmatpush1.msra.mxu0 0.0
  %7609 = vmatprep.subr.mxu0 0.0
  %7610 = vmatpush1.msra.mxu0 0.0
  %7611 = vmatprep.subr.mxu0 0.0
  %7612 = vmatpush1.msra.mxu0 0.0
  %7613 = vmatprep.subr.mxu0 0.0
  %7614 = vmatpush1.msra.mxu0 0.0
  %7615 = vmatprep.subr.mxu0 0.0
  %7616 = vmatpush1.msra.mxu0 0.0
  %7617 = vmatprep.subr.mxu0 0.0
  %7618 = vmatpush1.msra.mxu0 0.0
  %7619 = vmatprep.subr.mxu0 0.0
  %7620 = vmatpush1.msra.mxu0 0.0
  %7621 = vmatprep.subr.mxu0 0.0
  %7622 = vmatpush1.msra.mxu0 0.0
  %7623 = vmatprep.subr.mxu0 0.0
  %7624 = vmatpush1.msra.mxu0 0.0
  %7625 = vmatprep.subr.mxu0 0.0
  %7626 = vmatpush1.msra.mxu0 0.0
  %7627 = vmatprep.subr.mxu0 0.0
  %7628 = vmatpush1.msra.mxu0 0.0
  %7629 = vmatprep.subr.mxu0 0.0
  %7630 = vmatpush1.msra.mxu0 0.0
  %7631 = vmatprep.subr.mxu0 0.0
  %7632 = vmatpush1.msra.mxu0 0.0
  %7633 = vmatprep.subr.mxu0 0.0
  %7634 = vmatpush1.msra.mxu0 0.0
  %7635 = vmatprep.subr.mxu0 0.0
  %7636 = vmatpush1.msra.mxu0 0.0
  %7637 = vmatprep.subr.mxu0 0.0
  %7638 = vmatpush1.msra.mxu0 0.0
  %7639 = vmatprep.subr.mxu0 0.0
  %7640 = vmatpush1.msra.mxu0 0.0
  %7641 = vmatprep.subr.mxu0 0.0
  %7642 = vmatpush1.msra.mxu0 0.0
  %7643 = vmatprep.subr.mxu0 0.0
  %7644 = vmatpush1.msra.mxu0 0.0
  %7645 = vmatprep.subr.mxu0 0.0
  %7646 = vmatpush1.msra.mxu0 0.0
  %7647 = vmatprep.subr.mxu0 0.0
  %7648 = vmatpush1.msra.mxu0 0.0
  %7649 = vmatprep.subr.mxu0 0.0
  %7650 = vmatpush1.msra.mxu0 0.0
  %7651 = vmatprep.subr.mxu0 0.0
  %7652 = vmatpush1.msra.mxu0 0.0
  %7653 = vmatprep.subr.mxu0 0.0
  %7654 = vmatpush1.msra.mxu0 0.0
  %7655 = vmatprep.subr.mxu0 0.0
  %7656 = vmatpush1.msra.mxu0 0.0
  %7657 = vmatprep.mubr.f32.mxu0 0.0
  %7658 = vmatmul.mubr.f32.gmra.mrb[0].mxu0 %v7582
  %v7659 = vpop.f32.mrb[0].mxu0
  %v7660 = vadd.f32 0.0, %v7659
  %v7661 = vpop.f32.mrb[0].mxu0
  %v7662 = vadd.f32 0.0, %v7661
  %7663 = vmatprep.mubr.f32.mxu0 0.0
  %7664 = vmatmul.mubr.f32.gmra.mrb[0].mxu0 %v7585
  %v7665 = vpop.f32.mrb[0].mxu0
  %v7666 = vadd.f32 0.0, %v7665
  %v7667 = vpop.f32.mrb[0].mxu0
  %v7668 = vadd.f32 0.0, %v7667
  %7669 = vdwg.mxu0
  %v7670 = vld [vmem:[%s4] sm:$0xff]
  %v7671 = vld [vmem:[%s4 + $0x8] sm:$0xff]
  %v7672 = vld [vmem:[%s4 + $0x10] sm:$0xff]
  %v7673 = vld [vmem:[%s4 + $0x18] sm:$0xff]
  %v7674 = vld [vmem:[%s4 + $0x20] sm:$0xff]
  %v7675 = vld [vmem:[%s4 + $0x28] sm:$0xff]
  %v7676 = vld [vmem:[%s4 + $0x30] sm:$0xff]
  %v7677 = vld [vmem:[%s4 + $0x38] sm:$0xff]
  %v7678 = vld [vmem:[%s4 + $0x40] sm:$0xff]
  %v7679 = vld [vmem:[%s4 + $0x48] sm:$0xff]
  %v7680 = vld [vmem:[%s4 + $0x50] sm:$0xff]
  %v7681 = vld [vmem:[%s4 + $0x58] sm:$0xff]
  %v7682 = vld [vmem:[%s4 + $0x60] sm:$0xff]
  %v7683 = vld [vmem:[%s4 + $0x68] sm:$0xff]
  %v7684 = vld [vmem:[%s4 + $0x70] sm:$0xff]
  %v7685 = vld [vmem:[%s4 + $0x78] sm:$0xff]
  %v7686 = vld [vmem:[%s4 + $0x80] sm:$0xff]
  %v7687 = vld [vmem:[%s4 + $0x88] sm:$0xff]
  %v7688 = vld [vmem:[%s4 + $0x90] sm:$0xff]
  %v7689 = vld [vmem:[%s4 + $0x98] sm:$0xff]
  %v7690 = vld [vmem:[%s4 + $0xa0] sm:$0xff]
  %v7692 = vsel %vm465, %v7662, 0
  %v7695 = vsel %vm465, %v7668, 0
  %7697 = vmatprep.subr.mxu0 0.0
  %7698 = vmatpush1.msra.mxu0 %v7670
  %7699 = vmatprep.subr.mxu0 0.0
  %7700 = vmatpush1.msra.mxu0 %v7671
  %7701 = vmatprep.subr.mxu0 0.0
  %7702 = vmatpush1.msra.mxu0 %v7672
  %7703 = vmatprep.subr.mxu0 0.0
  %7704 = vmatpush1.msra.mxu0 %v7673
  %7705 = vmatprep.subr.mxu0 0.0
  %7706 = vmatpush1.msra.mxu0 %v7674
  %7707 = vmatprep.subr.mxu0 0.0
  %7708 = vmatpush1.msra.mxu0 %v7675
  %7709 = vmatprep.subr.mxu0 0.0
  %7710 = vmatpush1.msra.mxu0 %v7676
  %7711 = vmatprep.subr.mxu0 0.0
  %7712 = vmatpush1.msra.mxu0 %v7677
  %7713 = vmatprep.subr.mxu0 0.0
  %7714 = vmatpush1.msra.mxu0 %v7678
  %7715 = vmatprep.subr.mxu0 0.0
  %7716 = vmatpush1.msra.mxu0 %v7679
  %7717 = vmatprep.subr.mxu0 0.0
  %7718 = vmatpush1.msra.mxu0 %v7680
  %7719 = vmatprep.subr.mxu0 0.0
  %7720 = vmatpush1.msra.mxu0 %v7681
  %7721 = vmatprep.subr.mxu0 0.0
  %7722 = vmatpush1.msra.mxu0 %v7682
  %7723 = vmatprep.subr.mxu0 0.0
  %7724 = vmatpush1.msra.mxu0 %v7683
  %7725 = vmatprep.subr.mxu0 0.0
  %7726 = vmatpush1.msra.mxu0 %v7684
  %7727 = vmatprep.subr.mxu0 0.0
  %7728 = vmatpush1.msra.mxu0 %v7685
  %7729 = vmatprep.subr.mxu0 0.0
  %7730 = vmatpush1.msra.mxu0 %v7686
  %7731 = vmatprep.subr.mxu0 0.0
  %7732 = vmatpush1.msra.mxu0 %v7687
  %7733 = vmatprep.subr.mxu0 0.0
  %7734 = vmatpush1.msra.mxu0 %v7688
  %7735 = vmatprep.subr.mxu0 0.0
  %7736 = vmatpush1.msra.mxu0 %v7689
  %7737 = vmatprep.subr.mxu0 0.0
  %7738 = vmatpush1.msra.mxu0 %v7690
  %7739 = vmatprep.subr.mxu0 0.0
  %7740 = vmatpush1.msra.mxu0 0.0
  %7741 = vmatprep.subr.mxu0 0.0
  %7742 = vmatpush1.msra.mxu0 0.0
  %7743 = vmatprep.subr.mxu0 0.0
  %7744 = vmatpush1.msra.mxu0 0.0
  %7745 = vmatprep.subr.mxu0 0.0
  %7746 = vmatpush1.msra.mxu0 0.0
  %7747 = vmatprep.subr.mxu0 0.0
  %7748 = vmatpush1.msra.mxu0 0.0
  %7749 = vmatprep.subr.mxu0 0.0
  %7750 = vmatpush1.msra.mxu0 0.0
  %7751 = vmatprep.subr.mxu0 0.0
  %7752 = vmatpush1.msra.mxu0 0.0
  %7753 = vmatprep.subr.mxu0 0.0
  %7754 = vmatpush1.msra.mxu0 0.0
  %7755 = vmatprep.subr.mxu0 0.0
  %7756 = vmatpush1.msra.mxu0 0.0
  %7757 = vmatprep.subr.mxu0 0.0
  %7758 = vmatpush1.msra.mxu0 0.0
  %7759 = vmatprep.subr.mxu0 0.0
  %7760 = vmatpush1.msra.mxu0 0.0
  %7761 = vmatprep.mubr.f32.mxu0 %v7692
  %7762 = vmatmul.mubr.f32.gmra.mrb[0].mxu0 %v7660
  %v7763 = vpop.f32.mrb[0].mxu0
  %v7764 = vadd.f32 0.0, %v7763
  %v7765 = vpop.f32.mrb[0].mxu0
  %7766 = vmatprep.mubr.f32.mxu0 %v7695
  %7767 = vmatmul.mubr.f32.gmra.mrb[0].mxu0 %v7666
  %v7768 = vpop.f32.mrb[0].mxu0
  %v7769 = vadd.f32 0.0, %v7768
  %v7770 = vpop.f32.mrb[0].mxu0
  %7771 = vdwg.mxu0
  %7772 = vst.msk [vmem:[#allocation3] sm:$0xff] %vm547, %v7764
  %7773 = vst.msk [vmem:[#allocation3 + $0x20] sm:$0x3] %vm549, %v7769
  %v7776 = vrot.slane %v7764, 1
  %v7777 = vrot.slane %v7769, 1
  %v7778 = vsel %vm553, %v7776, %v7777
  %7779 = vrot.lane.b32.xlu0 %v7778, 84
  %v7780 = vpop.permute.xlu0 %7779
  %7781 = vrot.lane.b32.xlu0 %v7777, 84
  %v7782 = vpop.permute.xlu0 %7781
  %7785 = vst.msk [vmem:[#allocation3] sm:$0xff] %vm563, %v7780
  %7786 = vst.msk [vmem:[#allocation3 + $0x8] sm:$0xff] %vm465, %v7780
  %7787 = vst.msk [vmem:[#allocation3 + $0x20] sm:$0x3] %vm566, %v7782
  %7788 = vst.msk [vmem:[#allocation3 + $0x28] sm:$0x3] %vm568, %v7782
  %v7789 = vrot.slane %v7764, 2
  %v7790 = vrot.slane %v7769, 2
  %v7791 = vsel %vm570, %v7789, %v7790
  %7792 = vrot.lane.b32.xlu0 %v7791, 40
  %v7793 = vpop.permute.xlu0 %7792
  %7794 = vrot.lane.b32.xlu0 %v7790, 40
  %v7795 = vpop.permute.xlu0 %7794
  %7798 = vst.msk [vmem:[#allocation3 + $0x8] sm:$0xff] %vm580, %v7793
  %7799 = vst.msk [vmem:[#allocation3 + $0x28] sm:$0x3] %vm582, %v7795
  %v7800 = vrot.slane %v7764, 3
  %v7801 = vrot.slane %v7769, 3
  %v7802 = vsel %vm584, %v7800, %v7801
  %7803 = vrot.lane.b32.xlu0 %v7802, 124
  %v7804 = vpop.permute.xlu0 %7803
  %7805 = vrot.lane.b32.xlu0 %v7801, 124
  %v7806 = vpop.permute.xlu0 %7805
  %7809 = vst.msk [vmem:[#allocation3 + $0x8] sm:$0xff] %vm594, %v7804
  %7810 = vst.msk [vmem:[#allocation3 + $0x10] sm:$0xff] %vm596, %v7804
  %7811 = vst.msk [vmem:[#allocation3 + $0x28] sm:$0x3] %vm598, %v7806
  %7812 = vst.msk [vmem:[#allocation3 + $0x30] sm:$0x3] %vm600, %v7806
  %v7813 = vrot.slane %v7764, 4
  %v7814 = vrot.slane %v7769, 4
  %v7815 = vsel %vm360, %v7813, %v7814
  %7816 = vrot.lane.b32.xlu0 %v7815, 80
  %v7817 = vpop.permute.xlu0 %7816
  %7818 = vrot.lane.b32.xlu0 %v7814, 80
  %v7819 = vpop.permute.xlu0 %7818
  %7822 = vst.msk [vmem:[#allocation3 + $0x10] sm:$0xff] %vm611, %v7817
  %7823 = vst.msk [vmem:[#allocation3 + $0x18] sm:$0xff] %vm613, %v7817
  %7824 = vst.msk [vmem:[#allocation3 + $0x30] sm:$0x3] %vm615, %v7819
  %7825 = vst.msk [vmem:[#allocation3 + $0x38] sm:$0x3] %vm617, %v7819
  %v7826 = vld [vmem:[#allocation3] sm:$0xff]
  %v7827 = vld [vmem:[#allocation3 + $0x8] sm:$0xff]
  %v7828 = vld [vmem:[#allocation3 + $0x10] sm:$0xff]
  %v7829 = vld [vmem:[#allocation3 + $0x18] sm:$0xff]
  %v7830 = vld [vmem:[#allocation3 + $0x20] sm:$0x3]
  %v7831 = vld [vmem:[#allocation3 + $0x28] sm:$0x3]
  %v7832 = vld [vmem:[#allocation3 + $0x30] sm:$0x3]
  %v7833 = vld [vmem:[#allocation3 + $0x38] sm:$0x3]
  %v7834 = vld [vmem:[%s5] sm:$0xff]
  %v7835 = vld [vmem:[%s5 + $0x8] sm:$0xff]
  %v7836 = vld [vmem:[%s5 + $0x10] sm:$0xff]
  %v7837 = vld [vmem:[%s5 + $0x18] sm:$0xff]
  %v7838 = vld [vmem:[%s5 + $0x20] sm:$0xff]
  %v7839 = vld [vmem:[%s5 + $0x28] sm:$0xff]
  %v7840 = vld [vmem:[%s5 + $0x30] sm:$0xff]
  %v7841 = vld [vmem:[%s5 + $0x38] sm:$0xff]
  %v7842 = vld [vmem:[%s5 + $0x40] sm:$0xff]
  %v7843 = vld [vmem:[%s5 + $0x48] sm:$0xff]
  %v7844 = vld [vmem:[%s5 + $0x50] sm:$0xff]
  %v7845 = vld [vmem:[%s5 + $0x58] sm:$0xff]
  %v7846 = vld [vmem:[%s5 + $0x60] sm:$0xff]
  %v7847 = vld [vmem:[%s5 + $0x68] sm:$0xff]
  %v7848 = vld [vmem:[%s5 + $0x70] sm:$0xff]
  %v7849 = vld [vmem:[%s5 + $0x78] sm:$0xff]
  %v7850 = vld [vmem:[%s5 + $0x80] sm:$0xff]
  %v7851 = vld [vmem:[%s5 + $0x88] sm:$0xff]
  %v7852 = vld [vmem:[%s5 + $0x90] sm:$0xff]
  %v7853 = vld [vmem:[%s5 + $0x98] sm:$0xff]
  %v7854 = vld [vmem:[%s5 + $0xa0] sm:$0xff]
  %v7855 = vld [vmem:[%s5 + $0xa8] sm:$0xff]
  %v7856 = vld [vmem:[%s5 + $0xb0] sm:$0xff]
  %v7857 = vld [vmem:[%s5 + $0xb8] sm:$0xff]
  %v7858 = vld [vmem:[%s5 + $0xc0] sm:$0xff]
  %v7859 = vld [vmem:[%s5 + $0xc8] sm:$0xff]
  %v7860 = vld [vmem:[%s5 + $0xd0] sm:$0xff]
  %v7861 = vld [vmem:[%s5 + $0xd8] sm:$0xff]
  %v7862 = vld [vmem:[%s5 + $0xe0] sm:$0xff]
  %v7863 = vld [vmem:[%s5 + $0xe8] sm:$0xff]
  %v7864 = vld [vmem:[%s5 + $0xf0] sm:$0xff]
  %v7865 = vld [vmem:[%s5 + $0xf8] sm:$0xff]
  %v7866 = vld [vmem:[%s5 + $0x100] sm:$0xff]
  %v7867 = vld [vmem:[%s5 + $0x108] sm:$0xff]
  %v7868 = vld [vmem:[%s5 + $0x110] sm:$0xff]
  %v7869 = vld [vmem:[%s5 + $0x118] sm:$0xff]
  %v7870 = vld [vmem:[%s5 + $0x120] sm:$0xff]
  %v7871 = vld [vmem:[%s5 + $0x128] sm:$0xff]
  %v7872 = vld [vmem:[%s5 + $0x130] sm:$0xff]
  %v7873 = vld [vmem:[%s5 + $0x138] sm:$0xff]
  %v7874 = vld [vmem:[%s5 + $0x140] sm:$0xff]
  %v7875 = vld [vmem:[%s5 + $0x148] sm:$0xff]
  %v7876 = vld [vmem:[%s5 + $0x150] sm:$0xff]
  %v7877 = vld [vmem:[%s5 + $0x158] sm:$0xff]
  %v7878 = vld [vmem:[%s5 + $0x160] sm:$0xff]
  %v7879 = vld [vmem:[%s5 + $0x168] sm:$0xff]
  %v7880 = vld [vmem:[%s5 + $0x170] sm:$0xff]
  %v7881 = vld [vmem:[%s5 + $0x178] sm:$0xff]
  %v7882 = vld [vmem:[%s5 + $0x180] sm:$0xff]
  %v7883 = vld [vmem:[%s5 + $0x188] sm:$0xff]
  %v7884 = vld [vmem:[%s5 + $0x190] sm:$0xff]
  %v7885 = vld [vmem:[%s5 + $0x198] sm:$0xff]
  %v7886 = vld [vmem:[%s5 + $0x1a0] sm:$0xff]
  %v7887 = vld [vmem:[%s5 + $0x1a8] sm:$0xff]
  %v7888 = vld [vmem:[%s5 + $0x1b0] sm:$0xff]
  %v7889 = vld [vmem:[%s5 + $0x1b8] sm:$0xff]
  %v7890 = vld [vmem:[%s5 + $0x1c0] sm:$0xff]
  %v7891 = vld [vmem:[%s5 + $0x1c8] sm:$0xff]
  %v7892 = vld [vmem:[%s5 + $0x1d0] sm:$0xff]
  %v7893 = vld [vmem:[%s5 + $0x1d8] sm:$0xff]
  %v7894 = vld [vmem:[%s5 + $0x1e0] sm:$0xff]
  %v7895 = vld [vmem:[%s5 + $0x1e8] sm:$0xff]
  %v7896 = vld [vmem:[%s5 + $0x1f0] sm:$0xff]
  %v7897 = vld [vmem:[%s5 + $0x1f8] sm:$0xff]
  %v7898 = vld [vmem:[%s5 + $0x200] sm:$0xff]
  %v7899 = vld [vmem:[%s5 + $0x208] sm:$0xff]
  %v7900 = vld [vmem:[%s5 + $0x210] sm:$0xff]
  %v7901 = vld [vmem:[%s5 + $0x218] sm:$0xff]
  %v7902 = vld [vmem:[%s5 + $0x220] sm:$0xff]
  %v7903 = vld [vmem:[%s5 + $0x228] sm:$0xff]
  %v7904 = vld [vmem:[%s5 + $0x230] sm:$0xff]
  %v7905 = vld [vmem:[%s5 + $0x238] sm:$0xff]
  %v7906 = vld [vmem:[%s5 + $0x240] sm:$0xff]
  %v7907 = vld [vmem:[%s5 + $0x248] sm:$0xff]
  %v7908 = vld [vmem:[%s5 + $0x250] sm:$0xff]
  %v7909 = vld [vmem:[%s5 + $0x258] sm:$0xff]
  %v7910 = vld [vmem:[%s5 + $0x260] sm:$0xff]
  %v7911 = vld [vmem:[%s5 + $0x268] sm:$0xff]
  %v7912 = vld [vmem:[%s5 + $0x270] sm:$0xff]
  %v7913 = vld [vmem:[%s5 + $0x278] sm:$0xff]
  %v7914 = vld [vmem:[%s5 + $0x280] sm:$0xff]
  %v7915 = vld [vmem:[%s5 + $0x288] sm:$0xff]
  %v7916 = vld [vmem:[%s5 + $0x290] sm:$0xff]
  %v7917 = vld [vmem:[%s5 + $0x298] sm:$0xff]
  %v7918 = vld [vmem:[%s5 + $0x2a0] sm:$0xff]
  %v7919 = vld [vmem:[%s5 + $0x2a8] sm:$0xff]
  %v7920 = vld [vmem:[%s5 + $0x2b0] sm:$0xff]
  %v7921 = vld [vmem:[%s5 + $0x2b8] sm:$0xff]
  %v7922 = vld [vmem:[%s5 + $0x2c0] sm:$0xff]
  %v7923 = vld [vmem:[%s5 + $0x2c8] sm:$0xff]
  %v7924 = vld [vmem:[%s5 + $0x2d0] sm:$0xff]
  %v7925 = vld [vmem:[%s5 + $0x2d8] sm:$0xff]
  %v7926 = vld [vmem:[%s5 + $0x2e0] sm:$0xff]
  %v7927 = vld [vmem:[%s5 + $0x2e8] sm:$0xff]
  %v7928 = vld [vmem:[%s5 + $0x2f0] sm:$0xff]
  %v7929 = vld [vmem:[%s5 + $0x2f8] sm:$0xff]
  %v7930 = vld [vmem:[%s5 + $0x300] sm:$0xff]
  %v7931 = vld [vmem:[%s5 + $0x308] sm:$0xff]
  %v7932 = vld [vmem:[%s5 + $0x310] sm:$0xff]
  %v7933 = vld [vmem:[%s5 + $0x318] sm:$0xff]
  %v7934 = vld [vmem:[%s5 + $0x320] sm:$0xff]
  %v7935 = vld [vmem:[%s5 + $0x328] sm:$0xff]
  %v7936 = vld [vmem:[%s5 + $0x330] sm:$0xff]
  %v7937 = vld [vmem:[%s5 + $0x338] sm:$0xff]
  %v7938 = vld [vmem:[%s5 + $0x340] sm:$0xf]
  %v7939 = vld [vmem:[%s5 + $0x348] sm:$0xf]
  %v7940 = vld [vmem:[%s6] sm:$0xff]
  %v7941 = vld [vmem:[%s6 + $0x8] sm:$0xff]
  %v7942 = vld [vmem:[%s6 + $0x10] sm:$0x3]
  %v7943 = vld [vmem:[%s6 + $0x18] sm:$0x3]
  %v7945 = vsel %vm613, %v7829, 0
  %v7948 = vsel %vm613, %v7833, 0
  %v7951 = vsel %vm360, %v7938, 0
  %v7954 = vsel %vm360, %v7939, 0
  %7956 = vmatprep.subr.mxu0 %v7835
  %7957 = vmatpush1.msra.mxu0 %v7834
  %7958 = vmatprep.subr.mxu0 %v7837
  %7959 = vmatpush1.msra.mxu0 %v7836
  %7960 = vmatprep.subr.mxu0 %v7839
  %7961 = vmatpush1.msra.mxu0 %v7838
  %7962 = vmatprep.subr.mxu0 %v7841
  %7963 = vmatpush1.msra.mxu0 %v7840
  %7964 = vmatprep.subr.mxu0 %v7843
  %7965 = vmatpush1.msra.mxu0 %v7842
  %7966 = vmatprep.subr.mxu0 %v7845
  %7967 = vmatpush1.msra.mxu0 %v7844
  %7968 = vmatprep.subr.mxu0 %v7847
  %7969 = vmatpush1.msra.mxu0 %v7846
  %7970 = vmatprep.subr.mxu0 %v7849
  %7971 = vmatpush1.msra.mxu0 %v7848
  %7972 = vmatprep.subr.mxu0 %v7851
  %7973 = vmatpush1.msra.mxu0 %v7850
  %7974 = vmatprep.subr.mxu0 %v7853
  %7975 = vmatpush1.msra.mxu0 %v7852
  %7976 = vmatprep.subr.mxu0 %v7855
  %7977 = vmatpush1.msra.mxu0 %v7854
  %7978 = vmatprep.subr.mxu0 %v7857
  %7979 = vmatpush1.msra.mxu0 %v7856
  %7980 = vmatprep.subr.mxu0 %v7859
  %7981 = vmatpush1.msra.mxu0 %v7858
  %7982 = vmatprep.subr.mxu0 %v7861
  %7983 = vmatpush1.msra.mxu0 %v7860
  %7984 = vmatprep.subr.mxu0 %v7863
  %7985 = vmatpush1.msra.mxu0 %v7862
  %7986 = vmatprep.subr.mxu0 %v7865
  %7987 = vmatpush1.msra.mxu0 %v7864
  %7988 = vmatprep.subr.mxu0 %v7867
  %7989 = vmatpush1.msra.mxu0 %v7866
  %7990 = vmatprep.subr.mxu0 %v7869
  %7991 = vmatpush1.msra.mxu0 %v7868
  %7992 = vmatprep.subr.mxu0 %v7871
  %7993 = vmatpush1.msra.mxu0 %v7870
  %7994 = vmatprep.subr.mxu0 %v7873
  %7995 = vmatpush1.msra.mxu0 %v7872
  %7996 = vmatprep.subr.mxu0 %v7875
  %7997 = vmatpush1.msra.mxu0 %v7874
  %7998 = vmatprep.subr.mxu0 %v7877
  %7999 = vmatpush1.msra.mxu0 %v7876
  %8000 = vmatprep.subr.mxu0 %v7879
  %8001 = vmatpush1.msra.mxu0 %v7878
  %8002 = vmatprep.subr.mxu0 %v7881
  %8003 = vmatpush1.msra.mxu0 %v7880
  %8004 = vmatprep.subr.mxu0 %v7883
  %8005 = vmatpush1.msra.mxu0 %v7882
  %8006 = vmatprep.subr.mxu0 %v7885
  %8007 = vmatpush1.msra.mxu0 %v7884
  %8008 = vmatprep.subr.mxu0 %v7887
  %8009 = vmatpush1.msra.mxu0 %v7886
  %8010 = vmatprep.subr.mxu0 %v7889
  %8011 = vmatpush1.msra.mxu0 %v7888
  %8012 = vmatprep.subr.mxu0 %v7891
  %8013 = vmatpush1.msra.mxu0 %v7890
  %8014 = vmatprep.subr.mxu0 %v7893
  %8015 = vmatpush1.msra.mxu0 %v7892
  %8016 = vmatprep.subr.mxu0 %v7895
  %8017 = vmatpush1.msra.mxu0 %v7894
  %8018 = vmatprep.subr.mxu0 %v7897
  %8019 = vmatpush1.msra.mxu0 %v7896
  %8020 = vmatprep.mubr.f32.mxu0 %v7827
  %8021 = vmatmul.mubr.f32.gmra.mrb[0].mxu0 %v7826
  %v8022 = vpop.f32.mrb[0].mxu0
  %v8023 = vadd.f32 %v7940, %v8022
  %v8024 = vpop.f32.mrb[0].mxu0
  %v8025 = vadd.f32 %v7941, %v8024
  %8026 = vmatprep.mubr.f32.mxu0 %v7831
  %8027 = vmatmul.mubr.f32.gmra.mrb[0].mxu0 %v7830
  %v8028 = vpop.f32.mrb[0].mxu0
  %v8029 = vadd.f32 %v7942, %v8028
  %v8030 = vpop.f32.mrb[0].mxu0
  %v8031 = vadd.f32 %v7943, %v8030
  %8032 = vdwg.mxu0
  %8033 = vmatprep.subr.mxu0 %v7899
  %8034 = vmatpush1.msra.mxu0 %v7898
  %8035 = vmatprep.subr.mxu0 %v7901
  %8036 = vmatpush1.msra.mxu0 %v7900
  %8037 = vmatprep.subr.mxu0 %v7903
  %8038 = vmatpush1.msra.mxu0 %v7902
  %8039 = vmatprep.subr.mxu0 %v7905
  %8040 = vmatpush1.msra.mxu0 %v7904
  %8041 = vmatprep.subr.mxu0 %v7907
  %8042 = vmatpush1.msra.mxu0 %v7906
  %8043 = vmatprep.subr.mxu0 %v7909
  %8044 = vmatpush1.msra.mxu0 %v7908
  %8045 = vmatprep.subr.mxu0 %v7911
  %8046 = vmatpush1.msra.mxu0 %v7910
  %8047 = vmatprep.subr.mxu0 %v7913
  %8048 = vmatpush1.msra.mxu0 %v7912
  %8049 = vmatprep.subr.mxu0 %v7915
  %8050 = vmatpush1.msra.mxu0 %v7914
  %8051 = vmatprep.subr.mxu0 %v7917
  %8052 = vmatpush1.msra.mxu0 %v7916
  %8053 = vmatprep.subr.mxu0 %v7919
  %8054 = vmatpush1.msra.mxu0 %v7918
  %8055 = vmatprep.subr.mxu0 %v7921
  %8056 = vmatpush1.msra.mxu0 %v7920
  %8057 = vmatprep.subr.mxu0 %v7923
  %8058 = vmatpush1.msra.mxu0 %v7922
  %8059 = vmatprep.subr.mxu0 %v7925
  %8060 = vmatpush1.msra.mxu0 %v7924
  %8061 = vmatprep.subr.mxu0 %v7927
  %8062 = vmatpush1.msra.mxu0 %v7926
  %8063 = vmatprep.subr.mxu0 %v7929
  %8064 = vmatpush1.msra.mxu0 %v7928
  %8065 = vmatprep.subr.mxu0 %v7931
  %8066 = vmatpush1.msra.mxu0 %v7930
  %8067 = vmatprep.subr.mxu0 %v7933
  %8068 = vmatpush1.msra.mxu0 %v7932
  %8069 = vmatprep.subr.mxu0 %v7935
  %8070 = vmatpush1.msra.mxu0 %v7934
  %8071 = vmatprep.subr.mxu0 %v7937
  %8072 = vmatpush1.msra.mxu0 %v7936
  %8073 = vmatprep.subr.mxu0 %v7954
  %8074 = vmatpush1.msra.mxu0 %v7951
  %8075 = vmatprep.subr.mxu0 0.0
  %8076 = vmatpush1.msra.mxu0 0.0
  %8077 = vmatprep.subr.mxu0 0.0
  %8078 = vmatpush1.msra.mxu0 0.0
  %8079 = vmatprep.subr.mxu0 0.0
  %8080 = vmatpush1.msra.mxu0 0.0
  %8081 = vmatprep.subr.mxu0 0.0
  %8082 = vmatpush1.msra.mxu0 0.0
  %8083 = vmatprep.subr.mxu0 0.0
  %8084 = vmatpush1.msra.mxu0 0.0
  %8085 = vmatprep.subr.mxu0 0.0
  %8086 = vmatpush1.msra.mxu0 0.0
  %8087 = vmatprep.subr.mxu0 0.0
  %8088 = vmatpush1.msra.mxu0 0.0
  %8089 = vmatprep.subr.mxu0 0.0
  %8090 = vmatpush1.msra.mxu0 0.0
  %8091 = vmatprep.subr.mxu0 0.0
  %8092 = vmatpush1.msra.mxu0 0.0
  %8093 = vmatprep.subr.mxu0 0.0
  %8094 = vmatpush1.msra.mxu0 0.0
  %8095 = vmatprep.subr.mxu0 0.0
  %8096 = vmatpush1.msra.mxu0 0.0
  %8097 = vmatprep.mubr.f32.mxu0 %v7945
  %8098 = vmatmul.mubr.f32.gmra.mrb[0].mxu0 %v7828
  %v8099 = vpop.f32.mrb[0].mxu0
  %v8100 = vadd.f32 %v8023, %v8099
  %v8101 = vpop.f32.mrb[0].mxu0
  %v8102 = vadd.f32 %v8025, %v8101
  %8103 = vmatprep.mubr.f32.mxu0 %v7948
  %8104 = vmatmul.mubr.f32.gmra.mrb[0].mxu0 %v7832
  %v8105 = vpop.f32.mrb[0].mxu0
  %v8106 = vadd.f32 %v8029, %v8105
  %v8107 = vpop.f32.mrb[0].mxu0
  %v8108 = vadd.f32 %v8031, %v8107
  %8109 = vdwg.mxu0
  %v8110 = vxor.u32 %v8100, 2147483648
  %v8111 = vxor.u32 %v8102, 2147483648
  %v8112 = vxor.u32 %v8106, 2147483648
  %v8113 = vxor.u32 %v8108, 2147483648
  %v8114 = vmul.f32 %v8110, 1.442695
  %v8115 = vpow.pop %v8114
  %v8116 = vmul.f32 %v8111, 1.442695
  %v8117 = vpow.pop %v8116
  %v8118 = vmul.f32 %v8112, 1.442695
  %v8119 = vpow.pop %v8118
  %v8120 = vmul.f32 %v8113, 1.442695
  %v8121 = vpow.pop %v8120
  %v8122 = vadd.f32 %v8115, 1.0
  %v8123 = vadd.f32 %v8117, 1.0
  %v8124 = vadd.f32 %v8119, 1.0
  %v8125 = vadd.f32 %v8121, 1.0
  %v8126 = vrcp.pop %v8122
  %v8127 = vmul.f32 1.0, %v8126
  %v8128 = vrcp.pop %v8123
  %v8129 = vmul.f32 1.0, %v8128
  %v8130 = vrcp.pop %v8124
  %v8131 = vmul.f32 1.0, %v8130
  %v8132 = vrcp.pop %v8125
  %v8133 = vmul.f32 1.0, %v8132
  %v8134 = vld [vmem:[%s7] sm:$0x1f]
  %v8136 = vsel %vm928, %v8134, 0
  %v8139 = vsel %vm932, %v8131, 0
  %v8142 = vsel %vm932, %v8133, 0
  %8144 = vmatprep.subr.mxu0 %v8129
  %8145 = vmatpush1.msra.mxu0 %v8127
  %8146 = vmatprep.subr.mxu0 %v8142
  %8147 = vmatpush1.msra.mxu0 %v8139
  %8148 = vmatprep.subr.mxu0 0.0
  %8149 = vmatpush1.msra.mxu0 0.0
  %8150 = vmatprep.subr.mxu0 0.0
  %8151 = vmatpush1.msra.mxu0 0.0
  %8152 = vmatprep.subr.mxu0 0.0
  %8153 = vmatpush1.msra.mxu0 0.0
  %8154 = vmatprep.subr.mxu0 0.0
  %8155 = vmatpush1.msra.mxu0 0.0
  %8156 = vmatprep.subr.mxu0 0.0
  %8157 = vmatpush1.msra.mxu0 0.0
  %8158 = vmatprep.subr.mxu0 0.0
  %8159 = vmatpush1.msra.mxu0 0.0
  %8160 = vmatprep.subr.mxu0 0.0
  %8161 = vmatpush1.msra.mxu0 0.0
  %8162 = vmatprep.subr.mxu0 0.0
  %8163 = vmatpush1.msra.mxu0 0.0
  %8164 = vmatprep.subr.mxu0 0.0
  %8165 = vmatpush1.msra.mxu0 0.0
  %8166 = vmatprep.subr.mxu0 0.0
  %8167 = vmatpush1.msra.mxu0 0.0
  %8168 = vmatprep.subr.mxu0 0.0
  %8169 = vmatpush1.msra.mxu0 0.0
  %8170 = vmatprep.subr.mxu0 0.0
  %8171 = vmatpush1.msra.mxu0 0.0
  %8172 = vmatprep.subr.mxu0 0.0
  %8173 = vmatpush1.msra.mxu0 0.0
  %8174 = vmatprep.subr.mxu0 0.0
  %8175 = vmatpush1.msra.mxu0 0.0
  %8176 = vmatprep.subr.mxu0 0.0
  %8177 = vmatpush1.msra.mxu0 0.0
  %8178 = vmatprep.subr.mxu0 0.0
  %8179 = vmatpush1.msra.mxu0 0.0
  %8180 = vmatprep.subr.mxu0 0.0
  %8181 = vmatpush1.msra.mxu0 0.0
  %8182 = vmatprep.subr.mxu0 0.0
  %8183 = vmatpush1.msra.mxu0 0.0
  %8184 = vmatprep.subr.mxu0 0.0
  %8185 = vmatpush1.msra.mxu0 0.0
  %8186 = vmatprep.subr.mxu0 0.0
  %8187 = vmatpush1.msra.mxu0 0.0
  %8188 = vmatprep.subr.mxu0 0.0
  %8189 = vmatpush1.msra.mxu0 0.0
  %8190 = vmatprep.subr.mxu0 0.0
  %8191 = vmatpush1.msra.mxu0 0.0
  %8192 = vmatprep.subr.mxu0 0.0
  %8193 = vmatpush1.msra.mxu0 0.0
  %8194 = vmatprep.subr.mxu0 0.0
  %8195 = vmatpush1.msra.mxu0 0.0
  %8196 = vmatprep.subr.mxu0 0.0
  %8197 = vmatpush1.msra.mxu0 0.0
  %8198 = vmatprep.subr.mxu0 0.0
  %8199 = vmatpush1.msra.mxu0 0.0
  %8200 = vmatprep.subr.mxu0 0.0
  %8201 = vmatpush1.msra.mxu0 0.0
  %8202 = vmatprep.subr.mxu0 0.0
  %8203 = vmatpush1.msra.mxu0 0.0
  %8204 = vmatprep.subr.mxu0 0.0
  %8205 = vmatpush1.msra.mxu0 0.0
  %8206 = vmatprep.subr.mxu0 0.0
  %8207 = vmatpush1.msra.mxu0 0.0
  %8208 = vmatprep.mubr.f32.mxu0 0.0
  %8209 = vmatmul.mubr.f32.gmra.mrb[0].mxu0 %v8136
  %v8210 = vpop.f32.mrb[0].mxu0
  %v8211 = vadd.f32 0.0, %v8210
  %v8212 = vpop.f32.mrb[0].mxu0
  %v8213 = vadd.f32 0.0, %v8212
  %8214 = vdwg.mxu0
  %v8215 = vld [vmem:[%s8] sm:$0xff]
  %v8216 = vld [vmem:[%s8 + $0x8] sm:$0xff]
  %v8217 = vld [vmem:[%s8 + $0x10] sm:$0xff]
  %v8218 = vld [vmem:[%s8 + $0x18] sm:$0xff]
  %v8219 = vld [vmem:[%s8 + $0x20] sm:$0xff]
  %v8220 = vld [vmem:[%s8 + $0x28] sm:$0xff]
  %v8221 = vld [vmem:[%s8 + $0x30] sm:$0xff]
  %v8222 = vld [vmem:[%s8 + $0x38] sm:$0xff]
  %v8223 = vld [vmem:[%s8 + $0x40] sm:$0xff]
  %v8224 = vld [vmem:[%s8 + $0x48] sm:$0xff]
  %v8225 = vld [vmem:[%s8 + $0x50] sm:$0xff]
  %v8226 = vld [vmem:[%s8 + $0x58] sm:$0xff]
  %v8227 = vld [vmem:[%s8 + $0x60] sm:$0xff]
  %v8228 = vld [vmem:[%s8 + $0x68] sm:$0xff]
  %v8229 = vld [vmem:[%s8 + $0x70] sm:$0xff]
  %v8230 = vld [vmem:[%s8 + $0x78] sm:$0xff]
  %v8231 = vld [vmem:[%s8 + $0x80] sm:$0xff]
  %v8232 = vld [vmem:[%s8 + $0x88] sm:$0xff]
  %v8233 = vld [vmem:[%s8 + $0x90] sm:$0xff]
  %v8234 = vld [vmem:[%s8 + $0x98] sm:$0xff]
  %v8236 = vsel %vm54, %v8213, 0
  %8238 = vmatprep.subr.mxu0 0.0
  %8239 = vmatpush1.msra.mxu0 %v8215
  %8240 = vmatprep.subr.mxu0 0.0
  %8241 = vmatpush1.msra.mxu0 %v8216
  %8242 = vmatprep.subr.mxu0 0.0
  %8243 = vmatpush1.msra.mxu0 %v8217
  %8244 = vmatprep.subr.mxu0 0.0
  %8245 = vmatpush1.msra.mxu0 %v8218
  %8246 = vmatprep.subr.mxu0 0.0
  %8247 = vmatpush1.msra.mxu0 %v8219
  %8248 = vmatprep.subr.mxu0 0.0
  %8249 = vmatpush1.msra.mxu0 %v8220
  %8250 = vmatprep.subr.mxu0 0.0
  %8251 = vmatpush1.msra.mxu0 %v8221
  %8252 = vmatprep.subr.mxu0 0.0
  %8253 = vmatpush1.msra.mxu0 %v8222
  %8254 = vmatprep.subr.mxu0 0.0
  %8255 = vmatpush1.msra.mxu0 %v8223
  %8256 = vmatprep.subr.mxu0 0.0
  %8257 = vmatpush1.msra.mxu0 %v8224
  %8258 = vmatprep.subr.mxu0 0.0
  %8259 = vmatpush1.msra.mxu0 %v8225
  %8260 = vmatprep.subr.mxu0 0.0
  %8261 = vmatpush1.msra.mxu0 %v8226
  %8262 = vmatprep.subr.mxu0 0.0
  %8263 = vmatpush1.msra.mxu0 %v8227
  %8264 = vmatprep.subr.mxu0 0.0
  %8265 = vmatpush1.msra.mxu0 %v8228
  %8266 = vmatprep.subr.mxu0 0.0
  %8267 = vmatpush1.msra.mxu0 %v8229
  %8268 = vmatprep.subr.mxu0 0.0
  %8269 = vmatpush1.msra.mxu0 %v8230
  %8270 = vmatprep.subr.mxu0 0.0
  %8271 = vmatpush1.msra.mxu0 %v8231
  %8272 = vmatprep.subr.mxu0 0.0
  %8273 = vmatpush1.msra.mxu0 %v8232
  %8274 = vmatprep.subr.mxu0 0.0
  %8275 = vmatpush1.msra.mxu0 %v8233
  %8276 = vmatprep.subr.mxu0 0.0
  %8277 = vmatpush1.msra.mxu0 %v8234
  %8278 = vmatprep.subr.mxu0 0.0
  %8279 = vmatpush1.msra.mxu0 0.0
  %8280 = vmatprep.subr.mxu0 0.0
  %8281 = vmatpush1.msra.mxu0 0.0
  %8282 = vmatprep.subr.mxu0 0.0
  %8283 = vmatpush1.msra.mxu0 0.0
  %8284 = vmatprep.subr.mxu0 0.0
  %8285 = vmatpush1.msra.mxu0 0.0
  %8286 = vmatprep.subr.mxu0 0.0
  %8287 = vmatpush1.msra.mxu0 0.0
  %8288 = vmatprep.subr.mxu0 0.0
  %8289 = vmatpush1.msra.mxu0 0.0
  %8290 = vmatprep.subr.mxu0 0.0
  %8291 = vmatpush1.msra.mxu0 0.0
  %8292 = vmatprep.subr.mxu0 0.0
  %8293 = vmatpush1.msra.mxu0 0.0
  %8294 = vmatprep.subr.mxu0 0.0
  %8295 = vmatpush1.msra.mxu0 0.0
  %8296 = vmatprep.subr.mxu0 0.0
  %8297 = vmatpush1.msra.mxu0 0.0
  %8298 = vmatprep.subr.mxu0 0.0
  %8299 = vmatpush1.msra.mxu0 0.0
  %8300 = vmatprep.subr.mxu0 0.0
  %8301 = vmatpush1.msra.mxu0 0.0
  %8302 = vmatprep.mubr.f32.mxu0 %v8236
  %8303 = vmatmul.mubr.f32.gmra.mrb[0].mxu0 %v8211
  %v8304 = vpop.f32.mrb[0].mxu0
  %v8305 = vadd.f32 0.0, %v8304
  %v8306 = vpop.f32.mrb[0].mxu0
  %8307 = vdwg.mxu0
  %8308 = vst.msk [vmem:[#allocation4 + $0x7] sm:$0x1] %vm1103, %v8305
  %8309 = vst.msk [vmem:[%s1105 + $0x6] sm:$0x2] %vm1106, %v8305
  %8310 = vst.msk [vmem:[%s1108 + $0x5] sm:$0x4] %vm1109, %v8305
  %8311 = vst.msk [vmem:[%s1111 + $0x4] sm:$0x8] %vm1112, %v8305
  %8312 = vst.msk [vmem:[%s1114 + $0x3] sm:$0x10] %vm1115, %v8305
  %v8313 = vld [vmem:[#allocation4] sm:$0xff]
  %v8314 = vld [vmem:[%s9] sm:$0xff]
  %v8315 = vld [vmem:[%s9 + $0x8] sm:$0xff]
  %v8316 = vld [vmem:[%s9 + $0x10] sm:$0xff]
  %v8317 = vld [vmem:[%s9 + $0x18] sm:$0xff]
  %v8318 = vld [vmem:[%s9 + $0x20] sm:$0xff]
  %v8319 = vld [vmem:[%s9 + $0x28] sm:$0xff]
  %v8320 = vld [vmem:[%s9 + $0x30] sm:$0xff]
  %v8321 = vld [vmem:[%s9 + $0x38] sm:$0xff]
  %v8322 = vld [vmem:[%s9 + $0x40] sm:$0xff]
  %v8323 = vld [vmem:[%s9 + $0x48] sm:$0xff]
  %v8324 = vld [vmem:[%s1105] sm:$0xff]
  %s8325 = scalar_lea.vmem %s9, 80
  %v8326 = vld [vmem:[%s8325] sm:$0xff]
  %v8327 = vld [vmem:[%s8325 + $0x8] sm:$0xff]
  %v8328 = vld [vmem:[%s8325 + $0x10] sm:$0xff]
  %v8329 = vld [vmem:[%s8325 + $0x18] sm:$0xff]
  %v8330 = vld [vmem:[%s8325 + $0x20] sm:$0xff]
  %v8331 = vld [vmem:[%s8325 + $0x28] sm:$0xff]
  %v8332 = vld [vmem:[%s8325 + $0x30] sm:$0xff]
  %v8333 = vld [vmem:[%s8325 + $0x38] sm:$0xff]
  %v8334 = vld [vmem:[%s8325 + $0x40] sm:$0xff]
  %v8335 = vld [vmem:[%s8325 + $0x48] sm:$0xff]
  %v8337 = vsel %vm596, %v8324, 0
  %8339 = vmatprep.subr.mxu0 0.0
  %8340 = vmatpush1.msra.mxu0 %v8326
  %8341 = vmatprep.subr.mxu0 0.0
  %8342 = vmatpush1.msra.mxu0 %v8327
  %8343 = vmatprep.subr.mxu0 0.0
  %8344 = vmatpush1.msra.mxu0 %v8328
  %8345 = vmatprep.subr.mxu0 0.0
  %8346 = vmatpush1.msra.mxu0 %v8329
  %8347 = vmatprep.subr.mxu0 0.0
  %8348 = vmatpush1.msra.mxu0 %v8330
  %8349 = vmatprep.subr.mxu0 0.0
  %8350 = vmatpush1.msra.mxu0 %v8331
  %8351 = vmatprep.subr.mxu0 0.0
  %8352 = vmatpush1.msra.mxu0 %v8332
  %8353 = vmatprep.subr.mxu0 0.0
  %8354 = vmatpush1.msra.mxu0 %v8333
  %8355 = vmatprep.subr.mxu0 0.0
  %8356 = vmatpush1.msra.mxu0 %v8334
  %8357 = vmatprep.subr.mxu0 0.0
  %8358 = vmatpush1.msra.mxu0 %v8335
  %8359 = vmatprep.subr.mxu0 0.0
  %8360 = vmatpush1.msra.mxu0 0.0
  %8361 = vmatprep.subr.mxu0 0.0
  %8362 = vmatpush1.msra.mxu0 0.0
  %8363 = vmatprep.subr.mxu0 0.0
  %8364 = vmatpush1.msra.mxu0 0.0
  %8365 = vmatprep.subr.mxu0 0.0
  %8366 = vmatpush1.msra.mxu0 0.0
  %8367 = vmatprep.subr.mxu0 0.0
  %8368 = vmatpush1.msra.mxu0 0.0
  %8369 = vmatprep.subr.mxu0 0.0
  %8370 = vmatpush1.msra.mxu0 0.0
  %8371 = vmatprep.subr.mxu0 0.0
  %8372 = vmatpush1.msra.mxu0 0.0
  %8373 = vmatprep.subr.mxu0 0.0
  %8374 = vmatpush1.msra.mxu0 0.0
  %8375 = vmatprep.subr.mxu0 0.0
  %8376 = vmatpush1.msra.mxu0 0.0
  %8377 = vmatprep.subr.mxu0 0.0
  %8378 = vmatpush1.msra.mxu0 0.0
  %8379 = vmatprep.subr.mxu0 0.0
  %8380 = vmatpush1.msra.mxu0 0.0
  %8381 = vmatprep.subr.mxu0 0.0
  %8382 = vmatpush1.msra.mxu0 0.0
  %8383 = vmatprep.subr.mxu0 0.0
  %8384 = vmatpush1.msra.mxu0 0.0
  %8385 = vmatprep.subr.mxu0 0.0
  %8386 = vmatpush1.msra.mxu0 0.0
  %8387 = vmatprep.subr.mxu0 0.0
  %8388 = vmatpush1.msra.mxu0 0.0
  %8389 = vmatprep.subr.mxu0 0.0
  %8390 = vmatpush1.msra.mxu0 0.0
  %8391 = vmatprep.subr.mxu0 0.0
  %8392 = vmatpush1.msra.mxu0 0.0
  %8393 = vmatprep.subr.mxu0 0.0
  %8394 = vmatpush1.msra.mxu0 0.0
  %8395 = vmatprep.subr.mxu0 0.0
  %8396 = vmatpush1.msra.mxu0 0.0
  %8397 = vmatprep.subr.mxu0 0.0
  %8398 = vmatpush1.msra.mxu0 0.0
  %8399 = vmatprep.subr.mxu0 0.0
  %8400 = vmatpush1.msra.mxu0 0.0
  %8401 = vmatprep.subr.mxu0 0.0
  %8402 = vmatpush1.msra.mxu0 0.0
  %8403 = vmatprep.mubr.f32.mxu0 0.0
  %8404 = vmatmul.mubr.f32.gmra.mrb[0].mxu0 %v8337
  %v8405 = vpop.f32.mrb[0].mxu0
  %v8406 = vadd.f32 0.0, %v8405
  %v8407 = vpop.f32.mrb[0].mxu0
  %8408 = vdwg.mxu0
  %v8410 = vsel %vm596, %v8313, 0
  %8412 = vmatprep.subr.mxu0 0.0
  %8413 = vmatpush1.msra.mxu0 %v8314
  %8414 = vmatprep.subr.mxu0 0.0
  %8415 = vmatpush1.msra.mxu0 %v8315
  %8416 = vmatprep.subr.mxu0 0.0
  %8417 = vmatpush1.msra.mxu0 %v8316
  %8418 = vmatprep.subr.mxu0 0.0
  %8419 = vmatpush1.msra.mxu0 %v8317
  %8420 = vmatprep.subr.mxu0 0.0
  %8421 = vmatpush1.msra.mxu0 %v8318
  %8422 = vmatprep.subr.mxu0 0.0
  %8423 = vmatpush1.msra.mxu0 %v8319
  %8424 = vmatprep.subr.mxu0 0.0
  %8425 = vmatpush1.msra.mxu0 %v8320
  %8426 = vmatprep.subr.mxu0 0.0
  %8427 = vmatpush1.msra.mxu0 %v8321
  %8428 = vmatprep.subr.mxu0 0.0
  %8429 = vmatpush1.msra.mxu0 %v8322
  %8430 = vmatprep.subr.mxu0 0.0
  %8431 = vmatpush1.msra.mxu0 %v8323
  %8432 = vmatprep.subr.mxu0 0.0
  %8433 = vmatpush1.msra.mxu0 0.0
  %8434 = vmatprep.subr.mxu0 0.0
  %8435 = vmatpush1.msra.mxu0 0.0
  %8436 = vmatprep.subr.mxu0 0.0
  %8437 = vmatpush1.msra.mxu0 0.0
  %8438 = vmatprep.subr.mxu0 0.0
  %8439 = vmatpush1.msra.mxu0 0.0
  %8440 = vmatprep.subr.mxu0 0.0
  %8441 = vmatpush1.msra.mxu0 0.0
  %8442 = vmatprep.subr.mxu0 0.0
  %8443 = vmatpush1.msra.mxu0 0.0
  %8444 = vmatprep.subr.mxu0 0.0
  %8445 = vmatpush1.msra.mxu0 0.0
  %8446 = vmatprep.subr.mxu0 0.0
  %8447 = vmatpush1.msra.mxu0 0.0
  %8448 = vmatprep.subr.mxu0 0.0
  %8449 = vmatpush1.msra.mxu0 0.0
  %8450 = vmatprep.subr.mxu0 0.0
  %8451 = vmatpush1.msra.mxu0 0.0
  %8452 = vmatprep.subr.mxu0 0.0
  %8453 = vmatpush1.msra.mxu0 0.0
  %8454 = vmatprep.subr.mxu0 0.0
  %8455 = vmatpush1.msra.mxu0 0.0
  %8456 = vmatprep.subr.mxu0 0.0
  %8457 = vmatpush1.msra.mxu0 0.0
  %8458 = vmatprep.subr.mxu0 0.0
  %8459 = vmatpush1.msra.mxu0 0.0
  %8460 = vmatprep.subr.mxu0 0.0
  %8461 = vmatpush1.msra.mxu0 0.0
  %8462 = vmatprep.subr.mxu0 0.0
  %8463 = vmatpush1.msra.mxu0 0.0
  %8464 = vmatprep.subr.mxu0 0.0
  %8465 = vmatpush1.msra.mxu0 0.0
  %8466 = vmatprep.subr.mxu0 0.0
  %8467 = vmatpush1.msra.mxu0 0.0
  %8468 = vmatprep.subr.mxu0 0.0
  %8469 = vmatpush1.msra.mxu0 0.0
  %8470 = vmatprep.subr.mxu0 0.0
  %8471 = vmatpush1.msra.mxu0 0.0
  %8472 = vmatprep.subr.mxu0 0.0
  %8473 = vmatpush1.msra.mxu0 0.0
  %8474 = vmatprep.subr.mxu0 0.0
  %8475 = vmatpush1.msra.mxu0 0.0
  %8476 = vmatprep.mubr.f32.mxu0 0.0
  %8477 = vmatmul.mubr.f32.gmra.mrb[0].mxu0 %v8410
  %v8478 = vpop.f32.mrb[0].mxu0
  %v8479 = vadd.f32 %v8406, %v8478
  %v8480 = vpop.f32.mrb[0].mxu0
  %8481 = vdwg.mxu0
  %v8482 = vld [vmem:[%s1108] sm:$0xff]
  %s8483 = scalar_lea.vmem %s9, 160
  %v8484 = vld [vmem:[%s8483] sm:$0xff]
  %v8485 = vld [vmem:[%s8483 + $0x8] sm:$0xff]
  %v8486 = vld [vmem:[%s8483 + $0x10] sm:$0xff]
  %v8487 = vld [vmem:[%s8483 + $0x18] sm:$0xff]
  %v8488 = vld [vmem:[%s8483 + $0x20] sm:$0xff]
  %v8489 = vld [vmem:[%s8483 + $0x28] sm:$0xff]
  %v8490 = vld [vmem:[%s8483 + $0x30] sm:$0xff]
  %v8491 = vld [vmem:[%s8483 + $0x38] sm:$0xff]
  %v8492 = vld [vmem:[%s8483 + $0x40] sm:$0xff]
  %v8493 = vld [vmem:[%s8483 + $0x48] sm:$0xff]
  %v8495 = vsel %vm596, %v8482, 0
  %8497 = vmatprep.subr.mxu0 0.0
  %8498 = vmatpush1.msra.mxu0 %v8484
  %8499 = vmatprep.subr.mxu0 0.0
  %8500 = vmatpush1.msra.mxu0 %v8485
  %8501 = vmatprep.subr.mxu0 0.0
  %8502 = vmatpush1.msra.mxu0 %v8486
  %8503 = vmatprep.subr.mxu0 0.0
  %8504 = vmatpush1.msra.mxu0 %v8487
  %8505 = vmatprep.subr.mxu0 0.0
  %8506 = vmatpush1.msra.mxu0 %v8488
  %8507 = vmatprep.subr.mxu0 0.0
  %8508 = vmatpush1.msra.mxu0 %v8489
  %8509 = vmatprep.subr.mxu0 0.0
  %8510 = vmatpush1.msra.mxu0 %v8490
  %8511 = vmatprep.subr.mxu0 0.0
  %8512 = vmatpush1.msra.mxu0 %v8491
  %8513 = vmatprep.subr.mxu0 0.0
  %8514 = vmatpush1.msra.mxu0 %v8492
  %8515 = vmatprep.subr.mxu0 0.0
  %8516 = vmatpush1.msra.mxu0 %v8493
  %8517 = vmatprep.subr.mxu0 0.0
  %8518 = vmatpush1.msra.mxu0 0.0
  %8519 = vmatprep.subr.mxu0 0.0
  %8520 = vmatpush1.msra.mxu0 0.0
  %8521 = vmatprep.subr.mxu0 0.0
  %8522 = vmatpush1.msra.mxu0 0.0
  %8523 = vmatprep.subr.mxu0 0.0
  %8524 = vmatpush1.msra.mxu0 0.0
  %8525 = vmatprep.subr.mxu0 0.0
  %8526 = vmatpush1.msra.mxu0 0.0
  %8527 = vmatprep.subr.mxu0 0.0
  %8528 = vmatpush1.msra.mxu0 0.0
  %8529 = vmatprep.subr.mxu0 0.0
  %8530 = vmatpush1.msra.mxu0 0.0
  %8531 = vmatprep.subr.mxu0 0.0
  %8532 = vmatpush1.msra.mxu0 0.0
  %8533 = vmatprep.subr.mxu0 0.0
  %8534 = vmatpush1.msra.mxu0 0.0
  %8535 = vmatprep.subr.mxu0 0.0
  %8536 = vmatpush1.msra.mxu0 0.0
  %8537 = vmatprep.subr.mxu0 0.0
  %8538 = vmatpush1.msra.mxu0 0.0
  %8539 = vmatprep.subr.mxu0 0.0
  %8540 = vmatpush1.msra.mxu0 0.0
  %8541 = vmatprep.subr.mxu0 0.0
  %8542 = vmatpush1.msra.mxu0 0.0
  %8543 = vmatprep.subr.mxu0 0.0
  %8544 = vmatpush1.msra.mxu0 0.0
  %8545 = vmatprep.subr.mxu0 0.0
  %8546 = vmatpush1.msra.mxu0 0.0
  %8547 = vmatprep.subr.mxu0 0.0
  %8548 = vmatpush1.msra.mxu0 0.0
  %8549 = vmatprep.subr.mxu0 0.0
  %8550 = vmatpush1.msra.mxu0 0.0
  %8551 = vmatprep.subr.mxu0 0.0
  %8552 = vmatpush1.msra.mxu0 0.0
  %8553 = vmatprep.subr.mxu0 0.0
  %8554 = vmatpush1.msra.mxu0 0.0
  %8555 = vmatprep.subr.mxu0 0.0
  %8556 = vmatpush1.msra.mxu0 0.0
  %8557 = vmatprep.subr.mxu0 0.0
  %8558 = vmatpush1.msra.mxu0 0.0
  %8559 = vmatprep.subr.mxu0 0.0
  %8560 = vmatpush1.msra.mxu0 0.0
  %8561 = vmatprep.mubr.f32.mxu0 0.0
  %8562 = vmatmul.mubr.f32.gmra.mrb[0].mxu0 %v8495
  %v8563 = vpop.f32.mrb[0].mxu0
  %v8564 = vadd.f32 0.0, %v8563
  %v8565 = vpop.f32.mrb[0].mxu0
  %8566 = vdwg.mxu0
  %v8567 = vadd.f32 %v8479, %v8564
  %v8568 = vld [vmem:[%s1111] sm:$0xff]
  %s8569 = scalar_lea.vmem %s9, 240
  %v8570 = vld [vmem:[%s8569] sm:$0xff]
  %v8571 = vld [vmem:[%s8569 + $0x8] sm:$0xff]
  %v8572 = vld [vmem:[%s8569 + $0x10] sm:$0xff]
  %v8573 = vld [vmem:[%s8569 + $0x18] sm:$0xff]
  %v8574 = vld [vmem:[%s8569 + $0x20] sm:$0xff]
  %v8575 = vld [vmem:[%s8569 + $0x28] sm:$0xff]
  %v8576 = vld [vmem:[%s8569 + $0x30] sm:$0xff]
  %v8577 = vld [vmem:[%s8569 + $0x38] sm:$0xff]
  %v8578 = vld [vmem:[%s8569 + $0x40] sm:$0xff]
  %v8579 = vld [vmem:[%s8569 + $0x48] sm:$0xff]
  %v8581 = vsel %vm596, %v8568, 0
  %8583 = vmatprep.subr.mxu0 0.0
  %8584 = vmatpush1.msra.mxu0 %v8570
  %8585 = vmatprep.subr.mxu0 0.0
  %8586 = vmatpush1.msra.mxu0 %v8571
  %8587 = vmatprep.subr.mxu0 0.0
  %8588 = vmatpush1.msra.mxu0 %v8572
  %8589 = vmatprep.subr.mxu0 0.0
  %8590 = vmatpush1.msra.mxu0 %v8573
  %8591 = vmatprep.subr.mxu0 0.0
  %8592 = vmatpush1.msra.mxu0 %v8574
  %8593 = vmatprep.subr.mxu0 0.0
  %8594 = vmatpush1.msra.mxu0 %v8575
  %8595 = vmatprep.subr.mxu0 0.0
  %8596 = vmatpush1.msra.mxu0 %v8576
  %8597 = vmatprep.subr.mxu0 0.0
  %8598 = vmatpush1.msra.mxu0 %v8577
  %8599 = vmatprep.subr.mxu0 0.0
  %8600 = vmatpush1.msra.mxu0 %v8578
  %8601 = vmatprep.subr.mxu0 0.0
  %8602 = vmatpush1.msra.mxu0 %v8579
  %8603 = vmatprep.subr.mxu0 0.0
  %8604 = vmatpush1.msra.mxu0 0.0
  %8605 = vmatprep.subr.mxu0 0.0
  %8606 = vmatpush1.msra.mxu0 0.0
  %8607 = vmatprep.subr.mxu0 0.0
  %8608 = vmatpush1.msra.mxu0 0.0
  %8609 = vmatprep.subr.mxu0 0.0
  %8610 = vmatpush1.msra.mxu0 0.0
  %8611 = vmatprep.subr.mxu0 0.0
  %8612 = vmatpush1.msra.mxu0 0.0
  %8613 = vmatprep.subr.mxu0 0.0
  %8614 = vmatpush1.msra.mxu0 0.0
  %8615 = vmatprep.subr.mxu0 0.0
  %8616 = vmatpush1.msra.mxu0 0.0
  %8617 = vmatprep.subr.mxu0 0.0
  %8618 = vmatpush1.msra.mxu0 0.0
  %8619 = vmatprep.subr.mxu0 0.0
  %8620 = vmatpush1.msra.mxu0 0.0
  %8621 = vmatprep.subr.mxu0 0.0
  %8622 = vmatpush1.msra.mxu0 0.0
  %8623 = vmatprep.subr.mxu0 0.0
  %8624 = vmatpush1.msra.mxu0 0.0
  %8625 = vmatprep.subr.mxu0 0.0
  %8626 = vmatpush1.msra.mxu0 0.0
  %8627 = vmatprep.subr.mxu0 0.0
  %8628 = vmatpush1.msra.mxu0 0.0
  %8629 = vmatprep.subr.mxu0 0.0
  %8630 = vmatpush1.msra.mxu0 0.0
  %8631 = vmatprep.subr.mxu0 0.0
  %8632 = vmatpush1.msra.mxu0 0.0
  %8633 = vmatprep.subr.mxu0 0.0
  %8634 = vmatpush1.msra.mxu0 0.0
  %8635 = vmatprep.subr.mxu0 0.0
  %8636 = vmatpush1.msra.mxu0 0.0
  %8637 = vmatprep.subr.mxu0 0.0
  %8638 = vmatpush1.msra.mxu0 0.0
  %8639 = vmatprep.subr.mxu0 0.0
  %8640 = vmatpush1.msra.mxu0 0.0
  %8641 = vmatprep.subr.mxu0 0.0
  %8642 = vmatpush1.msra.mxu0 0.0
  %8643 = vmatprep.subr.mxu0 0.0
  %8644 = vmatpush1.msra.mxu0 0.0
  %8645 = vmatprep.subr.mxu0 0.0
  %8646 = vmatpush1.msra.mxu0 0.0
  %8647 = vmatprep.mubr.f32.mxu0 0.0
  %8648 = vmatmul.mubr.f32.gmra.mrb[0].mxu0 %v8581
  %v8649 = vpop.f32.mrb[0].mxu0
  %v8650 = vadd.f32 0.0, %v8649
  %v8651 = vpop.f32.mrb[0].mxu0
  %8652 = vdwg.mxu0
  %v8653 = vadd.f32 %v8567, %v8650
  %v8654 = vld [vmem:[%s1114] sm:$0xff]
  %s8655 = scalar_lea.vmem %s9, 320
  %v8656 = vld [vmem:[%s8655] sm:$0xff]
  %v8657 = vld [vmem:[%s8655 + $0x8] sm:$0xff]
  %v8658 = vld [vmem:[%s8655 + $0x10] sm:$0xff]
  %v8659 = vld [vmem:[%s8655 + $0x18] sm:$0xff]
  %v8660 = vld [vmem:[%s8655 + $0x20] sm:$0xff]
  %v8661 = vld [vmem:[%s8655 + $0x28] sm:$0xff]
  %v8662 = vld [vmem:[%s8655 + $0x30] sm:$0xff]
  %v8663 = vld [vmem:[%s8655 + $0x38] sm:$0xff]
  %v8664 = vld [vmem:[%s8655 + $0x40] sm:$0xff]
  %v8665 = vld [vmem:[%s8655 + $0x48] sm:$0xff]
  %v8667 = vsel %vm596, %v8654, 0
  %8669 = vmatprep.subr.mxu0 0.0
  %8670 = vmatpush1.msra.mxu0 %v8656
  %8671 = vmatprep.subr.mxu0 0.0
  %8672 = vmatpush1.msra.mxu0 %v8657
  %8673 = vmatprep.subr.mxu0 0.0
  %8674 = vmatpush1.msra.mxu0 %v8658
  %8675 = vmatprep.subr.mxu0 0.0
  %8676 = vmatpush1.msra.mxu0 %v8659
  %8677 = vmatprep.subr.mxu0 0.0
  %8678 = vmatpush1.msra.mxu0 %v8660
  %8679 = vmatprep.subr.mxu0 0.0
  %8680 = vmatpush1.msra.mxu0 %v8661
  %8681 = vmatprep.subr.mxu0 0.0
  %8682 = vmatpush1.msra.mxu0 %v8662
  %8683 = vmatprep.subr.mxu0 0.0
  %8684 = vmatpush1.msra.mxu0 %v8663
  %8685 = vmatprep.subr.mxu0 0.0
  %8686 = vmatpush1.msra.mxu0 %v8664
  %8687 = vmatprep.subr.mxu0 0.0
  %8688 = vmatpush1.msra.mxu0 %v8665
  %8689 = vmatprep.subr.mxu0 0.0
  %8690 = vmatpush1.msra.mxu0 0.0
  %8691 = vmatprep.subr.mxu0 0.0
  %8692 = vmatpush1.msra.mxu0 0.0
  %8693 = vmatprep.subr.mxu0 0.0
  %8694 = vmatpush1.msra.mxu0 0.0
  %8695 = vmatprep.subr.mxu0 0.0
  %8696 = vmatpush1.msra.mxu0 0.0
  %8697 = vmatprep.subr.mxu0 0.0
  %8698 = vmatpush1.msra.mxu0 0.0
  %8699 = vmatprep.subr.mxu0 0.0
  %8700 = vmatpush1.msra.mxu0 0.0
  %8701 = vmatprep.subr.mxu0 0.0
  %8702 = vmatpush1.msra.mxu0 0.0
  %8703 = vmatprep.subr.mxu0 0.0
  %8704 = vmatpush1.msra.mxu0 0.0
  %8705 = vmatprep.subr.mxu0 0.0
  %8706 = vmatpush1.msra.mxu0 0.0
  %8707 = vmatprep.subr.mxu0 0.0
  %8708 = vmatpush1.msra.mxu0 0.0
  %8709 = vmatprep.subr.mxu0 0.0
  %8710 = vmatpush1.msra.mxu0 0.0
  %8711 = vmatprep.subr.mxu0 0.0
  %8712 = vmatpush1.msra.mxu0 0.0
  %8713 = vmatprep.subr.mxu0 0.0
  %8714 = vmatpush1.msra.mxu0 0.0
  %8715 = vmatprep.subr.mxu0 0.0
  %8716 = vmatpush1.msra.mxu0 0.0
  %8717 = vmatprep.subr.mxu0 0.0
  %8718 = vmatpush1.msra.mxu0 0.0
  %8719 = vmatprep.subr.mxu0 0.0
  %8720 = vmatpush1.msra.mxu0 0.0
  %8721 = vmatprep.subr.mxu0 0.0
  %8722 = vmatpush1.msra.mxu0 0.0
  %8723 = vmatprep.subr.mxu0 0.0
  %8724 = vmatpush1.msra.mxu0 0.0
  %8725 = vmatprep.subr.mxu0 0.0
  %8726 = vmatpush1.msra.mxu0 0.0
  %8727 = vmatprep.subr.mxu0 0.0
  %8728 = vmatpush1.msra.mxu0 0.0
  %8729 = vmatprep.subr.mxu0 0.0
  %8730 = vmatpush1.msra.mxu0 0.0
  %8731 = vmatprep.subr.mxu0 0.0
  %8732 = vmatpush1.msra.mxu0 0.0
  %8733 = vmatprep.mubr.f32.mxu0 0.0
  %8734 = vmatmul.mubr.f32.gmra.mrb[0].mxu0 %v8667
  %v8735 = vpop.f32.mrb[0].mxu0
  %v8736 = vadd.f32 0.0, %v8735
  %v8737 = vpop.f32.mrb[0].mxu0
  %8738 = vdwg.mxu0
  %v8739 = vadd.f32 %v8653, %v8736
  %v8740 = vld [vmem:[%s10] sm:$0x1]
  %v8742 = vlaneseq
  %v8743 = vshrl.u32 %v8742, 7
  %v8744 = vsub.s32 0, %v8743
  %v8745 = vrot.slane %v8740, %v8744
  %v8747 = vadd.f32 %v8739, %v8745
  %v8748 = vxor.u32 %v8747, 2147483648
  %v8749 = vmul.f32 %v8748, 1.442695
  %v8750 = vpow.pop %v8749
  %v8751 = vadd.f32 %v8750, 1.0
  %v8752 = vrcp.pop %v8751
  %v8753 = vmul.f32 1.0, %v8752
  %v8754 = vld [vmem:[%s11] sm:$0xff]
  %v8755 = vld [vmem:[%s11 + $0x8] sm:$0xff]
  %v8756 = vld [vmem:[%s11 + $0x10] sm:$0xff]
  %v8757 = vld [vmem:[%s11 + $0x18] sm:$0xff]
  %v8758 = vld [vmem:[%s11 + $0x20] sm:$0xff]
  %v8759 = vld [vmem:[%s11 + $0x28] sm:$0xff]
  %v8760 = vld [vmem:[%s11 + $0x30] sm:$0xff]
  %v8761 = vld [vmem:[%s11 + $0x38] sm:$0xff]
  %v8762 = vld [vmem:[%s11 + $0x40] sm:$0xff]
  %v8763 = vld [vmem:[%s11 + $0x48] sm:$0xff]
  %v8764 = vld [vmem:[%s11 + $0x50] sm:$0xff]
  %v8765 = vld [vmem:[%s11 + $0x58] sm:$0xff]
  %v8766 = vld [vmem:[%s11 + $0x60] sm:$0xff]
  %v8767 = vld [vmem:[%s11 + $0x68] sm:$0xff]
  %v8768 = vld [vmem:[%s11 + $0x70] sm:$0xff]
  %v8769 = vld [vmem:[%s12] sm:$0x1]
  %v8771 = vlaneseq
  %v8772 = vshrl.u32 %v8771, 7
  %v8773 = vsub.s32 0, %v8772
  %v8774 = vrot.slane %v8769, %v8773
  %vm8776 = vcmask 982016
  %v8778 = vsel %vm8776, %v8753, 0
  %8780 = vmatprep.subr.mxu0 0.0
  %8781 = vmatpush1.msra.mxu0 %v8754
  %8782 = vmatprep.subr.mxu0 0.0
  %8783 = vmatpush1.msra.mxu0 %v8755
  %8784 = vmatprep.subr.mxu0 0.0
  %8785 = vmatpush1.msra.mxu0 %v8756
  %8786 = vmatprep.subr.mxu0 0.0
  %8787 = vmatpush1.msra.mxu0 %v8757
  %8788 = vmatprep.subr.mxu0 0.0
  %8789 = vmatpush1.msra.mxu0 %v8758
  %8790 = vmatprep.subr.mxu0 0.0
  %8791 = vmatpush1.msra.mxu0 %v8759
  %8792 = vmatprep.subr.mxu0 0.0
  %8793 = vmatpush1.msra.mxu0 %v8760
  %8794 = vmatprep.subr.mxu0 0.0
  %8795 = vmatpush1.msra.mxu0 %v8761
  %8796 = vmatprep.subr.mxu0 0.0
  %8797 = vmatpush1.msra.mxu0 %v8762
  %8798 = vmatprep.subr.mxu0 0.0
  %8799 = vmatpush1.msra.mxu0 %v8763
  %8800 = vmatprep.subr.mxu0 0.0
  %8801 = vmatpush1.msra.mxu0 %v8764
  %8802 = vmatprep.subr.mxu0 0.0
  %8803 = vmatpush1.msra.mxu0 %v8765
  %8804 = vmatprep.subr.mxu0 0.0
  %8805 = vmatpush1.msra.mxu0 %v8766
  %8806 = vmatprep.subr.mxu0 0.0
  %8807 = vmatpush1.msra.mxu0 %v8767
  %8808 = vmatprep.subr.mxu0 0.0
  %8809 = vmatpush1.msra.mxu0 %v8768
  %8810 = vmatprep.subr.mxu0 0.0
  %8811 = vmatpush1.msra.mxu0 0.0
  %8812 = vmatprep.subr.mxu0 0.0
  %8813 = vmatpush1.msra.mxu0 0.0
  %8814 = vmatprep.subr.mxu0 0.0
  %8815 = vmatpush1.msra.mxu0 0.0
  %8816 = vmatprep.subr.mxu0 0.0
  %8817 = vmatpush1.msra.mxu0 0.0
  %8818 = vmatprep.subr.mxu0 0.0
  %8819 = vmatpush1.msra.mxu0 0.0
  %8820 = vmatprep.subr.mxu0 0.0
  %8821 = vmatpush1.msra.mxu0 0.0
  %8822 = vmatprep.subr.mxu0 0.0
  %8823 = vmatpush1.msra.mxu0 0.0
  %8824 = vmatprep.subr.mxu0 0.0
  %8825 = vmatpush1.msra.mxu0 0.0
  %8826 = vmatprep.subr.mxu0 0.0
  %8827 = vmatpush1.msra.mxu0 0.0
  %8828 = vmatprep.subr.mxu0 0.0
  %8829 = vmatpush1.msra.mxu0 0.0
  %8830 = vmatprep.subr.mxu0 0.0
  %8831 = vmatpush1.msra.mxu0 0.0
  %8832 = vmatprep.subr.mxu0 0.0
  %8833 = vmatpush1.msra.mxu0 0.0
  %8834 = vmatprep.subr.mxu0 0.0
  %8835 = vmatpush1.msra.mxu0 0.0
  %8836 = vmatprep.subr.mxu0 0.0
  %8837 = vmatpush1.msra.mxu0 0.0
  %8838 = vmatprep.subr.mxu0 0.0
  %8839 = vmatpush1.msra.mxu0 0.0
  %8840 = vmatprep.subr.mxu0 0.0
  %8841 = vmatpush1.msra.mxu0 0.0
  %8842 = vmatprep.subr.mxu0 0.0
  %8843 = vmatpush1.msra.mxu0 0.0
  %8844 = vmatprep.mubr.f32.mxu0 0.0
  %8845 = vmatmul.mubr.f32.gmra.mrb[0].mxu0 %v8778
  %v8846 = vpop.f32.mrb[0].mxu0
  %v8847 = vadd.f32 %v8774, %v8846
  %v8848 = vpop.f32.mrb[0].mxu0
  %8849 = vdwg.mxu0
  %v8850 = vxor.u32 %v8847, 2147483648
  %v8851 = vmul.f32 %v8850, 1.442695
  %v8852 = vpow.pop %v8851
  %v8853 = vadd.f32 %v8852, 1.0
  %v8854 = vrcp.pop %v8853
  %v8855 = vmul.f32 1.0, %v8854
  %v8856 = vld [vmem:[%s13] sm:$0xff]
  %v8857 = vld [vmem:[%s13 + $0x8] sm:$0xff]
  %v8858 = vld [vmem:[%s13 + $0x10] sm:$0xff]
  %v8859 = vld [vmem:[%s13 + $0x18] sm:$0xff]
  %v8860 = vld [vmem:[%s13 + $0x20] sm:$0xff]
  %v8861 = vld [vmem:[%s13 + $0x28] sm:$0xff]
  %v8862 = vld [vmem:[%s13 + $0x30] sm:$0xff]
  %v8863 = vld [vmem:[%s13 + $0x38] sm:$0xff]
  %v8864 = vld [vmem:[%s13 + $0x40] sm:$0xff]
  %v8865 = vld [vmem:[%s13 + $0x48] sm:$0xff]
  %v8866 = vld [vmem:[%s13 + $0x50] sm:$0xf]
  %v8867 = vld [vmem:[%s14] sm:$0x1]
  %v8869 = vlaneseq
  %v8870 = vshrl.u32 %v8869, 7
  %v8871 = vsub.s32 0, %v8870
  %v8872 = vrot.slane %v8867, %v8871
  %v8875 = vsel %vm547, %v8855, 0
  %v8878 = vsel %vm360, %v8866, 0
  %8880 = vmatprep.subr.mxu0 0.0
  %8881 = vmatpush1.msra.mxu0 %v8856
  %8882 = vmatprep.subr.mxu0 0.0
  %8883 = vmatpush1.msra.mxu0 %v8857
  %8884 = vmatprep.subr.mxu0 0.0
  %8885 = vmatpush1.msra.mxu0 %v8858
  %8886 = vmatprep.subr.mxu0 0.0
  %8887 = vmatpush1.msra.mxu0 %v8859
  %8888 = vmatprep.subr.mxu0 0.0
  %8889 = vmatpush1.msra.mxu0 %v8860
  %8890 = vmatprep.subr.mxu0 0.0
  %8891 = vmatpush1.msra.mxu0 %v8861
  %8892 = vmatprep.subr.mxu0 0.0
  %8893 = vmatpush1.msra.mxu0 %v8862
  %8894 = vmatprep.subr.mxu0 0.0
  %8895 = vmatpush1.msra.mxu0 %v8863
  %8896 = vmatprep.subr.mxu0 0.0
  %8897 = vmatpush1.msra.mxu0 %v8864
  %8898 = vmatprep.subr.mxu0 0.0
  %8899 = vmatpush1.msra.mxu0 %v8865
  %8900 = vmatprep.subr.mxu0 0.0
  %8901 = vmatpush1.msra.mxu0 %v8878
  %8902 = vmatprep.subr.mxu0 0.0
  %8903 = vmatpush1.msra.mxu0 0.0
  %8904 = vmatprep.subr.mxu0 0.0
  %8905 = vmatpush1.msra.mxu0 0.0
  %8906 = vmatprep.subr.mxu0 0.0
  %8907 = vmatpush1.msra.mxu0 0.0
  %8908 = vmatprep.subr.mxu0 0.0
  %8909 = vmatpush1.msra.mxu0 0.0
  %8910 = vmatprep.subr.mxu0 0.0
  %8911 = vmatpush1.msra.mxu0 0.0
  %8912 = vmatprep.subr.mxu0 0.0
  %8913 = vmatpush1.msra.mxu0 0.0
  %8914 = vmatprep.subr.mxu0 0.0
  %8915 = vmatpush1.msra.mxu0 0.0
  %8916 = vmatprep.subr.mxu0 0.0
  %8917 = vmatpush1.msra.mxu0 0.0
  %8918 = vmatprep.subr.mxu0 0.0
  %8919 = vmatpush1.msra.mxu0 0.0
  %8920 = vmatprep.subr.mxu0 0.0
  %8921 = vmatpush1.msra.mxu0 0.0
  %8922 = vmatprep.subr.mxu0 0.0
  %8923 = vmatpush1.msra.mxu0 0.0
  %8924 = vmatprep.subr.mxu0 0.0
  %8925 = vmatpush1.msra.mxu0 0.0
  %8926 = vmatprep.subr.mxu0 0.0
  %8927 = vmatpush1.msra.mxu0 0.0
  %8928 = vmatprep.subr.mxu0 0.0
  %8929 = vmatpush1.msra.mxu0 0.0
  %8930 = vmatprep.subr.mxu0 0.0
  %8931 = vmatpush1.msra.mxu0 0.0
  %8932 = vmatprep.subr.mxu0 0.0
  %8933 = vmatpush1.msra.mxu0 0.0
  %8934 = vmatprep.subr.mxu0 0.0
  %8935 = vmatpush1.msra.mxu0 0.0
  %8936 = vmatprep.subr.mxu0 0.0
  %8937 = vmatpush1.msra.mxu0 0.0
  %8938 = vmatprep.subr.mxu0 0.0
  %8939 = vmatpush1.msra.mxu0 0.0
  %8940 = vmatprep.subr.mxu0 0.0
  %8941 = vmatpush1.msra.mxu0 0.0
  %8942 = vmatprep.subr.mxu0 0.0
  %8943 = vmatpush1.msra.mxu0 0.0
  %8944 = vmatprep.mubr.f32.mxu0 0.0
  %8945 = vmatmul.mubr.f32.gmra.mrb[0].mxu0 %v8875
  %v8946 = vpop.f32.mrb[0].mxu0
  %v8947 = vadd.f32 %v8872, %v8946
  %v8948 = vpop.f32.mrb[0].mxu0
  %8949 = vdwg.mxu0
  %8950 = vst [vmem:[%s15] sm:$0xff] %v8947
  // Predicated region
  $region62: #{lenet_forward.1} parent=0 // pred_check
    _
  $region63: #{lenet_forward.1} parent=0 // pred_check_branch
    %8952 = sbr.rel (0) target = $region65
  $region64: #{lenet_forward.1} parent=0 // pred_region
    _
  $region65: #{lenet_forward.1} parent=0 // pred_fallthru
    _
  // Predicated region
  $region66: #{lenet_forward.1} parent=0 // pred_check
    _
  $region67: #{lenet_forward.1} parent=0 // pred_check_branch
    %8954 = sbr.rel (0) target = $region69
  $region68: #{lenet_forward.1} parent=0 // pred_region
    _
  $region69: #{lenet_forward.1} parent=0 // pred_fallthru
    _

</llo_original>
